<compile_context>
chip_gen: v5e
topology: v5e:2x2
jax: 0.10.0
libtpu: 0.0.40
codegen_flags: <defaults>
</compile_context>

<pallas_src>
import functools

import jax
import jax.numpy as jnp
from jax.experimental import pallas as pl
from jax.experimental.pallas import tpu as pltpu

EPS = 1e-5
MXU_DTYPE = jnp.bfloat16          # matmul operand dtype; accumulation stays f32

# ---------------- model config (scaled-down HuBERT base) ----------------
CONV_LAYERS = [(32, 10, 5), (32, 3, 2), (32, 2, 2)]   # (out_ch, kernel, stride)
D_MODEL = 64
N_HEADS = 4
HEAD_DIM = D_MODEL // N_HEADS
FFN_DIM = 128
N_LAYERS = 3          # layers available in the "checkpoint"
OUTPUT_LAYER = 2      # CustomHubert(output_layer=...): run this many layers
POS_CONV_KERNEL = 5
POS_CONV_GROUPS = 4

# weight-input order shared by the kernel signature and the wrapper
_WEIGHT_NAMES = (
    "c0_w", "c0_b", "gn",
    "c1_w", "c1_b",
    "c2_w", "c2_b", "ln_feat",
    "proj_w", "proj_b",
    "pos_w", "pos_b", "ln_enc",
    "wqkv", "bqkv", "wo", "bo", "ln1",
    "fc1_w", "fc1_b", "fc2_w", "fc2_b", "ln2",
)


# TODO(synk): torch nn.GELU defaults to exact erf GELU; we use the tanh
# approximation (guaranteed Mosaic lowering); max abs difference ~1e-3.
def _gelu(x):
    return jax.nn.gelu(x, approximate=True)


def _layer_norm(x, gamma, beta):
    mean = jnp.mean(x, axis=-1, keepdims=True)
    var = jnp.mean(jnp.square(x - mean), axis=-1, keepdims=True)
    return (x - mean) * jax.lax.rsqrt(var + EPS) * gamma + beta


# ---------------- single fused forward kernel (one batch element / grid step) ----------------

def _hubert_kernel(
    wav_ref,
    c0_w_ref, c0_b_ref, gn_ref,
    c1_w_ref, c1_b_ref,
    c2_w_ref, c2_b_ref, ln_feat_ref,
    proj_w_ref, proj_b_ref,
    pos_w_ref, pos_b_ref, ln_enc_ref,
    wqkv_ref, bqkv_ref, wo_ref, bo_ref, ln1_ref,
    fc1_w_ref, fc1_b_ref, fc2_w_ref, fc2_b_ref, ln2_ref,
    out_ref,
    s0_ref, s1_ref, hp_ref,
    *, seq_lens, n_layers,
):
    T0, T1, T2 = seq_lens
    c0, k0, st0 = CONV_LAYERS[0]
    c1, k1, st1 = CONV_LAYERS[1]
    c2, k2, st2 = CONV_LAYERS[2]

    # ---- conv0 (Cin=1) ----
    # wrapper folded the stride into the lane dim: wav_ref[0] is (T_use//st0, st0),
    # so each "fold group" j is a contiguous tap block -> k0//st0 small matmuls.
    xr = wav_ref[0].astype(jnp.float32)                        # (R0, st0)
    y = jnp.zeros((T0, c0), jnp.float32)
    for j in range(k0 // st0):
        y = y + jnp.dot(xr[j:j + T0, :], c0_w_ref[j * st0:(j + 1) * st0, :],
                        preferred_element_type=jnp.float32)
    y = y + c0_b_ref[...]
    # GroupNorm(num_groups=C) == per-channel normalization over time, then GELU
    mu = jnp.mean(y, axis=0, keepdims=True)
    var = jnp.mean(jnp.square(y - mu), axis=0, keepdims=True)
    y = (y - mu) * jax.lax.rsqrt(var + EPS) * gn_ref[0] + gn_ref[1]
    s0_ref[...] = _gelu(y)                                     # (T0, c0) f32 scratch

    # ---- conv1: in-kernel im2col via strided tap reads from VMEM scratch ----
    y = jnp.zeros((T1, c1), jnp.float32)
    for k in range(k1):
        tap = s0_ref[pl.ds(k, T1, stride=st1), :]              # (T1, c0)
        y = y + jnp.dot(tap, c1_w_ref[k], preferred_element_type=jnp.float32)
    s1_ref[...] = _gelu(y + c1_b_ref[...])                     # (T1, c1) f32 scratch

    # ---- conv2 + GELU + feature LayerNorm ----
    y = jnp.zeros((T2, c2), jnp.float32)
    for k in range(k2):
        tap = s1_ref[pl.ds(k, T2, stride=st2), :]
        y = y + jnp.dot(tap, c2_w_ref[k], preferred_element_type=jnp.float32)
    feats = _gelu(y + c2_b_ref[...])
    feats = _layer_norm(feats, ln_feat_ref[0], ln_feat_ref[1])

    # ---- post_extract_proj ----
    h = jnp.dot(feats.astype(MXU_DTYPE), proj_w_ref[...],
                preferred_element_type=jnp.float32) + proj_b_ref[...]   # (T2, D) f32

    # ---- positional grouped conv (tap loop over per-tap block-diag dense weights)
    #      + GELU + residual + encoder LayerNorm ----
    pad = POS_CONV_KERNEL // 2
    hp_ref[...] = jnp.zeros_like(hp_ref)
    hp_ref[pad:pad + T2, :] = h
    pos = jnp.zeros((T2, D_MODEL), jnp.float32)
    for k in range(POS_CONV_KERNEL):
        tap = hp_ref[k:k + T2, :].astype(MXU_DTYPE)
        pos = pos + jnp.dot(tap, pos_w_ref[k], preferred_element_type=jnp.float32)
    pos = _gelu(pos + pos_b_ref[...])
    h = _layer_norm(h + pos, ln_enc_ref[0], ln_enc_ref[1])

    # ---- transformer layers (post-LN); residual stream stays f32 in VMEM ----
    for li in range(n_layers):
        x16 = h.astype(MXU_DTYPE)
        attn = jnp.zeros((T2, D_MODEL), jnp.float32)
        for hd in range(N_HEADS):                 # head-major weights: no lane slicing
            q = jnp.dot(x16, wqkv_ref[li, 0, hd],
                        preferred_element_type=jnp.float32) + bqkv_ref[li, 0, hd]
            kk = jnp.dot(x16, wqkv_ref[li, 1, hd],
                         preferred_element_type=jnp.float32) + bqkv_ref[li, 1, hd]
            vv = jnp.dot(x16, wqkv_ref[li, 2, hd],
                         preferred_element_type=jnp.float32) + bqkv_ref[li, 2, hd]
            s = jax.lax.dot_general(q.astype(MXU_DTYPE), kk.astype(MXU_DTYPE),
                                    (((1,), (1,)), ((), ())),
                                    preferred_element_type=jnp.float32)   # (T2, T2)
            s = s - jnp.max(s, axis=-1, keepdims=True)
            p = jnp.exp(s)
            p = p * pl.reciprocal(jnp.sum(p, axis=-1, keepdims=True), approx=True)
            ctx = jnp.dot(p.astype(MXU_DTYPE), vv.astype(MXU_DTYPE),
                          preferred_element_type=jnp.float32)             # (T2, dh)
            # accumulate the out-projection per head: no head concat needed
            attn = attn + jnp.dot(ctx.astype(MXU_DTYPE), wo_ref[li, hd],
                                  preferred_element_type=jnp.float32)
        attn = attn + bo_ref[li]
        h = _layer_norm(h + attn, ln1_ref[li, 0], ln1_ref[li, 1])

        ff = _gelu(jnp.dot(h.astype(MXU_DTYPE), fc1_w_ref[li],
                           preferred_element_type=jnp.float32) + fc1_b_ref[li])
        ff = jnp.dot(ff.astype(MXU_DTYPE), fc2_w_ref[li],
                     preferred_element_type=jnp.float32) + fc2_b_ref[li]
        h = _layer_norm(h + ff, ln2_ref[li, 0], ln2_ref[li, 1])

    out_ref[0] = h.astype(out_ref.dtype)


def _const_spec(a):
    n = a.ndim
    return pl.BlockSpec(a.shape, lambda b, _n=n: (0,) * _n)


# ---------------- wrapper ----------------

def custom_hubert_forward(params, wav, flatten=True, seq_len_multiple_of=None):
    """Equivalent of CustomHubert.forward(wav_input, flatten=True)."""
    # TODO(synk): input_sample_hz resampling path has no clean Pallas equivalent; omitted.
    # TODO(synk): padding_mask path (variable-length batches) not implemented.
    if seq_len_multiple_of is not None:                    # curtail_to_multiple
        wav = wav[:, : (wav.shape[1] // seq_len_multiple_of) * seq_len_multiple_of]

    B, T_wav = wav.shape
    _, k0, st0 = CONV_LAYERS[0]
    t, seq_lens = T_wav, []
    for (_, k, s) in CONV_LAYERS:
        t = (t - k) // s + 1
        seq_lens.append(t)
    T0, T1, T2 = seq_lens

    # fold the conv0 stride into the lane dim (pure metadata reshape, no HBM copy):
    # (B, T_use) -> (B, T_use//st0, st0); requires k0 % st0 == 0 (true here).
    assert k0 % st0 == 0
    T_use = (T0 - 1) * st0 + k0
    x = wav[:, :T_use].reshape(B, T_use // st0, st0).astype(jnp.float32)

    weights = [params[n] for n in _WEIGHT_NAMES]
    n_layers = params["wqkv"].shape[0]

    in_specs = [pl.BlockSpec((1, T_use // st0, st0), lambda b: (b, 0, 0))]
    in_specs += [_const_spec(w) for w in weights]

    kernel = functools.partial(_hubert_kernel, seq_lens=(T0, T1, T2),
                               n_layers=n_layers)

    # TODO(synk): at real HuBERT sizes (D=768, FFN=3072, T in the thousands) tile the
    # KV axis flash-style, keep the pos-conv grouped, and set vmem_limit_bytes for
    # the 64 MiB v7x budget; at this config everything fits in a few hundred KiB.
    out = pl.pallas_call(
        kernel,
        out_shape=jax.ShapeDtypeStruct((B, T2, D_MODEL), jnp.float32),
        grid=(B,),
        in_specs=in_specs,
        out_specs=pl.BlockSpec((1, T2, D_MODEL), lambda b: (b, 0, 0)),
        scratch_shapes=[
            pltpu.VMEM((T0, CONV_LAYERS[0][0]), jnp.float32),               # conv0 out
            pltpu.VMEM((T1, CONV_LAYERS[1][0]), jnp.float32),               # conv1 out
            pltpu.VMEM((T2 + POS_CONV_KERNEL - 1, D_MODEL), jnp.float32),   # padded h
        ],
        compiler_params=pltpu.CompilerParams(
            dimension_semantics=("parallel",)),   # batch across TCs on v7x
    )(x, *weights)

    if flatten:                                            # pack([embed['x']], '* d')
        return out.reshape(B * T2, D_MODEL)
    return out


# ---------------- parameters ----------------

def init_params(key):
    """PyTorch-layout synthetic 'checkpoint'."""
    def nrm(k, shape, scale=0.02):
        return scale * jax.random.normal(k, shape, dtype=jnp.float32)

    keys = iter(jax.random.split(key, 64))
    zeros = lambda n: jnp.zeros((n,), jnp.float32)
    ones = lambda n: jnp.ones((n,), jnp.float32)

    p = {}
    conv_w, conv_b = [], []
    cin = 1
    for (cout, k, s) in CONV_LAYERS:
        conv_w.append(nrm(next(keys), (cout, cin, k)))
        conv_b.append(zeros(cout))
        cin = cout
    p["conv_w"], p["conv_b"] = conv_w, conv_b

    c0 = CONV_LAYERS[0][0]
    C = CONV_LAYERS[-1][0]
    p["gn_g"], p["gn_b"] = ones(c0), zeros(c0)
    p["ln_feat_g"], p["ln_feat_b"] = ones(C), zeros(C)
    p["proj_w"], p["proj_b"] = nrm(next(keys), (C, D_MODEL)), zeros(D_MODEL)
    p["pos_w"] = nrm(next(keys), (D_MODEL, D_MODEL // POS_CONV_GROUPS, POS_CONV_KERNEL))
    p["pos_b"] = zeros(D_MODEL)
    p["ln_enc_g"], p["ln_enc_b"] = ones(D_MODEL), zeros(D_MODEL)

    layers = []
    for _ in range(N_LAYERS):
        layers.append({
            "wq": nrm(next(keys), (D_MODEL, D_MODEL)), "bq": zeros(D_MODEL),
            "wk": nrm(next(keys), (D_MODEL, D_MODEL)), "bk": zeros(D_MODEL),
            "wv": nrm(next(keys), (D_MODEL, D_MODEL)), "bv": zeros(D_MODEL),
            "wo": nrm(next(keys), (D_MODEL, D_MODEL)), "bo": zeros(D_MODEL),
            "ln1_g": ones(D_MODEL), "ln1_b": zeros(D_MODEL),
            "fc1_w": nrm(next(keys), (D_MODEL, FFN_DIM)), "fc1_b": zeros(FFN_DIM),
            "fc2_w": nrm(next(keys), (FFN_DIM, D_MODEL)), "fc2_b": zeros(D_MODEL),
            "ln2_g": ones(D_MODEL), "ln2_b": zeros(D_MODEL),
        })
    p["layers"] = layers
    return p


def _split_cols(w):   # (D, D) -> (H, D, dh): head h = columns [h*dh, (h+1)*dh)
    return jnp.stack([w[:, h * HEAD_DIM:(h + 1) * HEAD_DIM] for h in range(N_HEADS)])


def _split_bias(b):   # (D,) -> (H, 1, dh)
    return jnp.stack([b[h * HEAD_DIM:(h + 1) * HEAD_DIM].reshape(1, HEAD_DIM)
                      for h in range(N_HEADS)])


def _split_rows(w):   # (D, D) -> (H, dh, D): head h = rows [h*dh, (h+1)*dh)
    return jnp.stack([w[h * HEAD_DIM:(h + 1) * HEAD_DIM, :] for h in range(N_HEADS)])


def prepare_params(raw):
    """Kernel-ready params: tap-major conv weights, head-major per-head QKV/out-proj
    weights (fairseq q-scaling folded in), stacked per-layer tensors, bf16 matmul
    weights (biases / norm affine stay f32)."""
    p = {}
    # conv0 (Cout, 1, K) -> (K, Cout)
    w0 = raw["conv_w"][0]
    p["c0_w"] = jnp.transpose(w0, (2, 1, 0)).reshape(w0.shape[2], w0.shape[0])
    p["c0_b"] = raw["conv_b"][0].reshape(1, -1)
    p["gn"] = jnp.stack([raw["gn_g"], raw["gn_b"]]).reshape(2, 1, -1)
    # conv1/conv2 (Cout, Cin, K) -> (K, Cin, Cout)
    for i in (1, 2):
        p[f"c{i}_w"] = jnp.transpose(raw["conv_w"][i], (2, 1, 0))
        p[f"c{i}_b"] = raw["conv_b"][i].reshape(1, -1)
    p["ln_feat"] = jnp.stack([raw["ln_feat_g"], raw["ln_feat_b"]]).reshape(2, 1, -1)
    p["proj_w"] = raw["proj_w"].astype(MXU_DTYPE)
    p["proj_b"] = raw["proj_b"].reshape(1, -1)

    # positional grouped conv (D, D//G, K) -> per-tap block-diagonal dense (K, D, D).
    # TODO(synk): at real HuBERT sizes (D=768, K=128, G=16) keep the grouped structure
    # (per-group matmuls / group grid) instead of densifying: the dense weight would be
    # ~113 MiB and exceed v7x VMEM; at this toy size the densification is harmless.
    wpos = raw["pos_w"]
    D, dg, K = wpos.shape
    wt = jnp.transpose(wpos, (2, 1, 0))                   # (K, dg, D_out)
    dense = jnp.zeros((K, D, D), jnp.float32)
    for g in range(POS_CONV_GROUPS):
        sl = slice(g * dg, (g + 1) * dg)
        dense = dense.at[:, sl, sl].set(wt[:, :, sl])
    p["pos_w"] = dense.astype(MXU_DTYPE)
    p["pos_b"] = raw["pos_b"].reshape(1, -1)
    p["ln_enc"] = jnp.stack([raw["ln_enc_g"], raw["ln_enc_b"]]).reshape(2, 1, -1)

    scale = 1.0 / (HEAD_DIM ** 0.5)       # fairseq scales q (incl. bias) before scores
    wqkv, bqkv, wo, bo, ln1 = [], [], [], [], []
    fc1_w, fc1_b, fc2_w, fc2_b, ln2 = [], [], [], [], []
    for lp in raw["layers"][:OUTPUT_LAYER]:
        wqkv.append(jnp.stack([_split_cols(lp["wq"] * scale),
                               _split_cols(lp["wk"]),
                               _split_cols(lp["wv"])]))            # (3, H, D, dh)
        bqkv.append(jnp.stack([_split_bias(lp["bq"] * scale),
                               _split_bias(lp["bk"]),
                               _split_bias(lp["bv"])]))            # (3, H, 1, dh)
        wo.append(_split_rows(lp["wo"]))                           # (H, dh, D)
        bo.append(lp["bo"].reshape(1, -1))
        ln1.append(jnp.stack([lp["ln1_g"], lp["ln1_b"]]).reshape(2, 1, -1))
        fc1_w.append(lp["fc1_w"]); fc1_b.append(lp["fc1_b"].reshape(1, -1))
        fc2_w.append(lp["fc2_w"]); fc2_b.append(lp["fc2_b"].reshape(1, -1))
        ln2.append(jnp.stack([lp["ln2_g"], lp["ln2_b"]]).reshape(2, 1, -1))

    p["wqkv"] = jnp.stack(wqkv).astype(MXU_DTYPE)       # (L, 3, H, D, dh)
    p["bqkv"] = jnp.stack(bqkv)                         # (L, 3, H, 1, dh) f32
    p["wo"] = jnp.stack(wo).astype(MXU_DTYPE)           # (L, H, dh, D)
    p["bo"] = jnp.stack(bo)                             # (L, 1, D)
    p["ln1"] = jnp.stack(ln1)                           # (L, 2, 1, D)
    p["fc1_w"] = jnp.stack(fc1_w).astype(MXU_DTYPE)     # (L, D, F)
    p["fc1_b"] = jnp.stack(fc1_b)                       # (L, 1, F)
    p["fc2_w"] = jnp.stack(fc2_w).astype(MXU_DTYPE)     # (L, F, D)
    p["fc2_b"] = jnp.stack(fc2_b)                       # (L, 1, D)
    p["ln2"] = jnp.stack(ln2)                           # (L, 2, 1, D)
    return p


if __name__ == "__main__":
    key = jax.random.PRNGKey(0)
    pkey, wkey = jax.random.split(key)
    params = prepare_params(init_params(pkey))

    B, T_WAV = 2, 400
    wav = jax.random.normal(wkey, (B, T_WAV), dtype=jnp.float32)

    out = jax.jit(custom_hubert_forward)(params, wav)
    out = jax.block_until_ready(out)

    # expected flattened shape: (B * T_frames, D_MODEL)
    t = T_WAV
    for (_, k, s) in CONV_LAYERS:
        t = (t - k) // s + 1
    assert out.shape == (B * t, D_MODEL), out.shape
    assert bool(jnp.all(jnp.isfinite(out)))
    print("KERNEL_OK")
</pallas_src>

<mosaic_0001>
module attributes {stable_mosaic.version = 11 : i64} {
  func.func @_hubert_kernel(%arg0: i32, %arg1: memref<1x80x5xf32, #tpu.memory_space<vmem>>, %arg2: memref<10x32xf32, #tpu.memory_space<vmem>>, %arg3: memref<1x32xf32, #tpu.memory_space<vmem>>, %arg4: memref<2x1x32xf32, #tpu.memory_space<vmem>>, %arg5: memref<3x32x32xf32, #tpu.memory_space<vmem>>, %arg6: memref<1x32xf32, #tpu.memory_space<vmem>>, %arg7: memref<2x32x32xf32, #tpu.memory_space<vmem>>, %arg8: memref<1x32xf32, #tpu.memory_space<vmem>>, %arg9: memref<2x1x32xf32, #tpu.memory_space<vmem>>, %arg10: memref<32x64xbf16, #tpu.memory_space<vmem>>, %arg11: memref<1x64xf32, #tpu.memory_space<vmem>>, %arg12: memref<5x64x64xbf16, #tpu.memory_space<vmem>>, %arg13: memref<1x64xf32, #tpu.memory_space<vmem>>, %arg14: memref<2x1x64xf32, #tpu.memory_space<vmem>>, %arg15: memref<2x3x4x64x16xbf16, #tpu.memory_space<vmem>>, %arg16: memref<2x3x4x1x16xf32, #tpu.memory_space<vmem>>, %arg17: memref<2x4x16x64xbf16, #tpu.memory_space<vmem>>, %arg18: memref<2x1x64xf32, #tpu.memory_space<vmem>>, %arg19: memref<2x2x1x64xf32, #tpu.memory_space<vmem>>, %arg20: memref<2x64x128xbf16, #tpu.memory_space<vmem>>, %arg21: memref<2x1x128xf32, #tpu.memory_space<vmem>>, %arg22: memref<2x128x64xbf16, #tpu.memory_space<vmem>>, %arg23: memref<2x1x64xf32, #tpu.memory_space<vmem>>, %arg24: memref<2x2x1x64xf32, #tpu.memory_space<vmem>>, %arg25: memref<1x19x64xf32, #tpu.memory_space<vmem>>, %arg26: memref<79x32xf32, #tpu.memory_space<vmem>>, %arg27: memref<39x32xf32, #tpu.memory_space<vmem>>, %arg28: memref<23x64xf32, #tpu.memory_space<vmem>>) attributes {dimension_semantics = [#tpu.dimension_semantics<parallel>], iteration_bounds = array<i64: 2>, scalar_prefetch = 0 : i64, scratch_operands = 3 : i64, tpu.core_type = #tpu.core_type<tc>, window_params = [{transform_indices = @transform_0, window_bounds = array<i64: 1, 80, 5>}, {pipeline_mode = #tpu.pipeline_mode<synchronous>, transform_indices = @transform_1, window_bounds = array<i64: 10, 32>}, {pipeline_mode = #tpu.pipeline_mode<synchronous>, transform_indices = @transform_2, window_bounds = array<i64: 1, 32>}, {pipeline_mode = #tpu.pipeline_mode<synchronous>, transform_indices = @transform_3, window_bounds = array<i64: 2, 1, 32>}, {pipeline_mode = #tpu.pipeline_mode<synchronous>, transform_indices = @transform_4, window_bounds = array<i64: 3, 32, 32>}, {pipeline_mode = #tpu.pipeline_mode<synchronous>, transform_indices = @transform_5, window_bounds = array<i64: 1, 32>}, {pipeline_mode = #tpu.pipeline_mode<synchronous>, transform_indices = @transform_6, window_bounds = array<i64: 2, 32, 32>}, {pipeline_mode = #tpu.pipeline_mode<synchronous>, transform_indices = @transform_7, window_bounds = array<i64: 1, 32>}, {pipeline_mode = #tpu.pipeline_mode<synchronous>, transform_indices = @transform_8, window_bounds = array<i64: 2, 1, 32>}, {pipeline_mode = #tpu.pipeline_mode<synchronous>, transform_indices = @transform_9, window_bounds = array<i64: 32, 64>}, {pipeline_mode = #tpu.pipeline_mode<synchronous>, transform_indices = @transform_10, window_bounds = array<i64: 1, 64>}, {pipeline_mode = #tpu.pipeline_mode<synchronous>, transform_indices = @transform_11, window_bounds = array<i64: 5, 64, 64>}, {pipeline_mode = #tpu.pipeline_mode<synchronous>, transform_indices = @transform_12, window_bounds = array<i64: 1, 64>}, {pipeline_mode = #tpu.pipeline_mode<synchronous>, transform_indices = @transform_13, window_bounds = array<i64: 2, 1, 64>}, {pipeline_mode = #tpu.pipeline_mode<synchronous>, transform_indices = @transform_14, window_bounds = array<i64: 2, 3, 4, 64, 16>}, {pipeline_mode = #tpu.pipeline_mode<synchronous>, transform_indices = @transform_15, window_bounds = array<i64: 2, 3, 4, 1, 16>}, {pipeline_mode = #tpu.pipeline_mode<synchronous>, transform_indices = @transform_16, window_bounds = array<i64: 2, 4, 16, 64>}, {pipeline_mode = #tpu.pipeline_mode<synchronous>, transform_indices = @transform_17, window_bounds = array<i64: 2, 1, 64>}, {pipeline_mode = #tpu.pipeline_mode<synchronous>, transform_indices = @transform_18, window_bounds = array<i64: 2, 2, 1, 64>}, {pipeline_mode = #tpu.pipeline_mode<synchronous>, transform_indices = @transform_19, window_bounds = array<i64: 2, 64, 128>}, {pipeline_mode = #tpu.pipeline_mode<synchronous>, transform_indices = @transform_20, window_bounds = array<i64: 2, 1, 128>}, {pipeline_mode = #tpu.pipeline_mode<synchronous>, transform_indices = @transform_21, window_bounds = array<i64: 2, 128, 64>}, {pipeline_mode = #tpu.pipeline_mode<synchronous>, transform_indices = @transform_22, window_bounds = array<i64: 2, 1, 64>}, {pipeline_mode = #tpu.pipeline_mode<synchronous>, transform_indices = @transform_23, window_bounds = array<i64: 2, 2, 1, 64>}, {transform_indices = @transform_24, window_bounds = array<i64: 1, 19, 64>}]} {
    %c0 = arith.constant 0 : index
    %c0_0 = arith.constant 0 : index
    %c0_1 = arith.constant 0 : index
    %0 = vector.load %arg1[%c0, %c0_0, %c0_1] : memref<1x80x5xf32, #tpu.memory_space<vmem>>, vector<1x80x5xf32>
    %1 = vector.shape_cast %0 : vector<1x80x5xf32> to vector<80x5xf32>
    %cst = arith.constant 0.000000e+00 : f32
    %2 = vector.broadcast %cst : f32 to vector<79x32xf32>
    %3 = vector.extract_strided_slice %1 {offsets = [0, 0], sizes = [79, 5], strides = [1, 1]} : vector<80x5xf32> to vector<79x5xf32>
    %c0_2 = arith.constant 0 : index
    %c0_3 = arith.constant 0 : index
    %4 = vector.load %arg2[%c0_2, %c0_3] : memref<10x32xf32, #tpu.memory_space<vmem>>, vector<5x32xf32>
    %cst_4 = arith.constant dense<0.000000e+00> : vector<79x32xf32>
    %5 = tpu.matmul %3, %4, %cst_4 {dimension_numbers = #tpu.dot_dimension_numbers<[1], [0], [0], [1], [0, 0, 1, 1], [], []>} : vector<79x5xf32>, vector<5x32xf32>, vector<79x32xf32> -> vector<79x32xf32>
    %6 = arith.addf %2, %5 : vector<79x32xf32>
    %7 = vector.extract_strided_slice %1 {offsets = [1, 0], sizes = [79, 5], strides = [1, 1]} : vector<80x5xf32> to vector<79x5xf32>
    %c5 = arith.constant 5 : index
    %c0_5 = arith.constant 0 : index
    %8 = vector.load %arg2[%c5, %c0_5] : memref<10x32xf32, #tpu.memory_space<vmem>>, vector<5x32xf32>
    %cst_6 = arith.constant dense<0.000000e+00> : vector<79x32xf32>
    %9 = tpu.matmul %7, %8, %cst_6 {dimension_numbers = #tpu.dot_dimension_numbers<[1], [0], [0], [1], [0, 0, 1, 1], [], []>} : vector<79x5xf32>, vector<5x32xf32>, vector<79x32xf32> -> vector<79x32xf32>
    %10 = arith.addf %6, %9 : vector<79x32xf32>
    %c0_7 = arith.constant 0 : index
    %c0_8 = arith.constant 0 : index
    %11 = vector.load %arg3[%c0_7, %c0_8] : memref<1x32xf32, #tpu.memory_space<vmem>>, vector<1x32xf32>
    %12 = vector.broadcast %11 : vector<1x32xf32> to vector<79x32xf32>
    %13 = arith.addf %10, %12 : vector<79x32xf32>
    %cst_9 = arith.constant dense<0.000000e+00> : vector<32xf32>
    %14 = vector.multi_reduction <add>, %13, %cst_9 [0] : vector<79x32xf32> to vector<32xf32>
    %15 = vector.shape_cast %14 : vector<32xf32> to vector<1x32xf32>
    %cst_10 = arith.constant 7.900000e+01 : f32
    %16 = vector.broadcast %cst_10 : f32 to vector<1x32xf32>
    %17 = arith.divf %15, %16 : vector<1x32xf32>
    %18 = vector.broadcast %17 : vector<1x32xf32> to vector<79x32xf32>
    %19 = arith.subf %13, %18 : vector<79x32xf32>
    %20 = arith.mulf %19, %19 : vector<79x32xf32>
    %cst_11 = arith.constant dense<0.000000e+00> : vector<32xf32>
    %21 = vector.multi_reduction <add>, %20, %cst_11 [0] : vector<79x32xf32> to vector<32xf32>
    %22 = vector.shape_cast %21 : vector<32xf32> to vector<1x32xf32>
    %cst_12 = arith.constant 7.900000e+01 : f32
    %23 = vector.broadcast %cst_12 : f32 to vector<1x32xf32>
    %24 = arith.divf %22, %23 : vector<1x32xf32>
    %25 = vector.broadcast %17 : vector<1x32xf32> to vector<79x32xf32>
    %26 = arith.subf %13, %25 : vector<79x32xf32>
    %cst_13 = arith.constant 9.99999974E-6 : f32
    %27 = vector.broadcast %cst_13 : f32 to vector<1x32xf32>
    %28 = arith.addf %24, %27 : vector<1x32xf32>
    %29 = math.rsqrt %28 : vector<1x32xf32>
    %30 = vector.broadcast %29 : vector<1x32xf32> to vector<79x32xf32>
    %31 = arith.mulf %26, %30 : vector<79x32xf32>
    %c0_14 = arith.constant 0 : index
    %c0_15 = arith.constant 0 : index
    %c0_16 = arith.constant 0 : index
    %32 = vector.load %arg4[%c0_14, %c0_15, %c0_16] : memref<2x1x32xf32, #tpu.memory_space<vmem>>, vector<1x1x32xf32>
    %33 = vector.shape_cast %32 : vector<1x1x32xf32> to vector<1x32xf32>
    %34 = vector.broadcast %33 : vector<1x32xf32> to vector<79x32xf32>
    %35 = arith.mulf %31, %34 : vector<79x32xf32>
    %c1 = arith.constant 1 : index
    %c0_17 = arith.constant 0 : index
    %c0_18 = arith.constant 0 : index
    %36 = vector.load %arg4[%c1, %c0_17, %c0_18] : memref<2x1x32xf32, #tpu.memory_space<vmem>>, vector<1x1x32xf32>
    %37 = vector.shape_cast %36 : vector<1x1x32xf32> to vector<1x32xf32>
    %38 = vector.broadcast %37 : vector<1x32xf32> to vector<79x32xf32>
    %39 = arith.addf %35, %38 : vector<79x32xf32>
    %40 = arith.mulf %39, %39 : vector<79x32xf32>
    %41 = arith.mulf %39, %40 : vector<79x32xf32>
    %cst_19 = arith.constant 4.471500e-02 : f32
    %42 = vector.broadcast %cst_19 : f32 to vector<79x32xf32>
    %43 = arith.mulf %42, %41 : vector<79x32xf32>
    %44 = arith.addf %39, %43 : vector<79x32xf32>
    %cst_20 = arith.constant 0.797884583 : f32
    %45 = vector.broadcast %cst_20 : f32 to vector<79x32xf32>
    %46 = arith.mulf %45, %44 : vector<79x32xf32>
    %47 = math.tanh %46 : vector<79x32xf32>
    %cst_21 = arith.constant 1.000000e+00 : f32
    %48 = vector.broadcast %cst_21 : f32 to vector<79x32xf32>
    %49 = arith.addf %48, %47 : vector<79x32xf32>
    %cst_22 = arith.constant 5.000000e-01 : f32
    %50 = vector.broadcast %cst_22 : f32 to vector<79x32xf32>
    %51 = arith.mulf %50, %49 : vector<79x32xf32>
    %52 = arith.mulf %39, %51 : vector<79x32xf32>
    %c0_23 = arith.constant 0 : index
    %c0_24 = arith.constant 0 : index
    %53 = vector.load %arg26[%c0_23, %c0_24] : memref<79x32xf32, #tpu.memory_space<vmem>>, vector<79x32xf32>
    tpu.vector_store %arg26[%c0_23, %c0_24], %52 {strides = array<i32>} : memref<79x32xf32, #tpu.memory_space<vmem>>, vector<79x32xf32>,
    %cst_25 = arith.constant 0.000000e+00 : f32
    %54 = vector.broadcast %cst_25 : f32 to vector<39x32xf32>
    %c0_26 = arith.constant 0 : index
    %c0_27 = arith.constant 0 : index
    %55 = tpu.strided_load %arg26[%c0_26, %c0_27] {strides = array<i32: 2, 1>} : memref<79x32xf32, #tpu.memory_space<vmem>>, vector<39x32xf32>
    %c0_28 = arith.constant 0 : index
    %c0_29 = arith.constant 0 : index
    %c0_30 = arith.constant 0 : index
    %56 = vector.load %arg5[%c0_28, %c0_29, %c0_30] : memref<3x32x32xf32, #tpu.memory_space<vmem>>, vector<1x32x32xf32>
    %57 = vector.shape_cast %56 : vector<1x32x32xf32> to vector<32x32xf32>
    %cst_31 = arith.constant dense<0.000000e+00> : vector<39x32xf32>
    %58 = tpu.matmul %55, %57, %cst_31 {dimension_numbers = #tpu.dot_dimension_numbers<[1], [0], [0], [1], [0, 0, 1, 1], [], []>} : vector<39x32xf32>, vector<32x32xf32>, vector<39x32xf32> -> vector<39x32xf32>
    %59 = arith.addf %54, %58 : vector<39x32xf32>
    %c1_32 = arith.constant 1 : index
    %c0_33 = arith.constant 0 : index
    %60 = tpu.strided_load %arg26[%c1_32, %c0_33] {strides = array<i32: 2, 1>} : memref<79x32xf32, #tpu.memory_space<vmem>>, vector<39x32xf32>
    %c1_34 = arith.constant 1 : index
    %c0_35 = arith.constant 0 : index
    %c0_36 = arith.constant 0 : index
    %61 = vector.load %arg5[%c1_34, %c0_35, %c0_36] : memref<3x32x32xf32, #tpu.memory_space<vmem>>, vector<1x32x32xf32>
    %62 = vector.shape_cast %61 : vector<1x32x32xf32> to vector<32x32xf32>
    %cst_37 = arith.constant dense<0.000000e+00> : vector<39x32xf32>
    %63 = tpu.matmul %60, %62, %cst_37 {dimension_numbers = #tpu.dot_dimension_numbers<[1], [0], [0], [1], [0, 0, 1, 1], [], []>} : vector<39x32xf32>, vector<32x32xf32>, vector<39x32xf32> -> vector<39x32xf32>
    %64 = arith.addf %59, %63 : vector<39x32xf32>
    %c2 = arith.constant 2 : index
    %c0_38 = arith.constant 0 : index
    %65 = tpu.strided_load %arg26[%c2, %c0_38] {strides = array<i32: 2, 1>} : memref<79x32xf32, #tpu.memory_space<vmem>>, vector<39x32xf32>
    %c2_39 = arith.constant 2 : index
    %c0_40 = arith.constant 0 : index
    %c0_41 = arith.constant 0 : index
    %66 = vector.load %arg5[%c2_39, %c0_40, %c0_41] : memref<3x32x32xf32, #tpu.memory_space<vmem>>, vector<1x32x32xf32>
    %67 = vector.shape_cast %66 : vector<1x32x32xf32> to vector<32x32xf32>
    %cst_42 = arith.constant dense<0.000000e+00> : vector<39x32xf32>
    %68 = tpu.matmul %65, %67, %cst_42 {dimension_numbers = #tpu.dot_dimension_numbers<[1], [0], [0], [1], [0, 0, 1, 1], [], []>} : vector<39x32xf32>, vector<32x32xf32>, vector<39x32xf32> -> vector<39x32xf32>
    %69 = arith.addf %64, %68 : vector<39x32xf32>
    %c0_43 = arith.constant 0 : index
    %c0_44 = arith.constant 0 : index
    %70 = vector.load %arg6[%c0_43, %c0_44] : memref<1x32xf32, #tpu.memory_space<vmem>>, vector<1x32xf32>
    %71 = vector.broadcast %70 : vector<1x32xf32> to vector<39x32xf32>
    %72 = arith.addf %69, %71 : vector<39x32xf32>
    %73 = arith.mulf %72, %72 : vector<39x32xf32>
    %74 = arith.mulf %72, %73 : vector<39x32xf32>
    %cst_45 = arith.constant 4.471500e-02 : f32
    %75 = vector.broadcast %cst_45 : f32 to vector<39x32xf32>
    %76 = arith.mulf %75, %74 : vector<39x32xf32>
    %77 = arith.addf %72, %76 : vector<39x32xf32>
    %cst_46 = arith.constant 0.797884583 : f32
    %78 = vector.broadcast %cst_46 : f32 to vector<39x32xf32>
    %79 = arith.mulf %78, %77 : vector<39x32xf32>
    %80 = math.tanh %79 : vector<39x32xf32>
    %cst_47 = arith.constant 1.000000e+00 : f32
    %81 = vector.broadcast %cst_47 : f32 to vector<39x32xf32>
    %82 = arith.addf %81, %80 : vector<39x32xf32>
    %cst_48 = arith.constant 5.000000e-01 : f32
    %83 = vector.broadcast %cst_48 : f32 to vector<39x32xf32>
    %84 = arith.mulf %83, %82 : vector<39x32xf32>
    %85 = arith.mulf %72, %84 : vector<39x32xf32>
    %c0_49 = arith.constant 0 : index
    %c0_50 = arith.constant 0 : index
    %86 = vector.load %arg27[%c0_49, %c0_50] : memref<39x32xf32, #tpu.memory_space<vmem>>, vector<39x32xf32>
    tpu.vector_store %arg27[%c0_49, %c0_50], %85 {strides = array<i32>} : memref<39x32xf32, #tpu.memory_space<vmem>>, vector<39x32xf32>,
    %cst_51 = arith.constant 0.000000e+00 : f32
    %87 = vector.broadcast %cst_51 : f32 to vector<19x32xf32>
    %c0_52 = arith.constant 0 : index
    %c0_53 = arith.constant 0 : index
    %88 = tpu.strided_load %arg27[%c0_52, %c0_53] {strides = array<i32: 2, 1>} : memref<39x32xf32, #tpu.memory_space<vmem>>, vector<19x32xf32>
    %c0_54 = arith.constant 0 : index
    %c0_55 = arith.constant 0 : index
    %c0_56 = arith.constant 0 : index
    %89 = vector.load %arg7[%c0_54, %c0_55, %c0_56] : memref<2x32x32xf32, #tpu.memory_space<vmem>>, vector<1x32x32xf32>
    %90 = vector.shape_cast %89 : vector<1x32x32xf32> to vector<32x32xf32>
    %cst_57 = arith.constant dense<0.000000e+00> : vector<19x32xf32>
    %91 = tpu.matmul %88, %90, %cst_57 {dimension_numbers = #tpu.dot_dimension_numbers<[1], [0], [0], [1], [0, 0, 1, 1], [], []>} : vector<19x32xf32>, vector<32x32xf32>, vector<19x32xf32> -> vector<19x32xf32>
    %92 = arith.addf %87, %91 : vector<19x32xf32>
    %c1_58 = arith.constant 1 : index
    %c0_59 = arith.constant 0 : index
    %93 = tpu.strided_load %arg27[%c1_58, %c0_59] {strides = array<i32: 2, 1>} : memref<39x32xf32, #tpu.memory_space<vmem>>, vector<19x32xf32>
    %c1_60 = arith.constant 1 : index
    %c0_61 = arith.constant 0 : index
    %c0_62 = arith.constant 0 : index
    %94 = vector.load %arg7[%c1_60, %c0_61, %c0_62] : memref<2x32x32xf32, #tpu.memory_space<vmem>>, vector<1x32x32xf32>
    %95 = vector.shape_cast %94 : vector<1x32x32xf32> to vector<32x32xf32>
    %cst_63 = arith.constant dense<0.000000e+00> : vector<19x32xf32>
    %96 = tpu.matmul %93, %95, %cst_63 {dimension_numbers = #tpu.dot_dimension_numbers<[1], [0], [0], [1], [0, 0, 1, 1], [], []>} : vector<19x32xf32>, vector<32x32xf32>, vector<19x32xf32> -> vector<19x32xf32>
    %97 = arith.addf %92, %96 : vector<19x32xf32>
    %c0_64 = arith.constant 0 : index
    %c0_65 = arith.constant 0 : index
    %98 = vector.load %arg8[%c0_64, %c0_65] : memref<1x32xf32, #tpu.memory_space<vmem>>, vector<1x32xf32>
    %99 = vector.broadcast %98 : vector<1x32xf32> to vector<19x32xf32>
    %100 = arith.addf %97, %99 : vector<19x32xf32>
    %101 = arith.mulf %100, %100 : vector<19x32xf32>
    %102 = arith.mulf %100, %101 : vector<19x32xf32>
    %cst_66 = arith.constant 4.471500e-02 : f32
    %103 = vector.broadcast %cst_66 : f32 to vector<19x32xf32>
    %104 = arith.mulf %103, %102 : vector<19x32xf32>
    %105 = arith.addf %100, %104 : vector<19x32xf32>
    %cst_67 = arith.constant 0.797884583 : f32
    %106 = vector.broadcast %cst_67 : f32 to vector<19x32xf32>
    %107 = arith.mulf %106, %105 : vector<19x32xf32>
    %108 = math.tanh %107 : vector<19x32xf32>
    %cst_68 = arith.constant 1.000000e+00 : f32
    %109 = vector.broadcast %cst_68 : f32 to vector<19x32xf32>
    %110 = arith.addf %109, %108 : vector<19x32xf32>
    %cst_69 = arith.constant 5.000000e-01 : f32
    %111 = vector.broadcast %cst_69 : f32 to vector<19x32xf32>
    %112 = arith.mulf %111, %110 : vector<19x32xf32>
    %113 = arith.mulf %100, %112 : vector<19x32xf32>
    %c0_70 = arith.constant 0 : index
    %c0_71 = arith.constant 0 : index
    %c0_72 = arith.constant 0 : index
    %114 = vector.load %arg9[%c0_70, %c0_71, %c0_72] : memref<2x1x32xf32, #tpu.memory_space<vmem>>, vector<1x1x32xf32>
    %115 = vector.shape_cast %114 : vector<1x1x32xf32> to vector<1x32xf32>
    %c1_73 = arith.constant 1 : index
    %c0_74 = arith.constant 0 : index
    %c0_75 = arith.constant 0 : index
    %116 = vector.load %arg9[%c1_73, %c0_74, %c0_75] : memref<2x1x32xf32, #tpu.memory_space<vmem>>, vector<1x1x32xf32>
    %117 = vector.shape_cast %116 : vector<1x1x32xf32> to vector<1x32xf32>
    %cst_76 = arith.constant dense<0.000000e+00> : vector<19xf32>
    %118 = vector.multi_reduction <add>, %113, %cst_76 [1] : vector<19x32xf32> to vector<19xf32>
    %119 = vector.shape_cast %118 : vector<19xf32> to vector<19x1xf32>
    %cst_77 = arith.constant 3.200000e+01 : f32
    %120 = vector.broadcast %cst_77 : f32 to vector<19x1xf32>
    %121 = arith.divf %119, %120 : vector<19x1xf32>
    %122 = vector.broadcast %121 : vector<19x1xf32> to vector<19x32xf32>
    %123 = arith.subf %113, %122 : vector<19x32xf32>
    %124 = arith.mulf %123, %123 : vector<19x32xf32>
    %cst_78 = arith.constant dense<0.000000e+00> : vector<19xf32>
    %125 = vector.multi_reduction <add>, %124, %cst_78 [1] : vector<19x32xf32> to vector<19xf32>
    %126 = vector.shape_cast %125 : vector<19xf32> to vector<19x1xf32>
    %cst_79 = arith.constant 3.200000e+01 : f32
    %127 = vector.broadcast %cst_79 : f32 to vector<19x1xf32>
    %128 = arith.divf %126, %127 : vector<19x1xf32>
    %129 = vector.broadcast %121 : vector<19x1xf32> to vector<19x32xf32>
    %130 = arith.subf %113, %129 : vector<19x32xf32>
    %cst_80 = arith.constant 9.99999974E-6 : f32
    %131 = vector.broadcast %cst_80 : f32 to vector<19x1xf32>
    %132 = arith.addf %128, %131 : vector<19x1xf32>
    %133 = math.rsqrt %132 : vector<19x1xf32>
    %134 = vector.broadcast %133 : vector<19x1xf32> to vector<19x32xf32>
    %135 = arith.mulf %130, %134 : vector<19x32xf32>
    %136 = vector.broadcast %115 : vector<1x32xf32> to vector<19x32xf32>
    %137 = arith.mulf %135, %136 : vector<19x32xf32>
    %138 = vector.broadcast %117 : vector<1x32xf32> to vector<19x32xf32>
    %139 = arith.addf %137, %138 : vector<19x32xf32>
    %140 = arith.truncf %139 : vector<19x32xf32> to vector<19x32xbf16>
    %c0_81 = arith.constant 0 : index
    %c0_82 = arith.constant 0 : index
    %141 = vector.load %arg10[%c0_81, %c0_82] : memref<32x64xbf16, #tpu.memory_space<vmem>>, vector<32x64xbf16>
    %cst_83 = arith.constant dense<0.000000e+00> : vector<19x64xf32>
    %142 = tpu.matmul %140, %141, %cst_83 {dimension_numbers = #tpu.dot_dimension_numbers<[1], [0], [0], [1], [0, 0, 1, 1], [], []>} : vector<19x32xbf16>, vector<32x64xbf16>, vector<19x64xf32> -> vector<19x64xf32>
    %c0_84 = arith.constant 0 : index
    %c0_85 = arith.constant 0 : index
    %143 = vector.load %arg11[%c0_84, %c0_85] : memref<1x64xf32, #tpu.memory_space<vmem>>, vector<1x64xf32>
    %144 = vector.broadcast %143 : vector<1x64xf32> to vector<19x64xf32>
    %145 = arith.addf %142, %144 : vector<19x64xf32>
    %cst_86 = arith.constant 0.000000e+00 : f32
    %146 = vector.broadcast %cst_86 : f32 to vector<23x64xf32>
    %c0_87 = arith.constant 0 : index
    %c0_88 = arith.constant 0 : index
    %147 = vector.load %arg28[%c0_87, %c0_88] : memref<23x64xf32, #tpu.memory_space<vmem>>, vector<23x64xf32>
    tpu.vector_store %arg28[%c0_87, %c0_88], %146 {strides = array<i32>} : memref<23x64xf32, #tpu.memory_space<vmem>>, vector<23x64xf32>,
    %c2_89 = arith.constant 2 : index
    %c0_90 = arith.constant 0 : index
    %148 = vector.load %arg28[%c2_89, %c0_90] : memref<23x64xf32, #tpu.memory_space<vmem>>, vector<19x64xf32>
    tpu.vector_store %arg28[%c2_89, %c0_90], %145 {strides = array<i32>} : memref<23x64xf32, #tpu.memory_space<vmem>>, vector<19x64xf32>,
    %cst_91 = arith.constant 0.000000e+00 : f32
    %149 = vector.broadcast %cst_91 : f32 to vector<19x64xf32>
    %c0_92 = arith.constant 0 : index
    %c0_93 = arith.constant 0 : index
    %150 = vector.load %arg28[%c0_92, %c0_93] : memref<23x64xf32, #tpu.memory_space<vmem>>, vector<19x64xf32>
    %151 = arith.truncf %150 : vector<19x64xf32> to vector<19x64xbf16>
    %c0_94 = arith.constant 0 : index
    %c0_95 = arith.constant 0 : index
    %c0_96 = arith.constant 0 : index
    %152 = vector.load %arg12[%c0_94, %c0_95, %c0_96] : memref<5x64x64xbf16, #tpu.memory_space<vmem>>, vector<1x64x64xbf16>
    %153 = vector.shape_cast %152 : vector<1x64x64xbf16> to vector<64x64xbf16>
    %cst_97 = arith.constant dense<0.000000e+00> : vector<19x64xf32>
    %154 = tpu.matmul %151, %153, %cst_97 {dimension_numbers = #tpu.dot_dimension_numbers<[1], [0], [0], [1], [0, 0, 1, 1], [], []>} : vector<19x64xbf16>, vector<64x64xbf16>, vector<19x64xf32> -> vector<19x64xf32>
    %155 = arith.addf %149, %154 : vector<19x64xf32>
    %c1_98 = arith.constant 1 : index
    %c0_99 = arith.constant 0 : index
    %156 = vector.load %arg28[%c1_98, %c0_99] : memref<23x64xf32, #tpu.memory_space<vmem>>, vector<19x64xf32>
    %157 = arith.truncf %156 : vector<19x64xf32> to vector<19x64xbf16>
    %c1_100 = arith.constant 1 : index
    %c0_101 = arith.constant 0 : index
    %c0_102 = arith.constant 0 : index
    %158 = vector.load %arg12[%c1_100, %c0_101, %c0_102] : memref<5x64x64xbf16, #tpu.memory_space<vmem>>, vector<1x64x64xbf16>
    %159 = vector.shape_cast %158 : vector<1x64x64xbf16> to vector<64x64xbf16>
    %cst_103 = arith.constant dense<0.000000e+00> : vector<19x64xf32>
    %160 = tpu.matmul %157, %159, %cst_103 {dimension_numbers = #tpu.dot_dimension_numbers<[1], [0], [0], [1], [0, 0, 1, 1], [], []>} : vector<19x64xbf16>, vector<64x64xbf16>, vector<19x64xf32> -> vector<19x64xf32>
    %161 = arith.addf %155, %160 : vector<19x64xf32>
    %c2_104 = arith.constant 2 : index
    %c0_105 = arith.constant 0 : index
    %162 = vector.load %arg28[%c2_104, %c0_105] : memref<23x64xf32, #tpu.memory_space<vmem>>, vector<19x64xf32>
    %163 = arith.truncf %162 : vector<19x64xf32> to vector<19x64xbf16>
    %c2_106 = arith.constant 2 : index
    %c0_107 = arith.constant 0 : index
    %c0_108 = arith.constant 0 : index
    %164 = vector.load %arg12[%c2_106, %c0_107, %c0_108] : memref<5x64x64xbf16, #tpu.memory_space<vmem>>, vector<1x64x64xbf16>
    %165 = vector.shape_cast %164 : vector<1x64x64xbf16> to vector<64x64xbf16>
    %cst_109 = arith.constant dense<0.000000e+00> : vector<19x64xf32>
    %166 = tpu.matmul %163, %165, %cst_109 {dimension_numbers = #tpu.dot_dimension_numbers<[1], [0], [0], [1], [0, 0, 1, 1], [], []>} : vector<19x64xbf16>, vector<64x64xbf16>, vector<19x64xf32> -> vector<19x64xf32>
    %167 = arith.addf %161, %166 : vector<19x64xf32>
    %c3 = arith.constant 3 : index
    %c0_110 = arith.constant 0 : index
    %168 = vector.load %arg28[%c3, %c0_110] : memref<23x64xf32, #tpu.memory_space<vmem>>, vector<19x64xf32>
    %169 = arith.truncf %168 : vector<19x64xf32> to vector<19x64xbf16>
    %c3_111 = arith.constant 3 : index
    %c0_112 = arith.constant 0 : index
    %c0_113 = arith.constant 0 : index
    %170 = vector.load %arg12[%c3_111, %c0_112, %c0_113] : memref<5x64x64xbf16, #tpu.memory_space<vmem>>, vector<1x64x64xbf16>
    %171 = vector.shape_cast %170 : vector<1x64x64xbf16> to vector<64x64xbf16>
    %cst_114 = arith.constant dense<0.000000e+00> : vector<19x64xf32>
    %172 = tpu.matmul %169, %171, %cst_114 {dimension_numbers = #tpu.dot_dimension_numbers<[1], [0], [0], [1], [0, 0, 1, 1], [], []>} : vector<19x64xbf16>, vector<64x64xbf16>, vector<19x64xf32> -> vector<19x64xf32>
    %173 = arith.addf %167, %172 : vector<19x64xf32>
    %c4 = arith.constant 4 : index
    %c0_115 = arith.constant 0 : index
    %174 = vector.load %arg28[%c4, %c0_115] : memref<23x64xf32, #tpu.memory_space<vmem>>, vector<19x64xf32>
    %175 = arith.truncf %174 : vector<19x64xf32> to vector<19x64xbf16>
    %c4_116 = arith.constant 4 : index
    %c0_117 = arith.constant 0 : index
    %c0_118 = arith.constant 0 : index
    %176 = vector.load %arg12[%c4_116, %c0_117, %c0_118] : memref<5x64x64xbf16, #tpu.memory_space<vmem>>, vector<1x64x64xbf16>
    %177 = vector.shape_cast %176 : vector<1x64x64xbf16> to vector<64x64xbf16>
    %cst_119 = arith.constant dense<0.000000e+00> : vector<19x64xf32>
    %178 = tpu.matmul %175, %177, %cst_119 {dimension_numbers = #tpu.dot_dimension_numbers<[1], [0], [0], [1], [0, 0, 1, 1], [], []>} : vector<19x64xbf16>, vector<64x64xbf16>, vector<19x64xf32> -> vector<19x64xf32>
    %179 = arith.addf %173, %178 : vector<19x64xf32>
    %c0_120 = arith.constant 0 : index
    %c0_121 = arith.constant 0 : index
    %180 = vector.load %arg13[%c0_120, %c0_121] : memref<1x64xf32, #tpu.memory_space<vmem>>, vector<1x64xf32>
    %181 = vector.broadcast %180 : vector<1x64xf32> to vector<19x64xf32>
    %182 = arith.addf %179, %181 : vector<19x64xf32>
    %183 = arith.mulf %182, %182 : vector<19x64xf32>
    %184 = arith.mulf %182, %183 : vector<19x64xf32>
    %cst_122 = arith.constant 4.471500e-02 : f32
    %185 = vector.broadcast %cst_122 : f32 to vector<19x64xf32>
    %186 = arith.mulf %185, %184 : vector<19x64xf32>
    %187 = arith.addf %182, %186 : vector<19x64xf32>
    %cst_123 = arith.constant 0.797884583 : f32
    %188 = vector.broadcast %cst_123 : f32 to vector<19x64xf32>
    %189 = arith.mulf %188, %187 : vector<19x64xf32>
    %190 = math.tanh %189 : vector<19x64xf32>
    %cst_124 = arith.constant 1.000000e+00 : f32
    %191 = vector.broadcast %cst_124 : f32 to vector<19x64xf32>
    %192 = arith.addf %191, %190 : vector<19x64xf32>
    %cst_125 = arith.constant 5.000000e-01 : f32
    %193 = vector.broadcast %cst_125 : f32 to vector<19x64xf32>
    %194 = arith.mulf %193, %192 : vector<19x64xf32>
    %195 = arith.mulf %182, %194 : vector<19x64xf32>
    %196 = arith.addf %145, %195 : vector<19x64xf32>
    %c0_126 = arith.constant 0 : index
    %c0_127 = arith.constant 0 : index
    %c0_128 = arith.constant 0 : index
    %197 = vector.load %arg14[%c0_126, %c0_127, %c0_128] : memref<2x1x64xf32, #tpu.memory_space<vmem>>, vector<1x1x64xf32>
    %198 = vector.shape_cast %197 : vector<1x1x64xf32> to vector<1x64xf32>
    %c1_129 = arith.constant 1 : index
    %c0_130 = arith.constant 0 : index
    %c0_131 = arith.constant 0 : index
    %199 = vector.load %arg14[%c1_129, %c0_130, %c0_131] : memref<2x1x64xf32, #tpu.memory_space<vmem>>, vector<1x1x64xf32>
    %200 = vector.shape_cast %199 : vector<1x1x64xf32> to vector<1x64xf32>
    %cst_132 = arith.constant dense<0.000000e+00> : vector<19xf32>
    %201 = vector.multi_reduction <add>, %196, %cst_132 [1] : vector<19x64xf32> to vector<19xf32>
    %202 = vector.shape_cast %201 : vector<19xf32> to vector<19x1xf32>
    %cst_133 = arith.constant 6.400000e+01 : f32
    %203 = vector.broadcast %cst_133 : f32 to vector<19x1xf32>
    %204 = arith.divf %202, %203 : vector<19x1xf32>
    %205 = vector.broadcast %204 : vector<19x1xf32> to vector<19x64xf32>
    %206 = arith.subf %196, %205 : vector<19x64xf32>
    %207 = arith.mulf %206, %206 : vector<19x64xf32>
    %cst_134 = arith.constant dense<0.000000e+00> : vector<19xf32>
    %208 = vector.multi_reduction <add>, %207, %cst_134 [1] : vector<19x64xf32> to vector<19xf32>
    %209 = vector.shape_cast %208 : vector<19xf32> to vector<19x1xf32>
    %cst_135 = arith.constant 6.400000e+01 : f32
    %210 = vector.broadcast %cst_135 : f32 to vector<19x1xf32>
    %211 = arith.divf %209, %210 : vector<19x1xf32>
    %212 = vector.broadcast %204 : vector<19x1xf32> to vector<19x64xf32>
    %213 = arith.subf %196, %212 : vector<19x64xf32>
    %cst_136 = arith.constant 9.99999974E-6 : f32
    %214 = vector.broadcast %cst_136 : f32 to vector<19x1xf32>
    %215 = arith.addf %211, %214 : vector<19x1xf32>
    %216 = math.rsqrt %215 : vector<19x1xf32>
    %217 = vector.broadcast %216 : vector<19x1xf32> to vector<19x64xf32>
    %218 = arith.mulf %213, %217 : vector<19x64xf32>
    %219 = vector.broadcast %198 : vector<1x64xf32> to vector<19x64xf32>
    %220 = arith.mulf %218, %219 : vector<19x64xf32>
    %221 = vector.broadcast %200 : vector<1x64xf32> to vector<19x64xf32>
    %222 = arith.addf %220, %221 : vector<19x64xf32>
    %223 = arith.truncf %222 : vector<19x64xf32> to vector<19x64xbf16>
    %cst_137 = arith.constant 0.000000e+00 : f32
    %224 = vector.broadcast %cst_137 : f32 to vector<19x64xf32>
    %c0_138 = arith.constant 0 : index
    %c0_139 = arith.constant 0 : index
    %c0_140 = arith.constant 0 : index
    %c0_141 = arith.constant 0 : index
    %c0_142 = arith.constant 0 : index
    %225 = vector.load %arg15[%c0_138, %c0_139, %c0_140, %c0_141, %c0_142] : memref<2x3x4x64x16xbf16, #tpu.memory_space<vmem>>, vector<1x1x1x64x16xbf16>
    %226 = vector.shape_cast %225 : vector<1x1x1x64x16xbf16> to vector<64x16xbf16>
    %cst_143 = arith.constant dense<0.000000e+00> : vector<19x16xf32>
    %227 = tpu.matmul %223, %226, %cst_143 {dimension_numbers = #tpu.dot_dimension_numbers<[1], [0], [0], [1], [0, 0, 1, 1], [], []>} : vector<19x64xbf16>, vector<64x16xbf16>, vector<19x16xf32> -> vector<19x16xf32>
    %c0_144 = arith.constant 0 : index
    %c0_145 = arith.constant 0 : index
    %c0_146 = arith.constant 0 : index
    %c0_147 = arith.constant 0 : index
    %c0_148 = arith.constant 0 : index
    %228 = vector.load %arg16[%c0_144, %c0_145, %c0_146, %c0_147, %c0_148] : memref<2x3x4x1x16xf32, #tpu.memory_space<vmem>>, vector<1x1x1x1x16xf32>
    %229 = vector.shape_cast %228 : vector<1x1x1x1x16xf32> to vector<1x16xf32>
    %230 = vector.broadcast %229 : vector<1x16xf32> to vector<19x16xf32>
    %231 = arith.addf %227, %230 : vector<19x16xf32>
    %c0_149 = arith.constant 0 : index
    %c1_150 = arith.constant 1 : index
    %c0_151 = arith.constant 0 : index
    %c0_152 = arith.constant 0 : index
    %c0_153 = arith.constant 0 : index
    %232 = vector.load %arg15[%c0_149, %c1_150, %c0_151, %c0_152, %c0_153] : memref<2x3x4x64x16xbf16, #tpu.memory_space<vmem>>, vector<1x1x1x64x16xbf16>
    %233 = vector.shape_cast %232 : vector<1x1x1x64x16xbf16> to vector<64x16xbf16>
    %cst_154 = arith.constant dense<0.000000e+00> : vector<19x16xf32>
    %234 = tpu.matmul %223, %233, %cst_154 {dimension_numbers = #tpu.dot_dimension_numbers<[1], [0], [0], [1], [0, 0, 1, 1], [], []>} : vector<19x64xbf16>, vector<64x16xbf16>, vector<19x16xf32> -> vector<19x16xf32>
    %c0_155 = arith.constant 0 : index
    %c1_156 = arith.constant 1 : index
    %c0_157 = arith.constant 0 : index
    %c0_158 = arith.constant 0 : index
    %c0_159 = arith.constant 0 : index
    %235 = vector.load %arg16[%c0_155, %c1_156, %c0_157, %c0_158, %c0_159] : memref<2x3x4x1x16xf32, #tpu.memory_space<vmem>>, vector<1x1x1x1x16xf32>
    %236 = vector.shape_cast %235 : vector<1x1x1x1x16xf32> to vector<1x16xf32>
    %237 = vector.broadcast %236 : vector<1x16xf32> to vector<19x16xf32>
    %238 = arith.addf %234, %237 : vector<19x16xf32>
    %c0_160 = arith.constant 0 : index
    %c2_161 = arith.constant 2 : index
    %c0_162 = arith.constant 0 : index
    %c0_163 = arith.constant 0 : index
    %c0_164 = arith.constant 0 : index
    %239 = vector.load %arg15[%c0_160, %c2_161, %c0_162, %c0_163, %c0_164] : memref<2x3x4x64x16xbf16, #tpu.memory_space<vmem>>, vector<1x1x1x64x16xbf16>
    %240 = vector.shape_cast %239 : vector<1x1x1x64x16xbf16> to vector<64x16xbf16>
    %cst_165 = arith.constant dense<0.000000e+00> : vector<19x16xf32>
    %241 = tpu.matmul %223, %240, %cst_165 {dimension_numbers = #tpu.dot_dimension_numbers<[1], [0], [0], [1], [0, 0, 1, 1], [], []>} : vector<19x64xbf16>, vector<64x16xbf16>, vector<19x16xf32> -> vector<19x16xf32>
    %c0_166 = arith.constant 0 : index
    %c2_167 = arith.constant 2 : index
    %c0_168 = arith.constant 0 : index
    %c0_169 = arith.constant 0 : index
    %c0_170 = arith.constant 0 : index
    %242 = vector.load %arg16[%c0_166, %c2_167, %c0_168, %c0_169, %c0_170] : memref<2x3x4x1x16xf32, #tpu.memory_space<vmem>>, vector<1x1x1x1x16xf32>
    %243 = vector.shape_cast %242 : vector<1x1x1x1x16xf32> to vector<1x16xf32>
    %244 = vector.broadcast %243 : vector<1x16xf32> to vector<19x16xf32>
    %245 = arith.addf %241, %244 : vector<19x16xf32>
    %246 = arith.truncf %231 : vector<19x16xf32> to vector<19x16xbf16>
    %247 = arith.truncf %238 : vector<19x16xf32> to vector<19x16xbf16>
    %cst_171 = arith.constant dense<0.000000e+00> : vector<19x19xf32>
    %248 = tpu.matmul %246, %247, %cst_171 {dimension_numbers = #tpu.dot_dimension_numbers<[1], [1], [0], [0], [0, 0, 1, 0], [], []>} : vector<19x16xbf16>, vector<19x16xbf16>, vector<19x19xf32> -> vector<19x19xf32>
    %cst_172 = arith.constant dense<0xFF800000> : vector<19xf32>
    %249 = vector.multi_reduction <maximumf>, %248, %cst_172 [1] : vector<19x19xf32> to vector<19xf32>
    %250 = vector.shape_cast %249 : vector<19xf32> to vector<19x1xf32>
    %251 = vector.broadcast %250 : vector<19x1xf32> to vector<19x19xf32>
    %252 = arith.subf %248, %251 : vector<19x19xf32>
    %253 = math.exp %252 : vector<19x19xf32>
    %cst_173 = arith.constant dense<0.000000e+00> : vector<19xf32>
    %254 = vector.multi_reduction <add>, %253, %cst_173 [1] : vector<19x19xf32> to vector<19xf32>
    %255 = vector.shape_cast %254 : vector<19xf32> to vector<19x1xf32>
    %256 = tpu.reciprocal %255 {approx = true} : vector<19x1xf32> -> vector<19x1xf32>
    %257 = vector.broadcast %256 : vector<19x1xf32> to vector<19x19xf32>
    %258 = arith.mulf %253, %257 : vector<19x19xf32>
    %259 = arith.truncf %258 : vector<19x19xf32> to vector<19x19xbf16>
    %260 = arith.truncf %245 : vector<19x16xf32> to vector<19x16xbf16>
    %cst_174 = arith.constant dense<0.000000e+00> : vector<19x16xf32>
    %261 = tpu.matmul %259, %260, %cst_174 {dimension_numbers = #tpu.dot_dimension_numbers<[1], [0], [0], [1], [0, 0, 1, 1], [], []>} : vector<19x19xbf16>, vector<19x16xbf16>, vector<19x16xf32> -> vector<19x16xf32>
    %262 = arith.truncf %261 : vector<19x16xf32> to vector<19x16xbf16>
    %c0_175 = arith.constant 0 : index
    %c0_176 = arith.constant 0 : index
    %c0_177 = arith.constant 0 : index
    %c0_178 = arith.constant 0 : index
    %263 = vector.load %arg17[%c0_175, %c0_176, %c0_177, %c0_178] : memref<2x4x16x64xbf16, #tpu.memory_space<vmem>>, vector<1x1x16x64xbf16>
    %264 = vector.shape_cast %263 : vector<1x1x16x64xbf16> to vector<16x64xbf16>
    %cst_179 = arith.constant dense<0.000000e+00> : vector<19x64xf32>
    %265 = tpu.matmul %262, %264, %cst_179 {dimension_numbers = #tpu.dot_dimension_numbers<[1], [0], [0], [1], [0, 0, 1, 1], [], []>} : vector<19x16xbf16>, vector<16x64xbf16>, vector<19x64xf32> -> vector<19x64xf32>
    %266 = arith.addf %224, %265 : vector<19x64xf32>
    %c0_180 = arith.constant 0 : index
    %c0_181 = arith.constant 0 : index
    %c1_182 = arith.constant 1 : index
    %c0_183 = arith.constant 0 : index
    %c0_184 = arith.constant 0 : index
    %267 = vector.load %arg15[%c0_180, %c0_181, %c1_182, %c0_183, %c0_184] : memref<2x3x4x64x16xbf16, #tpu.memory_space<vmem>>, vector<1x1x1x64x16xbf16>
    %268 = vector.shape_cast %267 : vector<1x1x1x64x16xbf16> to vector<64x16xbf16>
    %cst_185 = arith.constant dense<0.000000e+00> : vector<19x16xf32>
    %269 = tpu.matmul %223, %268, %cst_185 {dimension_numbers = #tpu.dot_dimension_numbers<[1], [0], [0], [1], [0, 0, 1, 1], [], []>} : vector<19x64xbf16>, vector<64x16xbf16>, vector<19x16xf32> -> vector<19x16xf32>
    %c0_186 = arith.constant 0 : index
    %c0_187 = arith.constant 0 : index
    %c1_188 = arith.constant 1 : index
    %c0_189 = arith.constant 0 : index
    %c0_190 = arith.constant 0 : index
    %270 = vector.load %arg16[%c0_186, %c0_187, %c1_188, %c0_189, %c0_190] : memref<2x3x4x1x16xf32, #tpu.memory_space<vmem>>, vector<1x1x1x1x16xf32>
    %271 = vector.shape_cast %270 : vector<1x1x1x1x16xf32> to vector<1x16xf32>
    %272 = vector.broadcast %271 : vector<1x16xf32> to vector<19x16xf32>
    %273 = arith.addf %269, %272 : vector<19x16xf32>
    %c0_191 = arith.constant 0 : index
    %c1_192 = arith.constant 1 : index
    %c1_193 = arith.constant 1 : index
    %c0_194 = arith.constant 0 : index
    %c0_195 = arith.constant 0 : index
    %274 = vector.load %arg15[%c0_191, %c1_192, %c1_193, %c0_194, %c0_195] : memref<2x3x4x64x16xbf16, #tpu.memory_space<vmem>>, vector<1x1x1x64x16xbf16>
    %275 = vector.shape_cast %274 : vector<1x1x1x64x16xbf16> to vector<64x16xbf16>
    %cst_196 = arith.constant dense<0.000000e+00> : vector<19x16xf32>
    %276 = tpu.matmul %223, %275, %cst_196 {dimension_numbers = #tpu.dot_dimension_numbers<[1], [0], [0], [1], [0, 0, 1, 1], [], []>} : vector<19x64xbf16>, vector<64x16xbf16>, vector<19x16xf32> -> vector<19x16xf32>
    %c0_197 = arith.constant 0 : index
    %c1_198 = arith.constant 1 : index
    %c1_199 = arith.constant 1 : index
    %c0_200 = arith.constant 0 : index
    %c0_201 = arith.constant 0 : index
    %277 = vector.load %arg16[%c0_197, %c1_198, %c1_199, %c0_200, %c0_201] : memref<2x3x4x1x16xf32, #tpu.memory_space<vmem>>, vector<1x1x1x1x16xf32>
    %278 = vector.shape_cast %277 : vector<1x1x1x1x16xf32> to vector<1x16xf32>
    %279 = vector.broadcast %278 : vector<1x16xf32> to vector<19x16xf32>
    %280 = arith.addf %276, %279 : vector<19x16xf32>
    %c0_202 = arith.constant 0 : index
    %c2_203 = arith.constant 2 : index
    %c1_204 = arith.constant 1 : index
    %c0_205 = arith.constant 0 : index
    %c0_206 = arith.constant 0 : index
    %281 = vector.load %arg15[%c0_202, %c2_203, %c1_204, %c0_205, %c0_206] : memref<2x3x4x64x16xbf16, #tpu.memory_space<vmem>>, vector<1x1x1x64x16xbf16>
    %282 = vector.shape_cast %281 : vector<1x1x1x64x16xbf16> to vector<64x16xbf16>
    %cst_207 = arith.constant dense<0.000000e+00> : vector<19x16xf32>
    %283 = tpu.matmul %223, %282, %cst_207 {dimension_numbers = #tpu.dot_dimension_numbers<[1], [0], [0], [1], [0, 0, 1, 1], [], []>} : vector<19x64xbf16>, vector<64x16xbf16>, vector<19x16xf32> -> vector<19x16xf32>
    %c0_208 = arith.constant 0 : index
    %c2_209 = arith.constant 2 : index
    %c1_210 = arith.constant 1 : index
    %c0_211 = arith.constant 0 : index
    %c0_212 = arith.constant 0 : index
    %284 = vector.load %arg16[%c0_208, %c2_209, %c1_210, %c0_211, %c0_212] : memref<2x3x4x1x16xf32, #tpu.memory_space<vmem>>, vector<1x1x1x1x16xf32>
    %285 = vector.shape_cast %284 : vector<1x1x1x1x16xf32> to vector<1x16xf32>
    %286 = vector.broadcast %285 : vector<1x16xf32> to vector<19x16xf32>
    %287 = arith.addf %283, %286 : vector<19x16xf32>
    %288 = arith.truncf %273 : vector<19x16xf32> to vector<19x16xbf16>
    %289 = arith.truncf %280 : vector<19x16xf32> to vector<19x16xbf16>
    %cst_213 = arith.constant dense<0.000000e+00> : vector<19x19xf32>
    %290 = tpu.matmul %288, %289, %cst_213 {dimension_numbers = #tpu.dot_dimension_numbers<[1], [1], [0], [0], [0, 0, 1, 0], [], []>} : vector<19x16xbf16>, vector<19x16xbf16>, vector<19x19xf32> -> vector<19x19xf32>
    %cst_214 = arith.constant dense<0xFF800000> : vector<19xf32>
    %291 = vector.multi_reduction <maximumf>, %290, %cst_214 [1] : vector<19x19xf32> to vector<19xf32>
    %292 = vector.shape_cast %291 : vector<19xf32> to vector<19x1xf32>
    %293 = vector.broadcast %292 : vector<19x1xf32> to vector<19x19xf32>
    %294 = arith.subf %290, %293 : vector<19x19xf32>
    %295 = math.exp %294 : vector<19x19xf32>
    %cst_215 = arith.constant dense<0.000000e+00> : vector<19xf32>
    %296 = vector.multi_reduction <add>, %295, %cst_215 [1] : vector<19x19xf32> to vector<19xf32>
    %297 = vector.shape_cast %296 : vector<19xf32> to vector<19x1xf32>
    %298 = tpu.reciprocal %297 {approx = true} : vector<19x1xf32> -> vector<19x1xf32>
    %299 = vector.broadcast %298 : vector<19x1xf32> to vector<19x19xf32>
    %300 = arith.mulf %295, %299 : vector<19x19xf32>
    %301 = arith.truncf %300 : vector<19x19xf32> to vector<19x19xbf16>
    %302 = arith.truncf %287 : vector<19x16xf32> to vector<19x16xbf16>
    %cst_216 = arith.constant dense<0.000000e+00> : vector<19x16xf32>
    %303 = tpu.matmul %301, %302, %cst_216 {dimension_numbers = #tpu.dot_dimension_numbers<[1], [0], [0], [1], [0, 0, 1, 1], [], []>} : vector<19x19xbf16>, vector<19x16xbf16>, vector<19x16xf32> -> vector<19x16xf32>
    %304 = arith.truncf %303 : vector<19x16xf32> to vector<19x16xbf16>
    %c0_217 = arith.constant 0 : index
    %c1_218 = arith.constant 1 : index
    %c0_219 = arith.constant 0 : index
    %c0_220 = arith.constant 0 : index
    %305 = vector.load %arg17[%c0_217, %c1_218, %c0_219, %c0_220] : memref<2x4x16x64xbf16, #tpu.memory_space<vmem>>, vector<1x1x16x64xbf16>
    %306 = vector.shape_cast %305 : vector<1x1x16x64xbf16> to vector<16x64xbf16>
    %cst_221 = arith.constant dense<0.000000e+00> : vector<19x64xf32>
    %307 = tpu.matmul %304, %306, %cst_221 {dimension_numbers = #tpu.dot_dimension_numbers<[1], [0], [0], [1], [0, 0, 1, 1], [], []>} : vector<19x16xbf16>, vector<16x64xbf16>, vector<19x64xf32> -> vector<19x64xf32>
    %308 = arith.addf %266, %307 : vector<19x64xf32>
    %c0_222 = arith.constant 0 : index
    %c0_223 = arith.constant 0 : index
    %c2_224 = arith.constant 2 : index
    %c0_225 = arith.constant 0 : index
    %c0_226 = arith.constant 0 : index
    %309 = vector.load %arg15[%c0_222, %c0_223, %c2_224, %c0_225, %c0_226] : memref<2x3x4x64x16xbf16, #tpu.memory_space<vmem>>, vector<1x1x1x64x16xbf16>
    %310 = vector.shape_cast %309 : vector<1x1x1x64x16xbf16> to vector<64x16xbf16>
    %cst_227 = arith.constant dense<0.000000e+00> : vector<19x16xf32>
    %311 = tpu.matmul %223, %310, %cst_227 {dimension_numbers = #tpu.dot_dimension_numbers<[1], [0], [0], [1], [0, 0, 1, 1], [], []>} : vector<19x64xbf16>, vector<64x16xbf16>, vector<19x16xf32> -> vector<19x16xf32>
    %c0_228 = arith.constant 0 : index
    %c0_229 = arith.constant 0 : index
    %c2_230 = arith.constant 2 : index
    %c0_231 = arith.constant 0 : index
    %c0_232 = arith.constant 0 : index
    %312 = vector.load %arg16[%c0_228, %c0_229, %c2_230, %c0_231, %c0_232] : memref<2x3x4x1x16xf32, #tpu.memory_space<vmem>>, vector<1x1x1x1x16xf32>
    %313 = vector.shape_cast %312 : vector<1x1x1x1x16xf32> to vector<1x16xf32>
    %314 = vector.broadcast %313 : vector<1x16xf32> to vector<19x16xf32>
    %315 = arith.addf %311, %314 : vector<19x16xf32>
    %c0_233 = arith.constant 0 : index
    %c1_234 = arith.constant 1 : index
    %c2_235 = arith.constant 2 : index
    %c0_236 = arith.constant 0 : index
    %c0_237 = arith.constant 0 : index
    %316 = vector.load %arg15[%c0_233, %c1_234, %c2_235, %c0_236, %c0_237] : memref<2x3x4x64x16xbf16, #tpu.memory_space<vmem>>, vector<1x1x1x64x16xbf16>
    %317 = vector.shape_cast %316 : vector<1x1x1x64x16xbf16> to vector<64x16xbf16>
    %cst_238 = arith.constant dense<0.000000e+00> : vector<19x16xf32>
    %318 = tpu.matmul %223, %317, %cst_238 {dimension_numbers = #tpu.dot_dimension_numbers<[1], [0], [0], [1], [0, 0, 1, 1], [], []>} : vector<19x64xbf16>, vector<64x16xbf16>, vector<19x16xf32> -> vector<19x16xf32>
    %c0_239 = arith.constant 0 : index
    %c1_240 = arith.constant 1 : index
    %c2_241 = arith.constant 2 : index
    %c0_242 = arith.constant 0 : index
    %c0_243 = arith.constant 0 : index
    %319 = vector.load %arg16[%c0_239, %c1_240, %c2_241, %c0_242, %c0_243] : memref<2x3x4x1x16xf32, #tpu.memory_space<vmem>>, vector<1x1x1x1x16xf32>
    %320 = vector.shape_cast %319 : vector<1x1x1x1x16xf32> to vector<1x16xf32>
    %321 = vector.broadcast %320 : vector<1x16xf32> to vector<19x16xf32>
    %322 = arith.addf %318, %321 : vector<19x16xf32>
    %c0_244 = arith.constant 0 : index
    %c2_245 = arith.constant 2 : index
    %c2_246 = arith.constant 2 : index
    %c0_247 = arith.constant 0 : index
    %c0_248 = arith.constant 0 : index
    %323 = vector.load %arg15[%c0_244, %c2_245, %c2_246, %c0_247, %c0_248] : memref<2x3x4x64x16xbf16, #tpu.memory_space<vmem>>, vector<1x1x1x64x16xbf16>
    %324 = vector.shape_cast %323 : vector<1x1x1x64x16xbf16> to vector<64x16xbf16>
    %cst_249 = arith.constant dense<0.000000e+00> : vector<19x16xf32>
    %325 = tpu.matmul %223, %324, %cst_249 {dimension_numbers = #tpu.dot_dimension_numbers<[1], [0], [0], [1], [0, 0, 1, 1], [], []>} : vector<19x64xbf16>, vector<64x16xbf16>, vector<19x16xf32> -> vector<19x16xf32>
    %c0_250 = arith.constant 0 : index
    %c2_251 = arith.constant 2 : index
    %c2_252 = arith.constant 2 : index
    %c0_253 = arith.constant 0 : index
    %c0_254 = arith.constant 0 : index
    %326 = vector.load %arg16[%c0_250, %c2_251, %c2_252, %c0_253, %c0_254] : memref<2x3x4x1x16xf32, #tpu.memory_space<vmem>>, vector<1x1x1x1x16xf32>
    %327 = vector.shape_cast %326 : vector<1x1x1x1x16xf32> to vector<1x16xf32>
    %328 = vector.broadcast %327 : vector<1x16xf32> to vector<19x16xf32>
    %329 = arith.addf %325, %328 : vector<19x16xf32>
    %330 = arith.truncf %315 : vector<19x16xf32> to vector<19x16xbf16>
    %331 = arith.truncf %322 : vector<19x16xf32> to vector<19x16xbf16>
    %cst_255 = arith.constant dense<0.000000e+00> : vector<19x19xf32>
    %332 = tpu.matmul %330, %331, %cst_255 {dimension_numbers = #tpu.dot_dimension_numbers<[1], [1], [0], [0], [0, 0, 1, 0], [], []>} : vector<19x16xbf16>, vector<19x16xbf16>, vector<19x19xf32> -> vector<19x19xf32>
    %cst_256 = arith.constant dense<0xFF800000> : vector<19xf32>
    %333 = vector.multi_reduction <maximumf>, %332, %cst_256 [1] : vector<19x19xf32> to vector<19xf32>
    %334 = vector.shape_cast %333 : vector<19xf32> to vector<19x1xf32>
    %335 = vector.broadcast %334 : vector<19x1xf32> to vector<19x19xf32>
    %336 = arith.subf %332, %335 : vector<19x19xf32>
    %337 = math.exp %336 : vector<19x19xf32>
    %cst_257 = arith.constant dense<0.000000e+00> : vector<19xf32>
    %338 = vector.multi_reduction <add>, %337, %cst_257 [1] : vector<19x19xf32> to vector<19xf32>
    %339 = vector.shape_cast %338 : vector<19xf32> to vector<19x1xf32>
    %340 = tpu.reciprocal %339 {approx = true} : vector<19x1xf32> -> vector<19x1xf32>
    %341 = vector.broadcast %340 : vector<19x1xf32> to vector<19x19xf32>
    %342 = arith.mulf %337, %341 : vector<19x19xf32>
    %343 = arith.truncf %342 : vector<19x19xf32> to vector<19x19xbf16>
    %344 = arith.truncf %329 : vector<19x16xf32> to vector<19x16xbf16>
    %cst_258 = arith.constant dense<0.000000e+00> : vector<19x16xf32>
    %345 = tpu.matmul %343, %344, %cst_258 {dimension_numbers = #tpu.dot_dimension_numbers<[1], [0], [0], [1], [0, 0, 1, 1], [], []>} : vector<19x19xbf16>, vector<19x16xbf16>, vector<19x16xf32> -> vector<19x16xf32>
    %346 = arith.truncf %345 : vector<19x16xf32> to vector<19x16xbf16>
    %c0_259 = arith.constant 0 : index
    %c2_260 = arith.constant 2 : index
    %c0_261 = arith.constant 0 : index
    %c0_262 = arith.constant 0 : index
    %347 = vector.load %arg17[%c0_259, %c2_260, %c0_261, %c0_262] : memref<2x4x16x64xbf16, #tpu.memory_space<vmem>>, vector<1x1x16x64xbf16>
    %348 = vector.shape_cast %347 : vector<1x1x16x64xbf16> to vector<16x64xbf16>
    %cst_263 = arith.constant dense<0.000000e+00> : vector<19x64xf32>
    %349 = tpu.matmul %346, %348, %cst_263 {dimension_numbers = #tpu.dot_dimension_numbers<[1], [0], [0], [1], [0, 0, 1, 1], [], []>} : vector<19x16xbf16>, vector<16x64xbf16>, vector<19x64xf32> -> vector<19x64xf32>
    %350 = arith.addf %308, %349 : vector<19x64xf32>
    %c0_264 = arith.constant 0 : index
    %c0_265 = arith.constant 0 : index
    %c3_266 = arith.constant 3 : index
    %c0_267 = arith.constant 0 : index
    %c0_268 = arith.constant 0 : index
    %351 = vector.load %arg15[%c0_264, %c0_265, %c3_266, %c0_267, %c0_268] : memref<2x3x4x64x16xbf16, #tpu.memory_space<vmem>>, vector<1x1x1x64x16xbf16>
    %352 = vector.shape_cast %351 : vector<1x1x1x64x16xbf16> to vector<64x16xbf16>
    %cst_269 = arith.constant dense<0.000000e+00> : vector<19x16xf32>
    %353 = tpu.matmul %223, %352, %cst_269 {dimension_numbers = #tpu.dot_dimension_numbers<[1], [0], [0], [1], [0, 0, 1, 1], [], []>} : vector<19x64xbf16>, vector<64x16xbf16>, vector<19x16xf32> -> vector<19x16xf32>
    %c0_270 = arith.constant 0 : index
    %c0_271 = arith.constant 0 : index
    %c3_272 = arith.constant 3 : index
    %c0_273 = arith.constant 0 : index
    %c0_274 = arith.constant 0 : index
    %354 = vector.load %arg16[%c0_270, %c0_271, %c3_272, %c0_273, %c0_274] : memref<2x3x4x1x16xf32, #tpu.memory_space<vmem>>, vector<1x1x1x1x16xf32>
    %355 = vector.shape_cast %354 : vector<1x1x1x1x16xf32> to vector<1x16xf32>
    %356 = vector.broadcast %355 : vector<1x16xf32> to vector<19x16xf32>
    %357 = arith.addf %353, %356 : vector<19x16xf32>
    %c0_275 = arith.constant 0 : index
    %c1_276 = arith.constant 1 : index
    %c3_277 = arith.constant 3 : index
    %c0_278 = arith.constant 0 : index
    %c0_279 = arith.constant 0 : index
    %358 = vector.load %arg15[%c0_275, %c1_276, %c3_277, %c0_278, %c0_279] : memref<2x3x4x64x16xbf16, #tpu.memory_space<vmem>>, vector<1x1x1x64x16xbf16>
    %359 = vector.shape_cast %358 : vector<1x1x1x64x16xbf16> to vector<64x16xbf16>
    %cst_280 = arith.constant dense<0.000000e+00> : vector<19x16xf32>
    %360 = tpu.matmul %223, %359, %cst_280 {dimension_numbers = #tpu.dot_dimension_numbers<[1], [0], [0], [1], [0, 0, 1, 1], [], []>} : vector<19x64xbf16>, vector<64x16xbf16>, vector<19x16xf32> -> vector<19x16xf32>
    %c0_281 = arith.constant 0 : index
    %c1_282 = arith.constant 1 : index
    %c3_283 = arith.constant 3 : index
    %c0_284 = arith.constant 0 : index
    %c0_285 = arith.constant 0 : index
    %361 = vector.load %arg16[%c0_281, %c1_282, %c3_283, %c0_284, %c0_285] : memref<2x3x4x1x16xf32, #tpu.memory_space<vmem>>, vector<1x1x1x1x16xf32>
    %362 = vector.shape_cast %361 : vector<1x1x1x1x16xf32> to vector<1x16xf32>
    %363 = vector.broadcast %362 : vector<1x16xf32> to vector<19x16xf32>
    %364 = arith.addf %360, %363 : vector<19x16xf32>
    %c0_286 = arith.constant 0 : index
    %c2_287 = arith.constant 2 : index
    %c3_288 = arith.constant 3 : index
    %c0_289 = arith.constant 0 : index
    %c0_290 = arith.constant 0 : index
    %365 = vector.load %arg15[%c0_286, %c2_287, %c3_288, %c0_289, %c0_290] : memref<2x3x4x64x16xbf16, #tpu.memory_space<vmem>>, vector<1x1x1x64x16xbf16>
    %366 = vector.shape_cast %365 : vector<1x1x1x64x16xbf16> to vector<64x16xbf16>
    %cst_291 = arith.constant dense<0.000000e+00> : vector<19x16xf32>
    %367 = tpu.matmul %223, %366, %cst_291 {dimension_numbers = #tpu.dot_dimension_numbers<[1], [0], [0], [1], [0, 0, 1, 1], [], []>} : vector<19x64xbf16>, vector<64x16xbf16>, vector<19x16xf32> -> vector<19x16xf32>
    %c0_292 = arith.constant 0 : index
    %c2_293 = arith.constant 2 : index
    %c3_294 = arith.constant 3 : index
    %c0_295 = arith.constant 0 : index
    %c0_296 = arith.constant 0 : index
    %368 = vector.load %arg16[%c0_292, %c2_293, %c3_294, %c0_295, %c0_296] : memref<2x3x4x1x16xf32, #tpu.memory_space<vmem>>, vector<1x1x1x1x16xf32>
    %369 = vector.shape_cast %368 : vector<1x1x1x1x16xf32> to vector<1x16xf32>
    %370 = vector.broadcast %369 : vector<1x16xf32> to vector<19x16xf32>
    %371 = arith.addf %367, %370 : vector<19x16xf32>
    %372 = arith.truncf %357 : vector<19x16xf32> to vector<19x16xbf16>
    %373 = arith.truncf %364 : vector<19x16xf32> to vector<19x16xbf16>
    %cst_297 = arith.constant dense<0.000000e+00> : vector<19x19xf32>
    %374 = tpu.matmul %372, %373, %cst_297 {dimension_numbers = #tpu.dot_dimension_numbers<[1], [1], [0], [0], [0, 0, 1, 0], [], []>} : vector<19x16xbf16>, vector<19x16xbf16>, vector<19x19xf32> -> vector<19x19xf32>
    %cst_298 = arith.constant dense<0xFF800000> : vector<19xf32>
    %375 = vector.multi_reduction <maximumf>, %374, %cst_298 [1] : vector<19x19xf32> to vector<19xf32>
    %376 = vector.shape_cast %375 : vector<19xf32> to vector<19x1xf32>
    %377 = vector.broadcast %376 : vector<19x1xf32> to vector<19x19xf32>
    %378 = arith.subf %374, %377 : vector<19x19xf32>
    %379 = math.exp %378 : vector<19x19xf32>
    %cst_299 = arith.constant dense<0.000000e+00> : vector<19xf32>
    %380 = vector.multi_reduction <add>, %379, %cst_299 [1] : vector<19x19xf32> to vector<19xf32>
    %381 = vector.shape_cast %380 : vector<19xf32> to vector<19x1xf32>
    %382 = tpu.reciprocal %381 {approx = true} : vector<19x1xf32> -> vector<19x1xf32>
    %383 = vector.broadcast %382 : vector<19x1xf32> to vector<19x19xf32>
    %384 = arith.mulf %379, %383 : vector<19x19xf32>
    %385 = arith.truncf %384 : vector<19x19xf32> to vector<19x19xbf16>
    %386 = arith.truncf %371 : vector<19x16xf32> to vector<19x16xbf16>
    %cst_300 = arith.constant dense<0.000000e+00> : vector<19x16xf32>
    %387 = tpu.matmul %385, %386, %cst_300 {dimension_numbers = #tpu.dot_dimension_numbers<[1], [0], [0], [1], [0, 0, 1, 1], [], []>} : vector<19x19xbf16>, vector<19x16xbf16>, vector<19x16xf32> -> vector<19x16xf32>
    %388 = arith.truncf %387 : vector<19x16xf32> to vector<19x16xbf16>
    %c0_301 = arith.constant 0 : index
    %c3_302 = arith.constant 3 : index
    %c0_303 = arith.constant 0 : index
    %c0_304 = arith.constant 0 : index
    %389 = vector.load %arg17[%c0_301, %c3_302, %c0_303, %c0_304] : memref<2x4x16x64xbf16, #tpu.memory_space<vmem>>, vector<1x1x16x64xbf16>
    %390 = vector.shape_cast %389 : vector<1x1x16x64xbf16> to vector<16x64xbf16>
    %cst_305 = arith.constant dense<0.000000e+00> : vector<19x64xf32>
    %391 = tpu.matmul %388, %390, %cst_305 {dimension_numbers = #tpu.dot_dimension_numbers<[1], [0], [0], [1], [0, 0, 1, 1], [], []>} : vector<19x16xbf16>, vector<16x64xbf16>, vector<19x64xf32> -> vector<19x64xf32>
    %392 = arith.addf %350, %391 : vector<19x64xf32>
    %c0_306 = arith.constant 0 : index
    %c0_307 = arith.constant 0 : index
    %c0_308 = arith.constant 0 : index
    %393 = vector.load %arg18[%c0_306, %c0_307, %c0_308] : memref<2x1x64xf32, #tpu.memory_space<vmem>>, vector<1x1x64xf32>
    %394 = vector.shape_cast %393 : vector<1x1x64xf32> to vector<1x64xf32>
    %395 = vector.broadcast %394 : vector<1x64xf32> to vector<19x64xf32>
    %396 = arith.addf %392, %395 : vector<19x64xf32>
    %397 = arith.addf %222, %396 : vector<19x64xf32>
    %c0_309 = arith.constant 0 : index
    %c0_310 = arith.constant 0 : index
    %c0_311 = arith.constant 0 : index
    %c0_312 = arith.constant 0 : index
    %398 = vector.load %arg19[%c0_309, %c0_310, %c0_311, %c0_312] : memref<2x2x1x64xf32, #tpu.memory_space<vmem>>, vector<1x1x1x64xf32>
    %399 = vector.shape_cast %398 : vector<1x1x1x64xf32> to vector<1x64xf32>
    %c0_313 = arith.constant 0 : index
    %c1_314 = arith.constant 1 : index
    %c0_315 = arith.constant 0 : index
    %c0_316 = arith.constant 0 : index
    %400 = vector.load %arg19[%c0_313, %c1_314, %c0_315, %c0_316] : memref<2x2x1x64xf32, #tpu.memory_space<vmem>>, vector<1x1x1x64xf32>
    %401 = vector.shape_cast %400 : vector<1x1x1x64xf32> to vector<1x64xf32>
    %cst_317 = arith.constant dense<0.000000e+00> : vector<19xf32>
    %402 = vector.multi_reduction <add>, %397, %cst_317 [1] : vector<19x64xf32> to vector<19xf32>
    %403 = vector.shape_cast %402 : vector<19xf32> to vector<19x1xf32>
    %cst_318 = arith.constant 6.400000e+01 : f32
    %404 = vector.broadcast %cst_318 : f32 to vector<19x1xf32>
    %405 = arith.divf %403, %404 : vector<19x1xf32>
    %406 = vector.broadcast %405 : vector<19x1xf32> to vector<19x64xf32>
    %407 = arith.subf %397, %406 : vector<19x64xf32>
    %408 = arith.mulf %407, %407 : vector<19x64xf32>
    %cst_319 = arith.constant dense<0.000000e+00> : vector<19xf32>
    %409 = vector.multi_reduction <add>, %408, %cst_319 [1] : vector<19x64xf32> to vector<19xf32>
    %410 = vector.shape_cast %409 : vector<19xf32> to vector<19x1xf32>
    %cst_320 = arith.constant 6.400000e+01 : f32
    %411 = vector.broadcast %cst_320 : f32 to vector<19x1xf32>
    %412 = arith.divf %410, %411 : vector<19x1xf32>
    %413 = vector.broadcast %405 : vector<19x1xf32> to vector<19x64xf32>
    %414 = arith.subf %397, %413 : vector<19x64xf32>
    %cst_321 = arith.constant 9.99999974E-6 : f32
    %415 = vector.broadcast %cst_321 : f32 to vector<19x1xf32>
    %416 = arith.addf %412, %415 : vector<19x1xf32>
    %417 = math.rsqrt %416 : vector<19x1xf32>
    %418 = vector.broadcast %417 : vector<19x1xf32> to vector<19x64xf32>
    %419 = arith.mulf %414, %418 : vector<19x64xf32>
    %420 = vector.broadcast %399 : vector<1x64xf32> to vector<19x64xf32>
    %421 = arith.mulf %419, %420 : vector<19x64xf32>
    %422 = vector.broadcast %401 : vector<1x64xf32> to vector<19x64xf32>
    %423 = arith.addf %421, %422 : vector<19x64xf32>
    %424 = arith.truncf %423 : vector<19x64xf32> to vector<19x64xbf16>
    %c0_322 = arith.constant 0 : index
    %c0_323 = arith.constant 0 : index
    %c0_324 = arith.constant 0 : index
    %425 = vector.load %arg20[%c0_322, %c0_323, %c0_324] : memref<2x64x128xbf16, #tpu.memory_space<vmem>>, vector<1x64x128xbf16>
    %426 = vector.shape_cast %425 : vector<1x64x128xbf16> to vector<64x128xbf16>
    %cst_325 = arith.constant dense<0.000000e+00> : vector<19x128xf32>
    %427 = tpu.matmul %424, %426, %cst_325 {dimension_numbers = #tpu.dot_dimension_numbers<[1], [0], [0], [1], [0, 0, 1, 1], [], []>} : vector<19x64xbf16>, vector<64x128xbf16>, vector<19x128xf32> -> vector<19x128xf32>
    %c0_326 = arith.constant 0 : index
    %c0_327 = arith.constant 0 : index
    %c0_328 = arith.constant 0 : index
    %428 = vector.load %arg21[%c0_326, %c0_327, %c0_328] : memref<2x1x128xf32, #tpu.memory_space<vmem>>, vector<1x1x128xf32>
    %429 = vector.shape_cast %428 : vector<1x1x128xf32> to vector<1x128xf32>
    %430 = vector.broadcast %429 : vector<1x128xf32> to vector<19x128xf32>
    %431 = arith.addf %427, %430 : vector<19x128xf32>
    %432 = arith.mulf %431, %431 : vector<19x128xf32>
    %433 = arith.mulf %431, %432 : vector<19x128xf32>
    %cst_329 = arith.constant 4.471500e-02 : f32
    %434 = vector.broadcast %cst_329 : f32 to vector<19x128xf32>
    %435 = arith.mulf %434, %433 : vector<19x128xf32>
    %436 = arith.addf %431, %435 : vector<19x128xf32>
    %cst_330 = arith.constant 0.797884583 : f32
    %437 = vector.broadcast %cst_330 : f32 to vector<19x128xf32>
    %438 = arith.mulf %437, %436 : vector<19x128xf32>
    %439 = math.tanh %438 : vector<19x128xf32>
    %cst_331 = arith.constant 1.000000e+00 : f32
    %440 = vector.broadcast %cst_331 : f32 to vector<19x128xf32>
    %441 = arith.addf %440, %439 : vector<19x128xf32>
    %cst_332 = arith.constant 5.000000e-01 : f32
    %442 = vector.broadcast %cst_332 : f32 to vector<19x128xf32>
    %443 = arith.mulf %442, %441 : vector<19x128xf32>
    %444 = arith.mulf %431, %443 : vector<19x128xf32>
    %445 = arith.truncf %444 : vector<19x128xf32> to vector<19x128xbf16>
    %c0_333 = arith.constant 0 : index
    %c0_334 = arith.constant 0 : index
    %c0_335 = arith.constant 0 : index
    %446 = vector.load %arg22[%c0_333, %c0_334, %c0_335] : memref<2x128x64xbf16, #tpu.memory_space<vmem>>, vector<1x128x64xbf16>
    %447 = vector.shape_cast %446 : vector<1x128x64xbf16> to vector<128x64xbf16>
    %cst_336 = arith.constant dense<0.000000e+00> : vector<19x64xf32>
    %448 = tpu.matmul %445, %447, %cst_336 {dimension_numbers = #tpu.dot_dimension_numbers<[1], [0], [0], [1], [0, 0, 1, 1], [], []>} : vector<19x128xbf16>, vector<128x64xbf16>, vector<19x64xf32> -> vector<19x64xf32>
    %c0_337 = arith.constant 0 : index
    %c0_338 = arith.constant 0 : index
    %c0_339 = arith.constant 0 : index
    %449 = vector.load %arg23[%c0_337, %c0_338, %c0_339] : memref<2x1x64xf32, #tpu.memory_space<vmem>>, vector<1x1x64xf32>
    %450 = vector.shape_cast %449 : vector<1x1x64xf32> to vector<1x64xf32>
    %451 = vector.broadcast %450 : vector<1x64xf32> to vector<19x64xf32>
    %452 = arith.addf %448, %451 : vector<19x64xf32>
    %453 = arith.addf %423, %452 : vector<19x64xf32>
    %c0_340 = arith.constant 0 : index
    %c0_341 = arith.constant 0 : index
    %c0_342 = arith.constant 0 : index
    %c0_343 = arith.constant 0 : index
    %454 = vector.load %arg24[%c0_340, %c0_341, %c0_342, %c0_343] : memref<2x2x1x64xf32, #tpu.memory_space<vmem>>, vector<1x1x1x64xf32>
    %455 = vector.shape_cast %454 : vector<1x1x1x64xf32> to vector<1x64xf32>
    %c0_344 = arith.constant 0 : index
    %c1_345 = arith.constant 1 : index
    %c0_346 = arith.constant 0 : index
    %c0_347 = arith.constant 0 : index
    %456 = vector.load %arg24[%c0_344, %c1_345, %c0_346, %c0_347] : memref<2x2x1x64xf32, #tpu.memory_space<vmem>>, vector<1x1x1x64xf32>
    %457 = vector.shape_cast %456 : vector<1x1x1x64xf32> to vector<1x64xf32>
    %cst_348 = arith.constant dense<0.000000e+00> : vector<19xf32>
    %458 = vector.multi_reduction <add>, %453, %cst_348 [1] : vector<19x64xf32> to vector<19xf32>
    %459 = vector.shape_cast %458 : vector<19xf32> to vector<19x1xf32>
    %cst_349 = arith.constant 6.400000e+01 : f32
    %460 = vector.broadcast %cst_349 : f32 to vector<19x1xf32>
    %461 = arith.divf %459, %460 : vector<19x1xf32>
    %462 = vector.broadcast %461 : vector<19x1xf32> to vector<19x64xf32>
    %463 = arith.subf %453, %462 : vector<19x64xf32>
    %464 = arith.mulf %463, %463 : vector<19x64xf32>
    %cst_350 = arith.constant dense<0.000000e+00> : vector<19xf32>
    %465 = vector.multi_reduction <add>, %464, %cst_350 [1] : vector<19x64xf32> to vector<19xf32>
    %466 = vector.shape_cast %465 : vector<19xf32> to vector<19x1xf32>
    %cst_351 = arith.constant 6.400000e+01 : f32
    %467 = vector.broadcast %cst_351 : f32 to vector<19x1xf32>
    %468 = arith.divf %466, %467 : vector<19x1xf32>
    %469 = vector.broadcast %461 : vector<19x1xf32> to vector<19x64xf32>
    %470 = arith.subf %453, %469 : vector<19x64xf32>
    %cst_352 = arith.constant 9.99999974E-6 : f32
    %471 = vector.broadcast %cst_352 : f32 to vector<19x1xf32>
    %472 = arith.addf %468, %471 : vector<19x1xf32>
    %473 = math.rsqrt %472 : vector<19x1xf32>
    %474 = vector.broadcast %473 : vector<19x1xf32> to vector<19x64xf32>
    %475 = arith.mulf %470, %474 : vector<19x64xf32>
    %476 = vector.broadcast %455 : vector<1x64xf32> to vector<19x64xf32>
    %477 = arith.mulf %475, %476 : vector<19x64xf32>
    %478 = vector.broadcast %457 : vector<1x64xf32> to vector<19x64xf32>
    %479 = arith.addf %477, %478 : vector<19x64xf32>
    %480 = arith.truncf %479 : vector<19x64xf32> to vector<19x64xbf16>
    %cst_353 = arith.constant 0.000000e+00 : f32
    %481 = vector.broadcast %cst_353 : f32 to vector<19x64xf32>
    %c1_354 = arith.constant 1 : index
    %c0_355 = arith.constant 0 : index
    %c0_356 = arith.constant 0 : index
    %c0_357 = arith.constant 0 : index
    %c0_358 = arith.constant 0 : index
    %482 = vector.load %arg15[%c1_354, %c0_355, %c0_356, %c0_357, %c0_358] : memref<2x3x4x64x16xbf16, #tpu.memory_space<vmem>>, vector<1x1x1x64x16xbf16>
    %483 = vector.shape_cast %482 : vector<1x1x1x64x16xbf16> to vector<64x16xbf16>
    %cst_359 = arith.constant dense<0.000000e+00> : vector<19x16xf32>
    %484 = tpu.matmul %480, %483, %cst_359 {dimension_numbers = #tpu.dot_dimension_numbers<[1], [0], [0], [1], [0, 0, 1, 1], [], []>} : vector<19x64xbf16>, vector<64x16xbf16>, vector<19x16xf32> -> vector<19x16xf32>
    %c1_360 = arith.constant 1 : index
    %c0_361 = arith.constant 0 : index
    %c0_362 = arith.constant 0 : index
    %c0_363 = arith.constant 0 : index
    %c0_364 = arith.constant 0 : index
    %485 = vector.load %arg16[%c1_360, %c0_361, %c0_362, %c0_363, %c0_364] : memref<2x3x4x1x16xf32, #tpu.memory_space<vmem>>, vector<1x1x1x1x16xf32>
    %486 = vector.shape_cast %485 : vector<1x1x1x1x16xf32> to vector<1x16xf32>
    %487 = vector.broadcast %486 : vector<1x16xf32> to vector<19x16xf32>
    %488 = arith.addf %484, %487 : vector<19x16xf32>
    %c1_365 = arith.constant 1 : index
    %c1_366 = arith.constant 1 : index
    %c0_367 = arith.constant 0 : index
    %c0_368 = arith.constant 0 : index
    %c0_369 = arith.constant 0 : index
    %489 = vector.load %arg15[%c1_365, %c1_366, %c0_367, %c0_368, %c0_369] : memref<2x3x4x64x16xbf16, #tpu.memory_space<vmem>>, vector<1x1x1x64x16xbf16>
    %490 = vector.shape_cast %489 : vector<1x1x1x64x16xbf16> to vector<64x16xbf16>
    %cst_370 = arith.constant dense<0.000000e+00> : vector<19x16xf32>
    %491 = tpu.matmul %480, %490, %cst_370 {dimension_numbers = #tpu.dot_dimension_numbers<[1], [0], [0], [1], [0, 0, 1, 1], [], []>} : vector<19x64xbf16>, vector<64x16xbf16>, vector<19x16xf32> -> vector<19x16xf32>
    %c1_371 = arith.constant 1 : index
    %c1_372 = arith.constant 1 : index
    %c0_373 = arith.constant 0 : index
    %c0_374 = arith.constant 0 : index
    %c0_375 = arith.constant 0 : index
    %492 = vector.load %arg16[%c1_371, %c1_372, %c0_373, %c0_374, %c0_375] : memref<2x3x4x1x16xf32, #tpu.memory_space<vmem>>, vector<1x1x1x1x16xf32>
    %493 = vector.shape_cast %492 : vector<1x1x1x1x16xf32> to vector<1x16xf32>
    %494 = vector.broadcast %493 : vector<1x16xf32> to vector<19x16xf32>
    %495 = arith.addf %491, %494 : vector<19x16xf32>
    %c1_376 = arith.constant 1 : index
    %c2_377 = arith.constant 2 : index
    %c0_378 = arith.constant 0 : index
    %c0_379 = arith.constant 0 : index
    %c0_380 = arith.constant 0 : index
    %496 = vector.load %arg15[%c1_376, %c2_377, %c0_378, %c0_379, %c0_380] : memref<2x3x4x64x16xbf16, #tpu.memory_space<vmem>>, vector<1x1x1x64x16xbf16>
    %497 = vector.shape_cast %496 : vector<1x1x1x64x16xbf16> to vector<64x16xbf16>
    %cst_381 = arith.constant dense<0.000000e+00> : vector<19x16xf32>
    %498 = tpu.matmul %480, %497, %cst_381 {dimension_numbers = #tpu.dot_dimension_numbers<[1], [0], [0], [1], [0, 0, 1, 1], [], []>} : vector<19x64xbf16>, vector<64x16xbf16>, vector<19x16xf32> -> vector<19x16xf32>
    %c1_382 = arith.constant 1 : index
    %c2_383 = arith.constant 2 : index
    %c0_384 = arith.constant 0 : index
    %c0_385 = arith.constant 0 : index
    %c0_386 = arith.constant 0 : index
    %499 = vector.load %arg16[%c1_382, %c2_383, %c0_384, %c0_385, %c0_386] : memref<2x3x4x1x16xf32, #tpu.memory_space<vmem>>, vector<1x1x1x1x16xf32>
    %500 = vector.shape_cast %499 : vector<1x1x1x1x16xf32> to vector<1x16xf32>
    %501 = vector.broadcast %500 : vector<1x16xf32> to vector<19x16xf32>
    %502 = arith.addf %498, %501 : vector<19x16xf32>
    %503 = arith.truncf %488 : vector<19x16xf32> to vector<19x16xbf16>
    %504 = arith.truncf %495 : vector<19x16xf32> to vector<19x16xbf16>
    %cst_387 = arith.constant dense<0.000000e+00> : vector<19x19xf32>
    %505 = tpu.matmul %503, %504, %cst_387 {dimension_numbers = #tpu.dot_dimension_numbers<[1], [1], [0], [0], [0, 0, 1, 0], [], []>} : vector<19x16xbf16>, vector<19x16xbf16>, vector<19x19xf32> -> vector<19x19xf32>
    %cst_388 = arith.constant dense<0xFF800000> : vector<19xf32>
    %506 = vector.multi_reduction <maximumf>, %505, %cst_388 [1] : vector<19x19xf32> to vector<19xf32>
    %507 = vector.shape_cast %506 : vector<19xf32> to vector<19x1xf32>
    %508 = vector.broadcast %507 : vector<19x1xf32> to vector<19x19xf32>
    %509 = arith.subf %505, %508 : vector<19x19xf32>
    %510 = math.exp %509 : vector<19x19xf32>
    %cst_389 = arith.constant dense<0.000000e+00> : vector<19xf32>
    %511 = vector.multi_reduction <add>, %510, %cst_389 [1] : vector<19x19xf32> to vector<19xf32>
    %512 = vector.shape_cast %511 : vector<19xf32> to vector<19x1xf32>
    %513 = tpu.reciprocal %512 {approx = true} : vector<19x1xf32> -> vector<19x1xf32>
    %514 = vector.broadcast %513 : vector<19x1xf32> to vector<19x19xf32>
    %515 = arith.mulf %510, %514 : vector<19x19xf32>
    %516 = arith.truncf %515 : vector<19x19xf32> to vector<19x19xbf16>
    %517 = arith.truncf %502 : vector<19x16xf32> to vector<19x16xbf16>
    %cst_390 = arith.constant dense<0.000000e+00> : vector<19x16xf32>
    %518 = tpu.matmul %516, %517, %cst_390 {dimension_numbers = #tpu.dot_dimension_numbers<[1], [0], [0], [1], [0, 0, 1, 1], [], []>} : vector<19x19xbf16>, vector<19x16xbf16>, vector<19x16xf32> -> vector<19x16xf32>
    %519 = arith.truncf %518 : vector<19x16xf32> to vector<19x16xbf16>
    %c1_391 = arith.constant 1 : index
    %c0_392 = arith.constant 0 : index
    %c0_393 = arith.constant 0 : index
    %c0_394 = arith.constant 0 : index
    %520 = vector.load %arg17[%c1_391, %c0_392, %c0_393, %c0_394] : memref<2x4x16x64xbf16, #tpu.memory_space<vmem>>, vector<1x1x16x64xbf16>
    %521 = vector.shape_cast %520 : vector<1x1x16x64xbf16> to vector<16x64xbf16>
    %cst_395 = arith.constant dense<0.000000e+00> : vector<19x64xf32>
    %522 = tpu.matmul %519, %521, %cst_395 {dimension_numbers = #tpu.dot_dimension_numbers<[1], [0], [0], [1], [0, 0, 1, 1], [], []>} : vector<19x16xbf16>, vector<16x64xbf16>, vector<19x64xf32> -> vector<19x64xf32>
    %523 = arith.addf %481, %522 : vector<19x64xf32>
    %c1_396 = arith.constant 1 : index
    %c0_397 = arith.constant 0 : index
    %c1_398 = arith.constant 1 : index
    %c0_399 = arith.constant 0 : index
    %c0_400 = arith.constant 0 : index
    %524 = vector.load %arg15[%c1_396, %c0_397, %c1_398, %c0_399, %c0_400] : memref<2x3x4x64x16xbf16, #tpu.memory_space<vmem>>, vector<1x1x1x64x16xbf16>
    %525 = vector.shape_cast %524 : vector<1x1x1x64x16xbf16> to vector<64x16xbf16>
    %cst_401 = arith.constant dense<0.000000e+00> : vector<19x16xf32>
    %526 = tpu.matmul %480, %525, %cst_401 {dimension_numbers = #tpu.dot_dimension_numbers<[1], [0], [0], [1], [0, 0, 1, 1], [], []>} : vector<19x64xbf16>, vector<64x16xbf16>, vector<19x16xf32> -> vector<19x16xf32>
    %c1_402 = arith.constant 1 : index
    %c0_403 = arith.constant 0 : index
    %c1_404 = arith.constant 1 : index
    %c0_405 = arith.constant 0 : index
    %c0_406 = arith.constant 0 : index
    %527 = vector.load %arg16[%c1_402, %c0_403, %c1_404, %c0_405, %c0_406] : memref<2x3x4x1x16xf32, #tpu.memory_space<vmem>>, vector<1x1x1x1x16xf32>
    %528 = vector.shape_cast %527 : vector<1x1x1x1x16xf32> to vector<1x16xf32>
    %529 = vector.broadcast %528 : vector<1x16xf32> to vector<19x16xf32>
    %530 = arith.addf %526, %529 : vector<19x16xf32>
    %c1_407 = arith.constant 1 : index
    %c1_408 = arith.constant 1 : index
    %c1_409 = arith.constant 1 : index
    %c0_410 = arith.constant 0 : index
    %c0_411 = arith.constant 0 : index
    %531 = vector.load %arg15[%c1_407, %c1_408, %c1_409, %c0_410, %c0_411] : memref<2x3x4x64x16xbf16, #tpu.memory_space<vmem>>, vector<1x1x1x64x16xbf16>
    %532 = vector.shape_cast %531 : vector<1x1x1x64x16xbf16> to vector<64x16xbf16>
    %cst_412 = arith.constant dense<0.000000e+00> : vector<19x16xf32>
    %533 = tpu.matmul %480, %532, %cst_412 {dimension_numbers = #tpu.dot_dimension_numbers<[1], [0], [0], [1], [0, 0, 1, 1], [], []>} : vector<19x64xbf16>, vector<64x16xbf16>, vector<19x16xf32> -> vector<19x16xf32>
    %c1_413 = arith.constant 1 : index
    %c1_414 = arith.constant 1 : index
    %c1_415 = arith.constant 1 : index
    %c0_416 = arith.constant 0 : index
    %c0_417 = arith.constant 0 : index
    %534 = vector.load %arg16[%c1_413, %c1_414, %c1_415, %c0_416, %c0_417] : memref<2x3x4x1x16xf32, #tpu.memory_space<vmem>>, vector<1x1x1x1x16xf32>
    %535 = vector.shape_cast %534 : vector<1x1x1x1x16xf32> to vector<1x16xf32>
    %536 = vector.broadcast %535 : vector<1x16xf32> to vector<19x16xf32>
    %537 = arith.addf %533, %536 : vector<19x16xf32>
    %c1_418 = arith.constant 1 : index
    %c2_419 = arith.constant 2 : index
    %c1_420 = arith.constant 1 : index
    %c0_421 = arith.constant 0 : index
    %c0_422 = arith.constant 0 : index
    %538 = vector.load %arg15[%c1_418, %c2_419, %c1_420, %c0_421, %c0_422] : memref<2x3x4x64x16xbf16, #tpu.memory_space<vmem>>, vector<1x1x1x64x16xbf16>
    %539 = vector.shape_cast %538 : vector<1x1x1x64x16xbf16> to vector<64x16xbf16>
    %cst_423 = arith.constant dense<0.000000e+00> : vector<19x16xf32>
    %540 = tpu.matmul %480, %539, %cst_423 {dimension_numbers = #tpu.dot_dimension_numbers<[1], [0], [0], [1], [0, 0, 1, 1], [], []>} : vector<19x64xbf16>, vector<64x16xbf16>, vector<19x16xf32> -> vector<19x16xf32>
    %c1_424 = arith.constant 1 : index
    %c2_425 = arith.constant 2 : index
    %c1_426 = arith.constant 1 : index
    %c0_427 = arith.constant 0 : index
    %c0_428 = arith.constant 0 : index
    %541 = vector.load %arg16[%c1_424, %c2_425, %c1_426, %c0_427, %c0_428] : memref<2x3x4x1x16xf32, #tpu.memory_space<vmem>>, vector<1x1x1x1x16xf32>
    %542 = vector.shape_cast %541 : vector<1x1x1x1x16xf32> to vector<1x16xf32>
    %543 = vector.broadcast %542 : vector<1x16xf32> to vector<19x16xf32>
    %544 = arith.addf %540, %543 : vector<19x16xf32>
    %545 = arith.truncf %530 : vector<19x16xf32> to vector<19x16xbf16>
    %546 = arith.truncf %537 : vector<19x16xf32> to vector<19x16xbf16>
    %cst_429 = arith.constant dense<0.000000e+00> : vector<19x19xf32>
    %547 = tpu.matmul %545, %546, %cst_429 {dimension_numbers = #tpu.dot_dimension_numbers<[1], [1], [0], [0], [0, 0, 1, 0], [], []>} : vector<19x16xbf16>, vector<19x16xbf16>, vector<19x19xf32> -> vector<19x19xf32>
    %cst_430 = arith.constant dense<0xFF800000> : vector<19xf32>
    %548 = vector.multi_reduction <maximumf>, %547, %cst_430 [1] : vector<19x19xf32> to vector<19xf32>
    %549 = vector.shape_cast %548 : vector<19xf32> to vector<19x1xf32>
    %550 = vector.broadcast %549 : vector<19x1xf32> to vector<19x19xf32>
    %551 = arith.subf %547, %550 : vector<19x19xf32>
    %552 = math.exp %551 : vector<19x19xf32>
    %cst_431 = arith.constant dense<0.000000e+00> : vector<19xf32>
    %553 = vector.multi_reduction <add>, %552, %cst_431 [1] : vector<19x19xf32> to vector<19xf32>
    %554 = vector.shape_cast %553 : vector<19xf32> to vector<19x1xf32>
    %555 = tpu.reciprocal %554 {approx = true} : vector<19x1xf32> -> vector<19x1xf32>
    %556 = vector.broadcast %555 : vector<19x1xf32> to vector<19x19xf32>
    %557 = arith.mulf %552, %556 : vector<19x19xf32>
    %558 = arith.truncf %557 : vector<19x19xf32> to vector<19x19xbf16>
    %559 = arith.truncf %544 : vector<19x16xf32> to vector<19x16xbf16>
    %cst_432 = arith.constant dense<0.000000e+00> : vector<19x16xf32>
    %560 = tpu.matmul %558, %559, %cst_432 {dimension_numbers = #tpu.dot_dimension_numbers<[1], [0], [0], [1], [0, 0, 1, 1], [], []>} : vector<19x19xbf16>, vector<19x16xbf16>, vector<19x16xf32> -> vector<19x16xf32>
    %561 = arith.truncf %560 : vector<19x16xf32> to vector<19x16xbf16>
    %c1_433 = arith.constant 1 : index
    %c1_434 = arith.constant 1 : index
    %c0_435 = arith.constant 0 : index
    %c0_436 = arith.constant 0 : index
    %562 = vector.load %arg17[%c1_433, %c1_434, %c0_435, %c0_436] : memref<2x4x16x64xbf16, #tpu.memory_space<vmem>>, vector<1x1x16x64xbf16>
    %563 = vector.shape_cast %562 : vector<1x1x16x64xbf16> to vector<16x64xbf16>
    %cst_437 = arith.constant dense<0.000000e+00> : vector<19x64xf32>
    %564 = tpu.matmul %561, %563, %cst_437 {dimension_numbers = #tpu.dot_dimension_numbers<[1], [0], [0], [1], [0, 0, 1, 1], [], []>} : vector<19x16xbf16>, vector<16x64xbf16>, vector<19x64xf32> -> vector<19x64xf32>
    %565 = arith.addf %523, %564 : vector<19x64xf32>
    %c1_438 = arith.constant 1 : index
    %c0_439 = arith.constant 0 : index
    %c2_440 = arith.constant 2 : index
    %c0_441 = arith.constant 0 : index
    %c0_442 = arith.constant 0 : index
    %566 = vector.load %arg15[%c1_438, %c0_439, %c2_440, %c0_441, %c0_442] : memref<2x3x4x64x16xbf16, #tpu.memory_space<vmem>>, vector<1x1x1x64x16xbf16>
    %567 = vector.shape_cast %566 : vector<1x1x1x64x16xbf16> to vector<64x16xbf16>
    %cst_443 = arith.constant dense<0.000000e+00> : vector<19x16xf32>
    %568 = tpu.matmul %480, %567, %cst_443 {dimension_numbers = #tpu.dot_dimension_numbers<[1], [0], [0], [1], [0, 0, 1, 1], [], []>} : vector<19x64xbf16>, vector<64x16xbf16>, vector<19x16xf32> -> vector<19x16xf32>
    %c1_444 = arith.constant 1 : index
    %c0_445 = arith.constant 0 : index
    %c2_446 = arith.constant 2 : index
    %c0_447 = arith.constant 0 : index
    %c0_448 = arith.constant 0 : index
    %569 = vector.load %arg16[%c1_444, %c0_445, %c2_446, %c0_447, %c0_448] : memref<2x3x4x1x16xf32, #tpu.memory_space<vmem>>, vector<1x1x1x1x16xf32>
    %570 = vector.shape_cast %569 : vector<1x1x1x1x16xf32> to vector<1x16xf32>
    %571 = vector.broadcast %570 : vector<1x16xf32> to vector<19x16xf32>
    %572 = arith.addf %568, %571 : vector<19x16xf32>
    %c1_449 = arith.constant 1 : index
    %c1_450 = arith.constant 1 : index
    %c2_451 = arith.constant 2 : index
    %c0_452 = arith.constant 0 : index
    %c0_453 = arith.constant 0 : index
    %573 = vector.load %arg15[%c1_449, %c1_450, %c2_451, %c0_452, %c0_453] : memref<2x3x4x64x16xbf16, #tpu.memory_space<vmem>>, vector<1x1x1x64x16xbf16>
    %574 = vector.shape_cast %573 : vector<1x1x1x64x16xbf16> to vector<64x16xbf16>
    %cst_454 = arith.constant dense<0.000000e+00> : vector<19x16xf32>
    %575 = tpu.matmul %480, %574, %cst_454 {dimension_numbers = #tpu.dot_dimension_numbers<[1], [0], [0], [1], [0, 0, 1, 1], [], []>} : vector<19x64xbf16>, vector<64x16xbf16>, vector<19x16xf32> -> vector<19x16xf32>
    %c1_455 = arith.constant 1 : index
    %c1_456 = arith.constant 1 : index
    %c2_457 = arith.constant 2 : index
    %c0_458 = arith.constant 0 : index
    %c0_459 = arith.constant 0 : index
    %576 = vector.load %arg16[%c1_455, %c1_456, %c2_457, %c0_458, %c0_459] : memref<2x3x4x1x16xf32, #tpu.memory_space<vmem>>, vector<1x1x1x1x16xf32>
    %577 = vector.shape_cast %576 : vector<1x1x1x1x16xf32> to vector<1x16xf32>
    %578 = vector.broadcast %577 : vector<1x16xf32> to vector<19x16xf32>
    %579 = arith.addf %575, %578 : vector<19x16xf32>
    %c1_460 = arith.constant 1 : index
    %c2_461 = arith.constant 2 : index
    %c2_462 = arith.constant 2 : index
    %c0_463 = arith.constant 0 : index
    %c0_464 = arith.constant 0 : index
    %580 = vector.load %arg15[%c1_460, %c2_461, %c2_462, %c0_463, %c0_464] : memref<2x3x4x64x16xbf16, #tpu.memory_space<vmem>>, vector<1x1x1x64x16xbf16>
    %581 = vector.shape_cast %580 : vector<1x1x1x64x16xbf16> to vector<64x16xbf16>
    %cst_465 = arith.constant dense<0.000000e+00> : vector<19x16xf32>
    %582 = tpu.matmul %480, %581, %cst_465 {dimension_numbers = #tpu.dot_dimension_numbers<[1], [0], [0], [1], [0, 0, 1, 1], [], []>} : vector<19x64xbf16>, vector<64x16xbf16>, vector<19x16xf32> -> vector<19x16xf32>
    %c1_466 = arith.constant 1 : index
    %c2_467 = arith.constant 2 : index
    %c2_468 = arith.constant 2 : index
    %c0_469 = arith.constant 0 : index
    %c0_470 = arith.constant 0 : index
    %583 = vector.load %arg16[%c1_466, %c2_467, %c2_468, %c0_469, %c0_470] : memref<2x3x4x1x16xf32, #tpu.memory_space<vmem>>, vector<1x1x1x1x16xf32>
    %584 = vector.shape_cast %583 : vector<1x1x1x1x16xf32> to vector<1x16xf32>
    %585 = vector.broadcast %584 : vector<1x16xf32> to vector<19x16xf32>
    %586 = arith.addf %582, %585 : vector<19x16xf32>
    %587 = arith.truncf %572 : vector<19x16xf32> to vector<19x16xbf16>
    %588 = arith.truncf %579 : vector<19x16xf32> to vector<19x16xbf16>
    %cst_471 = arith.constant dense<0.000000e+00> : vector<19x19xf32>
    %589 = tpu.matmul %587, %588, %cst_471 {dimension_numbers = #tpu.dot_dimension_numbers<[1], [1], [0], [0], [0, 0, 1, 0], [], []>} : vector<19x16xbf16>, vector<19x16xbf16>, vector<19x19xf32> -> vector<19x19xf32>
    %cst_472 = arith.constant dense<0xFF800000> : vector<19xf32>
    %590 = vector.multi_reduction <maximumf>, %589, %cst_472 [1] : vector<19x19xf32> to vector<19xf32>
    %591 = vector.shape_cast %590 : vector<19xf32> to vector<19x1xf32>
    %592 = vector.broadcast %591 : vector<19x1xf32> to vector<19x19xf32>
    %593 = arith.subf %589, %592 : vector<19x19xf32>
    %594 = math.exp %593 : vector<19x19xf32>
    %cst_473 = arith.constant dense<0.000000e+00> : vector<19xf32>
    %595 = vector.multi_reduction <add>, %594, %cst_473 [1] : vector<19x19xf32> to vector<19xf32>
    %596 = vector.shape_cast %595 : vector<19xf32> to vector<19x1xf32>
    %597 = tpu.reciprocal %596 {approx = true} : vector<19x1xf32> -> vector<19x1xf32>
    %598 = vector.broadcast %597 : vector<19x1xf32> to vector<19x19xf32>
    %599 = arith.mulf %594, %598 : vector<19x19xf32>
    %600 = arith.truncf %599 : vector<19x19xf32> to vector<19x19xbf16>
    %601 = arith.truncf %586 : vector<19x16xf32> to vector<19x16xbf16>
    %cst_474 = arith.constant dense<0.000000e+00> : vector<19x16xf32>
    %602 = tpu.matmul %600, %601, %cst_474 {dimension_numbers = #tpu.dot_dimension_numbers<[1], [0], [0], [1], [0, 0, 1, 1], [], []>} : vector<19x19xbf16>, vector<19x16xbf16>, vector<19x16xf32> -> vector<19x16xf32>
    %603 = arith.truncf %602 : vector<19x16xf32> to vector<19x16xbf16>
    %c1_475 = arith.constant 1 : index
    %c2_476 = arith.constant 2 : index
    %c0_477 = arith.constant 0 : index
    %c0_478 = arith.constant 0 : index
    %604 = vector.load %arg17[%c1_475, %c2_476, %c0_477, %c0_478] : memref<2x4x16x64xbf16, #tpu.memory_space<vmem>>, vector<1x1x16x64xbf16>
    %605 = vector.shape_cast %604 : vector<1x1x16x64xbf16> to vector<16x64xbf16>
    %cst_479 = arith.constant dense<0.000000e+00> : vector<19x64xf32>
    %606 = tpu.matmul %603, %605, %cst_479 {dimension_numbers = #tpu.dot_dimension_numbers<[1], [0], [0], [1], [0, 0, 1, 1], [], []>} : vector<19x16xbf16>, vector<16x64xbf16>, vector<19x64xf32> -> vector<19x64xf32>
    %607 = arith.addf %565, %606 : vector<19x64xf32>
    %c1_480 = arith.constant 1 : index
    %c0_481 = arith.constant 0 : index
    %c3_482 = arith.constant 3 : index
    %c0_483 = arith.constant 0 : index
    %c0_484 = arith.constant 0 : index
    %608 = vector.load %arg15[%c1_480, %c0_481, %c3_482, %c0_483, %c0_484] : memref<2x3x4x64x16xbf16, #tpu.memory_space<vmem>>, vector<1x1x1x64x16xbf16>
    %609 = vector.shape_cast %608 : vector<1x1x1x64x16xbf16> to vector<64x16xbf16>
    %cst_485 = arith.constant dense<0.000000e+00> : vector<19x16xf32>
    %610 = tpu.matmul %480, %609, %cst_485 {dimension_numbers = #tpu.dot_dimension_numbers<[1], [0], [0], [1], [0, 0, 1, 1], [], []>} : vector<19x64xbf16>, vector<64x16xbf16>, vector<19x16xf32> -> vector<19x16xf32>
    %c1_486 = arith.constant 1 : index
    %c0_487 = arith.constant 0 : index
    %c3_488 = arith.constant 3 : index
    %c0_489 = arith.constant 0 : index
    %c0_490 = arith.constant 0 : index
    %611 = vector.load %arg16[%c1_486, %c0_487, %c3_488, %c0_489, %c0_490] : memref<2x3x4x1x16xf32, #tpu.memory_space<vmem>>, vector<1x1x1x1x16xf32>
    %612 = vector.shape_cast %611 : vector<1x1x1x1x16xf32> to vector<1x16xf32>
    %613 = vector.broadcast %612 : vector<1x16xf32> to vector<19x16xf32>
    %614 = arith.addf %610, %613 : vector<19x16xf32>
    %c1_491 = arith.constant 1 : index
    %c1_492 = arith.constant 1 : index
    %c3_493 = arith.constant 3 : index
    %c0_494 = arith.constant 0 : index
    %c0_495 = arith.constant 0 : index
    %615 = vector.load %arg15[%c1_491, %c1_492, %c3_493, %c0_494, %c0_495] : memref<2x3x4x64x16xbf16, #tpu.memory_space<vmem>>, vector<1x1x1x64x16xbf16>
    %616 = vector.shape_cast %615 : vector<1x1x1x64x16xbf16> to vector<64x16xbf16>
    %cst_496 = arith.constant dense<0.000000e+00> : vector<19x16xf32>
    %617 = tpu.matmul %480, %616, %cst_496 {dimension_numbers = #tpu.dot_dimension_numbers<[1], [0], [0], [1], [0, 0, 1, 1], [], []>} : vector<19x64xbf16>, vector<64x16xbf16>, vector<19x16xf32> -> vector<19x16xf32>
    %c1_497 = arith.constant 1 : index
    %c1_498 = arith.constant 1 : index
    %c3_499 = arith.constant 3 : index
    %c0_500 = arith.constant 0 : index
    %c0_501 = arith.constant 0 : index
    %618 = vector.load %arg16[%c1_497, %c1_498, %c3_499, %c0_500, %c0_501] : memref<2x3x4x1x16xf32, #tpu.memory_space<vmem>>, vector<1x1x1x1x16xf32>
    %619 = vector.shape_cast %618 : vector<1x1x1x1x16xf32> to vector<1x16xf32>
    %620 = vector.broadcast %619 : vector<1x16xf32> to vector<19x16xf32>
    %621 = arith.addf %617, %620 : vector<19x16xf32>
    %c1_502 = arith.constant 1 : index
    %c2_503 = arith.constant 2 : index
    %c3_504 = arith.constant 3 : index
    %c0_505 = arith.constant 0 : index
    %c0_506 = arith.constant 0 : index
    %622 = vector.load %arg15[%c1_502, %c2_503, %c3_504, %c0_505, %c0_506] : memref<2x3x4x64x16xbf16, #tpu.memory_space<vmem>>, vector<1x1x1x64x16xbf16>
    %623 = vector.shape_cast %622 : vector<1x1x1x64x16xbf16> to vector<64x16xbf16>
    %cst_507 = arith.constant dense<0.000000e+00> : vector<19x16xf32>
    %624 = tpu.matmul %480, %623, %cst_507 {dimension_numbers = #tpu.dot_dimension_numbers<[1], [0], [0], [1], [0, 0, 1, 1], [], []>} : vector<19x64xbf16>, vector<64x16xbf16>, vector<19x16xf32> -> vector<19x16xf32>
    %c1_508 = arith.constant 1 : index
    %c2_509 = arith.constant 2 : index
    %c3_510 = arith.constant 3 : index
    %c0_511 = arith.constant 0 : index
    %c0_512 = arith.constant 0 : index
    %625 = vector.load %arg16[%c1_508, %c2_509, %c3_510, %c0_511, %c0_512] : memref<2x3x4x1x16xf32, #tpu.memory_space<vmem>>, vector<1x1x1x1x16xf32>
    %626 = vector.shape_cast %625 : vector<1x1x1x1x16xf32> to vector<1x16xf32>
    %627 = vector.broadcast %626 : vector<1x16xf32> to vector<19x16xf32>
    %628 = arith.addf %624, %627 : vector<19x16xf32>
    %629 = arith.truncf %614 : vector<19x16xf32> to vector<19x16xbf16>
    %630 = arith.truncf %621 : vector<19x16xf32> to vector<19x16xbf16>
    %cst_513 = arith.constant dense<0.000000e+00> : vector<19x19xf32>
    %631 = tpu.matmul %629, %630, %cst_513 {dimension_numbers = #tpu.dot_dimension_numbers<[1], [1], [0], [0], [0, 0, 1, 0], [], []>} : vector<19x16xbf16>, vector<19x16xbf16>, vector<19x19xf32> -> vector<19x19xf32>
    %cst_514 = arith.constant dense<0xFF800000> : vector<19xf32>
    %632 = vector.multi_reduction <maximumf>, %631, %cst_514 [1] : vector<19x19xf32> to vector<19xf32>
    %633 = vector.shape_cast %632 : vector<19xf32> to vector<19x1xf32>
    %634 = vector.broadcast %633 : vector<19x1xf32> to vector<19x19xf32>
    %635 = arith.subf %631, %634 : vector<19x19xf32>
    %636 = math.exp %635 : vector<19x19xf32>
    %cst_515 = arith.constant dense<0.000000e+00> : vector<19xf32>
    %637 = vector.multi_reduction <add>, %636, %cst_515 [1] : vector<19x19xf32> to vector<19xf32>
    %638 = vector.shape_cast %637 : vector<19xf32> to vector<19x1xf32>
    %639 = tpu.reciprocal %638 {approx = true} : vector<19x1xf32> -> vector<19x1xf32>
    %640 = vector.broadcast %639 : vector<19x1xf32> to vector<19x19xf32>
    %641 = arith.mulf %636, %640 : vector<19x19xf32>
    %642 = arith.truncf %641 : vector<19x19xf32> to vector<19x19xbf16>
    %643 = arith.truncf %628 : vector<19x16xf32> to vector<19x16xbf16>
    %cst_516 = arith.constant dense<0.000000e+00> : vector<19x16xf32>
    %644 = tpu.matmul %642, %643, %cst_516 {dimension_numbers = #tpu.dot_dimension_numbers<[1], [0], [0], [1], [0, 0, 1, 1], [], []>} : vector<19x19xbf16>, vector<19x16xbf16>, vector<19x16xf32> -> vector<19x16xf32>
    %645 = arith.truncf %644 : vector<19x16xf32> to vector<19x16xbf16>
    %c1_517 = arith.constant 1 : index
    %c3_518 = arith.constant 3 : index
    %c0_519 = arith.constant 0 : index
    %c0_520 = arith.constant 0 : index
    %646 = vector.load %arg17[%c1_517, %c3_518, %c0_519, %c0_520] : memref<2x4x16x64xbf16, #tpu.memory_space<vmem>>, vector<1x1x16x64xbf16>
    %647 = vector.shape_cast %646 : vector<1x1x16x64xbf16> to vector<16x64xbf16>
    %cst_521 = arith.constant dense<0.000000e+00> : vector<19x64xf32>
    %648 = tpu.matmul %645, %647, %cst_521 {dimension_numbers = #tpu.dot_dimension_numbers<[1], [0], [0], [1], [0, 0, 1, 1], [], []>} : vector<19x16xbf16>, vector<16x64xbf16>, vector<19x64xf32> -> vector<19x64xf32>
    %649 = arith.addf %607, %648 : vector<19x64xf32>
    %c1_522 = arith.constant 1 : index
    %c0_523 = arith.constant 0 : index
    %c0_524 = arith.constant 0 : index
    %650 = vector.load %arg18[%c1_522, %c0_523, %c0_524] : memref<2x1x64xf32, #tpu.memory_space<vmem>>, vector<1x1x64xf32>
    %651 = vector.shape_cast %650 : vector<1x1x64xf32> to vector<1x64xf32>
    %652 = vector.broadcast %651 : vector<1x64xf32> to vector<19x64xf32>
    %653 = arith.addf %649, %652 : vector<19x64xf32>
    %654 = arith.addf %479, %653 : vector<19x64xf32>
    %c1_525 = arith.constant 1 : index
    %c0_526 = arith.constant 0 : index
    %c0_527 = arith.constant 0 : index
    %c0_528 = arith.constant 0 : index
    %655 = vector.load %arg19[%c1_525, %c0_526, %c0_527, %c0_528] : memref<2x2x1x64xf32, #tpu.memory_space<vmem>>, vector<1x1x1x64xf32>
    %656 = vector.shape_cast %655 : vector<1x1x1x64xf32> to vector<1x64xf32>
    %c1_529 = arith.constant 1 : index
    %c1_530 = arith.constant 1 : index
    %c0_531 = arith.constant 0 : index
    %c0_532 = arith.constant 0 : index
    %657 = vector.load %arg19[%c1_529, %c1_530, %c0_531, %c0_532] : memref<2x2x1x64xf32, #tpu.memory_space<vmem>>, vector<1x1x1x64xf32>
    %658 = vector.shape_cast %657 : vector<1x1x1x64xf32> to vector<1x64xf32>
    %cst_533 = arith.constant dense<0.000000e+00> : vector<19xf32>
    %659 = vector.multi_reduction <add>, %654, %cst_533 [1] : vector<19x64xf32> to vector<19xf32>
    %660 = vector.shape_cast %659 : vector<19xf32> to vector<19x1xf32>
    %cst_534 = arith.constant 6.400000e+01 : f32
    %661 = vector.broadcast %cst_534 : f32 to vector<19x1xf32>
    %662 = arith.divf %660, %661 : vector<19x1xf32>
    %663 = vector.broadcast %662 : vector<19x1xf32> to vector<19x64xf32>
    %664 = arith.subf %654, %663 : vector<19x64xf32>
    %665 = arith.mulf %664, %664 : vector<19x64xf32>
    %cst_535 = arith.constant dense<0.000000e+00> : vector<19xf32>
    %666 = vector.multi_reduction <add>, %665, %cst_535 [1] : vector<19x64xf32> to vector<19xf32>
    %667 = vector.shape_cast %666 : vector<19xf32> to vector<19x1xf32>
    %cst_536 = arith.constant 6.400000e+01 : f32
    %668 = vector.broadcast %cst_536 : f32 to vector<19x1xf32>
    %669 = arith.divf %667, %668 : vector<19x1xf32>
    %670 = vector.broadcast %662 : vector<19x1xf32> to vector<19x64xf32>
    %671 = arith.subf %654, %670 : vector<19x64xf32>
    %cst_537 = arith.constant 9.99999974E-6 : f32
    %672 = vector.broadcast %cst_537 : f32 to vector<19x1xf32>
    %673 = arith.addf %669, %672 : vector<19x1xf32>
    %674 = math.rsqrt %673 : vector<19x1xf32>
    %675 = vector.broadcast %674 : vector<19x1xf32> to vector<19x64xf32>
    %676 = arith.mulf %671, %675 : vector<19x64xf32>
    %677 = vector.broadcast %656 : vector<1x64xf32> to vector<19x64xf32>
    %678 = arith.mulf %676, %677 : vector<19x64xf32>
    %679 = vector.broadcast %658 : vector<1x64xf32> to vector<19x64xf32>
    %680 = arith.addf %678, %679 : vector<19x64xf32>
    %681 = arith.truncf %680 : vector<19x64xf32> to vector<19x64xbf16>
    %c1_538 = arith.constant 1 : index
    %c0_539 = arith.constant 0 : index
    %c0_540 = arith.constant 0 : index
    %682 = vector.load %arg20[%c1_538, %c0_539, %c0_540] : memref<2x64x128xbf16, #tpu.memory_space<vmem>>, vector<1x64x128xbf16>
    %683 = vector.shape_cast %682 : vector<1x64x128xbf16> to vector<64x128xbf16>
    %cst_541 = arith.constant dense<0.000000e+00> : vector<19x128xf32>
    %684 = tpu.matmul %681, %683, %cst_541 {dimension_numbers = #tpu.dot_dimension_numbers<[1], [0], [0], [1], [0, 0, 1, 1], [], []>} : vector<19x64xbf16>, vector<64x128xbf16>, vector<19x128xf32> -> vector<19x128xf32>
    %c1_542 = arith.constant 1 : index
    %c0_543 = arith.constant 0 : index
    %c0_544 = arith.constant 0 : index
    %685 = vector.load %arg21[%c1_542, %c0_543, %c0_544] : memref<2x1x128xf32, #tpu.memory_space<vmem>>, vector<1x1x128xf32>
    %686 = vector.shape_cast %685 : vector<1x1x128xf32> to vector<1x128xf32>
    %687 = vector.broadcast %686 : vector<1x128xf32> to vector<19x128xf32>
    %688 = arith.addf %684, %687 : vector<19x128xf32>
    %689 = arith.mulf %688, %688 : vector<19x128xf32>
    %690 = arith.mulf %688, %689 : vector<19x128xf32>
    %cst_545 = arith.constant 4.471500e-02 : f32
    %691 = vector.broadcast %cst_545 : f32 to vector<19x128xf32>
    %692 = arith.mulf %691, %690 : vector<19x128xf32>
    %693 = arith.addf %688, %692 : vector<19x128xf32>
    %cst_546 = arith.constant 0.797884583 : f32
    %694 = vector.broadcast %cst_546 : f32 to vector<19x128xf32>
    %695 = arith.mulf %694, %693 : vector<19x128xf32>
    %696 = math.tanh %695 : vector<19x128xf32>
    %cst_547 = arith.constant 1.000000e+00 : f32
    %697 = vector.broadcast %cst_547 : f32 to vector<19x128xf32>
    %698 = arith.addf %697, %696 : vector<19x128xf32>
    %cst_548 = arith.constant 5.000000e-01 : f32
    %699 = vector.broadcast %cst_548 : f32 to vector<19x128xf32>
    %700 = arith.mulf %699, %698 : vector<19x128xf32>
    %701 = arith.mulf %688, %700 : vector<19x128xf32>
    %702 = arith.truncf %701 : vector<19x128xf32> to vector<19x128xbf16>
    %c1_549 = arith.constant 1 : index
    %c0_550 = arith.constant 0 : index
    %c0_551 = arith.constant 0 : index
    %703 = vector.load %arg22[%c1_549, %c0_550, %c0_551] : memref<2x128x64xbf16, #tpu.memory_space<vmem>>, vector<1x128x64xbf16>
    %704 = vector.shape_cast %703 : vector<1x128x64xbf16> to vector<128x64xbf16>
    %cst_552 = arith.constant dense<0.000000e+00> : vector<19x64xf32>
    %705 = tpu.matmul %702, %704, %cst_552 {dimension_numbers = #tpu.dot_dimension_numbers<[1], [0], [0], [1], [0, 0, 1, 1], [], []>} : vector<19x128xbf16>, vector<128x64xbf16>, vector<19x64xf32> -> vector<19x64xf32>
    %c1_553 = arith.constant 1 : index
    %c0_554 = arith.constant 0 : index
    %c0_555 = arith.constant 0 : index
    %706 = vector.load %arg23[%c1_553, %c0_554, %c0_555] : memref<2x1x64xf32, #tpu.memory_space<vmem>>, vector<1x1x64xf32>
    %707 = vector.shape_cast %706 : vector<1x1x64xf32> to vector<1x64xf32>
    %708 = vector.broadcast %707 : vector<1x64xf32> to vector<19x64xf32>
    %709 = arith.addf %705, %708 : vector<19x64xf32>
    %710 = arith.addf %680, %709 : vector<19x64xf32>
    %c1_556 = arith.constant 1 : index
    %c0_557 = arith.constant 0 : index
    %c0_558 = arith.constant 0 : index
    %c0_559 = arith.constant 0 : index
    %711 = vector.load %arg24[%c1_556, %c0_557, %c0_558, %c0_559] : memref<2x2x1x64xf32, #tpu.memory_space<vmem>>, vector<1x1x1x64xf32>
    %712 = vector.shape_cast %711 : vector<1x1x1x64xf32> to vector<1x64xf32>
    %c1_560 = arith.constant 1 : index
    %c1_561 = arith.constant 1 : index
    %c0_562 = arith.constant 0 : index
    %c0_563 = arith.constant 0 : index
    %713 = vector.load %arg24[%c1_560, %c1_561, %c0_562, %c0_563] : memref<2x2x1x64xf32, #tpu.memory_space<vmem>>, vector<1x1x1x64xf32>
    %714 = vector.shape_cast %713 : vector<1x1x1x64xf32> to vector<1x64xf32>
    %cst_564 = arith.constant dense<0.000000e+00> : vector<19xf32>
    %715 = vector.multi_reduction <add>, %710, %cst_564 [1] : vector<19x64xf32> to vector<19xf32>
    %716 = vector.shape_cast %715 : vector<19xf32> to vector<19x1xf32>
    %cst_565 = arith.constant 6.400000e+01 : f32
    %717 = vector.broadcast %cst_565 : f32 to vector<19x1xf32>
    %718 = arith.divf %716, %717 : vector<19x1xf32>
    %719 = vector.broadcast %718 : vector<19x1xf32> to vector<19x64xf32>
    %720 = arith.subf %710, %719 : vector<19x64xf32>
    %721 = arith.mulf %720, %720 : vector<19x64xf32>
    %cst_566 = arith.constant dense<0.000000e+00> : vector<19xf32>
    %722 = vector.multi_reduction <add>, %721, %cst_566 [1] : vector<19x64xf32> to vector<19xf32>
    %723 = vector.shape_cast %722 : vector<19xf32> to vector<19x1xf32>
    %cst_567 = arith.constant 6.400000e+01 : f32
    %724 = vector.broadcast %cst_567 : f32 to vector<19x1xf32>
    %725 = arith.divf %723, %724 : vector<19x1xf32>
    %726 = vector.broadcast %718 : vector<19x1xf32> to vector<19x64xf32>
    %727 = arith.subf %710, %726 : vector<19x64xf32>
    %cst_568 = arith.constant 9.99999974E-6 : f32
    %728 = vector.broadcast %cst_568 : f32 to vector<19x1xf32>
    %729 = arith.addf %725, %728 : vector<19x1xf32>
    %730 = math.rsqrt %729 : vector<19x1xf32>
    %731 = vector.broadcast %730 : vector<19x1xf32> to vector<19x64xf32>
    %732 = arith.mulf %727, %731 : vector<19x64xf32>
    %733 = vector.broadcast %712 : vector<1x64xf32> to vector<19x64xf32>
    %734 = arith.mulf %732, %733 : vector<19x64xf32>
    %735 = vector.broadcast %714 : vector<1x64xf32> to vector<19x64xf32>
    %736 = arith.addf %734, %735 : vector<19x64xf32>
    %c0_569 = arith.constant 0 : index
    %c0_570 = arith.constant 0 : index
    %c0_571 = arith.constant 0 : index
    %737 = vector.load %arg25[%c0_569, %c0_570, %c0_571] : memref<1x19x64xf32, #tpu.memory_space<vmem>>, vector<1x19x64xf32>
    %738 = vector.shape_cast %737 : vector<1x19x64xf32> to vector<19x64xf32>
    %739 = vector.shape_cast %736 : vector<19x64xf32> to vector<1x19x64xf32>
    tpu.vector_store %arg25[%c0_569, %c0_570, %c0_571], %739 {strides = array<i32>} : memref<1x19x64xf32, #tpu.memory_space<vmem>>, vector<1x19x64xf32>,
    return
  }
  func.func @transform_0(%arg0: i32) -> (i32, i32, i32) {
    %c0_i32 = arith.constant 0 : i32
    %c0_i32_0 = arith.constant 0 : i32
    %c0_i32_1 = arith.constant 0 : i32
    return %arg0, %c0_i32, %c0_i32_0 : i32, i32, i32
  }
  func.func @transform_1(%arg0: i32) -> (i32, i32) {
    %c0_i32 = arith.constant 0 : i32
    %c0_i32_0 = arith.constant 0 : i32
    %c0_i32_1 = arith.constant 0 : i32
    return %c0_i32, %c0_i32_0 : i32, i32
  }
  func.func @transform_2(%arg0: i32) -> (i32, i32) {
    %c0_i32 = arith.constant 0 : i32
    %c0_i32_0 = arith.constant 0 : i32
    %c0_i32_1 = arith.constant 0 : i32
    return %c0_i32, %c0_i32_0 : i32, i32
  }
  func.func @transform_3(%arg0: i32) -> (i32, i32, i32) {
    %c0_i32 = arith.constant 0 : i32
    %c0_i32_0 = arith.constant 0 : i32
    %c0_i32_1 = arith.constant 0 : i32
    %c0_i32_2 = arith.constant 0 : i32
    return %c0_i32, %c0_i32_0, %c0_i32_1 : i32, i32, i32
  }
  func.func @transform_4(%arg0: i32) -> (i32, i32, i32) {
    %c0_i32 = arith.constant 0 : i32
    %c0_i32_0 = arith.constant 0 : i32
    %c0_i32_1 = arith.constant 0 : i32
    %c0_i32_2 = arith.constant 0 : i32
    return %c0_i32, %c0_i32_0, %c0_i32_1 : i32, i32, i32
  }
  func.func @transform_5(%arg0: i32) -> (i32, i32) {
    %c0_i32 = arith.constant 0 : i32
    %c0_i32_0 = arith.constant 0 : i32
    %c0_i32_1 = arith.constant 0 : i32
    return %c0_i32, %c0_i32_0 : i32, i32
  }
  func.func @transform_6(%arg0: i32) -> (i32, i32, i32) {
    %c0_i32 = arith.constant 0 : i32
    %c0_i32_0 = arith.constant 0 : i32
    %c0_i32_1 = arith.constant 0 : i32
    %c0_i32_2 = arith.constant 0 : i32
    return %c0_i32, %c0_i32_0, %c0_i32_1 : i32, i32, i32
  }
  func.func @transform_7(%arg0: i32) -> (i32, i32) {
    %c0_i32 = arith.constant 0 : i32
    %c0_i32_0 = arith.constant 0 : i32
    %c0_i32_1 = arith.constant 0 : i32
    return %c0_i32, %c0_i32_0 : i32, i32
  }
  func.func @transform_8(%arg0: i32) -> (i32, i32, i32) {
    %c0_i32 = arith.constant 0 : i32
    %c0_i32_0 = arith.constant 0 : i32
    %c0_i32_1 = arith.constant 0 : i32
    %c0_i32_2 = arith.constant 0 : i32
    return %c0_i32, %c0_i32_0, %c0_i32_1 : i32, i32, i32
  }
  func.func @transform_9(%arg0: i32) -> (i32, i32) {
    %c0_i32 = arith.constant 0 : i32
    %c0_i32_0 = arith.constant 0 : i32
    %c0_i32_1 = arith.constant 0 : i32
    return %c0_i32, %c0_i32_0 : i32, i32
  }
  func.func @transform_10(%arg0: i32) -> (i32, i32) {
    %c0_i32 = arith.constant 0 : i32
    %c0_i32_0 = arith.constant 0 : i32
    %c0_i32_1 = arith.constant 0 : i32
    return %c0_i32, %c0_i32_0 : i32, i32
  }
  func.func @transform_11(%arg0: i32) -> (i32, i32, i32) {
    %c0_i32 = arith.constant 0 : i32
    %c0_i32_0 = arith.constant 0 : i32
    %c0_i32_1 = arith.constant 0 : i32
    %c0_i32_2 = arith.constant 0 : i32
    return %c0_i32, %c0_i32_0, %c0_i32_1 : i32, i32, i32
  }
  func.func @transform_12(%arg0: i32) -> (i32, i32) {
    %c0_i32 = arith.constant 0 : i32
    %c0_i32_0 = arith.constant 0 : i32
    %c0_i32_1 = arith.constant 0 : i32
    return %c0_i32, %c0_i32_0 : i32, i32
  }
  func.func @transform_13(%arg0: i32) -> (i32, i32, i32) {
    %c0_i32 = arith.constant 0 : i32
    %c0_i32_0 = arith.constant 0 : i32
    %c0_i32_1 = arith.constant 0 : i32
    %c0_i32_2 = arith.constant 0 : i32
    return %c0_i32, %c0_i32_0, %c0_i32_1 : i32, i32, i32
  }
  func.func @transform_14(%arg0: i32) -> (i32, i32, i32, i32, i32) {
    %c0_i32 = arith.constant 0 : i32
    %c0_i32_0 = arith.constant 0 : i32
    %c0_i32_1 = arith.constant 0 : i32
    %c0_i32_2 = arith.constant 0 : i32
    %c0_i32_3 = arith.constant 0 : i32
    %c0_i32_4 = arith.constant 0 : i32
    return %c0_i32, %c0_i32_0, %c0_i32_1, %c0_i32_2, %c0_i32_3 : i32, i32, i32, i32, i32
  }
  func.func @transform_15(%arg0: i32) -> (i32, i32, i32, i32, i32) {
    %c0_i32 = arith.constant 0 : i32
    %c0_i32_0 = arith.constant 0 : i32
    %c0_i32_1 = arith.constant 0 : i32
    %c0_i32_2 = arith.constant 0 : i32
    %c0_i32_3 = arith.constant 0 : i32
    %c0_i32_4 = arith.constant 0 : i32
    return %c0_i32, %c0_i32_0, %c0_i32_1, %c0_i32_2, %c0_i32_3 : i32, i32, i32, i32, i32
  }
  func.func @transform_16(%arg0: i32) -> (i32, i32, i32, i32) {
    %c0_i32 = arith.constant 0 : i32
    %c0_i32_0 = arith.constant 0 : i32
    %c0_i32_1 = arith.constant 0 : i32
    %c0_i32_2 = arith.constant 0 : i32
    %c0_i32_3 = arith.constant 0 : i32
    return %c0_i32, %c0_i32_0, %c0_i32_1, %c0_i32_2 : i32, i32, i32, i32
  }
  func.func @transform_17(%arg0: i32) -> (i32, i32, i32) {
    %c0_i32 = arith.constant 0 : i32
    %c0_i32_0 = arith.constant 0 : i32
    %c0_i32_1 = arith.constant 0 : i32
    %c0_i32_2 = arith.constant 0 : i32
    return %c0_i32, %c0_i32_0, %c0_i32_1 : i32, i32, i32
  }
  func.func @transform_18(%arg0: i32) -> (i32, i32, i32, i32) {
    %c0_i32 = arith.constant 0 : i32
    %c0_i32_0 = arith.constant 0 : i32
    %c0_i32_1 = arith.constant 0 : i32
    %c0_i32_2 = arith.constant 0 : i32
    %c0_i32_3 = arith.constant 0 : i32
    return %c0_i32, %c0_i32_0, %c0_i32_1, %c0_i32_2 : i32, i32, i32, i32
  }
  func.func @transform_19(%arg0: i32) -> (i32, i32, i32) {
    %c0_i32 = arith.constant 0 : i32
    %c0_i32_0 = arith.constant 0 : i32
    %c0_i32_1 = arith.constant 0 : i32
    %c0_i32_2 = arith.constant 0 : i32
    return %c0_i32, %c0_i32_0, %c0_i32_1 : i32, i32, i32
  }
  func.func @transform_20(%arg0: i32) -> (i32, i32, i32) {
    %c0_i32 = arith.constant 0 : i32
    %c0_i32_0 = arith.constant 0 : i32
    %c0_i32_1 = arith.constant 0 : i32
    %c0_i32_2 = arith.constant 0 : i32
    return %c0_i32, %c0_i32_0, %c0_i32_1 : i32, i32, i32
  }
  func.func @transform_21(%arg0: i32) -> (i32, i32, i32) {
    %c0_i32 = arith.constant 0 : i32
    %c0_i32_0 = arith.constant 0 : i32
    %c0_i32_1 = arith.constant 0 : i32
    %c0_i32_2 = arith.constant 0 : i32
    return %c0_i32, %c0_i32_0, %c0_i32_1 : i32, i32, i32
  }
  func.func @transform_22(%arg0: i32) -> (i32, i32, i32) {
    %c0_i32 = arith.constant 0 : i32
    %c0_i32_0 = arith.constant 0 : i32
    %c0_i32_1 = arith.constant 0 : i32
    %c0_i32_2 = arith.constant 0 : i32
    return %c0_i32, %c0_i32_0, %c0_i32_1 : i32, i32, i32
  }
  func.func @transform_23(%arg0: i32) -> (i32, i32, i32, i32) {
    %c0_i32 = arith.constant 0 : i32
    %c0_i32_0 = arith.constant 0 : i32
    %c0_i32_1 = arith.constant 0 : i32
    %c0_i32_2 = arith.constant 0 : i32
    %c0_i32_3 = arith.constant 0 : i32
    return %c0_i32, %c0_i32_0, %c0_i32_1, %c0_i32_2 : i32, i32, i32, i32
  }
  func.func @transform_24(%arg0: i32) -> (i32, i32, i32) {
    %c0_i32 = arith.constant 0 : i32
    %c0_i32_0 = arith.constant 0 : i32
    %c0_i32_1 = arith.constant 0 : i32
    return %arg0, %c0_i32, %c0_i32_0 : i32, i32, i32
  }
}

</mosaic_0001>

<llo_original>
// kernel: custom_hubert_forward.1
$region0: #{custom_hubert_forward.1}
  #allocation0 [shape = 'u32[]', space=smem, size = 0x4, offset = 0x4, fixed_abs, tag = 'smem constant byte address 0x4 - core index']
  #allocation1 [shape = 'u32[72,128]{1,0:T(1,128)}', space=vmem, size = 0x9000, scoped, tag = 'internal scratch']
  #allocation2 [shape = 'f32[79,32]{1,0:T(8,128)}', space=vmem, size = 0xa000, scoped, tag = 'scratch operand']
  #allocation3 [shape = 'f32[39,32]{1,0:T(8,128)}', space=vmem, size = 0x5000, scoped, tag = 'scratch operand']
  #allocation4 [shape = 'f32[23,64]{1,0:T(8,128)}', space=vmem, size = 0x3000, scoped, tag = 'scratch operand']
  %s0 = inlined_call_operand.vmem [shape: f32[2,80,5], index: 0, kind: input, shape index: {}]
  %s1 = inlined_call_operand.vmem [shape: f32[10,32], index: 1, kind: input, shape index: {}]
  %s2 = inlined_call_operand.vmem [shape: f32[1,32], index: 2, kind: input, shape index: {}]
  %s3 = inlined_call_operand.vmem [shape: f32[2,1,32], index: 3, kind: input, shape index: {}]
  %s4 = inlined_call_operand.vmem [shape: f32[3,32,32], index: 4, kind: input, shape index: {}]
  %s5 = inlined_call_operand.vmem [shape: f32[1,32], index: 5, kind: input, shape index: {}]
  %s6 = inlined_call_operand.vmem [shape: f32[2,32,32], index: 6, kind: input, shape index: {}]
  %s7 = inlined_call_operand.vmem [shape: f32[1,32], index: 7, kind: input, shape index: {}]
  %s8 = inlined_call_operand.vmem [shape: f32[2,1,32], index: 8, kind: input, shape index: {}]
  %s9 = inlined_call_operand.vmem [shape: bf16[32,64], index: 9, kind: input, shape index: {}]
  %s10 = inlined_call_operand.vmem [shape: f32[1,64], index: 10, kind: input, shape index: {}]
  %s11 = inlined_call_operand.vmem [shape: bf16[5,64,64], index: 11, kind: input, shape index: {}]
  %s12 = inlined_call_operand.vmem [shape: f32[1,64], index: 12, kind: input, shape index: {}]
  %s13 = inlined_call_operand.vmem [shape: f32[2,1,64], index: 13, kind: input, shape index: {}]
  %s14 = inlined_call_operand.vmem [shape: bf16[2,3,4,64,16], index: 14, kind: input, shape index: {}]
  %s15 = inlined_call_operand.vmem [shape: f32[2,3,4,1,16], index: 15, kind: input, shape index: {}]
  %s16 = inlined_call_operand.vmem [shape: bf16[2,4,16,64], index: 16, kind: input, shape index: {}]
  %s17 = inlined_call_operand.vmem [shape: f32[2,1,64], index: 17, kind: input, shape index: {}]
  %s18 = inlined_call_operand.vmem [shape: f32[2,2,1,64], index: 18, kind: input, shape index: {}]
  %s19 = inlined_call_operand.vmem [shape: bf16[2,64,128], index: 19, kind: input, shape index: {}]
  %s20 = inlined_call_operand.vmem [shape: f32[2,1,128], index: 20, kind: input, shape index: {}]
  %s21 = inlined_call_operand.vmem [shape: bf16[2,128,64], index: 21, kind: input, shape index: {}]
  %s22 = inlined_call_operand.vmem [shape: f32[2,1,64], index: 22, kind: input, shape index: {}]
  %s23 = inlined_call_operand.vmem [shape: f32[2,2,1,64], index: 23, kind: input, shape index: {}]
  %s24 = inlined_call_operand.vmem [shape: f32[2,19,64], index: 24, kind: output, shape index: {}]
  %s25 = sld [smem:[#allocation0]]
  $region129: #{custom_hubert_forward.1} parent=0
    _
  %s27 = ssub.s32 1, %s25
  %s28 = scalar_select 0, %s27, %s25
  loop: start=0, step=1, limit=4
  $region2: #{custom_hubert_forward.1} parent=0 // loop_pre_header
    _
  $region3: #{custom_hubert_forward.1} parent=0 // loop_header
    %s30 = sphi 0, %s34
    %p31 = scmp.ge.s32.totalorder %s30, 4
    %s40 = sphi 0, %s42
    %s43 = sphi 0, %s40
    %s44 = sphi 0, %s43
    %s60 = sphi 0, %s44
    %s64 = sphi 0, %s64
    %s66 = sphi 0, %s64
    %s67 = sphi 0, %s66
    %s81 = sphi 0, %s67
    %s85 = sphi 0, %s85
    %s87 = sphi 0, %s85
    %s88 = sphi 0, %s87
    %s102 = sphi 0, %s88
    %s106 = sphi 0, %s106
    %s108 = sphi 0, %s106
    %s109 = sphi 0, %s108
    %s123 = sphi 0, %s109
    %s127 = sphi 0, %s127
    %s129 = sphi 0, %s127
    %s130 = sphi 0, %s129
    %s144 = sphi 0, %s130
    %s148 = sphi 0, %s148
    %s150 = sphi 0, %s148
    %s151 = sphi 0, %s150
    %s165 = sphi 0, %s151
    %s169 = sphi 0, %s169
    %s171 = sphi 0, %s169
    %s172 = sphi 0, %s171
    %s186 = sphi 0, %s172
    %s190 = sphi 0, %s190
    %s192 = sphi 0, %s190
    %s193 = sphi 0, %s192
    %s207 = sphi 0, %s193
    %s211 = sphi 0, %s211
    %s213 = sphi 0, %s211
    %s214 = sphi 0, %s213
    %s228 = sphi 0, %s214
    %s232 = sphi 0, %s232
    %s234 = sphi 0, %s232
    %s235 = sphi 0, %s234
    %s249 = sphi 0, %s235
    %s253 = sphi 0, %s253
    %s255 = sphi 0, %s253
    %s256 = sphi 0, %s255
    %s270 = sphi 0, %s256
    %s274 = sphi 0, %s274
    %s276 = sphi 0, %s274
    %s277 = sphi 0, %s276
    %s291 = sphi 0, %s277
    %s295 = sphi 0, %s295
    %s297 = sphi 0, %s295
    %s298 = sphi 0, %s297
    %s312 = sphi 0, %s298
    %s316 = sphi 0, %s316
    %s318 = sphi 0, %s316
    %s319 = sphi 0, %s318
    %s333 = sphi 0, %s319
    %s337 = sphi 0, %s337
    %s339 = sphi 0, %s337
    %s340 = sphi 0, %s339
    %s354 = sphi 0, %s340
    %s358 = sphi 0, %s358
    %s360 = sphi 0, %s358
    %s361 = sphi 0, %s360
    %s375 = sphi 0, %s361
    %s379 = sphi 0, %s379
    %s381 = sphi 0, %s379
    %s382 = sphi 0, %s381
    %s396 = sphi 0, %s382
    %s400 = sphi 0, %s400
    %s402 = sphi 0, %s400
    %s403 = sphi 0, %s402
    %s417 = sphi 0, %s403
    %s421 = sphi 0, %s421
    %s423 = sphi 0, %s421
    %s424 = sphi 0, %s423
    %s438 = sphi 0, %s424
    %s442 = sphi 0, %s442
    %s444 = sphi 0, %s442
    %s445 = sphi 0, %s444
    %s459 = sphi 0, %s445
    %s463 = sphi 0, %s463
    %s465 = sphi 0, %s463
    %s466 = sphi 0, %s465
    %s480 = sphi 0, %s466
    %s484 = sphi 0, %s484
    %s486 = sphi 0, %s484
    %s487 = sphi 0, %s486
    %s501 = sphi 0, %s487
    %s505 = sphi 0, %s505
    %s507 = sphi 0, %s505
    %s508 = sphi 0, %s507
    %s522 = sphi 0, %s508
    %s526 = sphi 0, %s526
    %s528 = sphi 0, %s526
    %s529 = sphi 0, %s528
    %s543 = sphi 0, %s529
    %s549 = sphi 0, %s551
    %s552 = sphi 0, %s549
    %s553 = sphi 0, %s552
    %s569 = sphi 0, %s553
  $region4: #{custom_hubert_forward.1} parent=0 // loop_header_branch
    %33 = sbr.rel (%p31) target = $region8
  $region5: #{custom_hubert_forward.1} parent=0 // loop_body
    %s35 = ssub.s32 %s30, 1
    %s36 = ssub.s32 %s30, 2
    %s37 = sadd.s32 %s30, 1
    %s38 = ssub.s32 %s30, %s37
    %p39 = scmp.eq.s32.totalorder %s38, 0
    %s41 = sadd.s32 %s40, 1
    %s42 = scalar_select %p39, %s40, %s41
    %p45 = pneg %p39
    %p46 = scmp.eq.s32.totalorder %s30, 1
    %p47 = por %p45, %p46
    %p48 = scmp.ne.s32.totalorder %s40, %s43
    %p49 = scmp.eq.s32.totalorder %s30, 0
    %p50 = por %p48, %p49
    %p51 = scmp.ne.s32.totalorder %s40, %s43
    %p52 = scmp.eq.s32.totalorder %s35, 1
    %p53 = por %p51, %p52
    %p54 = scmp.ne.s32.totalorder %s43, %s44
    %p55 = scmp.eq.s32.totalorder %s35, 0
    %p56 = por %p54, %p55
    %p57 = scmp.ne.s32.totalorder %s43, %s44
    %p58 = scmp.eq.s32.totalorder %s36, 1
    %p59 = por %p57, %p58
    %p61 = scmp.ne.s32.totalorder %s44, %s60
    %p62 = scmp.eq.s32.totalorder %s36, 0
    %p63 = por %p61, %p62
    %s65 = sadd.s32 %s64, 1
    %p68 = scmp.eq.s32.totalorder %s30, 1
    %p69 = scmp.ne.s32.totalorder %s64, %s66
    %p70 = scmp.eq.s32.totalorder %s30, 0
    %p71 = por %p69, %p70
    %p72 = scmp.ne.s32.totalorder %s64, %s66
    %p73 = scmp.eq.s32.totalorder %s35, 1
    %p74 = por %p72, %p73
    %p75 = scmp.ne.s32.totalorder %s66, %s67
    %p76 = scmp.eq.s32.totalorder %s35, 0
    %p77 = por %p75, %p76
    %p78 = scmp.ne.s32.totalorder %s66, %s67
    %p79 = scmp.eq.s32.totalorder %s36, 1
    %p80 = por %p78, %p79
    %p82 = scmp.ne.s32.totalorder %s67, %s81
    %p83 = scmp.eq.s32.totalorder %s36, 0
    %p84 = por %p82, %p83
    %s86 = sadd.s32 %s85, 1
    %p89 = scmp.eq.s32.totalorder %s30, 1
    %p90 = scmp.ne.s32.totalorder %s85, %s87
    %p91 = scmp.eq.s32.totalorder %s30, 0
    %p92 = por %p90, %p91
    %p93 = scmp.ne.s32.totalorder %s85, %s87
    %p94 = scmp.eq.s32.totalorder %s35, 1
    %p95 = por %p93, %p94
    %p96 = scmp.ne.s32.totalorder %s87, %s88
    %p97 = scmp.eq.s32.totalorder %s35, 0
    %p98 = por %p96, %p97
    %p99 = scmp.ne.s32.totalorder %s87, %s88
    %p100 = scmp.eq.s32.totalorder %s36, 1
    %p101 = por %p99, %p100
    %p103 = scmp.ne.s32.totalorder %s88, %s102
    %p104 = scmp.eq.s32.totalorder %s36, 0
    %p105 = por %p103, %p104
    %s107 = sadd.s32 %s106, 1
    %p110 = scmp.eq.s32.totalorder %s30, 1
    %p111 = scmp.ne.s32.totalorder %s106, %s108
    %p112 = scmp.eq.s32.totalorder %s30, 0
    %p113 = por %p111, %p112
    %p114 = scmp.ne.s32.totalorder %s106, %s108
    %p115 = scmp.eq.s32.totalorder %s35, 1
    %p116 = por %p114, %p115
    %p117 = scmp.ne.s32.totalorder %s108, %s109
    %p118 = scmp.eq.s32.totalorder %s35, 0
    %p119 = por %p117, %p118
    %p120 = scmp.ne.s32.totalorder %s108, %s109
    %p121 = scmp.eq.s32.totalorder %s36, 1
    %p122 = por %p120, %p121
    %p124 = scmp.ne.s32.totalorder %s109, %s123
    %p125 = scmp.eq.s32.totalorder %s36, 0
    %p126 = por %p124, %p125
    %s128 = sadd.s32 %s127, 1
    %p131 = scmp.eq.s32.totalorder %s30, 1
    %p132 = scmp.ne.s32.totalorder %s127, %s129
    %p133 = scmp.eq.s32.totalorder %s30, 0
    %p134 = por %p132, %p133
    %p135 = scmp.ne.s32.totalorder %s127, %s129
    %p136 = scmp.eq.s32.totalorder %s35, 1
    %p137 = por %p135, %p136
    %p138 = scmp.ne.s32.totalorder %s129, %s130
    %p139 = scmp.eq.s32.totalorder %s35, 0
    %p140 = por %p138, %p139
    %p141 = scmp.ne.s32.totalorder %s129, %s130
    %p142 = scmp.eq.s32.totalorder %s36, 1
    %p143 = por %p141, %p142
    %p145 = scmp.ne.s32.totalorder %s130, %s144
    %p146 = scmp.eq.s32.totalorder %s36, 0
    %p147 = por %p145, %p146
    %s149 = sadd.s32 %s148, 1
    %p152 = scmp.eq.s32.totalorder %s30, 1
    %p153 = scmp.ne.s32.totalorder %s148, %s150
    %p154 = scmp.eq.s32.totalorder %s30, 0
    %p155 = por %p153, %p154
    %p156 = scmp.ne.s32.totalorder %s148, %s150
    %p157 = scmp.eq.s32.totalorder %s35, 1
    %p158 = por %p156, %p157
    %p159 = scmp.ne.s32.totalorder %s150, %s151
    %p160 = scmp.eq.s32.totalorder %s35, 0
    %p161 = por %p159, %p160
    %p162 = scmp.ne.s32.totalorder %s150, %s151
    %p163 = scmp.eq.s32.totalorder %s36, 1
    %p164 = por %p162, %p163
    %p166 = scmp.ne.s32.totalorder %s151, %s165
    %p167 = scmp.eq.s32.totalorder %s36, 0
    %p168 = por %p166, %p167
    %s170 = sadd.s32 %s169, 1
    %p173 = scmp.eq.s32.totalorder %s30, 1
    %p174 = scmp.ne.s32.totalorder %s169, %s171
    %p175 = scmp.eq.s32.totalorder %s30, 0
    %p176 = por %p174, %p175
    %p177 = scmp.ne.s32.totalorder %s169, %s171
    %p178 = scmp.eq.s32.totalorder %s35, 1
    %p179 = por %p177, %p178
    %p180 = scmp.ne.s32.totalorder %s171, %s172
    %p181 = scmp.eq.s32.totalorder %s35, 0
    %p182 = por %p180, %p181
    %p183 = scmp.ne.s32.totalorder %s171, %s172
    %p184 = scmp.eq.s32.totalorder %s36, 1
    %p185 = por %p183, %p184
    %p187 = scmp.ne.s32.totalorder %s172, %s186
    %p188 = scmp.eq.s32.totalorder %s36, 0
    %p189 = por %p187, %p188
    %s191 = sadd.s32 %s190, 1
    %p194 = scmp.eq.s32.totalorder %s30, 1
    %p195 = scmp.ne.s32.totalorder %s190, %s192
    %p196 = scmp.eq.s32.totalorder %s30, 0
    %p197 = por %p195, %p196
    %p198 = scmp.ne.s32.totalorder %s190, %s192
    %p199 = scmp.eq.s32.totalorder %s35, 1
    %p200 = por %p198, %p199
    %p201 = scmp.ne.s32.totalorder %s192, %s193
    %p202 = scmp.eq.s32.totalorder %s35, 0
    %p203 = por %p201, %p202
    %p204 = scmp.ne.s32.totalorder %s192, %s193
    %p205 = scmp.eq.s32.totalorder %s36, 1
    %p206 = por %p204, %p205
    %p208 = scmp.ne.s32.totalorder %s193, %s207
    %p209 = scmp.eq.s32.totalorder %s36, 0
    %p210 = por %p208, %p209
    %s212 = sadd.s32 %s211, 1
    %p215 = scmp.eq.s32.totalorder %s30, 1
    %p216 = scmp.ne.s32.totalorder %s211, %s213
    %p217 = scmp.eq.s32.totalorder %s30, 0
    %p218 = por %p216, %p217
    %p219 = scmp.ne.s32.totalorder %s211, %s213
    %p220 = scmp.eq.s32.totalorder %s35, 1
    %p221 = por %p219, %p220
    %p222 = scmp.ne.s32.totalorder %s213, %s214
    %p223 = scmp.eq.s32.totalorder %s35, 0
    %p224 = por %p222, %p223
    %p225 = scmp.ne.s32.totalorder %s213, %s214
    %p226 = scmp.eq.s32.totalorder %s36, 1
    %p227 = por %p225, %p226
    %p229 = scmp.ne.s32.totalorder %s214, %s228
    %p230 = scmp.eq.s32.totalorder %s36, 0
    %p231 = por %p229, %p230
    %s233 = sadd.s32 %s232, 1
    %p236 = scmp.eq.s32.totalorder %s30, 1
    %p237 = scmp.ne.s32.totalorder %s232, %s234
    %p238 = scmp.eq.s32.totalorder %s30, 0
    %p239 = por %p237, %p238
    %p240 = scmp.ne.s32.totalorder %s232, %s234
    %p241 = scmp.eq.s32.totalorder %s35, 1
    %p242 = por %p240, %p241
    %p243 = scmp.ne.s32.totalorder %s234, %s235
    %p244 = scmp.eq.s32.totalorder %s35, 0
    %p245 = por %p243, %p244
    %p246 = scmp.ne.s32.totalorder %s234, %s235
    %p247 = scmp.eq.s32.totalorder %s36, 1
    %p248 = por %p246, %p247
    %p250 = scmp.ne.s32.totalorder %s235, %s249
    %p251 = scmp.eq.s32.totalorder %s36, 0
    %p252 = por %p250, %p251
    %s254 = sadd.s32 %s253, 1
    %p257 = scmp.eq.s32.totalorder %s30, 1
    %p258 = scmp.ne.s32.totalorder %s253, %s255
    %p259 = scmp.eq.s32.totalorder %s30, 0
    %p260 = por %p258, %p259
    %p261 = scmp.ne.s32.totalorder %s253, %s255
    %p262 = scmp.eq.s32.totalorder %s35, 1
    %p263 = por %p261, %p262
    %p264 = scmp.ne.s32.totalorder %s255, %s256
    %p265 = scmp.eq.s32.totalorder %s35, 0
    %p266 = por %p264, %p265
    %p267 = scmp.ne.s32.totalorder %s255, %s256
    %p268 = scmp.eq.s32.totalorder %s36, 1
    %p269 = por %p267, %p268
    %p271 = scmp.ne.s32.totalorder %s256, %s270
    %p272 = scmp.eq.s32.totalorder %s36, 0
    %p273 = por %p271, %p272
    %s275 = sadd.s32 %s274, 1
    %p278 = scmp.eq.s32.totalorder %s30, 1
    %p279 = scmp.ne.s32.totalorder %s274, %s276
    %p280 = scmp.eq.s32.totalorder %s30, 0
    %p281 = por %p279, %p280
    %p282 = scmp.ne.s32.totalorder %s274, %s276
    %p283 = scmp.eq.s32.totalorder %s35, 1
    %p284 = por %p282, %p283
    %p285 = scmp.ne.s32.totalorder %s276, %s277
    %p286 = scmp.eq.s32.totalorder %s35, 0
    %p287 = por %p285, %p286
    %p288 = scmp.ne.s32.totalorder %s276, %s277
    %p289 = scmp.eq.s32.totalorder %s36, 1
    %p290 = por %p288, %p289
    %p292 = scmp.ne.s32.totalorder %s277, %s291
    %p293 = scmp.eq.s32.totalorder %s36, 0
    %p294 = por %p292, %p293
    %s296 = sadd.s32 %s295, 1
    %p299 = scmp.eq.s32.totalorder %s30, 1
    %p300 = scmp.ne.s32.totalorder %s295, %s297
    %p301 = scmp.eq.s32.totalorder %s30, 0
    %p302 = por %p300, %p301
    %p303 = scmp.ne.s32.totalorder %s295, %s297
    %p304 = scmp.eq.s32.totalorder %s35, 1
    %p305 = por %p303, %p304
    %p306 = scmp.ne.s32.totalorder %s297, %s298
    %p307 = scmp.eq.s32.totalorder %s35, 0
    %p308 = por %p306, %p307
    %p309 = scmp.ne.s32.totalorder %s297, %s298
    %p310 = scmp.eq.s32.totalorder %s36, 1
    %p311 = por %p309, %p310
    %p313 = scmp.ne.s32.totalorder %s298, %s312
    %p314 = scmp.eq.s32.totalorder %s36, 0
    %p315 = por %p313, %p314
    %s317 = sadd.s32 %s316, 1
    %p320 = scmp.eq.s32.totalorder %s30, 1
    %p321 = scmp.ne.s32.totalorder %s316, %s318
    %p322 = scmp.eq.s32.totalorder %s30, 0
    %p323 = por %p321, %p322
    %p324 = scmp.ne.s32.totalorder %s316, %s318
    %p325 = scmp.eq.s32.totalorder %s35, 1
    %p326 = por %p324, %p325
    %p327 = scmp.ne.s32.totalorder %s318, %s319
    %p328 = scmp.eq.s32.totalorder %s35, 0
    %p329 = por %p327, %p328
    %p330 = scmp.ne.s32.totalorder %s318, %s319
    %p331 = scmp.eq.s32.totalorder %s36, 1
    %p332 = por %p330, %p331
    %p334 = scmp.ne.s32.totalorder %s319, %s333
    %p335 = scmp.eq.s32.totalorder %s36, 0
    %p336 = por %p334, %p335
    %s338 = sadd.s32 %s337, 1
    %p341 = scmp.eq.s32.totalorder %s30, 1
    %p342 = scmp.ne.s32.totalorder %s337, %s339
    %p343 = scmp.eq.s32.totalorder %s30, 0
    %p344 = por %p342, %p343
    %p345 = scmp.ne.s32.totalorder %s337, %s339
    %p346 = scmp.eq.s32.totalorder %s35, 1
    %p347 = por %p345, %p346
    %p348 = scmp.ne.s32.totalorder %s339, %s340
    %p349 = scmp.eq.s32.totalorder %s35, 0
    %p350 = por %p348, %p349
    %p351 = scmp.ne.s32.totalorder %s339, %s340
    %p352 = scmp.eq.s32.totalorder %s36, 1
    %p353 = por %p351, %p352
    %p355 = scmp.ne.s32.totalorder %s340, %s354
    %p356 = scmp.eq.s32.totalorder %s36, 0
    %p357 = por %p355, %p356
    %s359 = sadd.s32 %s358, 1
    %p362 = scmp.eq.s32.totalorder %s30, 1
    %p363 = scmp.ne.s32.totalorder %s358, %s360
    %p364 = scmp.eq.s32.totalorder %s30, 0
    %p365 = por %p363, %p364
    %p366 = scmp.ne.s32.totalorder %s358, %s360
    %p367 = scmp.eq.s32.totalorder %s35, 1
    %p368 = por %p366, %p367
    %p369 = scmp.ne.s32.totalorder %s360, %s361
    %p370 = scmp.eq.s32.totalorder %s35, 0
    %p371 = por %p369, %p370
    %p372 = scmp.ne.s32.totalorder %s360, %s361
    %p373 = scmp.eq.s32.totalorder %s36, 1
    %p374 = por %p372, %p373
    %p376 = scmp.ne.s32.totalorder %s361, %s375
    %p377 = scmp.eq.s32.totalorder %s36, 0
    %p378 = por %p376, %p377
    %s380 = sadd.s32 %s379, 1
    %p383 = scmp.eq.s32.totalorder %s30, 1
    %p384 = scmp.ne.s32.totalorder %s379, %s381
    %p385 = scmp.eq.s32.totalorder %s30, 0
    %p386 = por %p384, %p385
    %p387 = scmp.ne.s32.totalorder %s379, %s381
    %p388 = scmp.eq.s32.totalorder %s35, 1
    %p389 = por %p387, %p388
    %p390 = scmp.ne.s32.totalorder %s381, %s382
    %p391 = scmp.eq.s32.totalorder %s35, 0
    %p392 = por %p390, %p391
    %p393 = scmp.ne.s32.totalorder %s381, %s382
    %p394 = scmp.eq.s32.totalorder %s36, 1
    %p395 = por %p393, %p394
    %p397 = scmp.ne.s32.totalorder %s382, %s396
    %p398 = scmp.eq.s32.totalorder %s36, 0
    %p399 = por %p397, %p398
    %s401 = sadd.s32 %s400, 1
    %p404 = scmp.eq.s32.totalorder %s30, 1
    %p405 = scmp.ne.s32.totalorder %s400, %s402
    %p406 = scmp.eq.s32.totalorder %s30, 0
    %p407 = por %p405, %p406
    %p408 = scmp.ne.s32.totalorder %s400, %s402
    %p409 = scmp.eq.s32.totalorder %s35, 1
    %p410 = por %p408, %p409
    %p411 = scmp.ne.s32.totalorder %s402, %s403
    %p412 = scmp.eq.s32.totalorder %s35, 0
    %p413 = por %p411, %p412
    %p414 = scmp.ne.s32.totalorder %s402, %s403
    %p415 = scmp.eq.s32.totalorder %s36, 1
    %p416 = por %p414, %p415
    %p418 = scmp.ne.s32.totalorder %s403, %s417
    %p419 = scmp.eq.s32.totalorder %s36, 0
    %p420 = por %p418, %p419
    %s422 = sadd.s32 %s421, 1
    %p425 = scmp.eq.s32.totalorder %s30, 1
    %p426 = scmp.ne.s32.totalorder %s421, %s423
    %p427 = scmp.eq.s32.totalorder %s30, 0
    %p428 = por %p426, %p427
    %p429 = scmp.ne.s32.totalorder %s421, %s423
    %p430 = scmp.eq.s32.totalorder %s35, 1
    %p431 = por %p429, %p430
    %p432 = scmp.ne.s32.totalorder %s423, %s424
    %p433 = scmp.eq.s32.totalorder %s35, 0
    %p434 = por %p432, %p433
    %p435 = scmp.ne.s32.totalorder %s423, %s424
    %p436 = scmp.eq.s32.totalorder %s36, 1
    %p437 = por %p435, %p436
    %p439 = scmp.ne.s32.totalorder %s424, %s438
    %p440 = scmp.eq.s32.totalorder %s36, 0
    %p441 = por %p439, %p440
    %s443 = sadd.s32 %s442, 1
    %p446 = scmp.eq.s32.totalorder %s30, 1
    %p447 = scmp.ne.s32.totalorder %s442, %s444
    %p448 = scmp.eq.s32.totalorder %s30, 0
    %p449 = por %p447, %p448
    %p450 = scmp.ne.s32.totalorder %s442, %s444
    %p451 = scmp.eq.s32.totalorder %s35, 1
    %p452 = por %p450, %p451
    %p453 = scmp.ne.s32.totalorder %s444, %s445
    %p454 = scmp.eq.s32.totalorder %s35, 0
    %p455 = por %p453, %p454
    %p456 = scmp.ne.s32.totalorder %s444, %s445
    %p457 = scmp.eq.s32.totalorder %s36, 1
    %p458 = por %p456, %p457
    %p460 = scmp.ne.s32.totalorder %s445, %s459
    %p461 = scmp.eq.s32.totalorder %s36, 0
    %p462 = por %p460, %p461
    %s464 = sadd.s32 %s463, 1
    %p467 = scmp.eq.s32.totalorder %s30, 1
    %p468 = scmp.ne.s32.totalorder %s463, %s465
    %p469 = scmp.eq.s32.totalorder %s30, 0
    %p470 = por %p468, %p469
    %p471 = scmp.ne.s32.totalorder %s463, %s465
    %p472 = scmp.eq.s32.totalorder %s35, 1
    %p473 = por %p471, %p472
    %p474 = scmp.ne.s32.totalorder %s465, %s466
    %p475 = scmp.eq.s32.totalorder %s35, 0
    %p476 = por %p474, %p475
    %p477 = scmp.ne.s32.totalorder %s465, %s466
    %p478 = scmp.eq.s32.totalorder %s36, 1
    %p479 = por %p477, %p478
    %p481 = scmp.ne.s32.totalorder %s466, %s480
    %p482 = scmp.eq.s32.totalorder %s36, 0
    %p483 = por %p481, %p482
    %s485 = sadd.s32 %s484, 1
    %p488 = scmp.eq.s32.totalorder %s30, 1
    %p489 = scmp.ne.s32.totalorder %s484, %s486
    %p490 = scmp.eq.s32.totalorder %s30, 0
    %p491 = por %p489, %p490
    %p492 = scmp.ne.s32.totalorder %s484, %s486
    %p493 = scmp.eq.s32.totalorder %s35, 1
    %p494 = por %p492, %p493
    %p495 = scmp.ne.s32.totalorder %s486, %s487
    %p496 = scmp.eq.s32.totalorder %s35, 0
    %p497 = por %p495, %p496
    %p498 = scmp.ne.s32.totalorder %s486, %s487
    %p499 = scmp.eq.s32.totalorder %s36, 1
    %p500 = por %p498, %p499
    %p502 = scmp.ne.s32.totalorder %s487, %s501
    %p503 = scmp.eq.s32.totalorder %s36, 0
    %p504 = por %p502, %p503
    %s506 = sadd.s32 %s505, 1
    %p509 = scmp.eq.s32.totalorder %s30, 1
    %p510 = scmp.ne.s32.totalorder %s505, %s507
    %p511 = scmp.eq.s32.totalorder %s30, 0
    %p512 = por %p510, %p511
    %p513 = scmp.ne.s32.totalorder %s505, %s507
    %p514 = scmp.eq.s32.totalorder %s35, 1
    %p515 = por %p513, %p514
    %p516 = scmp.ne.s32.totalorder %s507, %s508
    %p517 = scmp.eq.s32.totalorder %s35, 0
    %p518 = por %p516, %p517
    %p519 = scmp.ne.s32.totalorder %s507, %s508
    %p520 = scmp.eq.s32.totalorder %s36, 1
    %p521 = por %p519, %p520
    %p523 = scmp.ne.s32.totalorder %s508, %s522
    %p524 = scmp.eq.s32.totalorder %s36, 0
    %p525 = por %p523, %p524
    %s527 = sadd.s32 %s526, 1
    %p530 = scmp.eq.s32.totalorder %s30, 1
    %p531 = scmp.ne.s32.totalorder %s526, %s528
    %p532 = scmp.eq.s32.totalorder %s30, 0
    %p533 = por %p531, %p532
    %p534 = scmp.ne.s32.totalorder %s526, %s528
    %p535 = scmp.eq.s32.totalorder %s35, 1
    %p536 = por %p534, %p535
    %p537 = scmp.ne.s32.totalorder %s528, %s529
    %p538 = scmp.eq.s32.totalorder %s35, 0
    %p539 = por %p537, %p538
    %p540 = scmp.ne.s32.totalorder %s528, %s529
    %p541 = scmp.eq.s32.totalorder %s36, 1
    %p542 = por %p540, %p541
    %p544 = scmp.ne.s32.totalorder %s529, %s543
    %p545 = scmp.eq.s32.totalorder %s36, 0
    %p546 = por %p544, %p545
    %s547 = ssub.s32 %s30, %s37
    %p548 = scmp.eq.s32.totalorder %s547, 0
    %s550 = sadd.s32 %s549, 1
    %s551 = scalar_select %p548, %s549, %s550
    %p554 = pneg %p548
    %p555 = scmp.eq.s32.totalorder %s30, 1
    %p556 = por %p554, %p555
    %p557 = scmp.ne.s32.totalorder %s549, %s552
    %p558 = scmp.eq.s32.totalorder %s30, 0
    %p559 = por %p557, %p558
    %p560 = scmp.ne.s32.totalorder %s549, %s552
    %p561 = scmp.eq.s32.totalorder %s35, 1
    %p562 = por %p560, %p561
    %p563 = scmp.ne.s32.totalorder %s552, %s553
    %p564 = scmp.eq.s32.totalorder %s35, 0
    %p565 = por %p563, %p564
    %p566 = scmp.ne.s32.totalorder %s552, %s553
    %p567 = scmp.eq.s32.totalorder %s36, 1
    %p568 = por %p566, %p567
    %p570 = scmp.ne.s32.totalorder %s553, %s569
    %p571 = scmp.eq.s32.totalorder %s36, 0
    %p572 = por %p570, %p571
    %p573 = scmp.le.s32.totalorder 1, %s30
    %p574 = scmp.lt.s32.totalorder %s30, 3
    %p575 = pnand %p573, %p574
    %p576 = pneg %p575
    // Predicated region
    $region9: #{custom_hubert_forward.1} parent=5 // pred_check
      _
    $region10: #{custom_hubert_forward.1} parent=5 // pred_check_branch
      %578 = sbr.rel (%p575) target = $region12
    $region11: #{custom_hubert_forward.1} parent=5 // pred_region
      %s579 = ssub.s32 %s30, 1
      // Predicated region
      $region13: #{custom_hubert_forward.1} parent=11 // pred_check
        %p580 = pneg %p77
      $region14: #{custom_hubert_forward.1} parent=11 // pred_check_branch
        %582 = sbr.rel (%p580) target = $region16
      $region15: #{custom_hubert_forward.1} parent=11 // pred_region
        _
      $region16: #{custom_hubert_forward.1} parent=11 // pred_fallthru
        _
      // Predicated region
      $region17: #{custom_hubert_forward.1} parent=11 // pred_check
        %p583 = pneg %p98
      $region18: #{custom_hubert_forward.1} parent=11 // pred_check_branch
        %585 = sbr.rel (%p583) target = $region20
      $region19: #{custom_hubert_forward.1} parent=11 // pred_region
        _
      $region20: #{custom_hubert_forward.1} parent=11 // pred_fallthru
        _
      // Predicated region
      $region21: #{custom_hubert_forward.1} parent=11 // pred_check
        %p586 = pneg %p119
      $region22: #{custom_hubert_forward.1} parent=11 // pred_check_branch
        %588 = sbr.rel (%p586) target = $region24
      $region23: #{custom_hubert_forward.1} parent=11 // pred_region
        _
      $region24: #{custom_hubert_forward.1} parent=11 // pred_fallthru
        _
      // Predicated region
      $region25: #{custom_hubert_forward.1} parent=11 // pred_check
        %p589 = pneg %p140
      $region26: #{custom_hubert_forward.1} parent=11 // pred_check_branch
        %591 = sbr.rel (%p589) target = $region28
      $region27: #{custom_hubert_forward.1} parent=11 // pred_region
        _
      $region28: #{custom_hubert_forward.1} parent=11 // pred_fallthru
        _
      // Predicated region
      $region29: #{custom_hubert_forward.1} parent=11 // pred_check
        %p592 = pneg %p161
      $region30: #{custom_hubert_forward.1} parent=11 // pred_check_branch
        %594 = sbr.rel (%p592) target = $region32
      $region31: #{custom_hubert_forward.1} parent=11 // pred_region
        _
      $region32: #{custom_hubert_forward.1} parent=11 // pred_fallthru
        _
      // Predicated region
      $region33: #{custom_hubert_forward.1} parent=11 // pred_check
        %p595 = pneg %p182
      $region34: #{custom_hubert_forward.1} parent=11 // pred_check_branch
        %597 = sbr.rel (%p595) target = $region36
      $region35: #{custom_hubert_forward.1} parent=11 // pred_region
        _
      $region36: #{custom_hubert_forward.1} parent=11 // pred_fallthru
        _
      // Predicated region
      $region37: #{custom_hubert_forward.1} parent=11 // pred_check
        %p598 = pneg %p203
      $region38: #{custom_hubert_forward.1} parent=11 // pred_check_branch
        %600 = sbr.rel (%p598) target = $region40
      $region39: #{custom_hubert_forward.1} parent=11 // pred_region
        _
      $region40: #{custom_hubert_forward.1} parent=11 // pred_fallthru
        _
      // Predicated region
      $region41: #{custom_hubert_forward.1} parent=11 // pred_check
        %p601 = pneg %p224
      $region42: #{custom_hubert_forward.1} parent=11 // pred_check_branch
        %603 = sbr.rel (%p601) target = $region44
      $region43: #{custom_hubert_forward.1} parent=11 // pred_region
        _
      $region44: #{custom_hubert_forward.1} parent=11 // pred_fallthru
        _
      // Predicated region
      $region45: #{custom_hubert_forward.1} parent=11 // pred_check
        %p604 = pneg %p245
      $region46: #{custom_hubert_forward.1} parent=11 // pred_check_branch
        %606 = sbr.rel (%p604) target = $region48
      $region47: #{custom_hubert_forward.1} parent=11 // pred_region
        _
      $region48: #{custom_hubert_forward.1} parent=11 // pred_fallthru
        _
      // Predicated region
      $region49: #{custom_hubert_forward.1} parent=11 // pred_check
        %p607 = pneg %p266
      $region50: #{custom_hubert_forward.1} parent=11 // pred_check_branch
        %609 = sbr.rel (%p607) target = $region52
      $region51: #{custom_hubert_forward.1} parent=11 // pred_region
        _
      $region52: #{custom_hubert_forward.1} parent=11 // pred_fallthru
        _
      // Predicated region
      $region53: #{custom_hubert_forward.1} parent=11 // pred_check
        %p610 = pneg %p287
      $region54: #{custom_hubert_forward.1} parent=11 // pred_check_branch
        %612 = sbr.rel (%p610) target = $region56
      $region55: #{custom_hubert_forward.1} parent=11 // pred_region
        _
      $region56: #{custom_hubert_forward.1} parent=11 // pred_fallthru
        _
      // Predicated region
      $region57: #{custom_hubert_forward.1} parent=11 // pred_check
        %p613 = pneg %p308
      $region58: #{custom_hubert_forward.1} parent=11 // pred_check_branch
        %615 = sbr.rel (%p613) target = $region60
      $region59: #{custom_hubert_forward.1} parent=11 // pred_region
        _
      $region60: #{custom_hubert_forward.1} parent=11 // pred_fallthru
        _
      // Predicated region
      $region61: #{custom_hubert_forward.1} parent=11 // pred_check
        %p616 = pneg %p329
      $region62: #{custom_hubert_forward.1} parent=11 // pred_check_branch
        %618 = sbr.rel (%p616) target = $region64
      $region63: #{custom_hubert_forward.1} parent=11 // pred_region
        _
      $region64: #{custom_hubert_forward.1} parent=11 // pred_fallthru
        _
      // Predicated region
      $region65: #{custom_hubert_forward.1} parent=11 // pred_check
        %p619 = pneg %p350
      $region66: #{custom_hubert_forward.1} parent=11 // pred_check_branch
        %621 = sbr.rel (%p619) target = $region68
      $region67: #{custom_hubert_forward.1} parent=11 // pred_region
        _
      $region68: #{custom_hubert_forward.1} parent=11 // pred_fallthru
        _
      // Predicated region
      $region69: #{custom_hubert_forward.1} parent=11 // pred_check
        %p622 = pneg %p371
      $region70: #{custom_hubert_forward.1} parent=11 // pred_check_branch
        %624 = sbr.rel (%p622) target = $region72
      $region71: #{custom_hubert_forward.1} parent=11 // pred_region
        _
      $region72: #{custom_hubert_forward.1} parent=11 // pred_fallthru
        _
      // Predicated region
      $region73: #{custom_hubert_forward.1} parent=11 // pred_check
        %p625 = pneg %p392
      $region74: #{custom_hubert_forward.1} parent=11 // pred_check_branch
        %627 = sbr.rel (%p625) target = $region76
      $region75: #{custom_hubert_forward.1} parent=11 // pred_region
        _
      $region76: #{custom_hubert_forward.1} parent=11 // pred_fallthru
        _
      // Predicated region
      $region77: #{custom_hubert_forward.1} parent=11 // pred_check
        %p628 = pneg %p413
      $region78: #{custom_hubert_forward.1} parent=11 // pred_check_branch
        %630 = sbr.rel (%p628) target = $region80
      $region79: #{custom_hubert_forward.1} parent=11 // pred_region
        _
      $region80: #{custom_hubert_forward.1} parent=11 // pred_fallthru
        _
      // Predicated region
      $region81: #{custom_hubert_forward.1} parent=11 // pred_check
        %p631 = pneg %p434
      $region82: #{custom_hubert_forward.1} parent=11 // pred_check_branch
        %633 = sbr.rel (%p631) target = $region84
      $region83: #{custom_hubert_forward.1} parent=11 // pred_region
        _
      $region84: #{custom_hubert_forward.1} parent=11 // pred_fallthru
        _
      // Predicated region
      $region85: #{custom_hubert_forward.1} parent=11 // pred_check
        %p634 = pneg %p455
      $region86: #{custom_hubert_forward.1} parent=11 // pred_check_branch
        %636 = sbr.rel (%p634) target = $region88
      $region87: #{custom_hubert_forward.1} parent=11 // pred_region
        _
      $region88: #{custom_hubert_forward.1} parent=11 // pred_fallthru
        _
      // Predicated region
      $region89: #{custom_hubert_forward.1} parent=11 // pred_check
        %p637 = pneg %p476
      $region90: #{custom_hubert_forward.1} parent=11 // pred_check_branch
        %639 = sbr.rel (%p637) target = $region92
      $region91: #{custom_hubert_forward.1} parent=11 // pred_region
        _
      $region92: #{custom_hubert_forward.1} parent=11 // pred_fallthru
        _
      // Predicated region
      $region93: #{custom_hubert_forward.1} parent=11 // pred_check
        %p640 = pneg %p497
      $region94: #{custom_hubert_forward.1} parent=11 // pred_check_branch
        %642 = sbr.rel (%p640) target = $region96
      $region95: #{custom_hubert_forward.1} parent=11 // pred_region
        _
      $region96: #{custom_hubert_forward.1} parent=11 // pred_fallthru
        _
      // Predicated region
      $region97: #{custom_hubert_forward.1} parent=11 // pred_check
        %p643 = pneg %p518
      $region98: #{custom_hubert_forward.1} parent=11 // pred_check_branch
        %645 = sbr.rel (%p643) target = $region100
      $region99: #{custom_hubert_forward.1} parent=11 // pred_region
        _
      $region100: #{custom_hubert_forward.1} parent=11 // pred_fallthru
        _
      // Predicated region
      $region101: #{custom_hubert_forward.1} parent=11 // pred_check
        %p646 = pneg %p539
      $region102: #{custom_hubert_forward.1} parent=11 // pred_check_branch
        %648 = sbr.rel (%p646) target = $region104
      $region103: #{custom_hubert_forward.1} parent=11 // pred_region
        _
      $region104: #{custom_hubert_forward.1} parent=11 // pred_fallthru
        _
    $region12: #{custom_hubert_forward.1} parent=5 // pred_fallthru
      _
    %p649 = scmp.lt.s32.totalorder %s30, 2
    // Predicated region
    $region105: #{custom_hubert_forward.1} parent=5 // pred_check
      %p650 = pneg %p649
    $region106: #{custom_hubert_forward.1} parent=5 // pred_check_branch
      %652 = sbr.rel (%p650) target = $region108
    $region107: #{custom_hubert_forward.1} parent=5 // pred_region
      // Predicated region
      $region109: #{custom_hubert_forward.1} parent=107 // pred_check
        %p653 = pneg %p50
      $region110: #{custom_hubert_forward.1} parent=107 // pred_check_branch
        %655 = sbr.rel (%p653) target = $region112
      $region111: #{custom_hubert_forward.1} parent=107 // pred_region
        %p656 = scmp.lt.s32.totalorder %s30, 1
        %s657 = scalar_select %p656, %s30, 1
        %s658 = smul.addr %s657, 10
        %s659 = smul.addr %s658, 8
        %s660 = scalar_lea.vmem %s0, %s659
      $region112: #{custom_hubert_forward.1} parent=107 // pred_fallthru
        _
    $region108: #{custom_hubert_forward.1} parent=5 // pred_fallthru
      _
    %p661 = scmp.le.s32.totalorder 1, %s30
    %p662 = scmp.lt.s32.totalorder %s30, 3
    %p663 = pnand %p661, %p662
    %p664 = pneg %p663
    // Predicated region
    $region113: #{custom_hubert_forward.1} parent=5 // pred_check
      _
    $region114: #{custom_hubert_forward.1} parent=5 // pred_check_branch
      %666 = sbr.rel (%p663) target = $region116
    $region115: #{custom_hubert_forward.1} parent=5 // pred_region
      %s667 = ssub.s32 %s30, 1
      %p668 = scmp.lt.s32.totalorder %s35, 1
      %s669 = scalar_select %p668, %s35, 1
      %s670 = smul.addr %s669, 10
      %s671 = smul.addr %s670, 8
      %s672 = scalar_lea.vmem %s0, %s671
      %p673 = pneg %p56
      %p674 = pneg %p53
      %p675 = pneg %p77
      %p676 = pneg %p74
      %p677 = pneg %p98
      %p678 = pneg %p95
      %p679 = pneg %p119
      %p680 = pneg %p116
      %p681 = pneg %p140
      %p682 = pneg %p137
      %p683 = pneg %p161
      %p684 = pneg %p158
      %p685 = pneg %p182
      %p686 = pneg %p179
      %p687 = pneg %p203
      %p688 = pneg %p200
      %p689 = pneg %p224
      %p690 = pneg %p221
      %p691 = pneg %p245
      %p692 = pneg %p242
      %p693 = pneg %p266
      %p694 = pneg %p263
      %p695 = pneg %p287
      %p696 = pneg %p284
      %p697 = pneg %p308
      %p698 = pneg %p305
      %p699 = pneg %p329
      %p700 = pneg %p326
      %p701 = pneg %p350
      %p702 = pneg %p347
      %p703 = pneg %p371
      %p704 = pneg %p368
      %p705 = pneg %p392
      %p706 = pneg %p389
      %p707 = pneg %p413
      %p708 = pneg %p410
      %p709 = pneg %p434
      %p710 = pneg %p431
      %p711 = pneg %p455
      %p712 = pneg %p452
      %p713 = pneg %p476
      %p714 = pneg %p473
      %p715 = pneg %p497
      %p716 = pneg %p494
      %p717 = pneg %p518
      %p718 = pneg %p515
      %p719 = pneg %p539
      %p720 = pneg %p536
      %p721 = pneg %p565
      %p722 = pneg %p562
      %p723 = scmp.lt.s32.totalorder %s35, 1
      %s724 = scalar_select %p723, %s35, 1
      %s725 = smul.addr %s724, 3
      %s726 = smul.addr %s725, 8
      %s727 = scalar_lea.vmem %s24, %s726
      %p728 = scmp.lt.s32.totalorder %s35, 1
      %s729 = scalar_select %p728, %s35, 1
      %s730 = smul.addr %s729, 10
      %s731 = smul.addr %s730, 8
      %s732 = scalar_lea.vmem %s0, %s731
      %p733 = scmp.lt.s32.totalorder %s35, 1
      %s734 = scalar_select %p733, %s35, 1
      %s735 = smul.addr %s734, 3
      %s736 = smul.addr %s735, 8
      %s737 = scalar_lea.vmem %s24, %s736
      %v739 = vld [vmem:[%s732] sm:$0xff]
      %v740 = vld [vmem:[%s732 + $0x8] sm:$0xff]
      %v741 = vld [vmem:[%s732 + $0x10] sm:$0xff]
      %v742 = vld [vmem:[%s732 + $0x18] sm:$0xff]
      %v743 = vld [vmem:[%s732 + $0x20] sm:$0xff]
      %v744 = vld [vmem:[%s732 + $0x28] sm:$0xff]
      %v745 = vld [vmem:[%s732 + $0x30] sm:$0xff]
      %v746 = vld [vmem:[%s732 + $0x38] sm:$0xff]
      %v747 = vld [vmem:[%s732 + $0x40] sm:$0xff]
      %v748 = vld [vmem:[%s732 + $0x48] sm:$0xff]
      %v749 = vld [vmem:[%s1] sm:$0x1f]
      %v750 = vld [vmem:[%s1 + $0x5] sm:$0x1f]
      %vm761 = vcmask 1046528
      %v762 = vrot.slane %v739, 1
      %v763 = vrot.slane %v740, 1
      %v764 = vsel %vm761, %v762, %v763
      %v765 = vrot.slane %v741, 1
      %v766 = vsel %vm761, %v763, %v765
      %v767 = vrot.slane %v742, 1
      %v768 = vsel %vm761, %v765, %v767
      %v769 = vrot.slane %v743, 1
      %v770 = vsel %vm761, %v767, %v769
      %v771 = vrot.slane %v744, 1
      %v772 = vsel %vm761, %v769, %v771
      %v773 = vrot.slane %v745, 1
      %v774 = vsel %vm761, %v771, %v773
      %v775 = vrot.slane %v746, 1
      %v776 = vsel %vm761, %v773, %v775
      %v777 = vrot.slane %v747, 1
      %v778 = vsel %vm761, %v775, %v777
      %v779 = vrot.slane %v748, 1
      %v780 = vsel %vm761, %v777, %v779
      %vm781 = vcmask 39936
      %v782 = vsel %vm781, %v764, 0
      %v784 = vsel %vm781, %v766, 0
      %v786 = vsel %vm781, %v768, 0
      %v788 = vsel %vm781, %v770, 0
      %v790 = vsel %vm781, %v772, 0
      %v792 = vsel %vm781, %v774, 0
      %v794 = vsel %vm781, %v776, 0
      %v796 = vsel %vm781, %v778, 0
      %v798 = vsel %vm781, %v780, 0
      %v800 = vsel %vm781, %v779, 0
      %vm802 = vcmask 1044480
      %v804 = vsel %vm802, %v750, 0
      %806 = vmatpush.msra.mxu0 0.0
      %807 = vmatpush.msra.mxu0 0.0
      %808 = vmatpush.msra.mxu0 0.0
      %809 = vmatpush.msra.mxu0 0.0
      %810 = vmatpush.msra.mxu0 0.0
      %811 = vmatpush.msra.mxu0 0.0
      %812 = vmatpush.msra.mxu0 0.0
      %813 = vmatpush.msra.mxu0 0.0
      %814 = vmatpush.msra.mxu0 0.0
      %815 = vmatpush.msra.mxu0 0.0
      %816 = vmatpush.msra.mxu0 0.0
      %817 = vmatpush.msra.mxu0 0.0
      %818 = vmatpush.msra.mxu0 0.0
      %819 = vmatpush.msra.mxu0 0.0
      %820 = vmatpush.msra.mxu0 0.0
      %821 = vmatpush.msra.mxu0 %v804
      %822 = vmatmul.f32.gmra.mxu0 %v782
      %v823 = vpop.f32.mrf.mxu0
      %v824 = vadd.f32 0.0, %v823
      %825 = vmatmul.f32.gmra.mxu0 %v784
      %v826 = vpop.f32.mrf.mxu0
      %v827 = vadd.f32 0.0, %v826
      %828 = vmatmul.f32.gmra.mxu0 %v786
      %v829 = vpop.f32.mrf.mxu0
      %v830 = vadd.f32 0.0, %v829
      %831 = vmatmul.f32.gmra.mxu0 %v788
      %v832 = vpop.f32.mrf.mxu0
      %v833 = vadd.f32 0.0, %v832
      %834 = vmatmul.f32.gmra.mxu0 %v790
      %v835 = vpop.f32.mrf.mxu0
      %v836 = vadd.f32 0.0, %v835
      %837 = vmatmul.f32.gmra.mxu0 %v792
      %v838 = vpop.f32.mrf.mxu0
      %v839 = vadd.f32 0.0, %v838
      %840 = vmatmul.f32.gmra.mxu0 %v794
      %v841 = vpop.f32.mrf.mxu0
      %v842 = vadd.f32 0.0, %v841
      %843 = vmatmul.f32.gmra.mxu0 %v796
      %v844 = vpop.f32.mrf.mxu0
      %v845 = vadd.f32 0.0, %v844
      %846 = vmatmul.f32.gmra.mxu0 %v798
      %v847 = vpop.f32.mrf.mxu0
      %v848 = vadd.f32 0.0, %v847
      %849 = vmatmul.f32.gmra.mxu0 %v800
      %v850 = vpop.f32.mrf.mxu0
      %v851 = vadd.f32 0.0, %v850
      %852 = vdwg.mxu0
      %v853 = vsel %vm781, %v739, 0
      %v855 = vsel %vm781, %v740, 0
      %v857 = vsel %vm781, %v741, 0
      %v859 = vsel %vm781, %v742, 0
      %v861 = vsel %vm781, %v743, 0
      %v863 = vsel %vm781, %v744, 0
      %v865 = vsel %vm781, %v745, 0
      %v867 = vsel %vm781, %v746, 0
      %v869 = vsel %vm781, %v747, 0
      %v871 = vsel %vm781, %v748, 0
      %v874 = vsel %vm802, %v749, 0
      %876 = vmatpush.msra.mxu0 0.0
      %877 = vmatpush.msra.mxu0 0.0
      %878 = vmatpush.msra.mxu0 0.0
      %879 = vmatpush.msra.mxu0 0.0
      %880 = vmatpush.msra.mxu0 0.0
      %881 = vmatpush.msra.mxu0 0.0
      %882 = vmatpush.msra.mxu0 0.0
      %883 = vmatpush.msra.mxu0 0.0
      %884 = vmatpush.msra.mxu0 0.0
      %885 = vmatpush.msra.mxu0 0.0
      %886 = vmatpush.msra.mxu0 0.0
      %887 = vmatpush.msra.mxu0 0.0
      %888 = vmatpush.msra.mxu0 0.0
      %889 = vmatpush.msra.mxu0 0.0
      %890 = vmatpush.msra.mxu0 0.0
      %891 = vmatpush.msra.mxu0 %v874
      %892 = vmatmul.f32.gmra.mxu0 %v853
      %v893 = vpop.f32.mrf.mxu0
      %v894 = vadd.f32 %v824, %v893
      %895 = vmatmul.f32.gmra.mxu0 %v855
      %v896 = vpop.f32.mrf.mxu0
      %v897 = vadd.f32 %v827, %v896
      %898 = vmatmul.f32.gmra.mxu0 %v857
      %v899 = vpop.f32.mrf.mxu0
      %v900 = vadd.f32 %v830, %v899
      %901 = vmatmul.f32.gmra.mxu0 %v859
      %v902 = vpop.f32.mrf.mxu0
      %v903 = vadd.f32 %v833, %v902
      %904 = vmatmul.f32.gmra.mxu0 %v861
      %v905 = vpop.f32.mrf.mxu0
      %v906 = vadd.f32 %v836, %v905
      %907 = vmatmul.f32.gmra.mxu0 %v863
      %v908 = vpop.f32.mrf.mxu0
      %v909 = vadd.f32 %v839, %v908
      %910 = vmatmul.f32.gmra.mxu0 %v865
      %v911 = vpop.f32.mrf.mxu0
      %v912 = vadd.f32 %v842, %v911
      %913 = vmatmul.f32.gmra.mxu0 %v867
      %v914 = vpop.f32.mrf.mxu0
      %v915 = vadd.f32 %v845, %v914
      %916 = vmatmul.f32.gmra.mxu0 %v869
      %v917 = vpop.f32.mrf.mxu0
      %v918 = vadd.f32 %v848, %v917
      %919 = vmatmul.f32.gmra.mxu0 %v871
      %v920 = vpop.f32.mrf.mxu0
      %v921 = vadd.f32 %v851, %v920
      %922 = vdwg.mxu0
      %v923 = vld [vmem:[%s2] sm:$0x1]
      %v925 = vperm.slane %v923, 0
      %v927 = vadd.f32 %v894, %v925
      %v928 = vadd.f32 %v897, %v925
      %v929 = vadd.f32 %v900, %v925
      %v930 = vadd.f32 %v903, %v925
      %v931 = vadd.f32 %v906, %v925
      %v932 = vadd.f32 %v909, %v925
      %v933 = vadd.f32 %v912, %v925
      %v934 = vadd.f32 %v915, %v925
      %v935 = vadd.f32 %v918, %v925
      %v936 = vadd.f32 %v921, %v925
      %vm937 = vcmask 261120
      %v938 = vsel %vm937, %v927, 0.0
      %v939 = vsel %vm937, %v928, 0.0
      %v940 = vadd.f32 %v938, %v939
      %v941 = vsel %vm937, %v929, 0.0
      %v942 = vadd.f32 %v940, %v941
      %v943 = vsel %vm937, %v930, 0.0
      %v944 = vadd.f32 %v942, %v943
      %v945 = vsel %vm937, %v931, 0.0
      %v946 = vadd.f32 %v944, %v945
      %v947 = vsel %vm937, %v932, 0.0
      %v948 = vadd.f32 %v946, %v947
      %v949 = vsel %vm937, %v933, 0.0
      %v950 = vadd.f32 %v948, %v949
      %v951 = vsel %vm937, %v934, 0.0
      %v952 = vadd.f32 %v950, %v951
      %v953 = vsel %vm937, %v935, 0.0
      %v954 = vadd.f32 %v952, %v953
      %vm955 = vcmask 260096
      %v956 = vsel %vm955, %v936, 0.0
      %v957 = vadd.f32 %v954, %v956
      %v958 = vrot.slane %v957, 4
      %v959 = vadd.f32 %v957, %v958
      %v960 = vrot.slane %v959, 2
      %v961 = vadd.f32 %v959, %v960
      %v962 = vrot.slane %v961, 1
      %v963 = vadd.f32 %v961, %v962
      %v964 = vrcp.pop 79.0
      %v965 = vmul.f32 79.0, %v964
      %v966 = vsub.f32 1.0, %v965
      %v967 = vmul.f32 %v964, %v966
      %v968 = vadd.f32 %v964, %v967
      %vm969 = vweird.f32 %v964
      %v970 = vsel %vm969, %v964, %v968
      %v971 = vmul.f32 %v963, %v970
      %v972 = vsub.f32 %v927, %v971
      %v973 = vsub.f32 %v928, %v971
      %v974 = vsub.f32 %v929, %v971
      %v975 = vsub.f32 %v930, %v971
      %v976 = vsub.f32 %v931, %v971
      %v977 = vsub.f32 %v932, %v971
      %v978 = vsub.f32 %v933, %v971
      %v979 = vsub.f32 %v934, %v971
      %v980 = vsub.f32 %v935, %v971
      %v981 = vsub.f32 %v936, %v971
      %v982 = vmul.f32 %v972, %v972
      %v983 = vmul.f32 %v973, %v973
      %v984 = vmul.f32 %v974, %v974
      %v985 = vmul.f32 %v975, %v975
      %v986 = vmul.f32 %v976, %v976
      %v987 = vmul.f32 %v977, %v977
      %v988 = vmul.f32 %v978, %v978
      %v989 = vmul.f32 %v979, %v979
      %v990 = vmul.f32 %v980, %v980
      %v991 = vmul.f32 %v981, %v981
      %v992 = vsel %vm937, %v982, 0.0
      %v993 = vsel %vm937, %v983, 0.0
      %v994 = vadd.f32 %v992, %v993
      %v995 = vsel %vm937, %v984, 0.0
      %v996 = vadd.f32 %v994, %v995
      %v997 = vsel %vm937, %v985, 0.0
      %v998 = vadd.f32 %v996, %v997
      %v999 = vsel %vm937, %v986, 0.0
      %v1000 = vadd.f32 %v998, %v999
      %v1001 = vsel %vm937, %v987, 0.0
      %v1002 = vadd.f32 %v1000, %v1001
      %v1003 = vsel %vm937, %v988, 0.0
      %v1004 = vadd.f32 %v1002, %v1003
      %v1005 = vsel %vm937, %v989, 0.0
      %v1006 = vadd.f32 %v1004, %v1005
      %v1007 = vsel %vm937, %v990, 0.0
      %v1008 = vadd.f32 %v1006, %v1007
      %v1009 = vsel %vm955, %v991, 0.0
      %v1010 = vadd.f32 %v1008, %v1009
      %v1011 = vrot.slane %v1010, 4
      %v1012 = vadd.f32 %v1010, %v1011
      %v1013 = vrot.slane %v1012, 2
      %v1014 = vadd.f32 %v1012, %v1013
      %v1015 = vrot.slane %v1014, 1
      %v1016 = vadd.f32 %v1014, %v1015
      %v1017 = vmul.f32 %v1016, %v970
      %v1018 = vadd.f32 %v1017, 1e-05
      %v1019 = vrsqrt.pop %v1018
      %v1020 = vmul.f32 %v1019, %v1018
      %v1021 = vmul.f32 %v1020, %v1019
      %v1022 = vmul.f32 0.5, %v1021
      %v1023 = vsub.f32 1.5, %v1022
      %v1024 = vmul.f32 %v1019, %v1023
      %vm1025 = vweird.f32 %v1018
      %vm1026 = vweird.f32 %v1019
      %vm1027 = vmor %vm1025, %vm1026
      %v1028 = vsel %vm1027, %v1019, %v1024
      %v1029 = vmul.f32 %v972, %v1028
      %v1030 = vmul.f32 %v973, %v1028
      %v1031 = vmul.f32 %v974, %v1028
      %v1032 = vmul.f32 %v975, %v1028
      %v1033 = vmul.f32 %v976, %v1028
      %v1034 = vmul.f32 %v977, %v1028
      %v1035 = vmul.f32 %v978, %v1028
      %v1036 = vmul.f32 %v979, %v1028
      %v1037 = vmul.f32 %v980, %v1028
      %v1038 = vmul.f32 %v981, %v1028
      %v1039 = vld [vmem:[%s3] sm:$0x1]
      %v1041 = vperm.slane %v1039, 0
      %v1043 = vmul.f32 %v1029, %v1041
      %v1044 = vmul.f32 %v1030, %v1041
      %v1045 = vmul.f32 %v1031, %v1041
      %v1046 = vmul.f32 %v1032, %v1041
      %v1047 = vmul.f32 %v1033, %v1041
      %v1048 = vmul.f32 %v1034, %v1041
      %v1049 = vmul.f32 %v1035, %v1041
      %v1050 = vmul.f32 %v1036, %v1041
      %v1051 = vmul.f32 %v1037, %v1041
      %v1052 = vmul.f32 %v1038, %v1041
      %s1053 = scalar_lea.vmem %s3, 1
      %v1054 = vld [vmem:[%s1053] sm:$0x1]
      %v1056 = vperm.slane %v1054, 0
      %v1058 = vadd.f32 %v1043, %v1056
      %v1059 = vadd.f32 %v1044, %v1056
      %v1060 = vadd.f32 %v1045, %v1056
      %v1061 = vadd.f32 %v1046, %v1056
      %v1062 = vadd.f32 %v1047, %v1056
      %v1063 = vadd.f32 %v1048, %v1056
      %v1064 = vadd.f32 %v1049, %v1056
      %v1065 = vadd.f32 %v1050, %v1056
      %v1066 = vadd.f32 %v1051, %v1056
      %v1067 = vadd.f32 %v1052, %v1056
      %v1068 = vmul.f32 %v1058, %v1058
      %v1069 = vmul.f32 %v1059, %v1059
      %v1070 = vmul.f32 %v1060, %v1060
      %v1071 = vmul.f32 %v1061, %v1061
      %v1072 = vmul.f32 %v1062, %v1062
      %v1073 = vmul.f32 %v1063, %v1063
      %v1074 = vmul.f32 %v1064, %v1064
      %v1075 = vmul.f32 %v1065, %v1065
      %v1076 = vmul.f32 %v1066, %v1066
      %v1077 = vmul.f32 %v1067, %v1067
      %v1078 = vmul.f32 %v1058, %v1068
      %v1079 = vmul.f32 %v1059, %v1069
      %v1080 = vmul.f32 %v1060, %v1070
      %v1081 = vmul.f32 %v1061, %v1071
      %v1082 = vmul.f32 %v1062, %v1072
      %v1083 = vmul.f32 %v1063, %v1073
      %v1084 = vmul.f32 %v1064, %v1074
      %v1085 = vmul.f32 %v1065, %v1075
      %v1086 = vmul.f32 %v1066, %v1076
      %v1087 = vmul.f32 %v1067, %v1077
      %v1088 = vmul.f32 %v1078, 0.044715
      %v1089 = vmul.f32 %v1079, 0.044715
      %v1090 = vmul.f32 %v1080, 0.044715
      %v1091 = vmul.f32 %v1081, 0.044715
      %v1092 = vmul.f32 %v1082, 0.044715
      %v1093 = vmul.f32 %v1083, 0.044715
      %v1094 = vmul.f32 %v1084, 0.044715
      %v1095 = vmul.f32 %v1085, 0.044715
      %v1096 = vmul.f32 %v1086, 0.044715
      %v1097 = vmul.f32 %v1087, 0.044715
      %v1098 = vadd.f32 %v1058, %v1088
      %v1099 = vadd.f32 %v1059, %v1089
      %v1100 = vadd.f32 %v1060, %v1090
      %v1101 = vadd.f32 %v1061, %v1091
      %v1102 = vadd.f32 %v1062, %v1092
      %v1103 = vadd.f32 %v1063, %v1093
      %v1104 = vadd.f32 %v1064, %v1094
      %v1105 = vadd.f32 %v1065, %v1095
      %v1106 = vadd.f32 %v1066, %v1096
      %v1107 = vadd.f32 %v1067, %v1097
      %v1108 = vmul.f32 %v1098, 0.7978846
      %v1109 = vmul.f32 %v1099, 0.7978846
      %v1110 = vmul.f32 %v1100, 0.7978846
      %v1111 = vmul.f32 %v1101, 0.7978846
      %v1112 = vmul.f32 %v1102, 0.7978846
      %v1113 = vmul.f32 %v1103, 0.7978846
      %v1114 = vmul.f32 %v1104, 0.7978846
      %v1115 = vmul.f32 %v1105, 0.7978846
      %v1116 = vmul.f32 %v1106, 0.7978846
      %v1117 = vmul.f32 %v1107, 0.7978846
      %v1118 = vtanh.pop %v1108
      %v1119 = vtanh.pop %v1109
      %v1120 = vtanh.pop %v1110
      %v1121 = vtanh.pop %v1111
      %v1122 = vtanh.pop %v1112
      %v1123 = vtanh.pop %v1113
      %v1124 = vtanh.pop %v1114
      %v1125 = vtanh.pop %v1115
      %v1126 = vtanh.pop %v1116
      %v1127 = vtanh.pop %v1117
      %v1128 = vadd.f32 %v1118, 1.0
      %v1129 = vadd.f32 %v1119, 1.0
      %v1130 = vadd.f32 %v1120, 1.0
      %v1131 = vadd.f32 %v1121, 1.0
      %v1132 = vadd.f32 %v1122, 1.0
      %v1133 = vadd.f32 %v1123, 1.0
      %v1134 = vadd.f32 %v1124, 1.0
      %v1135 = vadd.f32 %v1125, 1.0
      %v1136 = vadd.f32 %v1126, 1.0
      %v1137 = vadd.f32 %v1127, 1.0
      %v1138 = vmul.f32 %v1128, 0.5
      %v1139 = vmul.f32 %v1129, 0.5
      %v1140 = vmul.f32 %v1130, 0.5
      %v1141 = vmul.f32 %v1131, 0.5
      %v1142 = vmul.f32 %v1132, 0.5
      %v1143 = vmul.f32 %v1133, 0.5
      %v1144 = vmul.f32 %v1134, 0.5
      %v1145 = vmul.f32 %v1135, 0.5
      %v1146 = vmul.f32 %v1136, 0.5
      %v1147 = vmul.f32 %v1137, 0.5
      %v1148 = vmul.f32 %v1058, %v1138
      %v1149 = vmul.f32 %v1059, %v1139
      %v1150 = vmul.f32 %v1060, %v1140
      %v1151 = vmul.f32 %v1061, %v1141
      %v1152 = vmul.f32 %v1062, %v1142
      %v1153 = vmul.f32 %v1063, %v1143
      %v1154 = vmul.f32 %v1064, %v1144
      %v1155 = vmul.f32 %v1065, %v1145
      %v1156 = vmul.f32 %v1066, %v1146
      %v1157 = vmul.f32 %v1067, %v1147
      %1158 = vst.msk [vmem:[#allocation2] sm:$0xff] %vm937, %v1148
      %1159 = vst.msk [vmem:[#allocation2 + $0x8] sm:$0xff] %vm937, %v1149
      %1160 = vst.msk [vmem:[#allocation2 + $0x10] sm:$0xff] %vm937, %v1150
      %1161 = vst.msk [vmem:[#allocation2 + $0x18] sm:$0xff] %vm937, %v1151
      %1162 = vst.msk [vmem:[#allocation2 + $0x20] sm:$0xff] %vm937, %v1152
      %1163 = vst.msk [vmem:[#allocation2 + $0x28] sm:$0xff] %vm937, %v1153
      %1164 = vst.msk [vmem:[#allocation2 + $0x30] sm:$0xff] %vm937, %v1154
      %1165 = vst.msk [vmem:[#allocation2 + $0x38] sm:$0xff] %vm937, %v1155
      %1166 = vst.msk [vmem:[#allocation2 + $0x40] sm:$0xff] %vm937, %v1156
      %1167 = vst.msk [vmem:[#allocation2 + $0x48] sm:$0x7f] %vm955, %v1157
      %v1168 = vld [vmem:[#allocation2] ss:$2 sm:$0xff]
      %s1169 = scalar_lea.vmem [#allocation2], 16
      %v1170 = vld [vmem:[%s1169] ss:$2 sm:$0xff]
      %s1171 = scalar_lea.vmem [#allocation2], 32
      %v1172 = vld [vmem:[%s1171] ss:$2 sm:$0xff]
      %s1173 = scalar_lea.vmem [#allocation2], 48
      %v1174 = vld [vmem:[%s1173] ss:$2 sm:$0xff]
      %s1175 = scalar_lea.vmem [#allocation2], 64
      %v1176 = vld [vmem:[%s1175] ss:$2 sm:$0x7f]
      %v1177 = vld [vmem:[%s4] sm:$0xff]
      %v1178 = vld [vmem:[%s4 + $0x8] sm:$0xff]
      %v1179 = vld [vmem:[%s4 + $0x10] sm:$0xff]
      %v1180 = vld [vmem:[%s4 + $0x18] sm:$0xff]
      %s1181 = scalar_lea.vmem [#allocation2], 1
      %v1182 = vld [vmem:[%s1181] ss:$2 sm:$0xff]
      %s1183 = scalar_lea.vmem [#allocation2], 17
      %v1184 = vld [vmem:[%s1183] ss:$2 sm:$0xff]
      %s1185 = scalar_lea.vmem [#allocation2], 33
      %v1186 = vld [vmem:[%s1185] ss:$2 sm:$0xff]
      %s1187 = scalar_lea.vmem [#allocation2], 49
      %v1188 = vld [vmem:[%s1187] ss:$2 sm:$0xff]
      %s1189 = scalar_lea.vmem [#allocation2], 65
      %v1190 = vld [vmem:[%s1189] ss:$2 sm:$0x7f]
      %s1191 = scalar_lea.vmem %s4, 32
      %v1192 = vld [vmem:[%s1191] sm:$0xff]
      %v1193 = vld [vmem:[%s1191 + $0x8] sm:$0xff]
      %v1194 = vld [vmem:[%s1191 + $0x10] sm:$0xff]
      %v1195 = vld [vmem:[%s1191 + $0x18] sm:$0xff]
      %v1197 = vsel %vm937, %v1182, 0
      %v1200 = vsel %vm937, %v1184, 0
      %v1203 = vsel %vm937, %v1186, 0
      %v1206 = vsel %vm937, %v1188, 0
      %v1209 = vsel %vm937, %v1190, 0
      %1211 = vmatpush.msra.mxu0 0.0
      %1212 = vmatpush.msra.mxu0 0.0
      %1213 = vmatpush.msra.mxu0 0.0
      %1214 = vmatpush.msra.mxu0 0.0
      %1215 = vmatpush.msra.mxu0 0.0
      %1216 = vmatpush.msra.mxu0 0.0
      %1217 = vmatpush.msra.mxu0 0.0
      %1218 = vmatpush.msra.mxu0 0.0
      %1219 = vmatpush.msra.mxu0 0.0
      %1220 = vmatpush.msra.mxu0 0.0
      %1221 = vmatpush.msra.mxu0 0.0
      %1222 = vmatpush.msra.mxu0 0.0
      %1223 = vmatpush.msra.mxu0 %v1195
      %1224 = vmatpush.msra.mxu0 %v1194
      %1225 = vmatpush.msra.mxu0 %v1193
      %1226 = vmatpush.msra.mxu0 %v1192
      %1227 = vmatmul.f32.gmra.mxu0 %v1197
      %v1228 = vpop.f32.mrf.mxu0
      %v1229 = vadd.f32 0.0, %v1228
      %1230 = vmatmul.f32.gmra.mxu0 %v1200
      %v1231 = vpop.f32.mrf.mxu0
      %v1232 = vadd.f32 0.0, %v1231
      %1233 = vmatmul.f32.gmra.mxu0 %v1203
      %v1234 = vpop.f32.mrf.mxu0
      %v1235 = vadd.f32 0.0, %v1234
      %1236 = vmatmul.f32.gmra.mxu0 %v1206
      %v1237 = vpop.f32.mrf.mxu0
      %v1238 = vadd.f32 0.0, %v1237
      %1239 = vmatmul.f32.gmra.mxu0 %v1209
      %v1240 = vpop.f32.mrf.mxu0
      %v1241 = vadd.f32 0.0, %v1240
      %1242 = vdwg.mxu0
      %v1244 = vsel %vm937, %v1168, 0
      %v1247 = vsel %vm937, %v1170, 0
      %v1250 = vsel %vm937, %v1172, 0
      %v1253 = vsel %vm937, %v1174, 0
      %v1256 = vsel %vm937, %v1176, 0
      %1258 = vmatpush.msra.mxu0 0.0
      %1259 = vmatpush.msra.mxu0 0.0
      %1260 = vmatpush.msra.mxu0 0.0
      %1261 = vmatpush.msra.mxu0 0.0
      %1262 = vmatpush.msra.mxu0 0.0
      %1263 = vmatpush.msra.mxu0 0.0
      %1264 = vmatpush.msra.mxu0 0.0
      %1265 = vmatpush.msra.mxu0 0.0
      %1266 = vmatpush.msra.mxu0 0.0
      %1267 = vmatpush.msra.mxu0 0.0
      %1268 = vmatpush.msra.mxu0 0.0
      %1269 = vmatpush.msra.mxu0 0.0
      %1270 = vmatpush.msra.mxu0 %v1180
      %1271 = vmatpush.msra.mxu0 %v1179
      %1272 = vmatpush.msra.mxu0 %v1178
      %1273 = vmatpush.msra.mxu0 %v1177
      %1274 = vmatmul.f32.gmra.mxu0 %v1244
      %v1275 = vpop.f32.mrf.mxu0
      %v1276 = vadd.f32 %v1229, %v1275
      %1277 = vmatmul.f32.gmra.mxu0 %v1247
      %v1278 = vpop.f32.mrf.mxu0
      %v1279 = vadd.f32 %v1232, %v1278
      %1280 = vmatmul.f32.gmra.mxu0 %v1250
      %v1281 = vpop.f32.mrf.mxu0
      %v1282 = vadd.f32 %v1235, %v1281
      %1283 = vmatmul.f32.gmra.mxu0 %v1253
      %v1284 = vpop.f32.mrf.mxu0
      %v1285 = vadd.f32 %v1238, %v1284
      %1286 = vmatmul.f32.gmra.mxu0 %v1256
      %v1287 = vpop.f32.mrf.mxu0
      %v1288 = vadd.f32 %v1241, %v1287
      %1289 = vdwg.mxu0
      %s1290 = scalar_lea.vmem [#allocation2], 2
      %v1291 = vld [vmem:[%s1290] ss:$2 sm:$0xff]
      %s1292 = scalar_lea.vmem [#allocation2], 18
      %v1293 = vld [vmem:[%s1292] ss:$2 sm:$0xff]
      %s1294 = scalar_lea.vmem [#allocation2], 34
      %v1295 = vld [vmem:[%s1294] ss:$2 sm:$0xff]
      %s1296 = scalar_lea.vmem [#allocation2], 50
      %v1297 = vld [vmem:[%s1296] ss:$2 sm:$0xff]
      %s1298 = scalar_lea.vmem [#allocation2], 66
      %v1299 = vld [vmem:[%s1298] ss:$2 sm:$0x7f]
      %s1300 = scalar_lea.vmem %s4, 64
      %v1301 = vld [vmem:[%s1300] sm:$0xff]
      %v1302 = vld [vmem:[%s1300 + $0x8] sm:$0xff]
      %v1303 = vld [vmem:[%s1300 + $0x10] sm:$0xff]
      %v1304 = vld [vmem:[%s1300 + $0x18] sm:$0xff]
      %v1306 = vsel %vm937, %v1291, 0
      %v1309 = vsel %vm937, %v1293, 0
      %v1312 = vsel %vm937, %v1295, 0
      %v1315 = vsel %vm937, %v1297, 0
      %v1318 = vsel %vm937, %v1299, 0
      %1320 = vmatpush.msra.mxu0 0.0
      %1321 = vmatpush.msra.mxu0 0.0
      %1322 = vmatpush.msra.mxu0 0.0
      %1323 = vmatpush.msra.mxu0 0.0
      %1324 = vmatpush.msra.mxu0 0.0
      %1325 = vmatpush.msra.mxu0 0.0
      %1326 = vmatpush.msra.mxu0 0.0
      %1327 = vmatpush.msra.mxu0 0.0
      %1328 = vmatpush.msra.mxu0 0.0
      %1329 = vmatpush.msra.mxu0 0.0
      %1330 = vmatpush.msra.mxu0 0.0
      %1331 = vmatpush.msra.mxu0 0.0
      %1332 = vmatpush.msra.mxu0 %v1304
      %1333 = vmatpush.msra.mxu0 %v1303
      %1334 = vmatpush.msra.mxu0 %v1302
      %1335 = vmatpush.msra.mxu0 %v1301
      %1336 = vmatmul.f32.gmra.mxu0 %v1306
      %v1337 = vpop.f32.mrf.mxu0
      %v1338 = vadd.f32 0.0, %v1337
      %1339 = vmatmul.f32.gmra.mxu0 %v1309
      %v1340 = vpop.f32.mrf.mxu0
      %v1341 = vadd.f32 0.0, %v1340
      %1342 = vmatmul.f32.gmra.mxu0 %v1312
      %v1343 = vpop.f32.mrf.mxu0
      %v1344 = vadd.f32 0.0, %v1343
      %1345 = vmatmul.f32.gmra.mxu0 %v1315
      %v1346 = vpop.f32.mrf.mxu0
      %v1347 = vadd.f32 0.0, %v1346
      %1348 = vmatmul.f32.gmra.mxu0 %v1318
      %v1349 = vpop.f32.mrf.mxu0
      %v1350 = vadd.f32 0.0, %v1349
      %1351 = vdwg.mxu0
      %v1352 = vadd.f32 %v1276, %v1338
      %v1353 = vadd.f32 %v1279, %v1341
      %v1354 = vadd.f32 %v1282, %v1344
      %v1355 = vadd.f32 %v1285, %v1347
      %v1356 = vadd.f32 %v1288, %v1350
      %v1357 = vld [vmem:[%s5] sm:$0x1]
      %v1359 = vperm.slane %v1357, 0
      %v1361 = vadd.f32 %v1352, %v1359
      %v1362 = vadd.f32 %v1353, %v1359
      %v1363 = vadd.f32 %v1354, %v1359
      %v1364 = vadd.f32 %v1355, %v1359
      %v1365 = vadd.f32 %v1356, %v1359
      %v1366 = vmul.f32 %v1361, %v1361
      %v1367 = vmul.f32 %v1362, %v1362
      %v1368 = vmul.f32 %v1363, %v1363
      %v1369 = vmul.f32 %v1364, %v1364
      %v1370 = vmul.f32 %v1365, %v1365
      %v1371 = vmul.f32 %v1361, %v1366
      %v1372 = vmul.f32 %v1362, %v1367
      %v1373 = vmul.f32 %v1363, %v1368
      %v1374 = vmul.f32 %v1364, %v1369
      %v1375 = vmul.f32 %v1365, %v1370
      %v1376 = vmul.f32 %v1371, 0.044715
      %v1377 = vmul.f32 %v1372, 0.044715
      %v1378 = vmul.f32 %v1373, 0.044715
      %v1379 = vmul.f32 %v1374, 0.044715
      %v1380 = vmul.f32 %v1375, 0.044715
      %v1381 = vadd.f32 %v1361, %v1376
      %v1382 = vadd.f32 %v1362, %v1377
      %v1383 = vadd.f32 %v1363, %v1378
      %v1384 = vadd.f32 %v1364, %v1379
      %v1385 = vadd.f32 %v1365, %v1380
      %v1386 = vmul.f32 %v1381, 0.7978846
      %v1387 = vmul.f32 %v1382, 0.7978846
      %v1388 = vmul.f32 %v1383, 0.7978846
      %v1389 = vmul.f32 %v1384, 0.7978846
      %v1390 = vmul.f32 %v1385, 0.7978846
      %v1391 = vtanh.pop %v1386
      %v1392 = vtanh.pop %v1387
      %v1393 = vtanh.pop %v1388
      %v1394 = vtanh.pop %v1389
      %v1395 = vtanh.pop %v1390
      %v1396 = vadd.f32 %v1391, 1.0
      %v1397 = vadd.f32 %v1392, 1.0
      %v1398 = vadd.f32 %v1393, 1.0
      %v1399 = vadd.f32 %v1394, 1.0
      %v1400 = vadd.f32 %v1395, 1.0
      %v1401 = vmul.f32 %v1396, 0.5
      %v1402 = vmul.f32 %v1397, 0.5
      %v1403 = vmul.f32 %v1398, 0.5
      %v1404 = vmul.f32 %v1399, 0.5
      %v1405 = vmul.f32 %v1400, 0.5
      %v1406 = vmul.f32 %v1361, %v1401
      %v1407 = vmul.f32 %v1362, %v1402
      %v1408 = vmul.f32 %v1363, %v1403
      %v1409 = vmul.f32 %v1364, %v1404
      %v1410 = vmul.f32 %v1365, %v1405
      %1411 = vst.msk [vmem:[#allocation3] sm:$0xff] %vm937, %v1406
      %1412 = vst.msk [vmem:[#allocation3 + $0x8] sm:$0xff] %vm937, %v1407
      %1413 = vst.msk [vmem:[#allocation3 + $0x10] sm:$0xff] %vm937, %v1408
      %1414 = vst.msk [vmem:[#allocation3 + $0x18] sm:$0xff] %vm937, %v1409
      %1415 = vst.msk [vmem:[#allocation3 + $0x20] sm:$0x7f] %vm955, %v1410
      %v1416 = vld [vmem:[#allocation3] ss:$2 sm:$0xff]
      %s1417 = scalar_lea.vmem [#allocation3], 16
      %v1418 = vld [vmem:[%s1417] ss:$2 sm:$0xff]
      %s1419 = scalar_lea.vmem [#allocation3], 32
      %v1420 = vld [vmem:[%s1419] ss:$2 sm:$0x7]
      %v1421 = vld [vmem:[%s6] sm:$0xff]
      %v1422 = vld [vmem:[%s6 + $0x8] sm:$0xff]
      %v1423 = vld [vmem:[%s6 + $0x10] sm:$0xff]
      %v1424 = vld [vmem:[%s6 + $0x18] sm:$0xff]
      %s1425 = scalar_lea.vmem [#allocation3], 1
      %v1426 = vld [vmem:[%s1425] ss:$2 sm:$0xff]
      %s1427 = scalar_lea.vmem [#allocation3], 17
      %v1428 = vld [vmem:[%s1427] ss:$2 sm:$0xff]
      %s1429 = scalar_lea.vmem [#allocation3], 33
      %v1430 = vld [vmem:[%s1429] ss:$2 sm:$0x7]
      %s1431 = scalar_lea.vmem %s6, 32
      %v1432 = vld [vmem:[%s1431] sm:$0xff]
      %v1433 = vld [vmem:[%s1431 + $0x8] sm:$0xff]
      %v1434 = vld [vmem:[%s1431 + $0x10] sm:$0xff]
      %v1435 = vld [vmem:[%s1431 + $0x18] sm:$0xff]
      %v1437 = vsel %vm937, %v1426, 0
      %v1440 = vsel %vm937, %v1428, 0
      %v1443 = vsel %vm937, %v1430, 0
      %1445 = vmatpush.msra.mxu0 0.0
      %1446 = vmatpush.msra.mxu0 0.0
      %1447 = vmatpush.msra.mxu0 0.0
      %1448 = vmatpush.msra.mxu0 0.0
      %1449 = vmatpush.msra.mxu0 0.0
      %1450 = vmatpush.msra.mxu0 0.0
      %1451 = vmatpush.msra.mxu0 0.0
      %1452 = vmatpush.msra.mxu0 0.0
      %1453 = vmatpush.msra.mxu0 0.0
      %1454 = vmatpush.msra.mxu0 0.0
      %1455 = vmatpush.msra.mxu0 0.0
      %1456 = vmatpush.msra.mxu0 0.0
      %1457 = vmatpush.msra.mxu0 %v1435
      %1458 = vmatpush.msra.mxu0 %v1434
      %1459 = vmatpush.msra.mxu0 %v1433
      %1460 = vmatpush.msra.mxu0 %v1432
      %1461 = vmatmul.f32.gmra.mxu0 %v1437
      %v1462 = vpop.f32.mrf.mxu0
      %v1463 = vadd.f32 0.0, %v1462
      %1464 = vmatmul.f32.gmra.mxu0 %v1440
      %v1465 = vpop.f32.mrf.mxu0
      %v1466 = vadd.f32 0.0, %v1465
      %1467 = vmatmul.f32.gmra.mxu0 %v1443
      %v1468 = vpop.f32.mrf.mxu0
      %v1469 = vadd.f32 0.0, %v1468
      %1470 = vdwg.mxu0
      %v1472 = vsel %vm937, %v1416, 0
      %v1475 = vsel %vm937, %v1418, 0
      %v1478 = vsel %vm937, %v1420, 0
      %1480 = vmatpush.msra.mxu0 0.0
      %1481 = vmatpush.msra.mxu0 0.0
      %1482 = vmatpush.msra.mxu0 0.0
      %1483 = vmatpush.msra.mxu0 0.0
      %1484 = vmatpush.msra.mxu0 0.0
      %1485 = vmatpush.msra.mxu0 0.0
      %1486 = vmatpush.msra.mxu0 0.0
      %1487 = vmatpush.msra.mxu0 0.0
      %1488 = vmatpush.msra.mxu0 0.0
      %1489 = vmatpush.msra.mxu0 0.0
      %1490 = vmatpush.msra.mxu0 0.0
      %1491 = vmatpush.msra.mxu0 0.0
      %1492 = vmatpush.msra.mxu0 %v1424
      %1493 = vmatpush.msra.mxu0 %v1423
      %1494 = vmatpush.msra.mxu0 %v1422
      %1495 = vmatpush.msra.mxu0 %v1421
      %1496 = vmatmul.f32.gmra.mxu0 %v1472
      %v1497 = vpop.f32.mrf.mxu0
      %v1498 = vadd.f32 %v1463, %v1497
      %1499 = vmatmul.f32.gmra.mxu0 %v1475
      %v1500 = vpop.f32.mrf.mxu0
      %v1501 = vadd.f32 %v1466, %v1500
      %1502 = vmatmul.f32.gmra.mxu0 %v1478
      %v1503 = vpop.f32.mrf.mxu0
      %v1504 = vadd.f32 %v1469, %v1503
      %1505 = vdwg.mxu0
      %v1506 = vld [vmem:[%s7] sm:$0x1]
      %v1508 = vperm.slane %v1506, 0
      %v1510 = vadd.f32 %v1498, %v1508
      %v1511 = vadd.f32 %v1501, %v1508
      %v1512 = vadd.f32 %v1504, %v1508
      %v1513 = vmul.f32 %v1510, %v1510
      %v1514 = vmul.f32 %v1511, %v1511
      %v1515 = vmul.f32 %v1512, %v1512
      %v1516 = vmul.f32 %v1510, %v1513
      %v1517 = vmul.f32 %v1511, %v1514
      %v1518 = vmul.f32 %v1512, %v1515
      %v1519 = vmul.f32 %v1516, 0.044715
      %v1520 = vmul.f32 %v1517, 0.044715
      %v1521 = vmul.f32 %v1518, 0.044715
      %v1522 = vadd.f32 %v1510, %v1519
      %v1523 = vadd.f32 %v1511, %v1520
      %v1524 = vadd.f32 %v1512, %v1521
      %v1525 = vmul.f32 %v1522, 0.7978846
      %v1526 = vmul.f32 %v1523, 0.7978846
      %v1527 = vmul.f32 %v1524, 0.7978846
      %v1528 = vtanh.pop %v1525
      %v1529 = vtanh.pop %v1526
      %v1530 = vtanh.pop %v1527
      %v1531 = vadd.f32 %v1528, 1.0
      %v1532 = vadd.f32 %v1529, 1.0
      %v1533 = vadd.f32 %v1530, 1.0
      %v1534 = vmul.f32 %v1531, 0.5
      %v1535 = vmul.f32 %v1532, 0.5
      %v1536 = vmul.f32 %v1533, 0.5
      %v1537 = vmul.f32 %v1510, %v1534
      %v1538 = vmul.f32 %v1511, %v1535
      %v1539 = vmul.f32 %v1512, %v1536
      %v1540 = vld [vmem:[%s8] sm:$0x1]
      %s1541 = scalar_lea.vmem %s8, 1
      %v1542 = vld [vmem:[%s1541] sm:$0x1]
      %v1543 = vsel %vm937, %v1537, 0.0
      %1544 = vadd.xlane.f32.xlu0 %v1543
      %v1545 = vpop.xlane.xlu0 %1544
      %v1546 = vsel %vm937, %v1538, 0.0
      %1547 = vadd.xlane.f32.xlu0 %v1546
      %v1548 = vpop.xlane.xlu0 %1547
      %vm1549 = vcmask 256000
      %v1550 = vsel %vm1549, %v1539, 0.0
      %1551 = vadd.xlane.f32.xlu0 %v1550
      %v1552 = vpop.xlane.xlu0 %1551
      %v1553 = vrcp.pop 32.0
      %v1554 = vmul.f32 32.0, %v1553
      %v1555 = vsub.f32 1.0, %v1554
      %v1556 = vmul.f32 %v1553, %v1555
      %v1557 = vadd.f32 %v1553, %v1556
      %vm1558 = vweird.f32 %v1553
      %v1559 = vsel %vm1558, %v1553, %v1557
      %v1560 = vmul.f32 %v1545, %v1559
      %v1561 = vmul.f32 %v1548, %v1559
      %v1562 = vmul.f32 %v1552, %v1559
      %v1563 = vsub.f32 %v1537, %v1560
      %v1564 = vsub.f32 %v1538, %v1561
      %v1565 = vsub.f32 %v1539, %v1562
      %v1566 = vmul.f32 %v1563, %v1563
      %v1567 = vmul.f32 %v1564, %v1564
      %v1568 = vmul.f32 %v1565, %v1565
      %v1569 = vsel %vm937, %v1566, 0.0
      %1570 = vadd.xlane.f32.xlu0 %v1569
      %v1571 = vpop.xlane.xlu0 %1570
      %v1572 = vsel %vm937, %v1567, 0.0
      %1573 = vadd.xlane.f32.xlu0 %v1572
      %v1574 = vpop.xlane.xlu0 %1573
      %v1575 = vsel %vm1549, %v1568, 0.0
      %1576 = vadd.xlane.f32.xlu0 %v1575
      %v1577 = vpop.xlane.xlu0 %1576
      %v1578 = vmul.f32 %v1571, %v1559
      %v1579 = vmul.f32 %v1574, %v1559
      %v1580 = vmul.f32 %v1577, %v1559
      %v1581 = vadd.f32 %v1578, 1e-05
      %v1582 = vadd.f32 %v1579, 1e-05
      %v1583 = vadd.f32 %v1580, 1e-05
      %v1584 = vrsqrt.pop %v1581
      %v1585 = vmul.f32 %v1584, %v1581
      %v1586 = vmul.f32 %v1585, %v1584
      %v1587 = vmul.f32 0.5, %v1586
      %v1588 = vsub.f32 1.5, %v1587
      %v1589 = vmul.f32 %v1584, %v1588
      %vm1590 = vweird.f32 %v1581
      %vm1591 = vweird.f32 %v1584
      %vm1592 = vmor %vm1590, %vm1591
      %v1593 = vsel %vm1592, %v1584, %v1589
      %v1594 = vrsqrt.pop %v1582
      %v1595 = vmul.f32 %v1594, %v1582
      %v1596 = vmul.f32 %v1595, %v1594
      %v1597 = vmul.f32 0.5, %v1596
      %v1598 = vsub.f32 1.5, %v1597
      %v1599 = vmul.f32 %v1594, %v1598
      %vm1600 = vweird.f32 %v1582
      %vm1601 = vweird.f32 %v1594
      %vm1602 = vmor %vm1600, %vm1601
      %v1603 = vsel %vm1602, %v1594, %v1599
      %v1604 = vrsqrt.pop %v1583
      %v1605 = vmul.f32 %v1604, %v1583
      %v1606 = vmul.f32 %v1605, %v1604
      %v1607 = vmul.f32 0.5, %v1606
      %v1608 = vsub.f32 1.5, %v1607
      %v1609 = vmul.f32 %v1604, %v1608
      %vm1610 = vweird.f32 %v1583
      %vm1611 = vweird.f32 %v1604
      %vm1612 = vmor %vm1610, %vm1611
      %v1613 = vsel %vm1612, %v1604, %v1609
      %v1614 = vmul.f32 %v1563, %v1593
      %v1615 = vmul.f32 %v1564, %v1603
      %v1616 = vmul.f32 %v1565, %v1613
      %v1618 = vperm.slane %v1540, 0
      %v1620 = vmul.f32 %v1614, %v1618
      %v1621 = vmul.f32 %v1615, %v1618
      %v1622 = vmul.f32 %v1616, %v1618
      %v1624 = vperm.slane %v1542, 0
      %v1626 = vadd.f32 %v1620, %v1624
      %v1627 = vadd.f32 %v1621, %v1624
      %v1628 = vadd.f32 %v1622, %v1624
      %v1629 = vpack.c.bf16 %v1627, %v1626
      %v1630 = vpack.c.bf16 %v1628, %v1628
      %v1631 = vld [vmem:[%s9] sm:$0xf]
      %v1632 = vld [vmem:[%s9 + $0x4] sm:$0xf]
      %v1633 = vld [vmem:[%s9 + $0x8] sm:$0xf]
      %v1634 = vld [vmem:[%s9 + $0xc] sm:$0xf]
      %v1635 = vld [vmem:[%s10] sm:$0x1]
      %v1637 = vperm.slane %v1635, 0
      %v1643 = vunpack.c.l.b16 %v1631
      %v1644 = vunpack.c.l.b16 %v1632
      %v1645 = vunpack.c.l.b16 %v1633
      %v1646 = vunpack.c.l.b16 %v1634
      %v1647 = vpack.c.b16 %v1644, %v1643
      %v1648 = vpack.c.b16 %v1646, %v1645
      %v1652 = vsel %vm937, %v1629, 0
      %v1655 = vsel %vm937, %v1630, 0
      %1657 = vmatpush.bf16.msra.mxu0 0
      %1658 = vmatpush.bf16.msra.mxu0 0
      %1659 = vmatpush.bf16.msra.mxu0 0
      %1660 = vmatpush.bf16.msra.mxu0 0
      %1661 = vmatpush.bf16.msra.mxu0 0
      %1662 = vmatpush.bf16.msra.mxu0 0
      %1663 = vmatpush.bf16.msra.mxu0 %v1648
      %1664 = vmatpush.bf16.msra.mxu0 %v1647
      %1665 = vmatmul.bf16.gmra.mxu0 %v1652
      %v1666 = vpop.f32.mrf.mxu0
      %v1667 = vadd.f32 %v1637, %v1666
      %v1668 = vpop.f32.mrf.mxu0
      %v1669 = vadd.f32 %v1637, %v1668
      %1670 = vmatmul.bf16.gmra.mxu0 %v1655
      %v1671 = vpop.f32.mrf.mxu0
      %v1672 = vadd.f32 %v1637, %v1671
      %v1673 = vpop.f32.mrf.mxu0
      %1674 = vdwg.mxu0
      %vm1675 = vcmask 523264
      %1676 = vst.msk [vmem:[#allocation4] sm:$0xff] %vm1675, 0.0
      %1677 = vst.msk [vmem:[#allocation4 + $0x8] sm:$0xff] %vm1675, 0.0
      %vm1678 = vcmask 522240
      %1679 = vst.msk [vmem:[#allocation4 + $0x10] sm:$0x7f] %vm1678, 0.0
      %1680 = vst.msk [vmem:[#allocation4 + $0x2] sm:$0xff] %vm1675, %v1667
      %1681 = vst.msk [vmem:[#allocation4 + $0xa] sm:$0xff] %vm1675, %v1669
      %vm1682 = vcmask 518144
      %1683 = vst.msk [vmem:[#allocation4 + $0x12] sm:$0x7] %vm1682, %v1672
      %v1684 = vld [vmem:[#allocation4] sm:$0xff]
      %v1685 = vld [vmem:[#allocation4 + $0x8] sm:$0xff]
      %v1686 = vld [vmem:[#allocation4 + $0x10] sm:$0x7]
      %v1687 = vpack.c.bf16 %v1685, %v1684
      %v1688 = vpack.c.bf16 %v1686, %v1686
      %v1689 = vld [vmem:[%s11] sm:$0xf]
      %v1690 = vld [vmem:[%s11 + $0x4] sm:$0xf]
      %v1691 = vld [vmem:[%s11 + $0x8] sm:$0xf]
      %v1692 = vld [vmem:[%s11 + $0xc] sm:$0xf]
      %v1693 = vld [vmem:[%s11 + $0x10] sm:$0xf]
      %v1694 = vld [vmem:[%s11 + $0x14] sm:$0xf]
      %v1695 = vld [vmem:[%s11 + $0x18] sm:$0xf]
      %v1696 = vld [vmem:[%s11 + $0x1c] sm:$0xf]
      %v1697 = vld [vmem:[#allocation4 + $0x1] sm:$0xff]
      %v1698 = vld [vmem:[#allocation4 + $0x9] sm:$0xff]
      %v1699 = vld [vmem:[#allocation4 + $0x11] sm:$0x7]
      %v1700 = vpack.c.bf16 %v1698, %v1697
      %v1701 = vpack.c.bf16 %v1699, %v1699
      %s1702 = scalar_lea.vmem %s11, 32
      %v1703 = vld [vmem:[%s1702] sm:$0xf]
      %v1704 = vld [vmem:[%s1702 + $0x4] sm:$0xf]
      %v1705 = vld [vmem:[%s1702 + $0x8] sm:$0xf]
      %v1706 = vld [vmem:[%s1702 + $0xc] sm:$0xf]
      %v1707 = vld [vmem:[%s1702 + $0x10] sm:$0xf]
      %v1708 = vld [vmem:[%s1702 + $0x14] sm:$0xf]
      %v1709 = vld [vmem:[%s1702 + $0x18] sm:$0xf]
      %v1710 = vld [vmem:[%s1702 + $0x1c] sm:$0xf]
      %v1719 = vunpack.c.l.b16 %v1703
      %v1720 = vunpack.c.l.b16 %v1704
      %v1721 = vunpack.c.l.b16 %v1705
      %v1722 = vunpack.c.l.b16 %v1706
      %v1723 = vunpack.c.l.b16 %v1707
      %v1724 = vunpack.c.l.b16 %v1708
      %v1725 = vunpack.c.l.b16 %v1709
      %v1726 = vunpack.c.l.b16 %v1710
      %v1727 = vpack.c.b16 %v1720, %v1719
      %v1728 = vpack.c.b16 %v1722, %v1721
      %v1729 = vpack.c.b16 %v1724, %v1723
      %v1730 = vpack.c.b16 %v1726, %v1725
      %v1736 = vsel %vm1675, %v1700, 0
      %v1739 = vsel %vm1675, %v1701, 0
      %1741 = vmatpush.bf16.msra.mxu0 0
      %1742 = vmatpush.bf16.msra.mxu0 0
      %1743 = vmatpush.bf16.msra.mxu0 0
      %1744 = vmatpush.bf16.msra.mxu0 0
      %1745 = vmatpush.bf16.msra.mxu0 %v1730
      %1746 = vmatpush.bf16.msra.mxu0 %v1729
      %1747 = vmatpush.bf16.msra.mxu0 %v1728
      %1748 = vmatpush.bf16.msra.mxu0 %v1727
      %1749 = vmatmul.bf16.gmra.mxu0 %v1736
      %v1750 = vpop.f32.mrf.mxu0
      %v1751 = vadd.f32 0.0, %v1750
      %v1752 = vpop.f32.mrf.mxu0
      %v1753 = vadd.f32 0.0, %v1752
      %1754 = vmatmul.bf16.gmra.mxu0 %v1739
      %v1755 = vpop.f32.mrf.mxu0
      %v1756 = vadd.f32 0.0, %v1755
      %v1757 = vpop.f32.mrf.mxu0
      %1758 = vdwg.mxu0
      %v1767 = vunpack.c.l.b16 %v1689
      %v1768 = vunpack.c.l.b16 %v1690
      %v1769 = vunpack.c.l.b16 %v1691
      %v1770 = vunpack.c.l.b16 %v1692
      %v1771 = vunpack.c.l.b16 %v1693
      %v1772 = vunpack.c.l.b16 %v1694
      %v1773 = vunpack.c.l.b16 %v1695
      %v1774 = vunpack.c.l.b16 %v1696
      %v1775 = vpack.c.b16 %v1768, %v1767
      %v1776 = vpack.c.b16 %v1770, %v1769
      %v1777 = vpack.c.b16 %v1772, %v1771
      %v1778 = vpack.c.b16 %v1774, %v1773
      %v1784 = vsel %vm1675, %v1687, 0
      %v1787 = vsel %vm1675, %v1688, 0
      %1789 = vmatpush.bf16.msra.mxu0 0
      %1790 = vmatpush.bf16.msra.mxu0 0
      %1791 = vmatpush.bf16.msra.mxu0 0
      %1792 = vmatpush.bf16.msra.mxu0 0
      %1793 = vmatpush.bf16.msra.mxu0 %v1778
      %1794 = vmatpush.bf16.msra.mxu0 %v1777
      %1795 = vmatpush.bf16.msra.mxu0 %v1776
      %1796 = vmatpush.bf16.msra.mxu0 %v1775
      %1797 = vmatmul.bf16.gmra.mxu0 %v1784
      %v1798 = vpop.f32.mrf.mxu0
      %v1799 = vadd.f32 %v1751, %v1798
      %v1800 = vpop.f32.mrf.mxu0
      %v1801 = vadd.f32 %v1753, %v1800
      %1802 = vmatmul.bf16.gmra.mxu0 %v1787
      %v1803 = vpop.f32.mrf.mxu0
      %v1804 = vadd.f32 %v1756, %v1803
      %v1805 = vpop.f32.mrf.mxu0
      %1806 = vdwg.mxu0
      %v1807 = vld [vmem:[#allocation4 + $0x2] sm:$0xff]
      %v1808 = vld [vmem:[#allocation4 + $0xa] sm:$0xff]
      %v1809 = vld [vmem:[#allocation4 + $0x12] sm:$0x7]
      %v1810 = vpack.c.bf16 %v1808, %v1807
      %v1811 = vpack.c.bf16 %v1809, %v1809
      %s1812 = scalar_lea.vmem %s11, 64
      %v1813 = vld [vmem:[%s1812] sm:$0xf]
      %v1814 = vld [vmem:[%s1812 + $0x4] sm:$0xf]
      %v1815 = vld [vmem:[%s1812 + $0x8] sm:$0xf]
      %v1816 = vld [vmem:[%s1812 + $0xc] sm:$0xf]
      %v1817 = vld [vmem:[%s1812 + $0x10] sm:$0xf]
      %v1818 = vld [vmem:[%s1812 + $0x14] sm:$0xf]
      %v1819 = vld [vmem:[%s1812 + $0x18] sm:$0xf]
      %v1820 = vld [vmem:[%s1812 + $0x1c] sm:$0xf]
      %v1829 = vunpack.c.l.b16 %v1813
      %v1830 = vunpack.c.l.b16 %v1814
      %v1831 = vunpack.c.l.b16 %v1815
      %v1832 = vunpack.c.l.b16 %v1816
      %v1833 = vunpack.c.l.b16 %v1817
      %v1834 = vunpack.c.l.b16 %v1818
      %v1835 = vunpack.c.l.b16 %v1819
      %v1836 = vunpack.c.l.b16 %v1820
      %v1837 = vpack.c.b16 %v1830, %v1829
      %v1838 = vpack.c.b16 %v1832, %v1831
      %v1839 = vpack.c.b16 %v1834, %v1833
      %v1840 = vpack.c.b16 %v1836, %v1835
      %v1846 = vsel %vm1675, %v1810, 0
      %v1849 = vsel %vm1675, %v1811, 0
      %1851 = vmatpush.bf16.msra.mxu0 0
      %1852 = vmatpush.bf16.msra.mxu0 0
      %1853 = vmatpush.bf16.msra.mxu0 0
      %1854 = vmatpush.bf16.msra.mxu0 0
      %1855 = vmatpush.bf16.msra.mxu0 %v1840
      %1856 = vmatpush.bf16.msra.mxu0 %v1839
      %1857 = vmatpush.bf16.msra.mxu0 %v1838
      %1858 = vmatpush.bf16.msra.mxu0 %v1837
      %1859 = vmatmul.bf16.gmra.mxu0 %v1846
      %v1860 = vpop.f32.mrf.mxu0
      %v1861 = vadd.f32 0.0, %v1860
      %v1862 = vpop.f32.mrf.mxu0
      %v1863 = vadd.f32 0.0, %v1862
      %1864 = vmatmul.bf16.gmra.mxu0 %v1849
      %v1865 = vpop.f32.mrf.mxu0
      %v1866 = vadd.f32 0.0, %v1865
      %v1867 = vpop.f32.mrf.mxu0
      %1868 = vdwg.mxu0
      %v1869 = vadd.f32 %v1799, %v1861
      %v1870 = vadd.f32 %v1801, %v1863
      %v1871 = vadd.f32 %v1804, %v1866
      %v1872 = vld [vmem:[#allocation4 + $0x3] sm:$0xff]
      %v1873 = vld [vmem:[#allocation4 + $0xb] sm:$0xff]
      %v1874 = vld [vmem:[#allocation4 + $0x13] sm:$0x7]
      %v1875 = vpack.c.bf16 %v1873, %v1872
      %v1876 = vpack.c.bf16 %v1874, %v1874
      %s1877 = scalar_lea.vmem %s11, 96
      %v1878 = vld [vmem:[%s1877] sm:$0xf]
      %v1879 = vld [vmem:[%s1877 + $0x4] sm:$0xf]
      %v1880 = vld [vmem:[%s1877 + $0x8] sm:$0xf]
      %v1881 = vld [vmem:[%s1877 + $0xc] sm:$0xf]
      %v1882 = vld [vmem:[%s1877 + $0x10] sm:$0xf]
      %v1883 = vld [vmem:[%s1877 + $0x14] sm:$0xf]
      %v1884 = vld [vmem:[%s1877 + $0x18] sm:$0xf]
      %v1885 = vld [vmem:[%s1877 + $0x1c] sm:$0xf]
      %v1894 = vunpack.c.l.b16 %v1878
      %v1895 = vunpack.c.l.b16 %v1879
      %v1896 = vunpack.c.l.b16 %v1880
      %v1897 = vunpack.c.l.b16 %v1881
      %v1898 = vunpack.c.l.b16 %v1882
      %v1899 = vunpack.c.l.b16 %v1883
      %v1900 = vunpack.c.l.b16 %v1884
      %v1901 = vunpack.c.l.b16 %v1885
      %v1902 = vpack.c.b16 %v1895, %v1894
      %v1903 = vpack.c.b16 %v1897, %v1896
      %v1904 = vpack.c.b16 %v1899, %v1898
      %v1905 = vpack.c.b16 %v1901, %v1900
      %v1911 = vsel %vm1675, %v1875, 0
      %v1914 = vsel %vm1675, %v1876, 0
      %1916 = vmatpush.bf16.msra.mxu0 0
      %1917 = vmatpush.bf16.msra.mxu0 0
      %1918 = vmatpush.bf16.msra.mxu0 0
      %1919 = vmatpush.bf16.msra.mxu0 0
      %1920 = vmatpush.bf16.msra.mxu0 %v1905
      %1921 = vmatpush.bf16.msra.mxu0 %v1904
      %1922 = vmatpush.bf16.msra.mxu0 %v1903
      %1923 = vmatpush.bf16.msra.mxu0 %v1902
      %1924 = vmatmul.bf16.gmra.mxu0 %v1911
      %v1925 = vpop.f32.mrf.mxu0
      %v1926 = vadd.f32 0.0, %v1925
      %v1927 = vpop.f32.mrf.mxu0
      %v1928 = vadd.f32 0.0, %v1927
      %1929 = vmatmul.bf16.gmra.mxu0 %v1914
      %v1930 = vpop.f32.mrf.mxu0
      %v1931 = vadd.f32 0.0, %v1930
      %v1932 = vpop.f32.mrf.mxu0
      %1933 = vdwg.mxu0
      %v1934 = vadd.f32 %v1869, %v1926
      %v1935 = vadd.f32 %v1870, %v1928
      %v1936 = vadd.f32 %v1871, %v1931
      %v1937 = vld [vmem:[#allocation4 + $0x4] sm:$0xff]
      %v1938 = vld [vmem:[#allocation4 + $0xc] sm:$0xff]
      %v1939 = vld [vmem:[#allocation4 + $0x14] sm:$0x7]
      %v1940 = vpack.c.bf16 %v1938, %v1937
      %v1941 = vpack.c.bf16 %v1939, %v1939
      %s1942 = scalar_lea.vmem %s11, 128
      %v1943 = vld [vmem:[%s1942] sm:$0xf]
      %v1944 = vld [vmem:[%s1942 + $0x4] sm:$0xf]
      %v1945 = vld [vmem:[%s1942 + $0x8] sm:$0xf]
      %v1946 = vld [vmem:[%s1942 + $0xc] sm:$0xf]
      %v1947 = vld [vmem:[%s1942 + $0x10] sm:$0xf]
      %v1948 = vld [vmem:[%s1942 + $0x14] sm:$0xf]
      %v1949 = vld [vmem:[%s1942 + $0x18] sm:$0xf]
      %v1950 = vld [vmem:[%s1942 + $0x1c] sm:$0xf]
      %v1959 = vunpack.c.l.b16 %v1943
      %v1960 = vunpack.c.l.b16 %v1944
      %v1961 = vunpack.c.l.b16 %v1945
      %v1962 = vunpack.c.l.b16 %v1946
      %v1963 = vunpack.c.l.b16 %v1947
      %v1964 = vunpack.c.l.b16 %v1948
      %v1965 = vunpack.c.l.b16 %v1949
      %v1966 = vunpack.c.l.b16 %v1950
      %v1967 = vpack.c.b16 %v1960, %v1959
      %v1968 = vpack.c.b16 %v1962, %v1961
      %v1969 = vpack.c.b16 %v1964, %v1963
      %v1970 = vpack.c.b16 %v1966, %v1965
      %v1976 = vsel %vm1675, %v1940, 0
      %v1979 = vsel %vm1675, %v1941, 0
      %1981 = vmatpush.bf16.msra.mxu0 0
      %1982 = vmatpush.bf16.msra.mxu0 0
      %1983 = vmatpush.bf16.msra.mxu0 0
      %1984 = vmatpush.bf16.msra.mxu0 0
      %1985 = vmatpush.bf16.msra.mxu0 %v1970
      %1986 = vmatpush.bf16.msra.mxu0 %v1969
      %1987 = vmatpush.bf16.msra.mxu0 %v1968
      %1988 = vmatpush.bf16.msra.mxu0 %v1967
      %1989 = vmatmul.bf16.gmra.mxu0 %v1976
      %v1990 = vpop.f32.mrf.mxu0
      %v1991 = vadd.f32 0.0, %v1990
      %v1992 = vpop.f32.mrf.mxu0
      %v1993 = vadd.f32 0.0, %v1992
      %1994 = vmatmul.bf16.gmra.mxu0 %v1979
      %v1995 = vpop.f32.mrf.mxu0
      %v1996 = vadd.f32 0.0, %v1995
      %v1997 = vpop.f32.mrf.mxu0
      %1998 = vdwg.mxu0
      %v1999 = vadd.f32 %v1934, %v1991
      %v2000 = vadd.f32 %v1935, %v1993
      %v2001 = vadd.f32 %v1936, %v1996
      %v2002 = vld [vmem:[%s12] sm:$0x1]
      %v2004 = vperm.slane %v2002, 0
      %v2006 = vadd.f32 %v1999, %v2004
      %v2007 = vadd.f32 %v2000, %v2004
      %v2008 = vadd.f32 %v2001, %v2004
      %v2009 = vmul.f32 %v2006, %v2006
      %v2010 = vmul.f32 %v2007, %v2007
      %v2011 = vmul.f32 %v2008, %v2008
      %v2012 = vmul.f32 %v2006, %v2009
      %v2013 = vmul.f32 %v2007, %v2010
      %v2014 = vmul.f32 %v2008, %v2011
      %v2015 = vmul.f32 %v2012, 0.044715
      %v2016 = vmul.f32 %v2013, 0.044715
      %v2017 = vmul.f32 %v2014, 0.044715
      %v2018 = vadd.f32 %v2006, %v2015
      %v2019 = vadd.f32 %v2007, %v2016
      %v2020 = vadd.f32 %v2008, %v2017
      %v2021 = vmul.f32 %v2018, 0.7978846
      %v2022 = vmul.f32 %v2019, 0.7978846
      %v2023 = vmul.f32 %v2020, 0.7978846
      %v2024 = vtanh.pop %v2021
      %v2025 = vtanh.pop %v2022
      %v2026 = vtanh.pop %v2023
      %v2027 = vadd.f32 %v2024, 1.0
      %v2028 = vadd.f32 %v2025, 1.0
      %v2029 = vadd.f32 %v2026, 1.0
      %v2030 = vmul.f32 %v2027, 0.5
      %v2031 = vmul.f32 %v2028, 0.5
      %v2032 = vmul.f32 %v2029, 0.5
      %v2033 = vmul.f32 %v2006, %v2030
      %v2034 = vmul.f32 %v2007, %v2031
      %v2035 = vmul.f32 %v2008, %v2032
      %v2036 = vadd.f32 %v1667, %v2033
      %v2037 = vadd.f32 %v1669, %v2034
      %v2038 = vadd.f32 %v1672, %v2035
      %v2039 = vld [vmem:[%s13] sm:$0x1]
      %s2040 = scalar_lea.vmem %s13, 1
      %v2041 = vld [vmem:[%s2040] sm:$0x1]
      %v2042 = vsel %vm1675, %v2036, 0.0
      %2043 = vadd.xlane.f32.xlu0 %v2042
      %v2044 = vpop.xlane.xlu0 %2043
      %v2045 = vsel %vm1675, %v2037, 0.0
      %2046 = vadd.xlane.f32.xlu0 %v2045
      %v2047 = vpop.xlane.xlu0 %2046
      %v2048 = vsel %vm1682, %v2038, 0.0
      %2049 = vadd.xlane.f32.xlu0 %v2048
      %v2050 = vpop.xlane.xlu0 %2049
      %v2051 = vrcp.pop 64.0
      %v2052 = vmul.f32 64.0, %v2051
      %v2053 = vsub.f32 1.0, %v2052
      %v2054 = vmul.f32 %v2051, %v2053
      %v2055 = vadd.f32 %v2051, %v2054
      %vm2056 = vweird.f32 %v2051
      %v2057 = vsel %vm2056, %v2051, %v2055
      %v2058 = vmul.f32 %v2044, %v2057
      %v2059 = vmul.f32 %v2047, %v2057
      %v2060 = vmul.f32 %v2050, %v2057
      %v2061 = vsub.f32 %v2036, %v2058
      %v2062 = vsub.f32 %v2037, %v2059
      %v2063 = vsub.f32 %v2038, %v2060
      %v2064 = vmul.f32 %v2061, %v2061
      %v2065 = vmul.f32 %v2062, %v2062
      %v2066 = vmul.f32 %v2063, %v2063
      %v2067 = vsel %vm1675, %v2064, 0.0
      %2068 = vadd.xlane.f32.xlu0 %v2067
      %v2069 = vpop.xlane.xlu0 %2068
      %v2070 = vsel %vm1675, %v2065, 0.0
      %2071 = vadd.xlane.f32.xlu0 %v2070
      %v2072 = vpop.xlane.xlu0 %2071
      %v2073 = vsel %vm1682, %v2066, 0.0
      %2074 = vadd.xlane.f32.xlu0 %v2073
      %v2075 = vpop.xlane.xlu0 %2074
      %v2076 = vmul.f32 %v2069, %v2057
      %v2077 = vmul.f32 %v2072, %v2057
      %v2078 = vmul.f32 %v2075, %v2057
      %v2079 = vadd.f32 %v2076, 1e-05
      %v2080 = vadd.f32 %v2077, 1e-05
      %v2081 = vadd.f32 %v2078, 1e-05
      %v2082 = vrsqrt.pop %v2079
      %v2083 = vmul.f32 %v2082, %v2079
      %v2084 = vmul.f32 %v2083, %v2082
      %v2085 = vmul.f32 0.5, %v2084
      %v2086 = vsub.f32 1.5, %v2085
      %v2087 = vmul.f32 %v2082, %v2086
      %vm2088 = vweird.f32 %v2079
      %vm2089 = vweird.f32 %v2082
      %vm2090 = vmor %vm2088, %vm2089
      %v2091 = vsel %vm2090, %v2082, %v2087
      %v2092 = vrsqrt.pop %v2080
      %v2093 = vmul.f32 %v2092, %v2080
      %v2094 = vmul.f32 %v2093, %v2092
      %v2095 = vmul.f32 0.5, %v2094
      %v2096 = vsub.f32 1.5, %v2095
      %v2097 = vmul.f32 %v2092, %v2096
      %vm2098 = vweird.f32 %v2080
      %vm2099 = vweird.f32 %v2092
      %vm2100 = vmor %vm2098, %vm2099
      %v2101 = vsel %vm2100, %v2092, %v2097
      %v2102 = vrsqrt.pop %v2081
      %v2103 = vmul.f32 %v2102, %v2081
      %v2104 = vmul.f32 %v2103, %v2102
      %v2105 = vmul.f32 0.5, %v2104
      %v2106 = vsub.f32 1.5, %v2105
      %v2107 = vmul.f32 %v2102, %v2106
      %vm2108 = vweird.f32 %v2081
      %vm2109 = vweird.f32 %v2102
      %vm2110 = vmor %vm2108, %vm2109
      %v2111 = vsel %vm2110, %v2102, %v2107
      %v2112 = vmul.f32 %v2061, %v2091
      %v2113 = vmul.f32 %v2062, %v2101
      %v2114 = vmul.f32 %v2063, %v2111
      %v2116 = vperm.slane %v2039, 0
      %v2118 = vmul.f32 %v2112, %v2116
      %v2119 = vmul.f32 %v2113, %v2116
      %v2120 = vmul.f32 %v2114, %v2116
      %v2122 = vperm.slane %v2041, 0
      %v2124 = vadd.f32 %v2118, %v2122
      %v2125 = vadd.f32 %v2119, %v2122
      %v2126 = vadd.f32 %v2120, %v2122
      %v2127 = vpack.c.bf16 %v2125, %v2124
      %v2128 = vpack.c.bf16 %v2126, %v2126
      %v2129 = vld [vmem:[%s14] sm:$0xf]
      %v2130 = vld [vmem:[%s14 + $0x4] sm:$0xf]
      %v2131 = vld [vmem:[%s14 + $0x8] sm:$0xf]
      %v2132 = vld [vmem:[%s14 + $0xc] sm:$0xf]
      %v2133 = vld [vmem:[%s14 + $0x10] sm:$0xf]
      %v2134 = vld [vmem:[%s14 + $0x14] sm:$0xf]
      %v2135 = vld [vmem:[%s14 + $0x18] sm:$0xf]
      %v2136 = vld [vmem:[%s14 + $0x1c] sm:$0xf]
      %v2137 = vld [vmem:[%s15] sm:$0x1]
      %v2139 = vperm.slane %v2137, 0
      %v2149 = vunpack.c.l.b16 %v2129
      %v2150 = vunpack.c.l.b16 %v2130
      %v2151 = vunpack.c.l.b16 %v2131
      %v2152 = vunpack.c.l.b16 %v2132
      %v2153 = vunpack.c.l.b16 %v2133
      %v2154 = vunpack.c.l.b16 %v2134
      %v2155 = vunpack.c.l.b16 %v2135
      %v2156 = vunpack.c.l.b16 %v2136
      %v2157 = vpack.c.b16 %v2150, %v2149
      %v2158 = vpack.c.b16 %v2152, %v2151
      %v2159 = vpack.c.b16 %v2154, %v2153
      %v2160 = vpack.c.b16 %v2156, %v2155
      %v2166 = vsel %vm1675, %v2127, 0
      %v2169 = vsel %vm1675, %v2128, 0
      %2171 = vmatpush.bf16.msra.mxu0 0
      %2172 = vmatpush.bf16.msra.mxu0 0
      %2173 = vmatpush.bf16.msra.mxu0 0
      %2174 = vmatpush.bf16.msra.mxu0 0
      %2175 = vmatpush.bf16.msra.mxu0 %v2160
      %2176 = vmatpush.bf16.msra.mxu0 %v2159
      %2177 = vmatpush.bf16.msra.mxu0 %v2158
      %2178 = vmatpush.bf16.msra.mxu0 %v2157
      %2179 = vmatmul.bf16.gmra.mxu0 %v2166
      %v2180 = vpop.f32.mrf.mxu0
      %v2181 = vadd.f32 %v2139, %v2180
      %v2182 = vpop.f32.mrf.mxu0
      %v2183 = vadd.f32 %v2139, %v2182
      %2184 = vmatmul.bf16.gmra.mxu0 %v2169
      %v2185 = vpop.f32.mrf.mxu0
      %v2186 = vadd.f32 %v2139, %v2185
      %v2187 = vpop.f32.mrf.mxu0
      %2188 = vdwg.mxu0
      %s2189 = scalar_lea.vmem %s14, 128
      %v2190 = vld [vmem:[%s2189] sm:$0xf]
      %v2191 = vld [vmem:[%s2189 + $0x4] sm:$0xf]
      %v2192 = vld [vmem:[%s2189 + $0x8] sm:$0xf]
      %v2193 = vld [vmem:[%s2189 + $0xc] sm:$0xf]
      %v2194 = vld [vmem:[%s2189 + $0x10] sm:$0xf]
      %v2195 = vld [vmem:[%s2189 + $0x14] sm:$0xf]
      %v2196 = vld [vmem:[%s2189 + $0x18] sm:$0xf]
      %v2197 = vld [vmem:[%s2189 + $0x1c] sm:$0xf]
      %s2198 = scalar_lea.vmem %s15, 4
      %v2199 = vld [vmem:[%s2198] sm:$0x1]
      %v2201 = vperm.slane %v2199, 0
      %v2211 = vunpack.c.l.b16 %v2190
      %v2212 = vunpack.c.l.b16 %v2191
      %v2213 = vunpack.c.l.b16 %v2192
      %v2214 = vunpack.c.l.b16 %v2193
      %v2215 = vunpack.c.l.b16 %v2194
      %v2216 = vunpack.c.l.b16 %v2195
      %v2217 = vunpack.c.l.b16 %v2196
      %v2218 = vunpack.c.l.b16 %v2197
      %v2219 = vpack.c.b16 %v2212, %v2211
      %v2220 = vpack.c.b16 %v2214, %v2213
      %v2221 = vpack.c.b16 %v2216, %v2215
      %v2222 = vpack.c.b16 %v2218, %v2217
      %2227 = vmatpush.bf16.msra.mxu0 0
      %2228 = vmatpush.bf16.msra.mxu0 0
      %2229 = vmatpush.bf16.msra.mxu0 0
      %2230 = vmatpush.bf16.msra.mxu0 0
      %2231 = vmatpush.bf16.msra.mxu0 %v2222
      %2232 = vmatpush.bf16.msra.mxu0 %v2221
      %2233 = vmatpush.bf16.msra.mxu0 %v2220
      %2234 = vmatpush.bf16.msra.mxu0 %v2219
      %2235 = vmatmul.bf16.gmra.mxu0 %v2166
      %v2236 = vpop.f32.mrf.mxu0
      %v2237 = vadd.f32 %v2201, %v2236
      %v2238 = vpop.f32.mrf.mxu0
      %v2239 = vadd.f32 %v2201, %v2238
      %2240 = vmatmul.bf16.gmra.mxu0 %v2169
      %v2241 = vpop.f32.mrf.mxu0
      %v2242 = vadd.f32 %v2201, %v2241
      %v2243 = vpop.f32.mrf.mxu0
      %2244 = vdwg.mxu0
      %s2245 = scalar_lea.vmem %s14, 256
      %v2246 = vld [vmem:[%s2245] sm:$0xf]
      %v2247 = vld [vmem:[%s2245 + $0x4] sm:$0xf]
      %v2248 = vld [vmem:[%s2245 + $0x8] sm:$0xf]
      %v2249 = vld [vmem:[%s2245 + $0xc] sm:$0xf]
      %v2250 = vld [vmem:[%s2245 + $0x10] sm:$0xf]
      %v2251 = vld [vmem:[%s2245 + $0x14] sm:$0xf]
      %v2252 = vld [vmem:[%s2245 + $0x18] sm:$0xf]
      %v2253 = vld [vmem:[%s2245 + $0x1c] sm:$0xf]
      %s2254 = scalar_lea.vmem %s15, 8
      %v2255 = vld [vmem:[%s2254] sm:$0x1]
      %v2257 = vperm.slane %v2255, 0
      %v2267 = vunpack.c.l.b16 %v2246
      %v2268 = vunpack.c.l.b16 %v2247
      %v2269 = vunpack.c.l.b16 %v2248
      %v2270 = vunpack.c.l.b16 %v2249
      %v2271 = vunpack.c.l.b16 %v2250
      %v2272 = vunpack.c.l.b16 %v2251
      %v2273 = vunpack.c.l.b16 %v2252
      %v2274 = vunpack.c.l.b16 %v2253
      %v2275 = vpack.c.b16 %v2268, %v2267
      %v2276 = vpack.c.b16 %v2270, %v2269
      %v2277 = vpack.c.b16 %v2272, %v2271
      %v2278 = vpack.c.b16 %v2274, %v2273
      %2283 = vmatpush.bf16.msra.mxu0 0
      %2284 = vmatpush.bf16.msra.mxu0 0
      %2285 = vmatpush.bf16.msra.mxu0 0
      %2286 = vmatpush.bf16.msra.mxu0 0
      %2287 = vmatpush.bf16.msra.mxu0 %v2278
      %2288 = vmatpush.bf16.msra.mxu0 %v2277
      %2289 = vmatpush.bf16.msra.mxu0 %v2276
      %2290 = vmatpush.bf16.msra.mxu0 %v2275
      %2291 = vmatmul.bf16.gmra.mxu0 %v2166
      %v2292 = vpop.f32.mrf.mxu0
      %v2293 = vadd.f32 %v2257, %v2292
      %v2294 = vpop.f32.mrf.mxu0
      %v2295 = vadd.f32 %v2257, %v2294
      %2296 = vmatmul.bf16.gmra.mxu0 %v2169
      %v2297 = vpop.f32.mrf.mxu0
      %v2298 = vadd.f32 %v2257, %v2297
      %v2299 = vpop.f32.mrf.mxu0
      %2300 = vdwg.mxu0
      %v2301 = vpack.c.bf16 %v2183, %v2181
      %v2302 = vpack.c.bf16 %v2186, %v2186
      %v2303 = vpack.c.bf16 %v2239, %v2237
      %v2304 = vpack.c.bf16 %v2242, %v2242
      %vm2305 = vcmask 130048
      %v2307 = vsel %vm2305, %v2301, 0
      %v2310 = vsel %vm2305, %v2302, 0
      %v2313 = vsel %vm2305, %v2303, 0
      %v2316 = vsel %vm2305, %v2304, 0
      %2318 = vmatpush.bf16.xpose.msra.mxu0 0
      %2319 = vmatpush.bf16.xpose.msra.mxu0 0
      %2320 = vmatpush.bf16.xpose.msra.mxu0 0
      %2321 = vmatpush.bf16.xpose.msra.mxu0 0
      %2322 = vmatpush.bf16.xpose.msra.mxu0 0
      %2323 = vmatpush.bf16.xpose.msra.mxu0 0
      %2324 = vmatpush.bf16.xpose.msra.mxu0 %v2316
      %2325 = vmatpush.bf16.xpose.msra.mxu0 %v2313
      %2326 = vmatmul.bf16.gmra.mxu0 %v2307
      %v2327 = vpop.f32.mrf.mxu0
      %v2328 = vadd.f32 0.0, %v2327
      %v2329 = vpop.f32.mrf.mxu0
      %v2330 = vadd.f32 0.0, %v2329
      %2331 = vmatmul.bf16.gmra.mxu0 %v2310
      %v2332 = vpop.f32.mrf.mxu0
      %v2333 = vadd.f32 0.0, %v2332
      %v2334 = vpop.f32.mrf.mxu0
      %2335 = vdwg.mxu0
      %vm2336 = vcmask 154624
      %v2337 = vsel %vm2336, %v2328, -inf
      %2338 = vmax.xlane.f32.xlu0 %v2337
      %v2339 = vpop.xlane.xlu0 %2338
      %v2340 = vsel %vm2336, %v2330, -inf
      %2341 = vmax.xlane.f32.xlu0 %v2340
      %v2342 = vpop.xlane.xlu0 %2341
      %vm2343 = vcmask 149504
      %v2344 = vsel %vm2343, %v2333, -inf
      %2345 = vmax.xlane.f32.xlu0 %v2344
      %v2346 = vpop.xlane.xlu0 %2345
      %v2347 = vsub.f32 %v2328, %v2339
      %v2348 = vsub.f32 %v2330, %v2342
      %v2349 = vsub.f32 %v2333, %v2346
      %v2350 = vmul.f32 %v2347, 1.442695
      %v2351 = vpow.pop %v2350
      %v2352 = vmul.f32 %v2348, 1.442695
      %v2353 = vpow.pop %v2352
      %v2354 = vmul.f32 %v2349, 1.442695
      %v2355 = vpow.pop %v2354
      %v2356 = vsel %vm2336, %v2351, 0.0
      %2357 = vadd.xlane.f32.xlu0 %v2356
      %v2358 = vpop.xlane.xlu0 %2357
      %v2359 = vsel %vm2336, %v2353, 0.0
      %2360 = vadd.xlane.f32.xlu0 %v2359
      %v2361 = vpop.xlane.xlu0 %2360
      %v2362 = vsel %vm2343, %v2355, 0.0
      %2363 = vadd.xlane.f32.xlu0 %v2362
      %v2364 = vpop.xlane.xlu0 %2363
      %v2365 = vrcp.pop %v2358
      %v2366 = vrcp.pop %v2361
      %v2367 = vrcp.pop %v2364
      %v2368 = vmul.f32 %v2351, %v2365
      %v2369 = vmul.f32 %v2353, %v2366
      %v2370 = vmul.f32 %v2355, %v2367
      %v2371 = vpack.c.bf16 %v2369, %v2368
      %v2372 = vpack.c.bf16 %v2370, %v2370
      %v2373 = vpack.c.bf16 %v2295, %v2293
      %v2374 = vpack.c.bf16 %v2298, %v2298
      %v2376 = vsel %vm2336, %v2371, 0
      %v2379 = vsel %vm2336, %v2372, 0
      %vm2381 = vcmask 1040384
      %vm2382 = vcmask 1041408
      %v2383 = vsel %vm2381, 4294967295, 65535
      %v2384 = vsel %vm2382, %v2383, 0
      %v2386 = vand.u32 %v2374, %v2384
      %2388 = vmatpush.bf16.msra.mxu0 0
      %2389 = vmatpush.bf16.msra.mxu0 0
      %2390 = vmatpush.bf16.msra.mxu0 0
      %2391 = vmatpush.bf16.msra.mxu0 0
      %2392 = vmatpush.bf16.msra.mxu0 0
      %2393 = vmatpush.bf16.msra.mxu0 0
      %2394 = vmatpush.bf16.msra.mxu0 %v2386
      %2395 = vmatpush.bf16.msra.mxu0 %v2373
      %2396 = vmatmul.bf16.gmra.mxu0 %v2376
      %v2397 = vpop.f32.mrf.mxu0
      %v2398 = vadd.f32 0.0, %v2397
      %v2399 = vpop.f32.mrf.mxu0
      %v2400 = vadd.f32 0.0, %v2399
      %2401 = vmatmul.bf16.gmra.mxu0 %v2379
      %v2402 = vpop.f32.mrf.mxu0
      %v2403 = vadd.f32 0.0, %v2402
      %v2404 = vpop.f32.mrf.mxu0
      %2405 = vdwg.mxu0
      %v2406 = vpack.c.bf16 %v2400, %v2398
      %v2407 = vpack.c.bf16 %v2403, %v2403
      %v2408 = vld [vmem:[%s16] sm:$0xf]
      %v2409 = vld [vmem:[%s16 + $0x4] sm:$0xf]
      %s2410 = scalar_lea.vmem %s14, 32
      %v2411 = vld [vmem:[%s2410] sm:$0xf]
      %v2412 = vld [vmem:[%s2410 + $0x4] sm:$0xf]
      %v2413 = vld [vmem:[%s2410 + $0x8] sm:$0xf]
      %v2414 = vld [vmem:[%s2410 + $0xc] sm:$0xf]
      %v2415 = vld [vmem:[%s2410 + $0x10] sm:$0xf]
      %v2416 = vld [vmem:[%s2410 + $0x14] sm:$0xf]
      %v2417 = vld [vmem:[%s2410 + $0x18] sm:$0xf]
      %v2418 = vld [vmem:[%s2410 + $0x1c] sm:$0xf]
      %s2419 = scalar_lea.vmem %s15, 1
      %v2420 = vld [vmem:[%s2419] sm:$0x1]
      %v2422 = vperm.slane %v2420, 0
      %v2432 = vunpack.c.l.b16 %v2411
      %v2433 = vunpack.c.l.b16 %v2412
      %v2434 = vunpack.c.l.b16 %v2413
      %v2435 = vunpack.c.l.b16 %v2414
      %v2436 = vunpack.c.l.b16 %v2415
      %v2437 = vunpack.c.l.b16 %v2416
      %v2438 = vunpack.c.l.b16 %v2417
      %v2439 = vunpack.c.l.b16 %v2418
      %v2440 = vpack.c.b16 %v2433, %v2432
      %v2441 = vpack.c.b16 %v2435, %v2434
      %v2442 = vpack.c.b16 %v2437, %v2436
      %v2443 = vpack.c.b16 %v2439, %v2438
      %2448 = vmatpush.bf16.msra.mxu0 0
      %2449 = vmatpush.bf16.msra.mxu0 0
      %2450 = vmatpush.bf16.msra.mxu0 0
      %2451 = vmatpush.bf16.msra.mxu0 0
      %2452 = vmatpush.bf16.msra.mxu0 %v2443
      %2453 = vmatpush.bf16.msra.mxu0 %v2442
      %2454 = vmatpush.bf16.msra.mxu0 %v2441
      %2455 = vmatpush.bf16.msra.mxu0 %v2440
      %2456 = vmatmul.bf16.gmra.mxu0 %v2166
      %v2457 = vpop.f32.mrf.mxu0
      %v2458 = vadd.f32 %v2422, %v2457
      %v2459 = vpop.f32.mrf.mxu0
      %v2460 = vadd.f32 %v2422, %v2459
      %2461 = vmatmul.bf16.gmra.mxu0 %v2169
      %v2462 = vpop.f32.mrf.mxu0
      %v2463 = vadd.f32 %v2422, %v2462
      %v2464 = vpop.f32.mrf.mxu0
      %2465 = vdwg.mxu0
      %s2466 = scalar_lea.vmem %s14, 160
      %v2467 = vld [vmem:[%s2466] sm:$0xf]
      %v2468 = vld [vmem:[%s2466 + $0x4] sm:$0xf]
      %v2469 = vld [vmem:[%s2466 + $0x8] sm:$0xf]
      %v2470 = vld [vmem:[%s2466 + $0xc] sm:$0xf]
      %v2471 = vld [vmem:[%s2466 + $0x10] sm:$0xf]
      %v2472 = vld [vmem:[%s2466 + $0x14] sm:$0xf]
      %v2473 = vld [vmem:[%s2466 + $0x18] sm:$0xf]
      %v2474 = vld [vmem:[%s2466 + $0x1c] sm:$0xf]
      %s2475 = scalar_lea.vmem %s15, 5
      %v2476 = vld [vmem:[%s2475] sm:$0x1]
      %v2478 = vperm.slane %v2476, 0
      %v2488 = vunpack.c.l.b16 %v2467
      %v2489 = vunpack.c.l.b16 %v2468
      %v2490 = vunpack.c.l.b16 %v2469
      %v2491 = vunpack.c.l.b16 %v2470
      %v2492 = vunpack.c.l.b16 %v2471
      %v2493 = vunpack.c.l.b16 %v2472
      %v2494 = vunpack.c.l.b16 %v2473
      %v2495 = vunpack.c.l.b16 %v2474
      %v2496 = vpack.c.b16 %v2489, %v2488
      %v2497 = vpack.c.b16 %v2491, %v2490
      %v2498 = vpack.c.b16 %v2493, %v2492
      %v2499 = vpack.c.b16 %v2495, %v2494
      %2504 = vmatpush.bf16.msra.mxu0 0
      %2505 = vmatpush.bf16.msra.mxu0 0
      %2506 = vmatpush.bf16.msra.mxu0 0
      %2507 = vmatpush.bf16.msra.mxu0 0
      %2508 = vmatpush.bf16.msra.mxu0 %v2499
      %2509 = vmatpush.bf16.msra.mxu0 %v2498
      %2510 = vmatpush.bf16.msra.mxu0 %v2497
      %2511 = vmatpush.bf16.msra.mxu0 %v2496
      %2512 = vmatmul.bf16.gmra.mxu0 %v2166
      %v2513 = vpop.f32.mrf.mxu0
      %v2514 = vadd.f32 %v2478, %v2513
      %v2515 = vpop.f32.mrf.mxu0
      %v2516 = vadd.f32 %v2478, %v2515
      %2517 = vmatmul.bf16.gmra.mxu0 %v2169
      %v2518 = vpop.f32.mrf.mxu0
      %v2519 = vadd.f32 %v2478, %v2518
      %v2520 = vpop.f32.mrf.mxu0
      %2521 = vdwg.mxu0
      %s2522 = scalar_lea.vmem %s14, 288
      %v2523 = vld [vmem:[%s2522] sm:$0xf]
      %v2524 = vld [vmem:[%s2522 + $0x4] sm:$0xf]
      %v2525 = vld [vmem:[%s2522 + $0x8] sm:$0xf]
      %v2526 = vld [vmem:[%s2522 + $0xc] sm:$0xf]
      %v2527 = vld [vmem:[%s2522 + $0x10] sm:$0xf]
      %v2528 = vld [vmem:[%s2522 + $0x14] sm:$0xf]
      %v2529 = vld [vmem:[%s2522 + $0x18] sm:$0xf]
      %v2530 = vld [vmem:[%s2522 + $0x1c] sm:$0xf]
      %s2531 = scalar_lea.vmem %s15, 9
      %v2532 = vld [vmem:[%s2531] sm:$0x1]
      %v2534 = vperm.slane %v2532, 0
      %v2544 = vunpack.c.l.b16 %v2523
      %v2545 = vunpack.c.l.b16 %v2524
      %v2546 = vunpack.c.l.b16 %v2525
      %v2547 = vunpack.c.l.b16 %v2526
      %v2548 = vunpack.c.l.b16 %v2527
      %v2549 = vunpack.c.l.b16 %v2528
      %v2550 = vunpack.c.l.b16 %v2529
      %v2551 = vunpack.c.l.b16 %v2530
      %v2552 = vpack.c.b16 %v2545, %v2544
      %v2553 = vpack.c.b16 %v2547, %v2546
      %v2554 = vpack.c.b16 %v2549, %v2548
      %v2555 = vpack.c.b16 %v2551, %v2550
      %2560 = vmatpush.bf16.msra.mxu0 0
      %2561 = vmatpush.bf16.msra.mxu0 0
      %2562 = vmatpush.bf16.msra.mxu0 0
      %2563 = vmatpush.bf16.msra.mxu0 0
      %2564 = vmatpush.bf16.msra.mxu0 %v2555
      %2565 = vmatpush.bf16.msra.mxu0 %v2554
      %2566 = vmatpush.bf16.msra.mxu0 %v2553
      %2567 = vmatpush.bf16.msra.mxu0 %v2552
      %2568 = vmatmul.bf16.gmra.mxu0 %v2166
      %v2569 = vpop.f32.mrf.mxu0
      %v2570 = vadd.f32 %v2534, %v2569
      %v2571 = vpop.f32.mrf.mxu0
      %v2572 = vadd.f32 %v2534, %v2571
      %2573 = vmatmul.bf16.gmra.mxu0 %v2169
      %v2574 = vpop.f32.mrf.mxu0
      %v2575 = vadd.f32 %v2534, %v2574
      %v2576 = vpop.f32.mrf.mxu0
      %2577 = vdwg.mxu0
      %v2578 = vpack.c.bf16 %v2460, %v2458
      %v2579 = vpack.c.bf16 %v2463, %v2463
      %v2580 = vpack.c.bf16 %v2516, %v2514
      %v2581 = vpack.c.bf16 %v2519, %v2519
      %v2583 = vsel %vm2305, %v2578, 0
      %v2586 = vsel %vm2305, %v2579, 0
      %v2589 = vsel %vm2305, %v2580, 0
      %v2592 = vsel %vm2305, %v2581, 0
      %2594 = vmatpush.bf16.xpose.msra.mxu0 0
      %2595 = vmatpush.bf16.xpose.msra.mxu0 0
      %2596 = vmatpush.bf16.xpose.msra.mxu0 0
      %2597 = vmatpush.bf16.xpose.msra.mxu0 0
      %2598 = vmatpush.bf16.xpose.msra.mxu0 0
      %2599 = vmatpush.bf16.xpose.msra.mxu0 0
      %2600 = vmatpush.bf16.xpose.msra.mxu0 %v2592
      %2601 = vmatpush.bf16.xpose.msra.mxu0 %v2589
      %2602 = vmatmul.bf16.gmra.mxu0 %v2583
      %v2603 = vpop.f32.mrf.mxu0
      %v2604 = vadd.f32 0.0, %v2603
      %v2605 = vpop.f32.mrf.mxu0
      %v2606 = vadd.f32 0.0, %v2605
      %2607 = vmatmul.bf16.gmra.mxu0 %v2586
      %v2608 = vpop.f32.mrf.mxu0
      %v2609 = vadd.f32 0.0, %v2608
      %v2610 = vpop.f32.mrf.mxu0
      %2611 = vdwg.mxu0
      %v2612 = vsel %vm2336, %v2604, -inf
      %2613 = vmax.xlane.f32.xlu0 %v2612
      %v2614 = vpop.xlane.xlu0 %2613
      %v2615 = vsel %vm2336, %v2606, -inf
      %2616 = vmax.xlane.f32.xlu0 %v2615
      %v2617 = vpop.xlane.xlu0 %2616
      %v2618 = vsel %vm2343, %v2609, -inf
      %2619 = vmax.xlane.f32.xlu0 %v2618
      %v2620 = vpop.xlane.xlu0 %2619
      %v2621 = vsub.f32 %v2604, %v2614
      %v2622 = vsub.f32 %v2606, %v2617
      %v2623 = vsub.f32 %v2609, %v2620
      %v2624 = vmul.f32 %v2621, 1.442695
      %v2625 = vpow.pop %v2624
      %v2626 = vmul.f32 %v2622, 1.442695
      %v2627 = vpow.pop %v2626
      %v2628 = vmul.f32 %v2623, 1.442695
      %v2629 = vpow.pop %v2628
      %v2630 = vsel %vm2336, %v2625, 0.0
      %2631 = vadd.xlane.f32.xlu0 %v2630
      %v2632 = vpop.xlane.xlu0 %2631
      %v2633 = vsel %vm2336, %v2627, 0.0
      %2634 = vadd.xlane.f32.xlu0 %v2633
      %v2635 = vpop.xlane.xlu0 %2634
      %v2636 = vsel %vm2343, %v2629, 0.0
      %2637 = vadd.xlane.f32.xlu0 %v2636
      %v2638 = vpop.xlane.xlu0 %2637
      %v2639 = vrcp.pop %v2632
      %v2640 = vrcp.pop %v2635
      %v2641 = vrcp.pop %v2638
      %v2642 = vmul.f32 %v2625, %v2639
      %v2643 = vmul.f32 %v2627, %v2640
      %v2644 = vmul.f32 %v2629, %v2641
      %v2645 = vpack.c.bf16 %v2643, %v2642
      %v2646 = vpack.c.bf16 %v2644, %v2644
      %v2647 = vpack.c.bf16 %v2572, %v2570
      %v2648 = vpack.c.bf16 %v2575, %v2575
      %v2650 = vsel %vm2336, %v2645, 0
      %v2653 = vsel %vm2336, %v2646, 0
      %v2656 = vand.u32 %v2648, %v2384
      %2658 = vmatpush.bf16.msra.mxu0 0
      %2659 = vmatpush.bf16.msra.mxu0 0
      %2660 = vmatpush.bf16.msra.mxu0 0
      %2661 = vmatpush.bf16.msra.mxu0 0
      %2662 = vmatpush.bf16.msra.mxu0 0
      %2663 = vmatpush.bf16.msra.mxu0 0
      %2664 = vmatpush.bf16.msra.mxu0 %v2656
      %2665 = vmatpush.bf16.msra.mxu0 %v2647
      %2666 = vmatmul.bf16.gmra.mxu0 %v2650
      %v2667 = vpop.f32.mrf.mxu0
      %v2668 = vadd.f32 0.0, %v2667
      %v2669 = vpop.f32.mrf.mxu0
      %v2670 = vadd.f32 0.0, %v2669
      %2671 = vmatmul.bf16.gmra.mxu0 %v2653
      %v2672 = vpop.f32.mrf.mxu0
      %v2673 = vadd.f32 0.0, %v2672
      %v2674 = vpop.f32.mrf.mxu0
      %2675 = vdwg.mxu0
      %v2676 = vpack.c.bf16 %v2670, %v2668
      %v2677 = vpack.c.bf16 %v2673, %v2673
      %s2678 = scalar_lea.vmem %s16, 8
      %v2679 = vld [vmem:[%s2678] sm:$0xf]
      %v2680 = vld [vmem:[%s2678 + $0x4] sm:$0xf]
      %v2683 = vunpack.c.l.b16 %v2679
      %v2684 = vunpack.c.l.b16 %v2680
      %v2685 = vpack.c.b16 %v2684, %v2683
      %v2688 = vsel %vm2305, %v2676, 0
      %v2691 = vsel %vm2305, %v2677, 0
      %2693 = vmatpush.bf16.msra.mxu0 0
      %2694 = vmatpush.bf16.msra.mxu0 0
      %2695 = vmatpush.bf16.msra.mxu0 0
      %2696 = vmatpush.bf16.msra.mxu0 0
      %2697 = vmatpush.bf16.msra.mxu0 0
      %2698 = vmatpush.bf16.msra.mxu0 0
      %2699 = vmatpush.bf16.msra.mxu0 0
      %2700 = vmatpush.bf16.msra.mxu0 %v2685
      %2701 = vmatmul.bf16.gmra.mxu0 %v2688
      %v2702 = vpop.f32.mrf.mxu0
      %v2703 = vadd.f32 0.0, %v2702
      %v2704 = vpop.f32.mrf.mxu0
      %v2705 = vadd.f32 0.0, %v2704
      %2706 = vmatmul.bf16.gmra.mxu0 %v2691
      %v2707 = vpop.f32.mrf.mxu0
      %v2708 = vadd.f32 0.0, %v2707
      %v2709 = vpop.f32.mrf.mxu0
      %2710 = vdwg.mxu0
      %v2713 = vunpack.c.l.b16 %v2408
      %v2714 = vunpack.c.l.b16 %v2409
      %v2715 = vpack.c.b16 %v2714, %v2713
      %v2718 = vsel %vm2305, %v2406, 0
      %v2721 = vsel %vm2305, %v2407, 0
      %2723 = vmatpush.bf16.msra.mxu0 0
      %2724 = vmatpush.bf16.msra.mxu0 0
      %2725 = vmatpush.bf16.msra.mxu0 0
      %2726 = vmatpush.bf16.msra.mxu0 0
      %2727 = vmatpush.bf16.msra.mxu0 0
      %2728 = vmatpush.bf16.msra.mxu0 0
      %2729 = vmatpush.bf16.msra.mxu0 0
      %2730 = vmatpush.bf16.msra.mxu0 %v2715
      %2731 = vmatmul.bf16.gmra.mxu0 %v2718
      %v2732 = vpop.f32.mrf.mxu0
      %v2733 = vadd.f32 %v2703, %v2732
      %v2734 = vpop.f32.mrf.mxu0
      %v2735 = vadd.f32 %v2705, %v2734
      %2736 = vmatmul.bf16.gmra.mxu0 %v2721
      %v2737 = vpop.f32.mrf.mxu0
      %v2738 = vadd.f32 %v2708, %v2737
      %v2739 = vpop.f32.mrf.mxu0
      %2740 = vdwg.mxu0
      %s2741 = scalar_lea.vmem %s14, 64
      %v2742 = vld [vmem:[%s2741] sm:$0xf]
      %v2743 = vld [vmem:[%s2741 + $0x4] sm:$0xf]
      %v2744 = vld [vmem:[%s2741 + $0x8] sm:$0xf]
      %v2745 = vld [vmem:[%s2741 + $0xc] sm:$0xf]
      %v2746 = vld [vmem:[%s2741 + $0x10] sm:$0xf]
      %v2747 = vld [vmem:[%s2741 + $0x14] sm:$0xf]
      %v2748 = vld [vmem:[%s2741 + $0x18] sm:$0xf]
      %v2749 = vld [vmem:[%s2741 + $0x1c] sm:$0xf]
      %s2750 = scalar_lea.vmem %s15, 2
      %v2751 = vld [vmem:[%s2750] sm:$0x1]
      %v2753 = vperm.slane %v2751, 0
      %v2763 = vunpack.c.l.b16 %v2742
      %v2764 = vunpack.c.l.b16 %v2743
      %v2765 = vunpack.c.l.b16 %v2744
      %v2766 = vunpack.c.l.b16 %v2745
      %v2767 = vunpack.c.l.b16 %v2746
      %v2768 = vunpack.c.l.b16 %v2747
      %v2769 = vunpack.c.l.b16 %v2748
      %v2770 = vunpack.c.l.b16 %v2749
      %v2771 = vpack.c.b16 %v2764, %v2763
      %v2772 = vpack.c.b16 %v2766, %v2765
      %v2773 = vpack.c.b16 %v2768, %v2767
      %v2774 = vpack.c.b16 %v2770, %v2769
      %2779 = vmatpush.bf16.msra.mxu0 0
      %2780 = vmatpush.bf16.msra.mxu0 0
      %2781 = vmatpush.bf16.msra.mxu0 0
      %2782 = vmatpush.bf16.msra.mxu0 0
      %2783 = vmatpush.bf16.msra.mxu0 %v2774
      %2784 = vmatpush.bf16.msra.mxu0 %v2773
      %2785 = vmatpush.bf16.msra.mxu0 %v2772
      %2786 = vmatpush.bf16.msra.mxu0 %v2771
      %2787 = vmatmul.bf16.gmra.mxu0 %v2166
      %v2788 = vpop.f32.mrf.mxu0
      %v2789 = vadd.f32 %v2753, %v2788
      %v2790 = vpop.f32.mrf.mxu0
      %v2791 = vadd.f32 %v2753, %v2790
      %2792 = vmatmul.bf16.gmra.mxu0 %v2169
      %v2793 = vpop.f32.mrf.mxu0
      %v2794 = vadd.f32 %v2753, %v2793
      %v2795 = vpop.f32.mrf.mxu0
      %2796 = vdwg.mxu0
      %s2797 = scalar_lea.vmem %s14, 192
      %v2798 = vld [vmem:[%s2797] sm:$0xf]
      %v2799 = vld [vmem:[%s2797 + $0x4] sm:$0xf]
      %v2800 = vld [vmem:[%s2797 + $0x8] sm:$0xf]
      %v2801 = vld [vmem:[%s2797 + $0xc] sm:$0xf]
      %v2802 = vld [vmem:[%s2797 + $0x10] sm:$0xf]
      %v2803 = vld [vmem:[%s2797 + $0x14] sm:$0xf]
      %v2804 = vld [vmem:[%s2797 + $0x18] sm:$0xf]
      %v2805 = vld [vmem:[%s2797 + $0x1c] sm:$0xf]
      %s2806 = scalar_lea.vmem %s15, 6
      %v2807 = vld [vmem:[%s2806] sm:$0x1]
      %v2809 = vperm.slane %v2807, 0
      %v2819 = vunpack.c.l.b16 %v2798
      %v2820 = vunpack.c.l.b16 %v2799
      %v2821 = vunpack.c.l.b16 %v2800
      %v2822 = vunpack.c.l.b16 %v2801
      %v2823 = vunpack.c.l.b16 %v2802
      %v2824 = vunpack.c.l.b16 %v2803
      %v2825 = vunpack.c.l.b16 %v2804
      %v2826 = vunpack.c.l.b16 %v2805
      %v2827 = vpack.c.b16 %v2820, %v2819
      %v2828 = vpack.c.b16 %v2822, %v2821
      %v2829 = vpack.c.b16 %v2824, %v2823
      %v2830 = vpack.c.b16 %v2826, %v2825
      %2835 = vmatpush.bf16.msra.mxu0 0
      %2836 = vmatpush.bf16.msra.mxu0 0
      %2837 = vmatpush.bf16.msra.mxu0 0
      %2838 = vmatpush.bf16.msra.mxu0 0
      %2839 = vmatpush.bf16.msra.mxu0 %v2830
      %2840 = vmatpush.bf16.msra.mxu0 %v2829
      %2841 = vmatpush.bf16.msra.mxu0 %v2828
      %2842 = vmatpush.bf16.msra.mxu0 %v2827
      %2843 = vmatmul.bf16.gmra.mxu0 %v2166
      %v2844 = vpop.f32.mrf.mxu0
      %v2845 = vadd.f32 %v2809, %v2844
      %v2846 = vpop.f32.mrf.mxu0
      %v2847 = vadd.f32 %v2809, %v2846
      %2848 = vmatmul.bf16.gmra.mxu0 %v2169
      %v2849 = vpop.f32.mrf.mxu0
      %v2850 = vadd.f32 %v2809, %v2849
      %v2851 = vpop.f32.mrf.mxu0
      %2852 = vdwg.mxu0
      %s2853 = scalar_lea.vmem %s14, 320
      %v2854 = vld [vmem:[%s2853] sm:$0xf]
      %v2855 = vld [vmem:[%s2853 + $0x4] sm:$0xf]
      %v2856 = vld [vmem:[%s2853 + $0x8] sm:$0xf]
      %v2857 = vld [vmem:[%s2853 + $0xc] sm:$0xf]
      %v2858 = vld [vmem:[%s2853 + $0x10] sm:$0xf]
      %v2859 = vld [vmem:[%s2853 + $0x14] sm:$0xf]
      %v2860 = vld [vmem:[%s2853 + $0x18] sm:$0xf]
      %v2861 = vld [vmem:[%s2853 + $0x1c] sm:$0xf]
      %s2862 = scalar_lea.vmem %s15, 10
      %v2863 = vld [vmem:[%s2862] sm:$0x1]
      %v2865 = vperm.slane %v2863, 0
      %v2875 = vunpack.c.l.b16 %v2854
      %v2876 = vunpack.c.l.b16 %v2855
      %v2877 = vunpack.c.l.b16 %v2856
      %v2878 = vunpack.c.l.b16 %v2857
      %v2879 = vunpack.c.l.b16 %v2858
      %v2880 = vunpack.c.l.b16 %v2859
      %v2881 = vunpack.c.l.b16 %v2860
      %v2882 = vunpack.c.l.b16 %v2861
      %v2883 = vpack.c.b16 %v2876, %v2875
      %v2884 = vpack.c.b16 %v2878, %v2877
      %v2885 = vpack.c.b16 %v2880, %v2879
      %v2886 = vpack.c.b16 %v2882, %v2881
      %2891 = vmatpush.bf16.msra.mxu0 0
      %2892 = vmatpush.bf16.msra.mxu0 0
      %2893 = vmatpush.bf16.msra.mxu0 0
      %2894 = vmatpush.bf16.msra.mxu0 0
      %2895 = vmatpush.bf16.msra.mxu0 %v2886
      %2896 = vmatpush.bf16.msra.mxu0 %v2885
      %2897 = vmatpush.bf16.msra.mxu0 %v2884
      %2898 = vmatpush.bf16.msra.mxu0 %v2883
      %2899 = vmatmul.bf16.gmra.mxu0 %v2166
      %v2900 = vpop.f32.mrf.mxu0
      %v2901 = vadd.f32 %v2865, %v2900
      %v2902 = vpop.f32.mrf.mxu0
      %v2903 = vadd.f32 %v2865, %v2902
      %2904 = vmatmul.bf16.gmra.mxu0 %v2169
      %v2905 = vpop.f32.mrf.mxu0
      %v2906 = vadd.f32 %v2865, %v2905
      %v2907 = vpop.f32.mrf.mxu0
      %2908 = vdwg.mxu0
      %v2909 = vpack.c.bf16 %v2791, %v2789
      %v2910 = vpack.c.bf16 %v2794, %v2794
      %v2911 = vpack.c.bf16 %v2847, %v2845
      %v2912 = vpack.c.bf16 %v2850, %v2850
      %v2914 = vsel %vm2305, %v2909, 0
      %v2917 = vsel %vm2305, %v2910, 0
      %v2920 = vsel %vm2305, %v2911, 0
      %v2923 = vsel %vm2305, %v2912, 0
      %2925 = vmatpush.bf16.xpose.msra.mxu0 0
      %2926 = vmatpush.bf16.xpose.msra.mxu0 0
      %2927 = vmatpush.bf16.xpose.msra.mxu0 0
      %2928 = vmatpush.bf16.xpose.msra.mxu0 0
      %2929 = vmatpush.bf16.xpose.msra.mxu0 0
      %2930 = vmatpush.bf16.xpose.msra.mxu0 0
      %2931 = vmatpush.bf16.xpose.msra.mxu0 %v2923
      %2932 = vmatpush.bf16.xpose.msra.mxu0 %v2920
      %2933 = vmatmul.bf16.gmra.mxu0 %v2914
      %v2934 = vpop.f32.mrf.mxu0
      %v2935 = vadd.f32 0.0, %v2934
      %v2936 = vpop.f32.mrf.mxu0
      %v2937 = vadd.f32 0.0, %v2936
      %2938 = vmatmul.bf16.gmra.mxu0 %v2917
      %v2939 = vpop.f32.mrf.mxu0
      %v2940 = vadd.f32 0.0, %v2939
      %v2941 = vpop.f32.mrf.mxu0
      %2942 = vdwg.mxu0
      %v2943 = vsel %vm2336, %v2935, -inf
      %2944 = vmax.xlane.f32.xlu0 %v2943
      %v2945 = vpop.xlane.xlu0 %2944
      %v2946 = vsel %vm2336, %v2937, -inf
      %2947 = vmax.xlane.f32.xlu0 %v2946
      %v2948 = vpop.xlane.xlu0 %2947
      %v2949 = vsel %vm2343, %v2940, -inf
      %2950 = vmax.xlane.f32.xlu0 %v2949
      %v2951 = vpop.xlane.xlu0 %2950
      %v2952 = vsub.f32 %v2935, %v2945
      %v2953 = vsub.f32 %v2937, %v2948
      %v2954 = vsub.f32 %v2940, %v2951
      %v2955 = vmul.f32 %v2952, 1.442695
      %v2956 = vpow.pop %v2955
      %v2957 = vmul.f32 %v2953, 1.442695
      %v2958 = vpow.pop %v2957
      %v2959 = vmul.f32 %v2954, 1.442695
      %v2960 = vpow.pop %v2959
      %v2961 = vsel %vm2336, %v2956, 0.0
      %2962 = vadd.xlane.f32.xlu0 %v2961
      %v2963 = vpop.xlane.xlu0 %2962
      %v2964 = vsel %vm2336, %v2958, 0.0
      %2965 = vadd.xlane.f32.xlu0 %v2964
      %v2966 = vpop.xlane.xlu0 %2965
      %v2967 = vsel %vm2343, %v2960, 0.0
      %2968 = vadd.xlane.f32.xlu0 %v2967
      %v2969 = vpop.xlane.xlu0 %2968
      %v2970 = vrcp.pop %v2963
      %v2971 = vrcp.pop %v2966
      %v2972 = vrcp.pop %v2969
      %v2973 = vmul.f32 %v2956, %v2970
      %v2974 = vmul.f32 %v2958, %v2971
      %v2975 = vmul.f32 %v2960, %v2972
      %v2976 = vpack.c.bf16 %v2974, %v2973
      %v2977 = vpack.c.bf16 %v2975, %v2975
      %v2978 = vpack.c.bf16 %v2903, %v2901
      %v2979 = vpack.c.bf16 %v2906, %v2906
      %v2981 = vsel %vm2336, %v2976, 0
      %v2984 = vsel %vm2336, %v2977, 0
      %v2987 = vand.u32 %v2979, %v2384
      %2989 = vmatpush.bf16.msra.mxu0 0
      %2990 = vmatpush.bf16.msra.mxu0 0
      %2991 = vmatpush.bf16.msra.mxu0 0
      %2992 = vmatpush.bf16.msra.mxu0 0
      %2993 = vmatpush.bf16.msra.mxu0 0
      %2994 = vmatpush.bf16.msra.mxu0 0
      %2995 = vmatpush.bf16.msra.mxu0 %v2987
      %2996 = vmatpush.bf16.msra.mxu0 %v2978
      %2997 = vmatmul.bf16.gmra.mxu0 %v2981
      %v2998 = vpop.f32.mrf.mxu0
      %v2999 = vadd.f32 0.0, %v2998
      %v3000 = vpop.f32.mrf.mxu0
      %v3001 = vadd.f32 0.0, %v3000
      %3002 = vmatmul.bf16.gmra.mxu0 %v2984
      %v3003 = vpop.f32.mrf.mxu0
      %v3004 = vadd.f32 0.0, %v3003
      %v3005 = vpop.f32.mrf.mxu0
      %3006 = vdwg.mxu0
      %v3007 = vpack.c.bf16 %v3001, %v2999
      %v3008 = vpack.c.bf16 %v3004, %v3004
      %s3009 = scalar_lea.vmem %s16, 16
      %v3010 = vld [vmem:[%s3009] sm:$0xf]
      %v3011 = vld [vmem:[%s3009 + $0x4] sm:$0xf]
      %v3014 = vunpack.c.l.b16 %v3010
      %v3015 = vunpack.c.l.b16 %v3011
      %v3016 = vpack.c.b16 %v3015, %v3014
      %v3019 = vsel %vm2305, %v3007, 0
      %v3022 = vsel %vm2305, %v3008, 0
      %3024 = vmatpush.bf16.msra.mxu0 0
      %3025 = vmatpush.bf16.msra.mxu0 0
      %3026 = vmatpush.bf16.msra.mxu0 0
      %3027 = vmatpush.bf16.msra.mxu0 0
      %3028 = vmatpush.bf16.msra.mxu0 0
      %3029 = vmatpush.bf16.msra.mxu0 0
      %3030 = vmatpush.bf16.msra.mxu0 0
      %3031 = vmatpush.bf16.msra.mxu0 %v3016
      %3032 = vmatmul.bf16.gmra.mxu0 %v3019
      %v3033 = vpop.f32.mrf.mxu0
      %v3034 = vadd.f32 0.0, %v3033
      %v3035 = vpop.f32.mrf.mxu0
      %v3036 = vadd.f32 0.0, %v3035
      %3037 = vmatmul.bf16.gmra.mxu0 %v3022
      %v3038 = vpop.f32.mrf.mxu0
      %v3039 = vadd.f32 0.0, %v3038
      %v3040 = vpop.f32.mrf.mxu0
      %3041 = vdwg.mxu0
      %v3042 = vadd.f32 %v2733, %v3034
      %v3043 = vadd.f32 %v2735, %v3036
      %v3044 = vadd.f32 %v2738, %v3039
      %s3045 = scalar_lea.vmem %s14, 96
      %v3046 = vld [vmem:[%s3045] sm:$0xf]
      %v3047 = vld [vmem:[%s3045 + $0x4] sm:$0xf]
      %v3048 = vld [vmem:[%s3045 + $0x8] sm:$0xf]
      %v3049 = vld [vmem:[%s3045 + $0xc] sm:$0xf]
      %v3050 = vld [vmem:[%s3045 + $0x10] sm:$0xf]
      %v3051 = vld [vmem:[%s3045 + $0x14] sm:$0xf]
      %v3052 = vld [vmem:[%s3045 + $0x18] sm:$0xf]
      %v3053 = vld [vmem:[%s3045 + $0x1c] sm:$0xf]
      %s3054 = scalar_lea.vmem %s15, 3
      %v3055 = vld [vmem:[%s3054] sm:$0x1]
      %v3057 = vperm.slane %v3055, 0
      %v3067 = vunpack.c.l.b16 %v3046
      %v3068 = vunpack.c.l.b16 %v3047
      %v3069 = vunpack.c.l.b16 %v3048
      %v3070 = vunpack.c.l.b16 %v3049
      %v3071 = vunpack.c.l.b16 %v3050
      %v3072 = vunpack.c.l.b16 %v3051
      %v3073 = vunpack.c.l.b16 %v3052
      %v3074 = vunpack.c.l.b16 %v3053
      %v3075 = vpack.c.b16 %v3068, %v3067
      %v3076 = vpack.c.b16 %v3070, %v3069
      %v3077 = vpack.c.b16 %v3072, %v3071
      %v3078 = vpack.c.b16 %v3074, %v3073
      %3083 = vmatpush.bf16.msra.mxu0 0
      %3084 = vmatpush.bf16.msra.mxu0 0
      %3085 = vmatpush.bf16.msra.mxu0 0
      %3086 = vmatpush.bf16.msra.mxu0 0
      %3087 = vmatpush.bf16.msra.mxu0 %v3078
      %3088 = vmatpush.bf16.msra.mxu0 %v3077
      %3089 = vmatpush.bf16.msra.mxu0 %v3076
      %3090 = vmatpush.bf16.msra.mxu0 %v3075
      %3091 = vmatmul.bf16.gmra.mxu0 %v2166
      %v3092 = vpop.f32.mrf.mxu0
      %v3093 = vadd.f32 %v3057, %v3092
      %v3094 = vpop.f32.mrf.mxu0
      %v3095 = vadd.f32 %v3057, %v3094
      %3096 = vmatmul.bf16.gmra.mxu0 %v2169
      %v3097 = vpop.f32.mrf.mxu0
      %v3098 = vadd.f32 %v3057, %v3097
      %v3099 = vpop.f32.mrf.mxu0
      %3100 = vdwg.mxu0
      %s3101 = scalar_lea.vmem %s14, 224
      %v3102 = vld [vmem:[%s3101] sm:$0xf]
      %v3103 = vld [vmem:[%s3101 + $0x4] sm:$0xf]
      %v3104 = vld [vmem:[%s3101 + $0x8] sm:$0xf]
      %v3105 = vld [vmem:[%s3101 + $0xc] sm:$0xf]
      %v3106 = vld [vmem:[%s3101 + $0x10] sm:$0xf]
      %v3107 = vld [vmem:[%s3101 + $0x14] sm:$0xf]
      %v3108 = vld [vmem:[%s3101 + $0x18] sm:$0xf]
      %v3109 = vld [vmem:[%s3101 + $0x1c] sm:$0xf]
      %s3110 = scalar_lea.vmem %s15, 7
      %v3111 = vld [vmem:[%s3110] sm:$0x1]
      %v3113 = vperm.slane %v3111, 0
      %v3123 = vunpack.c.l.b16 %v3102
      %v3124 = vunpack.c.l.b16 %v3103
      %v3125 = vunpack.c.l.b16 %v3104
      %v3126 = vunpack.c.l.b16 %v3105
      %v3127 = vunpack.c.l.b16 %v3106
      %v3128 = vunpack.c.l.b16 %v3107
      %v3129 = vunpack.c.l.b16 %v3108
      %v3130 = vunpack.c.l.b16 %v3109
      %v3131 = vpack.c.b16 %v3124, %v3123
      %v3132 = vpack.c.b16 %v3126, %v3125
      %v3133 = vpack.c.b16 %v3128, %v3127
      %v3134 = vpack.c.b16 %v3130, %v3129
      %3139 = vmatpush.bf16.msra.mxu0 0
      %3140 = vmatpush.bf16.msra.mxu0 0
      %3141 = vmatpush.bf16.msra.mxu0 0
      %3142 = vmatpush.bf16.msra.mxu0 0
      %3143 = vmatpush.bf16.msra.mxu0 %v3134
      %3144 = vmatpush.bf16.msra.mxu0 %v3133
      %3145 = vmatpush.bf16.msra.mxu0 %v3132
      %3146 = vmatpush.bf16.msra.mxu0 %v3131
      %3147 = vmatmul.bf16.gmra.mxu0 %v2166
      %v3148 = vpop.f32.mrf.mxu0
      %v3149 = vadd.f32 %v3113, %v3148
      %v3150 = vpop.f32.mrf.mxu0
      %v3151 = vadd.f32 %v3113, %v3150
      %3152 = vmatmul.bf16.gmra.mxu0 %v2169
      %v3153 = vpop.f32.mrf.mxu0
      %v3154 = vadd.f32 %v3113, %v3153
      %v3155 = vpop.f32.mrf.mxu0
      %3156 = vdwg.mxu0
      %s3157 = scalar_lea.vmem %s14, 352
      %v3158 = vld [vmem:[%s3157] sm:$0xf]
      %v3159 = vld [vmem:[%s3157 + $0x4] sm:$0xf]
      %v3160 = vld [vmem:[%s3157 + $0x8] sm:$0xf]
      %v3161 = vld [vmem:[%s3157 + $0xc] sm:$0xf]
      %v3162 = vld [vmem:[%s3157 + $0x10] sm:$0xf]
      %v3163 = vld [vmem:[%s3157 + $0x14] sm:$0xf]
      %v3164 = vld [vmem:[%s3157 + $0x18] sm:$0xf]
      %v3165 = vld [vmem:[%s3157 + $0x1c] sm:$0xf]
      %s3166 = scalar_lea.vmem %s15, 11
      %v3167 = vld [vmem:[%s3166] sm:$0x1]
      %v3169 = vperm.slane %v3167, 0
      %v3179 = vunpack.c.l.b16 %v3158
      %v3180 = vunpack.c.l.b16 %v3159
      %v3181 = vunpack.c.l.b16 %v3160
      %v3182 = vunpack.c.l.b16 %v3161
      %v3183 = vunpack.c.l.b16 %v3162
      %v3184 = vunpack.c.l.b16 %v3163
      %v3185 = vunpack.c.l.b16 %v3164
      %v3186 = vunpack.c.l.b16 %v3165
      %v3187 = vpack.c.b16 %v3180, %v3179
      %v3188 = vpack.c.b16 %v3182, %v3181
      %v3189 = vpack.c.b16 %v3184, %v3183
      %v3190 = vpack.c.b16 %v3186, %v3185
      %3195 = vmatpush.bf16.msra.mxu0 0
      %3196 = vmatpush.bf16.msra.mxu0 0
      %3197 = vmatpush.bf16.msra.mxu0 0
      %3198 = vmatpush.bf16.msra.mxu0 0
      %3199 = vmatpush.bf16.msra.mxu0 %v3190
      %3200 = vmatpush.bf16.msra.mxu0 %v3189
      %3201 = vmatpush.bf16.msra.mxu0 %v3188
      %3202 = vmatpush.bf16.msra.mxu0 %v3187
      %3203 = vmatmul.bf16.gmra.mxu0 %v2166
      %v3204 = vpop.f32.mrf.mxu0
      %v3205 = vadd.f32 %v3169, %v3204
      %v3206 = vpop.f32.mrf.mxu0
      %v3207 = vadd.f32 %v3169, %v3206
      %3208 = vmatmul.bf16.gmra.mxu0 %v2169
      %v3209 = vpop.f32.mrf.mxu0
      %v3210 = vadd.f32 %v3169, %v3209
      %v3211 = vpop.f32.mrf.mxu0
      %3212 = vdwg.mxu0
      %v3213 = vpack.c.bf16 %v3095, %v3093
      %v3214 = vpack.c.bf16 %v3098, %v3098
      %v3215 = vpack.c.bf16 %v3151, %v3149
      %v3216 = vpack.c.bf16 %v3154, %v3154
      %v3218 = vsel %vm2305, %v3213, 0
      %v3221 = vsel %vm2305, %v3214, 0
      %v3224 = vsel %vm2305, %v3215, 0
      %v3227 = vsel %vm2305, %v3216, 0
      %3229 = vmatpush.bf16.xpose.msra.mxu0 0
      %3230 = vmatpush.bf16.xpose.msra.mxu0 0
      %3231 = vmatpush.bf16.xpose.msra.mxu0 0
      %3232 = vmatpush.bf16.xpose.msra.mxu0 0
      %3233 = vmatpush.bf16.xpose.msra.mxu0 0
      %3234 = vmatpush.bf16.xpose.msra.mxu0 0
      %3235 = vmatpush.bf16.xpose.msra.mxu0 %v3227
      %3236 = vmatpush.bf16.xpose.msra.mxu0 %v3224
      %3237 = vmatmul.bf16.gmra.mxu0 %v3218
      %v3238 = vpop.f32.mrf.mxu0
      %v3239 = vadd.f32 0.0, %v3238
      %v3240 = vpop.f32.mrf.mxu0
      %v3241 = vadd.f32 0.0, %v3240
      %3242 = vmatmul.bf16.gmra.mxu0 %v3221
      %v3243 = vpop.f32.mrf.mxu0
      %v3244 = vadd.f32 0.0, %v3243
      %v3245 = vpop.f32.mrf.mxu0
      %3246 = vdwg.mxu0
      %v3247 = vsel %vm2336, %v3239, -inf
      %3248 = vmax.xlane.f32.xlu0 %v3247
      %v3249 = vpop.xlane.xlu0 %3248
      %v3250 = vsel %vm2336, %v3241, -inf
      %3251 = vmax.xlane.f32.xlu0 %v3250
      %v3252 = vpop.xlane.xlu0 %3251
      %v3253 = vsel %vm2343, %v3244, -inf
      %3254 = vmax.xlane.f32.xlu0 %v3253
      %v3255 = vpop.xlane.xlu0 %3254
      %v3256 = vsub.f32 %v3239, %v3249
      %v3257 = vsub.f32 %v3241, %v3252
      %v3258 = vsub.f32 %v3244, %v3255
      %v3259 = vmul.f32 %v3256, 1.442695
      %v3260 = vpow.pop %v3259
      %v3261 = vmul.f32 %v3257, 1.442695
      %v3262 = vpow.pop %v3261
      %v3263 = vmul.f32 %v3258, 1.442695
      %v3264 = vpow.pop %v3263
      %v3265 = vsel %vm2336, %v3260, 0.0
      %3266 = vadd.xlane.f32.xlu0 %v3265
      %v3267 = vpop.xlane.xlu0 %3266
      %v3268 = vsel %vm2336, %v3262, 0.0
      %3269 = vadd.xlane.f32.xlu0 %v3268
      %v3270 = vpop.xlane.xlu0 %3269
      %v3271 = vsel %vm2343, %v3264, 0.0
      %3272 = vadd.xlane.f32.xlu0 %v3271
      %v3273 = vpop.xlane.xlu0 %3272
      %v3274 = vrcp.pop %v3267
      %v3275 = vrcp.pop %v3270
      %v3276 = vrcp.pop %v3273
      %v3277 = vmul.f32 %v3260, %v3274
      %v3278 = vmul.f32 %v3262, %v3275
      %v3279 = vmul.f32 %v3264, %v3276
      %v3280 = vpack.c.bf16 %v3278, %v3277
      %v3281 = vpack.c.bf16 %v3279, %v3279
      %v3282 = vpack.c.bf16 %v3207, %v3205
      %v3283 = vpack.c.bf16 %v3210, %v3210
      %v3285 = vsel %vm2336, %v3280, 0
      %v3288 = vsel %vm2336, %v3281, 0
      %v3291 = vand.u32 %v3283, %v2384
      %3293 = vmatpush.bf16.msra.mxu0 0
      %3294 = vmatpush.bf16.msra.mxu0 0
      %3295 = vmatpush.bf16.msra.mxu0 0
      %3296 = vmatpush.bf16.msra.mxu0 0
      %3297 = vmatpush.bf16.msra.mxu0 0
      %3298 = vmatpush.bf16.msra.mxu0 0
      %3299 = vmatpush.bf16.msra.mxu0 %v3291
      %3300 = vmatpush.bf16.msra.mxu0 %v3282
      %3301 = vmatmul.bf16.gmra.mxu0 %v3285
      %v3302 = vpop.f32.mrf.mxu0
      %v3303 = vadd.f32 0.0, %v3302
      %v3304 = vpop.f32.mrf.mxu0
      %v3305 = vadd.f32 0.0, %v3304
      %3306 = vmatmul.bf16.gmra.mxu0 %v3288
      %v3307 = vpop.f32.mrf.mxu0
      %v3308 = vadd.f32 0.0, %v3307
      %v3309 = vpop.f32.mrf.mxu0
      %3310 = vdwg.mxu0
      %v3311 = vpack.c.bf16 %v3305, %v3303
      %v3312 = vpack.c.bf16 %v3308, %v3308
      %s3313 = scalar_lea.vmem %s16, 24
      %v3314 = vld [vmem:[%s3313] sm:$0xf]
      %v3315 = vld [vmem:[%s3313 + $0x4] sm:$0xf]
      %v3318 = vunpack.c.l.b16 %v3314
      %v3319 = vunpack.c.l.b16 %v3315
      %v3320 = vpack.c.b16 %v3319, %v3318
      %v3323 = vsel %vm2305, %v3311, 0
      %v3326 = vsel %vm2305, %v3312, 0
      %3328 = vmatpush.bf16.msra.mxu0 0
      %3329 = vmatpush.bf16.msra.mxu0 0
      %3330 = vmatpush.bf16.msra.mxu0 0
      %3331 = vmatpush.bf16.msra.mxu0 0
      %3332 = vmatpush.bf16.msra.mxu0 0
      %3333 = vmatpush.bf16.msra.mxu0 0
      %3334 = vmatpush.bf16.msra.mxu0 0
      %3335 = vmatpush.bf16.msra.mxu0 %v3320
      %3336 = vmatmul.bf16.gmra.mxu0 %v3323
      %v3337 = vpop.f32.mrf.mxu0
      %v3338 = vadd.f32 0.0, %v3337
      %v3339 = vpop.f32.mrf.mxu0
      %v3340 = vadd.f32 0.0, %v3339
      %3341 = vmatmul.bf16.gmra.mxu0 %v3326
      %v3342 = vpop.f32.mrf.mxu0
      %v3343 = vadd.f32 0.0, %v3342
      %v3344 = vpop.f32.mrf.mxu0
      %3345 = vdwg.mxu0
      %v3346 = vadd.f32 %v3042, %v3338
      %v3347 = vadd.f32 %v3043, %v3340
      %v3348 = vadd.f32 %v3044, %v3343
      %v3349 = vld [vmem:[%s17] sm:$0x1]
      %v3351 = vperm.slane %v3349, 0
      %v3353 = vadd.f32 %v3346, %v3351
      %v3354 = vadd.f32 %v3347, %v3351
      %v3355 = vadd.f32 %v3348, %v3351
      %v3356 = vadd.f32 %v2124, %v3353
      %v3357 = vadd.f32 %v2125, %v3354
      %v3358 = vadd.f32 %v2126, %v3355
      %v3359 = vld [vmem:[%s18] sm:$0x1]
      %s3360 = scalar_lea.vmem %s18, 1
      %v3361 = vld [vmem:[%s3360] sm:$0x1]
      %v3362 = vsel %vm1675, %v3356, 0.0
      %3363 = vadd.xlane.f32.xlu0 %v3362
      %v3364 = vpop.xlane.xlu0 %3363
      %v3365 = vsel %vm1675, %v3357, 0.0
      %3366 = vadd.xlane.f32.xlu0 %v3365
      %v3367 = vpop.xlane.xlu0 %3366
      %v3368 = vsel %vm1682, %v3358, 0.0
      %3369 = vadd.xlane.f32.xlu0 %v3368
      %v3370 = vpop.xlane.xlu0 %3369
      %v3371 = vmul.f32 %v3364, %v2057
      %v3372 = vmul.f32 %v3367, %v2057
      %v3373 = vmul.f32 %v3370, %v2057
      %v3374 = vsub.f32 %v3356, %v3371
      %v3375 = vsub.f32 %v3357, %v3372
      %v3376 = vsub.f32 %v3358, %v3373
      %v3377 = vmul.f32 %v3374, %v3374
      %v3378 = vmul.f32 %v3375, %v3375
      %v3379 = vmul.f32 %v3376, %v3376
      %v3380 = vsel %vm1675, %v3377, 0.0
      %3381 = vadd.xlane.f32.xlu0 %v3380
      %v3382 = vpop.xlane.xlu0 %3381
      %v3383 = vsel %vm1675, %v3378, 0.0
      %3384 = vadd.xlane.f32.xlu0 %v3383
      %v3385 = vpop.xlane.xlu0 %3384
      %v3386 = vsel %vm1682, %v3379, 0.0
      %3387 = vadd.xlane.f32.xlu0 %v3386
      %v3388 = vpop.xlane.xlu0 %3387
      %v3389 = vmul.f32 %v3382, %v2057
      %v3390 = vmul.f32 %v3385, %v2057
      %v3391 = vmul.f32 %v3388, %v2057
      %v3392 = vadd.f32 %v3389, 1e-05
      %v3393 = vadd.f32 %v3390, 1e-05
      %v3394 = vadd.f32 %v3391, 1e-05
      %v3395 = vrsqrt.pop %v3392
      %v3396 = vmul.f32 %v3395, %v3392
      %v3397 = vmul.f32 %v3396, %v3395
      %v3398 = vmul.f32 0.5, %v3397
      %v3399 = vsub.f32 1.5, %v3398
      %v3400 = vmul.f32 %v3395, %v3399
      %vm3401 = vweird.f32 %v3392
      %vm3402 = vweird.f32 %v3395
      %vm3403 = vmor %vm3401, %vm3402
      %v3404 = vsel %vm3403, %v3395, %v3400
      %v3405 = vrsqrt.pop %v3393
      %v3406 = vmul.f32 %v3405, %v3393
      %v3407 = vmul.f32 %v3406, %v3405
      %v3408 = vmul.f32 0.5, %v3407
      %v3409 = vsub.f32 1.5, %v3408
      %v3410 = vmul.f32 %v3405, %v3409
      %vm3411 = vweird.f32 %v3393
      %vm3412 = vweird.f32 %v3405
      %vm3413 = vmor %vm3411, %vm3412
      %v3414 = vsel %vm3413, %v3405, %v3410
      %v3415 = vrsqrt.pop %v3394
      %v3416 = vmul.f32 %v3415, %v3394
      %v3417 = vmul.f32 %v3416, %v3415
      %v3418 = vmul.f32 0.5, %v3417
      %v3419 = vsub.f32 1.5, %v3418
      %v3420 = vmul.f32 %v3415, %v3419
      %vm3421 = vweird.f32 %v3394
      %vm3422 = vweird.f32 %v3415
      %vm3423 = vmor %vm3421, %vm3422
      %v3424 = vsel %vm3423, %v3415, %v3420
      %v3425 = vmul.f32 %v3374, %v3404
      %v3426 = vmul.f32 %v3375, %v3414
      %v3427 = vmul.f32 %v3376, %v3424
      %v3429 = vperm.slane %v3359, 0
      %v3431 = vmul.f32 %v3425, %v3429
      %v3432 = vmul.f32 %v3426, %v3429
      %v3433 = vmul.f32 %v3427, %v3429
      %v3435 = vperm.slane %v3361, 0
      %v3437 = vadd.f32 %v3431, %v3435
      %v3438 = vadd.f32 %v3432, %v3435
      %v3439 = vadd.f32 %v3433, %v3435
      %v3440 = vpack.c.bf16 %v3438, %v3437
      %v3441 = vpack.c.bf16 %v3439, %v3439
      %v3442 = vld [vmem:[%s19] sm:$0xf]
      %v3443 = vld [vmem:[%s19 + $0x4] sm:$0xf]
      %v3444 = vld [vmem:[%s19 + $0x8] sm:$0xf]
      %v3445 = vld [vmem:[%s19 + $0xc] sm:$0xf]
      %v3446 = vld [vmem:[%s19 + $0x10] sm:$0xf]
      %v3447 = vld [vmem:[%s19 + $0x14] sm:$0xf]
      %v3448 = vld [vmem:[%s19 + $0x18] sm:$0xf]
      %v3449 = vld [vmem:[%s19 + $0x1c] sm:$0xf]
      %v3450 = vld [vmem:[%s20] sm:$0x1]
      %v3452 = vperm.slane %v3450, 0
      %v3462 = vunpack.c.l.b16 %v3442
      %v3463 = vunpack.c.l.b16 %v3443
      %v3464 = vunpack.c.l.b16 %v3444
      %v3465 = vunpack.c.l.b16 %v3445
      %v3466 = vunpack.c.l.b16 %v3446
      %v3467 = vunpack.c.l.b16 %v3447
      %v3468 = vunpack.c.l.b16 %v3448
      %v3469 = vunpack.c.l.b16 %v3449
      %v3470 = vpack.c.b16 %v3463, %v3462
      %v3471 = vpack.c.b16 %v3465, %v3464
      %v3472 = vpack.c.b16 %v3467, %v3466
      %v3473 = vpack.c.b16 %v3469, %v3468
      %v3479 = vsel %vm1675, %v3440, 0
      %v3482 = vsel %vm1675, %v3441, 0
      %3484 = vmatpush.bf16.msra.mxu0 0
      %3485 = vmatpush.bf16.msra.mxu0 0
      %3486 = vmatpush.bf16.msra.mxu0 0
      %3487 = vmatpush.bf16.msra.mxu0 0
      %3488 = vmatpush.bf16.msra.mxu0 %v3473
      %3489 = vmatpush.bf16.msra.mxu0 %v3472
      %3490 = vmatpush.bf16.msra.mxu0 %v3471
      %3491 = vmatpush.bf16.msra.mxu0 %v3470
      %3492 = vmatmul.bf16.gmra.mxu0 %v3479
      %v3493 = vpop.f32.mrf.mxu0
      %v3494 = vadd.f32 %v3452, %v3493
      %v3495 = vpop.f32.mrf.mxu0
      %v3496 = vadd.f32 %v3452, %v3495
      %3497 = vmatmul.bf16.gmra.mxu0 %v3482
      %v3498 = vpop.f32.mrf.mxu0
      %v3499 = vadd.f32 %v3452, %v3498
      %v3500 = vpop.f32.mrf.mxu0
      %3501 = vdwg.mxu0
      %v3502 = vmul.f32 %v3494, %v3494
      %v3503 = vmul.f32 %v3496, %v3496
      %v3504 = vmul.f32 %v3499, %v3499
      %v3505 = vmul.f32 %v3494, %v3502
      %v3506 = vmul.f32 %v3496, %v3503
      %v3507 = vmul.f32 %v3499, %v3504
      %v3508 = vmul.f32 %v3505, 0.044715
      %v3509 = vmul.f32 %v3506, 0.044715
      %v3510 = vmul.f32 %v3507, 0.044715
      %v3511 = vadd.f32 %v3494, %v3508
      %v3512 = vadd.f32 %v3496, %v3509
      %v3513 = vadd.f32 %v3499, %v3510
      %v3514 = vmul.f32 %v3511, 0.7978846
      %v3515 = vmul.f32 %v3512, 0.7978846
      %v3516 = vmul.f32 %v3513, 0.7978846
      %v3517 = vtanh.pop %v3514
      %v3518 = vtanh.pop %v3515
      %v3519 = vtanh.pop %v3516
      %v3520 = vadd.f32 %v3517, 1.0
      %v3521 = vadd.f32 %v3518, 1.0
      %v3522 = vadd.f32 %v3519, 1.0
      %v3523 = vmul.f32 %v3520, 0.5
      %v3524 = vmul.f32 %v3521, 0.5
      %v3525 = vmul.f32 %v3522, 0.5
      %v3526 = vmul.f32 %v3494, %v3523
      %v3527 = vmul.f32 %v3496, %v3524
      %v3528 = vmul.f32 %v3499, %v3525
      %v3529 = vpack.c.bf16 %v3527, %v3526
      %v3530 = vpack.c.bf16 %v3528, %v3528
      %v3531 = vld [vmem:[%s21] sm:$0xf]
      %v3532 = vld [vmem:[%s21 + $0x4] sm:$0xf]
      %v3533 = vld [vmem:[%s21 + $0x8] sm:$0xf]
      %v3534 = vld [vmem:[%s21 + $0xc] sm:$0xf]
      %v3535 = vld [vmem:[%s21 + $0x10] sm:$0xf]
      %v3536 = vld [vmem:[%s21 + $0x14] sm:$0xf]
      %v3537 = vld [vmem:[%s21 + $0x18] sm:$0xf]
      %v3538 = vld [vmem:[%s21 + $0x1c] sm:$0xf]
      %v3539 = vld [vmem:[%s21 + $0x20] sm:$0xf]
      %v3540 = vld [vmem:[%s21 + $0x24] sm:$0xf]
      %v3541 = vld [vmem:[%s21 + $0x28] sm:$0xf]
      %v3542 = vld [vmem:[%s21 + $0x2c] sm:$0xf]
      %v3543 = vld [vmem:[%s21 + $0x30] sm:$0xf]
      %v3544 = vld [vmem:[%s21 + $0x34] sm:$0xf]
      %v3545 = vld [vmem:[%s21 + $0x38] sm:$0xf]
      %v3546 = vld [vmem:[%s21 + $0x3c] sm:$0xf]
      %v3547 = vld [vmem:[%s22] sm:$0x1]
      %v3549 = vperm.slane %v3547, 0
      %v3567 = vunpack.c.l.b16 %v3531
      %v3568 = vunpack.c.l.b16 %v3532
      %v3569 = vunpack.c.l.b16 %v3533
      %v3570 = vunpack.c.l.b16 %v3534
      %v3571 = vunpack.c.l.b16 %v3535
      %v3572 = vunpack.c.l.b16 %v3536
      %v3573 = vunpack.c.l.b16 %v3537
      %v3574 = vunpack.c.l.b16 %v3538
      %v3575 = vunpack.c.l.b16 %v3539
      %v3576 = vunpack.c.l.b16 %v3540
      %v3577 = vunpack.c.l.b16 %v3541
      %v3578 = vunpack.c.l.b16 %v3542
      %v3579 = vunpack.c.l.b16 %v3543
      %v3580 = vunpack.c.l.b16 %v3544
      %v3581 = vunpack.c.l.b16 %v3545
      %v3582 = vunpack.c.l.b16 %v3546
      %v3583 = vpack.c.b16 %v3568, %v3567
      %v3584 = vpack.c.b16 %v3570, %v3569
      %v3585 = vpack.c.b16 %v3572, %v3571
      %v3586 = vpack.c.b16 %v3574, %v3573
      %v3587 = vpack.c.b16 %v3576, %v3575
      %v3588 = vpack.c.b16 %v3578, %v3577
      %v3589 = vpack.c.b16 %v3580, %v3579
      %v3590 = vpack.c.b16 %v3582, %v3581
      %3599 = vmatpush.bf16.msra.mxu0 %v3590
      %3600 = vmatpush.bf16.msra.mxu0 %v3589
      %3601 = vmatpush.bf16.msra.mxu0 %v3588
      %3602 = vmatpush.bf16.msra.mxu0 %v3587
      %3603 = vmatpush.bf16.msra.mxu0 %v3586
      %3604 = vmatpush.bf16.msra.mxu0 %v3585
      %3605 = vmatpush.bf16.msra.mxu0 %v3584
      %3606 = vmatpush.bf16.msra.mxu0 %v3583
      %3607 = vmatmul.bf16.gmra.mxu0 %v3529
      %v3608 = vpop.f32.mrf.mxu0
      %v3609 = vadd.f32 %v3549, %v3608
      %v3610 = vpop.f32.mrf.mxu0
      %v3611 = vadd.f32 %v3549, %v3610
      %3612 = vmatmul.bf16.gmra.mxu0 %v3530
      %v3613 = vpop.f32.mrf.mxu0
      %v3614 = vadd.f32 %v3549, %v3613
      %v3615 = vpop.f32.mrf.mxu0
      %3616 = vdwg.mxu0
      %v3617 = vadd.f32 %v3437, %v3609
      %v3618 = vadd.f32 %v3438, %v3611
      %v3619 = vadd.f32 %v3439, %v3614
      %v3620 = vld [vmem:[%s23] sm:$0x1]
      %s3621 = scalar_lea.vmem %s23, 1
      %v3622 = vld [vmem:[%s3621] sm:$0x1]
      %v3623 = vsel %vm1675, %v3617, 0.0
      %3624 = vadd.xlane.f32.xlu0 %v3623
      %v3625 = vpop.xlane.xlu0 %3624
      %v3626 = vsel %vm1675, %v3618, 0.0
      %3627 = vadd.xlane.f32.xlu0 %v3626
      %v3628 = vpop.xlane.xlu0 %3627
      %v3629 = vsel %vm1682, %v3619, 0.0
      %3630 = vadd.xlane.f32.xlu0 %v3629
      %v3631 = vpop.xlane.xlu0 %3630
      %v3632 = vmul.f32 %v3625, %v2057
      %v3633 = vmul.f32 %v3628, %v2057
      %v3634 = vmul.f32 %v3631, %v2057
      %v3635 = vsub.f32 %v3617, %v3632
      %v3636 = vsub.f32 %v3618, %v3633
      %v3637 = vsub.f32 %v3619, %v3634
      %v3638 = vmul.f32 %v3635, %v3635
      %v3639 = vmul.f32 %v3636, %v3636
      %v3640 = vmul.f32 %v3637, %v3637
      %v3641 = vsel %vm1675, %v3638, 0.0
      %3642 = vadd.xlane.f32.xlu0 %v3641
      %v3643 = vpop.xlane.xlu0 %3642
      %v3644 = vsel %vm1675, %v3639, 0.0
      %3645 = vadd.xlane.f32.xlu0 %v3644
      %v3646 = vpop.xlane.xlu0 %3645
      %v3647 = vsel %vm1682, %v3640, 0.0
      %3648 = vadd.xlane.f32.xlu0 %v3647
      %v3649 = vpop.xlane.xlu0 %3648
      %v3650 = vmul.f32 %v3643, %v2057
      %v3651 = vmul.f32 %v3646, %v2057
      %v3652 = vmul.f32 %v3649, %v2057
      %v3653 = vadd.f32 %v3650, 1e-05
      %v3654 = vadd.f32 %v3651, 1e-05
      %v3655 = vadd.f32 %v3652, 1e-05
      %v3656 = vrsqrt.pop %v3653
      %v3657 = vmul.f32 %v3656, %v3653
      %v3658 = vmul.f32 %v3657, %v3656
      %v3659 = vmul.f32 0.5, %v3658
      %v3660 = vsub.f32 1.5, %v3659
      %v3661 = vmul.f32 %v3656, %v3660
      %vm3662 = vweird.f32 %v3653
      %vm3663 = vweird.f32 %v3656
      %vm3664 = vmor %vm3662, %vm3663
      %v3665 = vsel %vm3664, %v3656, %v3661
      %v3666 = vrsqrt.pop %v3654
      %v3667 = vmul.f32 %v3666, %v3654
      %v3668 = vmul.f32 %v3667, %v3666
      %v3669 = vmul.f32 0.5, %v3668
      %v3670 = vsub.f32 1.5, %v3669
      %v3671 = vmul.f32 %v3666, %v3670
      %vm3672 = vweird.f32 %v3654
      %vm3673 = vweird.f32 %v3666
      %vm3674 = vmor %vm3672, %vm3673
      %v3675 = vsel %vm3674, %v3666, %v3671
      %v3676 = vrsqrt.pop %v3655
      %v3677 = vmul.f32 %v3676, %v3655
      %v3678 = vmul.f32 %v3677, %v3676
      %v3679 = vmul.f32 0.5, %v3678
      %v3680 = vsub.f32 1.5, %v3679
      %v3681 = vmul.f32 %v3676, %v3680
      %vm3682 = vweird.f32 %v3655
      %vm3683 = vweird.f32 %v3676
      %vm3684 = vmor %vm3682, %vm3683
      %v3685 = vsel %vm3684, %v3676, %v3681
      %v3686 = vmul.f32 %v3635, %v3665
      %v3687 = vmul.f32 %v3636, %v3675
      %v3688 = vmul.f32 %v3637, %v3685
      %v3690 = vperm.slane %v3620, 0
      %v3692 = vmul.f32 %v3686, %v3690
      %v3693 = vmul.f32 %v3687, %v3690
      %v3694 = vmul.f32 %v3688, %v3690
      %v3696 = vperm.slane %v3622, 0
      %v3698 = vadd.f32 %v3692, %v3696
      %v3699 = vadd.f32 %v3693, %v3696
      %v3700 = vadd.f32 %v3694, %v3696
      %v3701 = vpack.c.bf16 %v3699, %v3698
      %v3702 = vpack.c.bf16 %v3700, %v3700
      %s3703 = scalar_lea.vmem %s14, 384
      %v3704 = vld [vmem:[%s3703] sm:$0xf]
      %v3705 = vld [vmem:[%s3703 + $0x4] sm:$0xf]
      %v3706 = vld [vmem:[%s3703 + $0x8] sm:$0xf]
      %v3707 = vld [vmem:[%s3703 + $0xc] sm:$0xf]
      %v3708 = vld [vmem:[%s3703 + $0x10] sm:$0xf]
      %v3709 = vld [vmem:[%s3703 + $0x14] sm:$0xf]
      %v3710 = vld [vmem:[%s3703 + $0x18] sm:$0xf]
      %v3711 = vld [vmem:[%s3703 + $0x1c] sm:$0xf]
      %s3712 = scalar_lea.vmem %s15, 12
      %v3713 = vld [vmem:[%s3712] sm:$0x1]
      %v3715 = vperm.slane %v3713, 0
      %v3725 = vunpack.c.l.b16 %v3704
      %v3726 = vunpack.c.l.b16 %v3705
      %v3727 = vunpack.c.l.b16 %v3706
      %v3728 = vunpack.c.l.b16 %v3707
      %v3729 = vunpack.c.l.b16 %v3708
      %v3730 = vunpack.c.l.b16 %v3709
      %v3731 = vunpack.c.l.b16 %v3710
      %v3732 = vunpack.c.l.b16 %v3711
      %v3733 = vpack.c.b16 %v3726, %v3725
      %v3734 = vpack.c.b16 %v3728, %v3727
      %v3735 = vpack.c.b16 %v3730, %v3729
      %v3736 = vpack.c.b16 %v3732, %v3731
      %v3742 = vsel %vm1675, %v3701, 0
      %v3745 = vsel %vm1675, %v3702, 0
      %3747 = vmatpush.bf16.msra.mxu0 0
      %3748 = vmatpush.bf16.msra.mxu0 0
      %3749 = vmatpush.bf16.msra.mxu0 0
      %3750 = vmatpush.bf16.msra.mxu0 0
      %3751 = vmatpush.bf16.msra.mxu0 %v3736
      %3752 = vmatpush.bf16.msra.mxu0 %v3735
      %3753 = vmatpush.bf16.msra.mxu0 %v3734
      %3754 = vmatpush.bf16.msra.mxu0 %v3733
      %3755 = vmatmul.bf16.gmra.mxu0 %v3742
      %v3756 = vpop.f32.mrf.mxu0
      %v3757 = vadd.f32 %v3715, %v3756
      %v3758 = vpop.f32.mrf.mxu0
      %v3759 = vadd.f32 %v3715, %v3758
      %3760 = vmatmul.bf16.gmra.mxu0 %v3745
      %v3761 = vpop.f32.mrf.mxu0
      %v3762 = vadd.f32 %v3715, %v3761
      %v3763 = vpop.f32.mrf.mxu0
      %3764 = vdwg.mxu0
      %s3765 = scalar_lea.vmem %s14, 512
      %v3766 = vld [vmem:[%s3765] sm:$0xf]
      %v3767 = vld [vmem:[%s3765 + $0x4] sm:$0xf]
      %v3768 = vld [vmem:[%s3765 + $0x8] sm:$0xf]
      %v3769 = vld [vmem:[%s3765 + $0xc] sm:$0xf]
      %v3770 = vld [vmem:[%s3765 + $0x10] sm:$0xf]
      %v3771 = vld [vmem:[%s3765 + $0x14] sm:$0xf]
      %v3772 = vld [vmem:[%s3765 + $0x18] sm:$0xf]
      %v3773 = vld [vmem:[%s3765 + $0x1c] sm:$0xf]
      %s3774 = scalar_lea.vmem %s15, 16
      %v3775 = vld [vmem:[%s3774] sm:$0x1]
      %v3777 = vperm.slane %v3775, 0
      %v3787 = vunpack.c.l.b16 %v3766
      %v3788 = vunpack.c.l.b16 %v3767
      %v3789 = vunpack.c.l.b16 %v3768
      %v3790 = vunpack.c.l.b16 %v3769
      %v3791 = vunpack.c.l.b16 %v3770
      %v3792 = vunpack.c.l.b16 %v3771
      %v3793 = vunpack.c.l.b16 %v3772
      %v3794 = vunpack.c.l.b16 %v3773
      %v3795 = vpack.c.b16 %v3788, %v3787
      %v3796 = vpack.c.b16 %v3790, %v3789
      %v3797 = vpack.c.b16 %v3792, %v3791
      %v3798 = vpack.c.b16 %v3794, %v3793
      %3803 = vmatpush.bf16.msra.mxu0 0
      %3804 = vmatpush.bf16.msra.mxu0 0
      %3805 = vmatpush.bf16.msra.mxu0 0
      %3806 = vmatpush.bf16.msra.mxu0 0
      %3807 = vmatpush.bf16.msra.mxu0 %v3798
      %3808 = vmatpush.bf16.msra.mxu0 %v3797
      %3809 = vmatpush.bf16.msra.mxu0 %v3796
      %3810 = vmatpush.bf16.msra.mxu0 %v3795
      %3811 = vmatmul.bf16.gmra.mxu0 %v3742
      %v3812 = vpop.f32.mrf.mxu0
      %v3813 = vadd.f32 %v3777, %v3812
      %v3814 = vpop.f32.mrf.mxu0
      %v3815 = vadd.f32 %v3777, %v3814
      %3816 = vmatmul.bf16.gmra.mxu0 %v3745
      %v3817 = vpop.f32.mrf.mxu0
      %v3818 = vadd.f32 %v3777, %v3817
      %v3819 = vpop.f32.mrf.mxu0
      %3820 = vdwg.mxu0
      %s3821 = scalar_lea.vmem %s14, 640
      %v3822 = vld [vmem:[%s3821] sm:$0xf]
      %v3823 = vld [vmem:[%s3821 + $0x4] sm:$0xf]
      %v3824 = vld [vmem:[%s3821 + $0x8] sm:$0xf]
      %v3825 = vld [vmem:[%s3821 + $0xc] sm:$0xf]
      %v3826 = vld [vmem:[%s3821 + $0x10] sm:$0xf]
      %v3827 = vld [vmem:[%s3821 + $0x14] sm:$0xf]
      %v3828 = vld [vmem:[%s3821 + $0x18] sm:$0xf]
      %v3829 = vld [vmem:[%s3821 + $0x1c] sm:$0xf]
      %s3830 = scalar_lea.vmem %s15, 20
      %v3831 = vld [vmem:[%s3830] sm:$0x1]
      %v3833 = vperm.slane %v3831, 0
      %v3843 = vunpack.c.l.b16 %v3822
      %v3844 = vunpack.c.l.b16 %v3823
      %v3845 = vunpack.c.l.b16 %v3824
      %v3846 = vunpack.c.l.b16 %v3825
      %v3847 = vunpack.c.l.b16 %v3826
      %v3848 = vunpack.c.l.b16 %v3827
      %v3849 = vunpack.c.l.b16 %v3828
      %v3850 = vunpack.c.l.b16 %v3829
      %v3851 = vpack.c.b16 %v3844, %v3843
      %v3852 = vpack.c.b16 %v3846, %v3845
      %v3853 = vpack.c.b16 %v3848, %v3847
      %v3854 = vpack.c.b16 %v3850, %v3849
      %3859 = vmatpush.bf16.msra.mxu0 0
      %3860 = vmatpush.bf16.msra.mxu0 0
      %3861 = vmatpush.bf16.msra.mxu0 0
      %3862 = vmatpush.bf16.msra.mxu0 0
      %3863 = vmatpush.bf16.msra.mxu0 %v3854
      %3864 = vmatpush.bf16.msra.mxu0 %v3853
      %3865 = vmatpush.bf16.msra.mxu0 %v3852
      %3866 = vmatpush.bf16.msra.mxu0 %v3851
      %3867 = vmatmul.bf16.gmra.mxu0 %v3742
      %v3868 = vpop.f32.mrf.mxu0
      %v3869 = vadd.f32 %v3833, %v3868
      %v3870 = vpop.f32.mrf.mxu0
      %v3871 = vadd.f32 %v3833, %v3870
      %3872 = vmatmul.bf16.gmra.mxu0 %v3745
      %v3873 = vpop.f32.mrf.mxu0
      %v3874 = vadd.f32 %v3833, %v3873
      %v3875 = vpop.f32.mrf.mxu0
      %3876 = vdwg.mxu0
      %v3877 = vpack.c.bf16 %v3759, %v3757
      %v3878 = vpack.c.bf16 %v3762, %v3762
      %v3879 = vpack.c.bf16 %v3815, %v3813
      %v3880 = vpack.c.bf16 %v3818, %v3818
      %v3882 = vsel %vm2305, %v3877, 0
      %v3885 = vsel %vm2305, %v3878, 0
      %v3888 = vsel %vm2305, %v3879, 0
      %v3891 = vsel %vm2305, %v3880, 0
      %3893 = vmatpush.bf16.xpose.msra.mxu0 0
      %3894 = vmatpush.bf16.xpose.msra.mxu0 0
      %3895 = vmatpush.bf16.xpose.msra.mxu0 0
      %3896 = vmatpush.bf16.xpose.msra.mxu0 0
      %3897 = vmatpush.bf16.xpose.msra.mxu0 0
      %3898 = vmatpush.bf16.xpose.msra.mxu0 0
      %3899 = vmatpush.bf16.xpose.msra.mxu0 %v3891
      %3900 = vmatpush.bf16.xpose.msra.mxu0 %v3888
      %3901 = vmatmul.bf16.gmra.mxu0 %v3882
      %v3902 = vpop.f32.mrf.mxu0
      %v3903 = vadd.f32 0.0, %v3902
      %v3904 = vpop.f32.mrf.mxu0
      %v3905 = vadd.f32 0.0, %v3904
      %3906 = vmatmul.bf16.gmra.mxu0 %v3885
      %v3907 = vpop.f32.mrf.mxu0
      %v3908 = vadd.f32 0.0, %v3907
      %v3909 = vpop.f32.mrf.mxu0
      %3910 = vdwg.mxu0
      %v3911 = vsel %vm2336, %v3903, -inf
      %3912 = vmax.xlane.f32.xlu0 %v3911
      %v3913 = vpop.xlane.xlu0 %3912
      %v3914 = vsel %vm2336, %v3905, -inf
      %3915 = vmax.xlane.f32.xlu0 %v3914
      %v3916 = vpop.xlane.xlu0 %3915
      %v3917 = vsel %vm2343, %v3908, -inf
      %3918 = vmax.xlane.f32.xlu0 %v3917
      %v3919 = vpop.xlane.xlu0 %3918
      %v3920 = vsub.f32 %v3903, %v3913
      %v3921 = vsub.f32 %v3905, %v3916
      %v3922 = vsub.f32 %v3908, %v3919
      %v3923 = vmul.f32 %v3920, 1.442695
      %v3924 = vpow.pop %v3923
      %v3925 = vmul.f32 %v3921, 1.442695
      %v3926 = vpow.pop %v3925
      %v3927 = vmul.f32 %v3922, 1.442695
      %v3928 = vpow.pop %v3927
      %v3929 = vsel %vm2336, %v3924, 0.0
      %3930 = vadd.xlane.f32.xlu0 %v3929
      %v3931 = vpop.xlane.xlu0 %3930
      %v3932 = vsel %vm2336, %v3926, 0.0
      %3933 = vadd.xlane.f32.xlu0 %v3932
      %v3934 = vpop.xlane.xlu0 %3933
      %v3935 = vsel %vm2343, %v3928, 0.0
      %3936 = vadd.xlane.f32.xlu0 %v3935
      %v3937 = vpop.xlane.xlu0 %3936
      %v3938 = vrcp.pop %v3931
      %v3939 = vrcp.pop %v3934
      %v3940 = vrcp.pop %v3937
      %v3941 = vmul.f32 %v3924, %v3938
      %v3942 = vmul.f32 %v3926, %v3939
      %v3943 = vmul.f32 %v3928, %v3940
      %v3944 = vpack.c.bf16 %v3942, %v3941
      %v3945 = vpack.c.bf16 %v3943, %v3943
      %v3946 = vpack.c.bf16 %v3871, %v3869
      %v3947 = vpack.c.bf16 %v3874, %v3874
      %v3949 = vsel %vm2336, %v3944, 0
      %v3952 = vsel %vm2336, %v3945, 0
      %v3955 = vand.u32 %v3947, %v2384
      %3957 = vmatpush.bf16.msra.mxu0 0
      %3958 = vmatpush.bf16.msra.mxu0 0
      %3959 = vmatpush.bf16.msra.mxu0 0
      %3960 = vmatpush.bf16.msra.mxu0 0
      %3961 = vmatpush.bf16.msra.mxu0 0
      %3962 = vmatpush.bf16.msra.mxu0 0
      %3963 = vmatpush.bf16.msra.mxu0 %v3955
      %3964 = vmatpush.bf16.msra.mxu0 %v3946
      %3965 = vmatmul.bf16.gmra.mxu0 %v3949
      %v3966 = vpop.f32.mrf.mxu0
      %v3967 = vadd.f32 0.0, %v3966
      %v3968 = vpop.f32.mrf.mxu0
      %v3969 = vadd.f32 0.0, %v3968
      %3970 = vmatmul.bf16.gmra.mxu0 %v3952
      %v3971 = vpop.f32.mrf.mxu0
      %v3972 = vadd.f32 0.0, %v3971
      %v3973 = vpop.f32.mrf.mxu0
      %3974 = vdwg.mxu0
      %v3975 = vpack.c.bf16 %v3969, %v3967
      %v3976 = vpack.c.bf16 %v3972, %v3972
      %s3977 = scalar_lea.vmem %s16, 32
      %v3978 = vld [vmem:[%s3977] sm:$0xf]
      %v3979 = vld [vmem:[%s3977 + $0x4] sm:$0xf]
      %s3980 = scalar_lea.vmem %s14, 416
      %v3981 = vld [vmem:[%s3980] sm:$0xf]
      %v3982 = vld [vmem:[%s3980 + $0x4] sm:$0xf]
      %v3983 = vld [vmem:[%s3980 + $0x8] sm:$0xf]
      %v3984 = vld [vmem:[%s3980 + $0xc] sm:$0xf]
      %v3985 = vld [vmem:[%s3980 + $0x10] sm:$0xf]
      %v3986 = vld [vmem:[%s3980 + $0x14] sm:$0xf]
      %v3987 = vld [vmem:[%s3980 + $0x18] sm:$0xf]
      %v3988 = vld [vmem:[%s3980 + $0x1c] sm:$0xf]
      %s3989 = scalar_lea.vmem %s15, 13
      %v3990 = vld [vmem:[%s3989] sm:$0x1]
      %v3992 = vperm.slane %v3990, 0
      %v4002 = vunpack.c.l.b16 %v3981
      %v4003 = vunpack.c.l.b16 %v3982
      %v4004 = vunpack.c.l.b16 %v3983
      %v4005 = vunpack.c.l.b16 %v3984
      %v4006 = vunpack.c.l.b16 %v3985
      %v4007 = vunpack.c.l.b16 %v3986
      %v4008 = vunpack.c.l.b16 %v3987
      %v4009 = vunpack.c.l.b16 %v3988
      %v4010 = vpack.c.b16 %v4003, %v4002
      %v4011 = vpack.c.b16 %v4005, %v4004
      %v4012 = vpack.c.b16 %v4007, %v4006
      %v4013 = vpack.c.b16 %v4009, %v4008
      %4018 = vmatpush.bf16.msra.mxu0 0
      %4019 = vmatpush.bf16.msra.mxu0 0
      %4020 = vmatpush.bf16.msra.mxu0 0
      %4021 = vmatpush.bf16.msra.mxu0 0
      %4022 = vmatpush.bf16.msra.mxu0 %v4013
      %4023 = vmatpush.bf16.msra.mxu0 %v4012
      %4024 = vmatpush.bf16.msra.mxu0 %v4011
      %4025 = vmatpush.bf16.msra.mxu0 %v4010
      %4026 = vmatmul.bf16.gmra.mxu0 %v3742
      %v4027 = vpop.f32.mrf.mxu0
      %v4028 = vadd.f32 %v3992, %v4027
      %v4029 = vpop.f32.mrf.mxu0
      %v4030 = vadd.f32 %v3992, %v4029
      %4031 = vmatmul.bf16.gmra.mxu0 %v3745
      %v4032 = vpop.f32.mrf.mxu0
      %v4033 = vadd.f32 %v3992, %v4032
      %v4034 = vpop.f32.mrf.mxu0
      %4035 = vdwg.mxu0
      %s4036 = scalar_lea.vmem %s14, 544
      %v4037 = vld [vmem:[%s4036] sm:$0xf]
      %v4038 = vld [vmem:[%s4036 + $0x4] sm:$0xf]
      %v4039 = vld [vmem:[%s4036 + $0x8] sm:$0xf]
      %v4040 = vld [vmem:[%s4036 + $0xc] sm:$0xf]
      %v4041 = vld [vmem:[%s4036 + $0x10] sm:$0xf]
      %v4042 = vld [vmem:[%s4036 + $0x14] sm:$0xf]
      %v4043 = vld [vmem:[%s4036 + $0x18] sm:$0xf]
      %v4044 = vld [vmem:[%s4036 + $0x1c] sm:$0xf]
      %s4045 = scalar_lea.vmem %s15, 17
      %v4046 = vld [vmem:[%s4045] sm:$0x1]
      %v4048 = vperm.slane %v4046, 0
      %v4058 = vunpack.c.l.b16 %v4037
      %v4059 = vunpack.c.l.b16 %v4038
      %v4060 = vunpack.c.l.b16 %v4039
      %v4061 = vunpack.c.l.b16 %v4040
      %v4062 = vunpack.c.l.b16 %v4041
      %v4063 = vunpack.c.l.b16 %v4042
      %v4064 = vunpack.c.l.b16 %v4043
      %v4065 = vunpack.c.l.b16 %v4044
      %v4066 = vpack.c.b16 %v4059, %v4058
      %v4067 = vpack.c.b16 %v4061, %v4060
      %v4068 = vpack.c.b16 %v4063, %v4062
      %v4069 = vpack.c.b16 %v4065, %v4064
      %4074 = vmatpush.bf16.msra.mxu0 0
      %4075 = vmatpush.bf16.msra.mxu0 0
      %4076 = vmatpush.bf16.msra.mxu0 0
      %4077 = vmatpush.bf16.msra.mxu0 0
      %4078 = vmatpush.bf16.msra.mxu0 %v4069
      %4079 = vmatpush.bf16.msra.mxu0 %v4068
      %4080 = vmatpush.bf16.msra.mxu0 %v4067
      %4081 = vmatpush.bf16.msra.mxu0 %v4066
      %4082 = vmatmul.bf16.gmra.mxu0 %v3742
      %v4083 = vpop.f32.mrf.mxu0
      %v4084 = vadd.f32 %v4048, %v4083
      %v4085 = vpop.f32.mrf.mxu0
      %v4086 = vadd.f32 %v4048, %v4085
      %4087 = vmatmul.bf16.gmra.mxu0 %v3745
      %v4088 = vpop.f32.mrf.mxu0
      %v4089 = vadd.f32 %v4048, %v4088
      %v4090 = vpop.f32.mrf.mxu0
      %4091 = vdwg.mxu0
      %s4092 = scalar_lea.vmem %s14, 672
      %v4093 = vld [vmem:[%s4092] sm:$0xf]
      %v4094 = vld [vmem:[%s4092 + $0x4] sm:$0xf]
      %v4095 = vld [vmem:[%s4092 + $0x8] sm:$0xf]
      %v4096 = vld [vmem:[%s4092 + $0xc] sm:$0xf]
      %v4097 = vld [vmem:[%s4092 + $0x10] sm:$0xf]
      %v4098 = vld [vmem:[%s4092 + $0x14] sm:$0xf]
      %v4099 = vld [vmem:[%s4092 + $0x18] sm:$0xf]
      %v4100 = vld [vmem:[%s4092 + $0x1c] sm:$0xf]
      %s4101 = scalar_lea.vmem %s15, 21
      %v4102 = vld [vmem:[%s4101] sm:$0x1]
      %v4104 = vperm.slane %v4102, 0
      %v4114 = vunpack.c.l.b16 %v4093
      %v4115 = vunpack.c.l.b16 %v4094
      %v4116 = vunpack.c.l.b16 %v4095
      %v4117 = vunpack.c.l.b16 %v4096
      %v4118 = vunpack.c.l.b16 %v4097
      %v4119 = vunpack.c.l.b16 %v4098
      %v4120 = vunpack.c.l.b16 %v4099
      %v4121 = vunpack.c.l.b16 %v4100
      %v4122 = vpack.c.b16 %v4115, %v4114
      %v4123 = vpack.c.b16 %v4117, %v4116
      %v4124 = vpack.c.b16 %v4119, %v4118
      %v4125 = vpack.c.b16 %v4121, %v4120
      %4130 = vmatpush.bf16.msra.mxu0 0
      %4131 = vmatpush.bf16.msra.mxu0 0
      %4132 = vmatpush.bf16.msra.mxu0 0
      %4133 = vmatpush.bf16.msra.mxu0 0
      %4134 = vmatpush.bf16.msra.mxu0 %v4125
      %4135 = vmatpush.bf16.msra.mxu0 %v4124
      %4136 = vmatpush.bf16.msra.mxu0 %v4123
      %4137 = vmatpush.bf16.msra.mxu0 %v4122
      %4138 = vmatmul.bf16.gmra.mxu0 %v3742
      %v4139 = vpop.f32.mrf.mxu0
      %v4140 = vadd.f32 %v4104, %v4139
      %v4141 = vpop.f32.mrf.mxu0
      %v4142 = vadd.f32 %v4104, %v4141
      %4143 = vmatmul.bf16.gmra.mxu0 %v3745
      %v4144 = vpop.f32.mrf.mxu0
      %v4145 = vadd.f32 %v4104, %v4144
      %v4146 = vpop.f32.mrf.mxu0
      %4147 = vdwg.mxu0
      %v4148 = vpack.c.bf16 %v4030, %v4028
      %v4149 = vpack.c.bf16 %v4033, %v4033
      %v4150 = vpack.c.bf16 %v4086, %v4084
      %v4151 = vpack.c.bf16 %v4089, %v4089
      %v4153 = vsel %vm2305, %v4148, 0
      %v4156 = vsel %vm2305, %v4149, 0
      %v4159 = vsel %vm2305, %v4150, 0
      %v4162 = vsel %vm2305, %v4151, 0
      %4164 = vmatpush.bf16.xpose.msra.mxu0 0
      %4165 = vmatpush.bf16.xpose.msra.mxu0 0
      %4166 = vmatpush.bf16.xpose.msra.mxu0 0
      %4167 = vmatpush.bf16.xpose.msra.mxu0 0
      %4168 = vmatpush.bf16.xpose.msra.mxu0 0
      %4169 = vmatpush.bf16.xpose.msra.mxu0 0
      %4170 = vmatpush.bf16.xpose.msra.mxu0 %v4162
      %4171 = vmatpush.bf16.xpose.msra.mxu0 %v4159
      %4172 = vmatmul.bf16.gmra.mxu0 %v4153
      %v4173 = vpop.f32.mrf.mxu0
      %v4174 = vadd.f32 0.0, %v4173
      %v4175 = vpop.f32.mrf.mxu0
      %v4176 = vadd.f32 0.0, %v4175
      %4177 = vmatmul.bf16.gmra.mxu0 %v4156
      %v4178 = vpop.f32.mrf.mxu0
      %v4179 = vadd.f32 0.0, %v4178
      %v4180 = vpop.f32.mrf.mxu0
      %4181 = vdwg.mxu0
      %v4182 = vsel %vm2336, %v4174, -inf
      %4183 = vmax.xlane.f32.xlu0 %v4182
      %v4184 = vpop.xlane.xlu0 %4183
      %v4185 = vsel %vm2336, %v4176, -inf
      %4186 = vmax.xlane.f32.xlu0 %v4185
      %v4187 = vpop.xlane.xlu0 %4186
      %v4188 = vsel %vm2343, %v4179, -inf
      %4189 = vmax.xlane.f32.xlu0 %v4188
      %v4190 = vpop.xlane.xlu0 %4189
      %v4191 = vsub.f32 %v4174, %v4184
      %v4192 = vsub.f32 %v4176, %v4187
      %v4193 = vsub.f32 %v4179, %v4190
      %v4194 = vmul.f32 %v4191, 1.442695
      %v4195 = vpow.pop %v4194
      %v4196 = vmul.f32 %v4192, 1.442695
      %v4197 = vpow.pop %v4196
      %v4198 = vmul.f32 %v4193, 1.442695
      %v4199 = vpow.pop %v4198
      %v4200 = vsel %vm2336, %v4195, 0.0
      %4201 = vadd.xlane.f32.xlu0 %v4200
      %v4202 = vpop.xlane.xlu0 %4201
      %v4203 = vsel %vm2336, %v4197, 0.0
      %4204 = vadd.xlane.f32.xlu0 %v4203
      %v4205 = vpop.xlane.xlu0 %4204
      %v4206 = vsel %vm2343, %v4199, 0.0
      %4207 = vadd.xlane.f32.xlu0 %v4206
      %v4208 = vpop.xlane.xlu0 %4207
      %v4209 = vrcp.pop %v4202
      %v4210 = vrcp.pop %v4205
      %v4211 = vrcp.pop %v4208
      %v4212 = vmul.f32 %v4195, %v4209
      %v4213 = vmul.f32 %v4197, %v4210
      %v4214 = vmul.f32 %v4199, %v4211
      %v4215 = vpack.c.bf16 %v4213, %v4212
      %v4216 = vpack.c.bf16 %v4214, %v4214
      %v4217 = vpack.c.bf16 %v4142, %v4140
      %v4218 = vpack.c.bf16 %v4145, %v4145
      %v4220 = vsel %vm2336, %v4215, 0
      %v4223 = vsel %vm2336, %v4216, 0
      %v4226 = vand.u32 %v4218, %v2384
      %4228 = vmatpush.bf16.msra.mxu0 0
      %4229 = vmatpush.bf16.msra.mxu0 0
      %4230 = vmatpush.bf16.msra.mxu0 0
      %4231 = vmatpush.bf16.msra.mxu0 0
      %4232 = vmatpush.bf16.msra.mxu0 0
      %4233 = vmatpush.bf16.msra.mxu0 0
      %4234 = vmatpush.bf16.msra.mxu0 %v4226
      %4235 = vmatpush.bf16.msra.mxu0 %v4217
      %4236 = vmatmul.bf16.gmra.mxu0 %v4220
      %v4237 = vpop.f32.mrf.mxu0
      %v4238 = vadd.f32 0.0, %v4237
      %v4239 = vpop.f32.mrf.mxu0
      %v4240 = vadd.f32 0.0, %v4239
      %4241 = vmatmul.bf16.gmra.mxu0 %v4223
      %v4242 = vpop.f32.mrf.mxu0
      %v4243 = vadd.f32 0.0, %v4242
      %v4244 = vpop.f32.mrf.mxu0
      %4245 = vdwg.mxu0
      %v4246 = vpack.c.bf16 %v4240, %v4238
      %v4247 = vpack.c.bf16 %v4243, %v4243
      %s4248 = scalar_lea.vmem %s16, 40
      %v4249 = vld [vmem:[%s4248] sm:$0xf]
      %v4250 = vld [vmem:[%s4248 + $0x4] sm:$0xf]
      %v4253 = vunpack.c.l.b16 %v4249
      %v4254 = vunpack.c.l.b16 %v4250
      %v4255 = vpack.c.b16 %v4254, %v4253
      %v4258 = vsel %vm2305, %v4246, 0
      %v4261 = vsel %vm2305, %v4247, 0
      %4263 = vmatpush.bf16.msra.mxu0 0
      %4264 = vmatpush.bf16.msra.mxu0 0
      %4265 = vmatpush.bf16.msra.mxu0 0
      %4266 = vmatpush.bf16.msra.mxu0 0
      %4267 = vmatpush.bf16.msra.mxu0 0
      %4268 = vmatpush.bf16.msra.mxu0 0
      %4269 = vmatpush.bf16.msra.mxu0 0
      %4270 = vmatpush.bf16.msra.mxu0 %v4255
      %4271 = vmatmul.bf16.gmra.mxu0 %v4258
      %v4272 = vpop.f32.mrf.mxu0
      %v4273 = vadd.f32 0.0, %v4272
      %v4274 = vpop.f32.mrf.mxu0
      %v4275 = vadd.f32 0.0, %v4274
      %4276 = vmatmul.bf16.gmra.mxu0 %v4261
      %v4277 = vpop.f32.mrf.mxu0
      %v4278 = vadd.f32 0.0, %v4277
      %v4279 = vpop.f32.mrf.mxu0
      %4280 = vdwg.mxu0
      %v4283 = vunpack.c.l.b16 %v3978
      %v4284 = vunpack.c.l.b16 %v3979
      %v4285 = vpack.c.b16 %v4284, %v4283
      %v4288 = vsel %vm2305, %v3975, 0
      %v4291 = vsel %vm2305, %v3976, 0
      %4293 = vmatpush.bf16.msra.mxu0 0
      %4294 = vmatpush.bf16.msra.mxu0 0
      %4295 = vmatpush.bf16.msra.mxu0 0
      %4296 = vmatpush.bf16.msra.mxu0 0
      %4297 = vmatpush.bf16.msra.mxu0 0
      %4298 = vmatpush.bf16.msra.mxu0 0
      %4299 = vmatpush.bf16.msra.mxu0 0
      %4300 = vmatpush.bf16.msra.mxu0 %v4285
      %4301 = vmatmul.bf16.gmra.mxu0 %v4288
      %v4302 = vpop.f32.mrf.mxu0
      %v4303 = vadd.f32 %v4273, %v4302
      %v4304 = vpop.f32.mrf.mxu0
      %v4305 = vadd.f32 %v4275, %v4304
      %4306 = vmatmul.bf16.gmra.mxu0 %v4291
      %v4307 = vpop.f32.mrf.mxu0
      %v4308 = vadd.f32 %v4278, %v4307
      %v4309 = vpop.f32.mrf.mxu0
      %4310 = vdwg.mxu0
      %s4311 = scalar_lea.vmem %s14, 448
      %v4312 = vld [vmem:[%s4311] sm:$0xf]
      %v4313 = vld [vmem:[%s4311 + $0x4] sm:$0xf]
      %v4314 = vld [vmem:[%s4311 + $0x8] sm:$0xf]
      %v4315 = vld [vmem:[%s4311 + $0xc] sm:$0xf]
      %v4316 = vld [vmem:[%s4311 + $0x10] sm:$0xf]
      %v4317 = vld [vmem:[%s4311 + $0x14] sm:$0xf]
      %v4318 = vld [vmem:[%s4311 + $0x18] sm:$0xf]
      %v4319 = vld [vmem:[%s4311 + $0x1c] sm:$0xf]
      %s4320 = scalar_lea.vmem %s15, 14
      %v4321 = vld [vmem:[%s4320] sm:$0x1]
      %v4323 = vperm.slane %v4321, 0
      %v4333 = vunpack.c.l.b16 %v4312
      %v4334 = vunpack.c.l.b16 %v4313
      %v4335 = vunpack.c.l.b16 %v4314
      %v4336 = vunpack.c.l.b16 %v4315
      %v4337 = vunpack.c.l.b16 %v4316
      %v4338 = vunpack.c.l.b16 %v4317
      %v4339 = vunpack.c.l.b16 %v4318
      %v4340 = vunpack.c.l.b16 %v4319
      %v4341 = vpack.c.b16 %v4334, %v4333
      %v4342 = vpack.c.b16 %v4336, %v4335
      %v4343 = vpack.c.b16 %v4338, %v4337
      %v4344 = vpack.c.b16 %v4340, %v4339
      %4349 = vmatpush.bf16.msra.mxu0 0
      %4350 = vmatpush.bf16.msra.mxu0 0
      %4351 = vmatpush.bf16.msra.mxu0 0
      %4352 = vmatpush.bf16.msra.mxu0 0
      %4353 = vmatpush.bf16.msra.mxu0 %v4344
      %4354 = vmatpush.bf16.msra.mxu0 %v4343
      %4355 = vmatpush.bf16.msra.mxu0 %v4342
      %4356 = vmatpush.bf16.msra.mxu0 %v4341
      %4357 = vmatmul.bf16.gmra.mxu0 %v3742
      %v4358 = vpop.f32.mrf.mxu0
      %v4359 = vadd.f32 %v4323, %v4358
      %v4360 = vpop.f32.mrf.mxu0
      %v4361 = vadd.f32 %v4323, %v4360
      %4362 = vmatmul.bf16.gmra.mxu0 %v3745
      %v4363 = vpop.f32.mrf.mxu0
      %v4364 = vadd.f32 %v4323, %v4363
      %v4365 = vpop.f32.mrf.mxu0
      %4366 = vdwg.mxu0
      %s4367 = scalar_lea.vmem %s14, 576
      %v4368 = vld [vmem:[%s4367] sm:$0xf]
      %v4369 = vld [vmem:[%s4367 + $0x4] sm:$0xf]
      %v4370 = vld [vmem:[%s4367 + $0x8] sm:$0xf]
      %v4371 = vld [vmem:[%s4367 + $0xc] sm:$0xf]
      %v4372 = vld [vmem:[%s4367 + $0x10] sm:$0xf]
      %v4373 = vld [vmem:[%s4367 + $0x14] sm:$0xf]
      %v4374 = vld [vmem:[%s4367 + $0x18] sm:$0xf]
      %v4375 = vld [vmem:[%s4367 + $0x1c] sm:$0xf]
      %s4376 = scalar_lea.vmem %s15, 18
      %v4377 = vld [vmem:[%s4376] sm:$0x1]
      %v4379 = vperm.slane %v4377, 0
      %v4389 = vunpack.c.l.b16 %v4368
      %v4390 = vunpack.c.l.b16 %v4369
      %v4391 = vunpack.c.l.b16 %v4370
      %v4392 = vunpack.c.l.b16 %v4371
      %v4393 = vunpack.c.l.b16 %v4372
      %v4394 = vunpack.c.l.b16 %v4373
      %v4395 = vunpack.c.l.b16 %v4374
      %v4396 = vunpack.c.l.b16 %v4375
      %v4397 = vpack.c.b16 %v4390, %v4389
      %v4398 = vpack.c.b16 %v4392, %v4391
      %v4399 = vpack.c.b16 %v4394, %v4393
      %v4400 = vpack.c.b16 %v4396, %v4395
      %4405 = vmatpush.bf16.msra.mxu0 0
      %4406 = vmatpush.bf16.msra.mxu0 0
      %4407 = vmatpush.bf16.msra.mxu0 0
      %4408 = vmatpush.bf16.msra.mxu0 0
      %4409 = vmatpush.bf16.msra.mxu0 %v4400
      %4410 = vmatpush.bf16.msra.mxu0 %v4399
      %4411 = vmatpush.bf16.msra.mxu0 %v4398
      %4412 = vmatpush.bf16.msra.mxu0 %v4397
      %4413 = vmatmul.bf16.gmra.mxu0 %v3742
      %v4414 = vpop.f32.mrf.mxu0
      %v4415 = vadd.f32 %v4379, %v4414
      %v4416 = vpop.f32.mrf.mxu0
      %v4417 = vadd.f32 %v4379, %v4416
      %4418 = vmatmul.bf16.gmra.mxu0 %v3745
      %v4419 = vpop.f32.mrf.mxu0
      %v4420 = vadd.f32 %v4379, %v4419
      %v4421 = vpop.f32.mrf.mxu0
      %4422 = vdwg.mxu0
      %s4423 = scalar_lea.vmem %s14, 704
      %v4424 = vld [vmem:[%s4423] sm:$0xf]
      %v4425 = vld [vmem:[%s4423 + $0x4] sm:$0xf]
      %v4426 = vld [vmem:[%s4423 + $0x8] sm:$0xf]
      %v4427 = vld [vmem:[%s4423 + $0xc] sm:$0xf]
      %v4428 = vld [vmem:[%s4423 + $0x10] sm:$0xf]
      %v4429 = vld [vmem:[%s4423 + $0x14] sm:$0xf]
      %v4430 = vld [vmem:[%s4423 + $0x18] sm:$0xf]
      %v4431 = vld [vmem:[%s4423 + $0x1c] sm:$0xf]
      %s4432 = scalar_lea.vmem %s15, 22
      %v4433 = vld [vmem:[%s4432] sm:$0x1]
      %v4435 = vperm.slane %v4433, 0
      %v4445 = vunpack.c.l.b16 %v4424
      %v4446 = vunpack.c.l.b16 %v4425
      %v4447 = vunpack.c.l.b16 %v4426
      %v4448 = vunpack.c.l.b16 %v4427
      %v4449 = vunpack.c.l.b16 %v4428
      %v4450 = vunpack.c.l.b16 %v4429
      %v4451 = vunpack.c.l.b16 %v4430
      %v4452 = vunpack.c.l.b16 %v4431
      %v4453 = vpack.c.b16 %v4446, %v4445
      %v4454 = vpack.c.b16 %v4448, %v4447
      %v4455 = vpack.c.b16 %v4450, %v4449
      %v4456 = vpack.c.b16 %v4452, %v4451
      %4461 = vmatpush.bf16.msra.mxu0 0
      %4462 = vmatpush.bf16.msra.mxu0 0
      %4463 = vmatpush.bf16.msra.mxu0 0
      %4464 = vmatpush.bf16.msra.mxu0 0
      %4465 = vmatpush.bf16.msra.mxu0 %v4456
      %4466 = vmatpush.bf16.msra.mxu0 %v4455
      %4467 = vmatpush.bf16.msra.mxu0 %v4454
      %4468 = vmatpush.bf16.msra.mxu0 %v4453
      %4469 = vmatmul.bf16.gmra.mxu0 %v3742
      %v4470 = vpop.f32.mrf.mxu0
      %v4471 = vadd.f32 %v4435, %v4470
      %v4472 = vpop.f32.mrf.mxu0
      %v4473 = vadd.f32 %v4435, %v4472
      %4474 = vmatmul.bf16.gmra.mxu0 %v3745
      %v4475 = vpop.f32.mrf.mxu0
      %v4476 = vadd.f32 %v4435, %v4475
      %v4477 = vpop.f32.mrf.mxu0
      %4478 = vdwg.mxu0
      %v4479 = vpack.c.bf16 %v4361, %v4359
      %v4480 = vpack.c.bf16 %v4364, %v4364
      %v4481 = vpack.c.bf16 %v4417, %v4415
      %v4482 = vpack.c.bf16 %v4420, %v4420
      %v4484 = vsel %vm2305, %v4479, 0
      %v4487 = vsel %vm2305, %v4480, 0
      %v4490 = vsel %vm2305, %v4481, 0
      %v4493 = vsel %vm2305, %v4482, 0
      %4495 = vmatpush.bf16.xpose.msra.mxu0 0
      %4496 = vmatpush.bf16.xpose.msra.mxu0 0
      %4497 = vmatpush.bf16.xpose.msra.mxu0 0
      %4498 = vmatpush.bf16.xpose.msra.mxu0 0
      %4499 = vmatpush.bf16.xpose.msra.mxu0 0
      %4500 = vmatpush.bf16.xpose.msra.mxu0 0
      %4501 = vmatpush.bf16.xpose.msra.mxu0 %v4493
      %4502 = vmatpush.bf16.xpose.msra.mxu0 %v4490
      %4503 = vmatmul.bf16.gmra.mxu0 %v4484
      %v4504 = vpop.f32.mrf.mxu0
      %v4505 = vadd.f32 0.0, %v4504
      %v4506 = vpop.f32.mrf.mxu0
      %v4507 = vadd.f32 0.0, %v4506
      %4508 = vmatmul.bf16.gmra.mxu0 %v4487
      %v4509 = vpop.f32.mrf.mxu0
      %v4510 = vadd.f32 0.0, %v4509
      %v4511 = vpop.f32.mrf.mxu0
      %4512 = vdwg.mxu0
      %v4513 = vsel %vm2336, %v4505, -inf
      %4514 = vmax.xlane.f32.xlu0 %v4513
      %v4515 = vpop.xlane.xlu0 %4514
      %v4516 = vsel %vm2336, %v4507, -inf
      %4517 = vmax.xlane.f32.xlu0 %v4516
      %v4518 = vpop.xlane.xlu0 %4517
      %v4519 = vsel %vm2343, %v4510, -inf
      %4520 = vmax.xlane.f32.xlu0 %v4519
      %v4521 = vpop.xlane.xlu0 %4520
      %v4522 = vsub.f32 %v4505, %v4515
      %v4523 = vsub.f32 %v4507, %v4518
      %v4524 = vsub.f32 %v4510, %v4521
      %v4525 = vmul.f32 %v4522, 1.442695
      %v4526 = vpow.pop %v4525
      %v4527 = vmul.f32 %v4523, 1.442695
      %v4528 = vpow.pop %v4527
      %v4529 = vmul.f32 %v4524, 1.442695
      %v4530 = vpow.pop %v4529
      %v4531 = vsel %vm2336, %v4526, 0.0
      %4532 = vadd.xlane.f32.xlu0 %v4531
      %v4533 = vpop.xlane.xlu0 %4532
      %v4534 = vsel %vm2336, %v4528, 0.0
      %4535 = vadd.xlane.f32.xlu0 %v4534
      %v4536 = vpop.xlane.xlu0 %4535
      %v4537 = vsel %vm2343, %v4530, 0.0
      %4538 = vadd.xlane.f32.xlu0 %v4537
      %v4539 = vpop.xlane.xlu0 %4538
      %v4540 = vrcp.pop %v4533
      %v4541 = vrcp.pop %v4536
      %v4542 = vrcp.pop %v4539
      %v4543 = vmul.f32 %v4526, %v4540
      %v4544 = vmul.f32 %v4528, %v4541
      %v4545 = vmul.f32 %v4530, %v4542
      %v4546 = vpack.c.bf16 %v4544, %v4543
      %v4547 = vpack.c.bf16 %v4545, %v4545
      %v4548 = vpack.c.bf16 %v4473, %v4471
      %v4549 = vpack.c.bf16 %v4476, %v4476
      %v4551 = vsel %vm2336, %v4546, 0
      %v4554 = vsel %vm2336, %v4547, 0
      %v4557 = vand.u32 %v4549, %v2384
      %4559 = vmatpush.bf16.msra.mxu0 0
      %4560 = vmatpush.bf16.msra.mxu0 0
      %4561 = vmatpush.bf16.msra.mxu0 0
      %4562 = vmatpush.bf16.msra.mxu0 0
      %4563 = vmatpush.bf16.msra.mxu0 0
      %4564 = vmatpush.bf16.msra.mxu0 0
      %4565 = vmatpush.bf16.msra.mxu0 %v4557
      %4566 = vmatpush.bf16.msra.mxu0 %v4548
      %4567 = vmatmul.bf16.gmra.mxu0 %v4551
      %v4568 = vpop.f32.mrf.mxu0
      %v4569 = vadd.f32 0.0, %v4568
      %v4570 = vpop.f32.mrf.mxu0
      %v4571 = vadd.f32 0.0, %v4570
      %4572 = vmatmul.bf16.gmra.mxu0 %v4554
      %v4573 = vpop.f32.mrf.mxu0
      %v4574 = vadd.f32 0.0, %v4573
      %v4575 = vpop.f32.mrf.mxu0
      %4576 = vdwg.mxu0
      %v4577 = vpack.c.bf16 %v4571, %v4569
      %v4578 = vpack.c.bf16 %v4574, %v4574
      %s4579 = scalar_lea.vmem %s16, 48
      %v4580 = vld [vmem:[%s4579] sm:$0xf]
      %v4581 = vld [vmem:[%s4579 + $0x4] sm:$0xf]
      %v4584 = vunpack.c.l.b16 %v4580
      %v4585 = vunpack.c.l.b16 %v4581
      %v4586 = vpack.c.b16 %v4585, %v4584
      %v4589 = vsel %vm2305, %v4577, 0
      %v4592 = vsel %vm2305, %v4578, 0
      %4594 = vmatpush.bf16.msra.mxu0 0
      %4595 = vmatpush.bf16.msra.mxu0 0
      %4596 = vmatpush.bf16.msra.mxu0 0
      %4597 = vmatpush.bf16.msra.mxu0 0
      %4598 = vmatpush.bf16.msra.mxu0 0
      %4599 = vmatpush.bf16.msra.mxu0 0
      %4600 = vmatpush.bf16.msra.mxu0 0
      %4601 = vmatpush.bf16.msra.mxu0 %v4586
      %4602 = vmatmul.bf16.gmra.mxu0 %v4589
      %v4603 = vpop.f32.mrf.mxu0
      %v4604 = vadd.f32 0.0, %v4603
      %v4605 = vpop.f32.mrf.mxu0
      %v4606 = vadd.f32 0.0, %v4605
      %4607 = vmatmul.bf16.gmra.mxu0 %v4592
      %v4608 = vpop.f32.mrf.mxu0
      %v4609 = vadd.f32 0.0, %v4608
      %v4610 = vpop.f32.mrf.mxu0
      %4611 = vdwg.mxu0
      %v4612 = vadd.f32 %v4303, %v4604
      %v4613 = vadd.f32 %v4305, %v4606
      %v4614 = vadd.f32 %v4308, %v4609
      %s4615 = scalar_lea.vmem %s14, 480
      %v4616 = vld [vmem:[%s4615] sm:$0xf]
      %v4617 = vld [vmem:[%s4615 + $0x4] sm:$0xf]
      %v4618 = vld [vmem:[%s4615 + $0x8] sm:$0xf]
      %v4619 = vld [vmem:[%s4615 + $0xc] sm:$0xf]
      %v4620 = vld [vmem:[%s4615 + $0x10] sm:$0xf]
      %v4621 = vld [vmem:[%s4615 + $0x14] sm:$0xf]
      %v4622 = vld [vmem:[%s4615 + $0x18] sm:$0xf]
      %v4623 = vld [vmem:[%s4615 + $0x1c] sm:$0xf]
      %s4624 = scalar_lea.vmem %s15, 15
      %v4625 = vld [vmem:[%s4624] sm:$0x1]
      %v4627 = vperm.slane %v4625, 0
      %v4637 = vunpack.c.l.b16 %v4616
      %v4638 = vunpack.c.l.b16 %v4617
      %v4639 = vunpack.c.l.b16 %v4618
      %v4640 = vunpack.c.l.b16 %v4619
      %v4641 = vunpack.c.l.b16 %v4620
      %v4642 = vunpack.c.l.b16 %v4621
      %v4643 = vunpack.c.l.b16 %v4622
      %v4644 = vunpack.c.l.b16 %v4623
      %v4645 = vpack.c.b16 %v4638, %v4637
      %v4646 = vpack.c.b16 %v4640, %v4639
      %v4647 = vpack.c.b16 %v4642, %v4641
      %v4648 = vpack.c.b16 %v4644, %v4643
      %4653 = vmatpush.bf16.msra.mxu0 0
      %4654 = vmatpush.bf16.msra.mxu0 0
      %4655 = vmatpush.bf16.msra.mxu0 0
      %4656 = vmatpush.bf16.msra.mxu0 0
      %4657 = vmatpush.bf16.msra.mxu0 %v4648
      %4658 = vmatpush.bf16.msra.mxu0 %v4647
      %4659 = vmatpush.bf16.msra.mxu0 %v4646
      %4660 = vmatpush.bf16.msra.mxu0 %v4645
      %4661 = vmatmul.bf16.gmra.mxu0 %v3742
      %v4662 = vpop.f32.mrf.mxu0
      %v4663 = vadd.f32 %v4627, %v4662
      %v4664 = vpop.f32.mrf.mxu0
      %v4665 = vadd.f32 %v4627, %v4664
      %4666 = vmatmul.bf16.gmra.mxu0 %v3745
      %v4667 = vpop.f32.mrf.mxu0
      %v4668 = vadd.f32 %v4627, %v4667
      %v4669 = vpop.f32.mrf.mxu0
      %4670 = vdwg.mxu0
      %s4671 = scalar_lea.vmem %s14, 608
      %v4672 = vld [vmem:[%s4671] sm:$0xf]
      %v4673 = vld [vmem:[%s4671 + $0x4] sm:$0xf]
      %v4674 = vld [vmem:[%s4671 + $0x8] sm:$0xf]
      %v4675 = vld [vmem:[%s4671 + $0xc] sm:$0xf]
      %v4676 = vld [vmem:[%s4671 + $0x10] sm:$0xf]
      %v4677 = vld [vmem:[%s4671 + $0x14] sm:$0xf]
      %v4678 = vld [vmem:[%s4671 + $0x18] sm:$0xf]
      %v4679 = vld [vmem:[%s4671 + $0x1c] sm:$0xf]
      %s4680 = scalar_lea.vmem %s15, 19
      %v4681 = vld [vmem:[%s4680] sm:$0x1]
      %v4683 = vperm.slane %v4681, 0
      %v4693 = vunpack.c.l.b16 %v4672
      %v4694 = vunpack.c.l.b16 %v4673
      %v4695 = vunpack.c.l.b16 %v4674
      %v4696 = vunpack.c.l.b16 %v4675
      %v4697 = vunpack.c.l.b16 %v4676
      %v4698 = vunpack.c.l.b16 %v4677
      %v4699 = vunpack.c.l.b16 %v4678
      %v4700 = vunpack.c.l.b16 %v4679
      %v4701 = vpack.c.b16 %v4694, %v4693
      %v4702 = vpack.c.b16 %v4696, %v4695
      %v4703 = vpack.c.b16 %v4698, %v4697
      %v4704 = vpack.c.b16 %v4700, %v4699
      %4709 = vmatpush.bf16.msra.mxu0 0
      %4710 = vmatpush.bf16.msra.mxu0 0
      %4711 = vmatpush.bf16.msra.mxu0 0
      %4712 = vmatpush.bf16.msra.mxu0 0
      %4713 = vmatpush.bf16.msra.mxu0 %v4704
      %4714 = vmatpush.bf16.msra.mxu0 %v4703
      %4715 = vmatpush.bf16.msra.mxu0 %v4702
      %4716 = vmatpush.bf16.msra.mxu0 %v4701
      %4717 = vmatmul.bf16.gmra.mxu0 %v3742
      %v4718 = vpop.f32.mrf.mxu0
      %v4719 = vadd.f32 %v4683, %v4718
      %v4720 = vpop.f32.mrf.mxu0
      %v4721 = vadd.f32 %v4683, %v4720
      %4722 = vmatmul.bf16.gmra.mxu0 %v3745
      %v4723 = vpop.f32.mrf.mxu0
      %v4724 = vadd.f32 %v4683, %v4723
      %v4725 = vpop.f32.mrf.mxu0
      %4726 = vdwg.mxu0
      %s4727 = scalar_lea.vmem %s14, 736
      %v4728 = vld [vmem:[%s4727] sm:$0xf]
      %v4729 = vld [vmem:[%s4727 + $0x4] sm:$0xf]
      %v4730 = vld [vmem:[%s4727 + $0x8] sm:$0xf]
      %v4731 = vld [vmem:[%s4727 + $0xc] sm:$0xf]
      %v4732 = vld [vmem:[%s4727 + $0x10] sm:$0xf]
      %v4733 = vld [vmem:[%s4727 + $0x14] sm:$0xf]
      %v4734 = vld [vmem:[%s4727 + $0x18] sm:$0xf]
      %v4735 = vld [vmem:[%s4727 + $0x1c] sm:$0xf]
      %s4736 = scalar_lea.vmem %s15, 23
      %v4737 = vld [vmem:[%s4736] sm:$0x1]
      %v4739 = vperm.slane %v4737, 0
      %v4749 = vunpack.c.l.b16 %v4728
      %v4750 = vunpack.c.l.b16 %v4729
      %v4751 = vunpack.c.l.b16 %v4730
      %v4752 = vunpack.c.l.b16 %v4731
      %v4753 = vunpack.c.l.b16 %v4732
      %v4754 = vunpack.c.l.b16 %v4733
      %v4755 = vunpack.c.l.b16 %v4734
      %v4756 = vunpack.c.l.b16 %v4735
      %v4757 = vpack.c.b16 %v4750, %v4749
      %v4758 = vpack.c.b16 %v4752, %v4751
      %v4759 = vpack.c.b16 %v4754, %v4753
      %v4760 = vpack.c.b16 %v4756, %v4755
      %4765 = vmatpush.bf16.msra.mxu0 0
      %4766 = vmatpush.bf16.msra.mxu0 0
      %4767 = vmatpush.bf16.msra.mxu0 0
      %4768 = vmatpush.bf16.msra.mxu0 0
      %4769 = vmatpush.bf16.msra.mxu0 %v4760
      %4770 = vmatpush.bf16.msra.mxu0 %v4759
      %4771 = vmatpush.bf16.msra.mxu0 %v4758
      %4772 = vmatpush.bf16.msra.mxu0 %v4757
      %4773 = vmatmul.bf16.gmra.mxu0 %v3742
      %v4774 = vpop.f32.mrf.mxu0
      %v4775 = vadd.f32 %v4739, %v4774
      %v4776 = vpop.f32.mrf.mxu0
      %v4777 = vadd.f32 %v4739, %v4776
      %4778 = vmatmul.bf16.gmra.mxu0 %v3745
      %v4779 = vpop.f32.mrf.mxu0
      %v4780 = vadd.f32 %v4739, %v4779
      %v4781 = vpop.f32.mrf.mxu0
      %4782 = vdwg.mxu0
      %v4783 = vpack.c.bf16 %v4665, %v4663
      %v4784 = vpack.c.bf16 %v4668, %v4668
      %v4785 = vpack.c.bf16 %v4721, %v4719
      %v4786 = vpack.c.bf16 %v4724, %v4724
      %v4788 = vsel %vm2305, %v4783, 0
      %v4791 = vsel %vm2305, %v4784, 0
      %v4794 = vsel %vm2305, %v4785, 0
      %v4797 = vsel %vm2305, %v4786, 0
      %4799 = vmatpush.bf16.xpose.msra.mxu0 0
      %4800 = vmatpush.bf16.xpose.msra.mxu0 0
      %4801 = vmatpush.bf16.xpose.msra.mxu0 0
      %4802 = vmatpush.bf16.xpose.msra.mxu0 0
      %4803 = vmatpush.bf16.xpose.msra.mxu0 0
      %4804 = vmatpush.bf16.xpose.msra.mxu0 0
      %4805 = vmatpush.bf16.xpose.msra.mxu0 %v4797
      %4806 = vmatpush.bf16.xpose.msra.mxu0 %v4794
      %4807 = vmatmul.bf16.gmra.mxu0 %v4788
      %v4808 = vpop.f32.mrf.mxu0
      %v4809 = vadd.f32 0.0, %v4808
      %v4810 = vpop.f32.mrf.mxu0
      %v4811 = vadd.f32 0.0, %v4810
      %4812 = vmatmul.bf16.gmra.mxu0 %v4791
      %v4813 = vpop.f32.mrf.mxu0
      %v4814 = vadd.f32 0.0, %v4813
      %v4815 = vpop.f32.mrf.mxu0
      %4816 = vdwg.mxu0
      %v4817 = vsel %vm2336, %v4809, -inf
      %4818 = vmax.xlane.f32.xlu0 %v4817
      %v4819 = vpop.xlane.xlu0 %4818
      %v4820 = vsel %vm2336, %v4811, -inf
      %4821 = vmax.xlane.f32.xlu0 %v4820
      %v4822 = vpop.xlane.xlu0 %4821
      %v4823 = vsel %vm2343, %v4814, -inf
      %4824 = vmax.xlane.f32.xlu0 %v4823
      %v4825 = vpop.xlane.xlu0 %4824
      %v4826 = vsub.f32 %v4809, %v4819
      %v4827 = vsub.f32 %v4811, %v4822
      %v4828 = vsub.f32 %v4814, %v4825
      %v4829 = vmul.f32 %v4826, 1.442695
      %v4830 = vpow.pop %v4829
      %v4831 = vmul.f32 %v4827, 1.442695
      %v4832 = vpow.pop %v4831
      %v4833 = vmul.f32 %v4828, 1.442695
      %v4834 = vpow.pop %v4833
      %v4835 = vsel %vm2336, %v4830, 0.0
      %4836 = vadd.xlane.f32.xlu0 %v4835
      %v4837 = vpop.xlane.xlu0 %4836
      %v4838 = vsel %vm2336, %v4832, 0.0
      %4839 = vadd.xlane.f32.xlu0 %v4838
      %v4840 = vpop.xlane.xlu0 %4839
      %v4841 = vsel %vm2343, %v4834, 0.0
      %4842 = vadd.xlane.f32.xlu0 %v4841
      %v4843 = vpop.xlane.xlu0 %4842
      %v4844 = vrcp.pop %v4837
      %v4845 = vrcp.pop %v4840
      %v4846 = vrcp.pop %v4843
      %v4847 = vmul.f32 %v4830, %v4844
      %v4848 = vmul.f32 %v4832, %v4845
      %v4849 = vmul.f32 %v4834, %v4846
      %v4850 = vpack.c.bf16 %v4848, %v4847
      %v4851 = vpack.c.bf16 %v4849, %v4849
      %v4852 = vpack.c.bf16 %v4777, %v4775
      %v4853 = vpack.c.bf16 %v4780, %v4780
      %v4855 = vsel %vm2336, %v4850, 0
      %v4858 = vsel %vm2336, %v4851, 0
      %v4861 = vand.u32 %v4853, %v2384
      %4863 = vmatpush.bf16.msra.mxu0 0
      %4864 = vmatpush.bf16.msra.mxu0 0
      %4865 = vmatpush.bf16.msra.mxu0 0
      %4866 = vmatpush.bf16.msra.mxu0 0
      %4867 = vmatpush.bf16.msra.mxu0 0
      %4868 = vmatpush.bf16.msra.mxu0 0
      %4869 = vmatpush.bf16.msra.mxu0 %v4861
      %4870 = vmatpush.bf16.msra.mxu0 %v4852
      %4871 = vmatmul.bf16.gmra.mxu0 %v4855
      %v4872 = vpop.f32.mrf.mxu0
      %v4873 = vadd.f32 0.0, %v4872
      %v4874 = vpop.f32.mrf.mxu0
      %v4875 = vadd.f32 0.0, %v4874
      %4876 = vmatmul.bf16.gmra.mxu0 %v4858
      %v4877 = vpop.f32.mrf.mxu0
      %v4878 = vadd.f32 0.0, %v4877
      %v4879 = vpop.f32.mrf.mxu0
      %4880 = vdwg.mxu0
      %v4881 = vpack.c.bf16 %v4875, %v4873
      %v4882 = vpack.c.bf16 %v4878, %v4878
      %s4883 = scalar_lea.vmem %s16, 56
      %v4884 = vld [vmem:[%s4883] sm:$0xf]
      %v4885 = vld [vmem:[%s4883 + $0x4] sm:$0xf]
      %v4888 = vunpack.c.l.b16 %v4884
      %v4889 = vunpack.c.l.b16 %v4885
      %v4890 = vpack.c.b16 %v4889, %v4888
      %v4893 = vsel %vm2305, %v4881, 0
      %v4896 = vsel %vm2305, %v4882, 0
      %4898 = vmatpush.bf16.msra.mxu0 0
      %4899 = vmatpush.bf16.msra.mxu0 0
      %4900 = vmatpush.bf16.msra.mxu0 0
      %4901 = vmatpush.bf16.msra.mxu0 0
      %4902 = vmatpush.bf16.msra.mxu0 0
      %4903 = vmatpush.bf16.msra.mxu0 0
      %4904 = vmatpush.bf16.msra.mxu0 0
      %4905 = vmatpush.bf16.msra.mxu0 %v4890
      %4906 = vmatmul.bf16.gmra.mxu0 %v4893
      %v4907 = vpop.f32.mrf.mxu0
      %v4908 = vadd.f32 0.0, %v4907
      %v4909 = vpop.f32.mrf.mxu0
      %v4910 = vadd.f32 0.0, %v4909
      %4911 = vmatmul.bf16.gmra.mxu0 %v4896
      %v4912 = vpop.f32.mrf.mxu0
      %v4913 = vadd.f32 0.0, %v4912
      %v4914 = vpop.f32.mrf.mxu0
      %4915 = vdwg.mxu0
      %v4916 = vadd.f32 %v4612, %v4908
      %v4917 = vadd.f32 %v4613, %v4910
      %v4918 = vadd.f32 %v4614, %v4913
      %s4919 = scalar_lea.vmem %s17, 1
      %v4920 = vld [vmem:[%s4919] sm:$0x1]
      %v4922 = vperm.slane %v4920, 0
      %v4924 = vadd.f32 %v4916, %v4922
      %v4925 = vadd.f32 %v4917, %v4922
      %v4926 = vadd.f32 %v4918, %v4922
      %v4927 = vadd.f32 %v3698, %v4924
      %v4928 = vadd.f32 %v3699, %v4925
      %v4929 = vadd.f32 %v3700, %v4926
      %s4930 = scalar_lea.vmem %s18, 2
      %v4931 = vld [vmem:[%s4930] sm:$0x1]
      %s4932 = scalar_lea.vmem %s18, 3
      %v4933 = vld [vmem:[%s4932] sm:$0x1]
      %v4934 = vsel %vm1675, %v4927, 0.0
      %4935 = vadd.xlane.f32.xlu0 %v4934
      %v4936 = vpop.xlane.xlu0 %4935
      %v4937 = vsel %vm1675, %v4928, 0.0
      %4938 = vadd.xlane.f32.xlu0 %v4937
      %v4939 = vpop.xlane.xlu0 %4938
      %v4940 = vsel %vm1682, %v4929, 0.0
      %4941 = vadd.xlane.f32.xlu0 %v4940
      %v4942 = vpop.xlane.xlu0 %4941
      %v4943 = vmul.f32 %v4936, %v2057
      %v4944 = vmul.f32 %v4939, %v2057
      %v4945 = vmul.f32 %v4942, %v2057
      %v4946 = vsub.f32 %v4927, %v4943
      %v4947 = vsub.f32 %v4928, %v4944
      %v4948 = vsub.f32 %v4929, %v4945
      %v4949 = vmul.f32 %v4946, %v4946
      %v4950 = vmul.f32 %v4947, %v4947
      %v4951 = vmul.f32 %v4948, %v4948
      %v4952 = vsel %vm1675, %v4949, 0.0
      %4953 = vadd.xlane.f32.xlu0 %v4952
      %v4954 = vpop.xlane.xlu0 %4953
      %v4955 = vsel %vm1675, %v4950, 0.0
      %4956 = vadd.xlane.f32.xlu0 %v4955
      %v4957 = vpop.xlane.xlu0 %4956
      %v4958 = vsel %vm1682, %v4951, 0.0
      %4959 = vadd.xlane.f32.xlu0 %v4958
      %v4960 = vpop.xlane.xlu0 %4959
      %v4961 = vmul.f32 %v4954, %v2057
      %v4962 = vmul.f32 %v4957, %v2057
      %v4963 = vmul.f32 %v4960, %v2057
      %v4964 = vadd.f32 %v4961, 1e-05
      %v4965 = vadd.f32 %v4962, 1e-05
      %v4966 = vadd.f32 %v4963, 1e-05
      %v4967 = vrsqrt.pop %v4964
      %v4968 = vmul.f32 %v4967, %v4964
      %v4969 = vmul.f32 %v4968, %v4967
      %v4970 = vmul.f32 0.5, %v4969
      %v4971 = vsub.f32 1.5, %v4970
      %v4972 = vmul.f32 %v4967, %v4971
      %vm4973 = vweird.f32 %v4964
      %vm4974 = vweird.f32 %v4967
      %vm4975 = vmor %vm4973, %vm4974
      %v4976 = vsel %vm4975, %v4967, %v4972
      %v4977 = vrsqrt.pop %v4965
      %v4978 = vmul.f32 %v4977, %v4965
      %v4979 = vmul.f32 %v4978, %v4977
      %v4980 = vmul.f32 0.5, %v4979
      %v4981 = vsub.f32 1.5, %v4980
      %v4982 = vmul.f32 %v4977, %v4981
      %vm4983 = vweird.f32 %v4965
      %vm4984 = vweird.f32 %v4977
      %vm4985 = vmor %vm4983, %vm4984
      %v4986 = vsel %vm4985, %v4977, %v4982
      %v4987 = vrsqrt.pop %v4966
      %v4988 = vmul.f32 %v4987, %v4966
      %v4989 = vmul.f32 %v4988, %v4987
      %v4990 = vmul.f32 0.5, %v4989
      %v4991 = vsub.f32 1.5, %v4990
      %v4992 = vmul.f32 %v4987, %v4991
      %vm4993 = vweird.f32 %v4966
      %vm4994 = vweird.f32 %v4987
      %vm4995 = vmor %vm4993, %vm4994
      %v4996 = vsel %vm4995, %v4987, %v4992
      %v4997 = vmul.f32 %v4946, %v4976
      %v4998 = vmul.f32 %v4947, %v4986
      %v4999 = vmul.f32 %v4948, %v4996
      %v5001 = vperm.slane %v4931, 0
      %v5003 = vmul.f32 %v4997, %v5001
      %v5004 = vmul.f32 %v4998, %v5001
      %v5005 = vmul.f32 %v4999, %v5001
      %v5007 = vperm.slane %v4933, 0
      %v5009 = vadd.f32 %v5003, %v5007
      %v5010 = vadd.f32 %v5004, %v5007
      %v5011 = vadd.f32 %v5005, %v5007
      %v5012 = vpack.c.bf16 %v5010, %v5009
      %v5013 = vpack.c.bf16 %v5011, %v5011
      %s5014 = scalar_lea.vmem %s19, 32
      %v5015 = vld [vmem:[%s5014] sm:$0xf]
      %v5016 = vld [vmem:[%s5014 + $0x4] sm:$0xf]
      %v5017 = vld [vmem:[%s5014 + $0x8] sm:$0xf]
      %v5018 = vld [vmem:[%s5014 + $0xc] sm:$0xf]
      %v5019 = vld [vmem:[%s5014 + $0x10] sm:$0xf]
      %v5020 = vld [vmem:[%s5014 + $0x14] sm:$0xf]
      %v5021 = vld [vmem:[%s5014 + $0x18] sm:$0xf]
      %v5022 = vld [vmem:[%s5014 + $0x1c] sm:$0xf]
      %s5023 = scalar_lea.vmem %s20, 1
      %v5024 = vld [vmem:[%s5023] sm:$0x1]
      %v5026 = vperm.slane %v5024, 0
      %v5036 = vunpack.c.l.b16 %v5015
      %v5037 = vunpack.c.l.b16 %v5016
      %v5038 = vunpack.c.l.b16 %v5017
      %v5039 = vunpack.c.l.b16 %v5018
      %v5040 = vunpack.c.l.b16 %v5019
      %v5041 = vunpack.c.l.b16 %v5020
      %v5042 = vunpack.c.l.b16 %v5021
      %v5043 = vunpack.c.l.b16 %v5022
      %v5044 = vpack.c.b16 %v5037, %v5036
      %v5045 = vpack.c.b16 %v5039, %v5038
      %v5046 = vpack.c.b16 %v5041, %v5040
      %v5047 = vpack.c.b16 %v5043, %v5042
      %v5053 = vsel %vm1675, %v5012, 0
      %v5056 = vsel %vm1675, %v5013, 0
      %5058 = vmatpush.bf16.msra.mxu0 0
      %5059 = vmatpush.bf16.msra.mxu0 0
      %5060 = vmatpush.bf16.msra.mxu0 0
      %5061 = vmatpush.bf16.msra.mxu0 0
      %5062 = vmatpush.bf16.msra.mxu0 %v5047
      %5063 = vmatpush.bf16.msra.mxu0 %v5046
      %5064 = vmatpush.bf16.msra.mxu0 %v5045
      %5065 = vmatpush.bf16.msra.mxu0 %v5044
      %5066 = vmatmul.bf16.gmra.mxu0 %v5053
      %v5067 = vpop.f32.mrf.mxu0
      %v5068 = vadd.f32 %v5026, %v5067
      %v5069 = vpop.f32.mrf.mxu0
      %v5070 = vadd.f32 %v5026, %v5069
      %5071 = vmatmul.bf16.gmra.mxu0 %v5056
      %v5072 = vpop.f32.mrf.mxu0
      %v5073 = vadd.f32 %v5026, %v5072
      %v5074 = vpop.f32.mrf.mxu0
      %5075 = vdwg.mxu0
      %v5076 = vmul.f32 %v5068, %v5068
      %v5077 = vmul.f32 %v5070, %v5070
      %v5078 = vmul.f32 %v5073, %v5073
      %v5079 = vmul.f32 %v5068, %v5076
      %v5080 = vmul.f32 %v5070, %v5077
      %v5081 = vmul.f32 %v5073, %v5078
      %v5082 = vmul.f32 %v5079, 0.044715
      %v5083 = vmul.f32 %v5080, 0.044715
      %v5084 = vmul.f32 %v5081, 0.044715
      %v5085 = vadd.f32 %v5068, %v5082
      %v5086 = vadd.f32 %v5070, %v5083
      %v5087 = vadd.f32 %v5073, %v5084
      %v5088 = vmul.f32 %v5085, 0.7978846
      %v5089 = vmul.f32 %v5086, 0.7978846
      %v5090 = vmul.f32 %v5087, 0.7978846
      %v5091 = vtanh.pop %v5088
      %v5092 = vtanh.pop %v5089
      %v5093 = vtanh.pop %v5090
      %v5094 = vadd.f32 %v5091, 1.0
      %v5095 = vadd.f32 %v5092, 1.0
      %v5096 = vadd.f32 %v5093, 1.0
      %v5097 = vmul.f32 %v5094, 0.5
      %v5098 = vmul.f32 %v5095, 0.5
      %v5099 = vmul.f32 %v5096, 0.5
      %v5100 = vmul.f32 %v5068, %v5097
      %v5101 = vmul.f32 %v5070, %v5098
      %v5102 = vmul.f32 %v5073, %v5099
      %v5103 = vpack.c.bf16 %v5101, %v5100
      %v5104 = vpack.c.bf16 %v5102, %v5102
      %s5105 = scalar_lea.vmem %s21, 64
      %v5106 = vld [vmem:[%s5105] sm:$0xf]
      %v5107 = vld [vmem:[%s5105 + $0x4] sm:$0xf]
      %v5108 = vld [vmem:[%s5105 + $0x8] sm:$0xf]
      %v5109 = vld [vmem:[%s5105 + $0xc] sm:$0xf]
      %v5110 = vld [vmem:[%s5105 + $0x10] sm:$0xf]
      %v5111 = vld [vmem:[%s5105 + $0x14] sm:$0xf]
      %v5112 = vld [vmem:[%s5105 + $0x18] sm:$0xf]
      %v5113 = vld [vmem:[%s5105 + $0x1c] sm:$0xf]
      %v5114 = vld [vmem:[%s5105 + $0x20] sm:$0xf]
      %v5115 = vld [vmem:[%s5105 + $0x24] sm:$0xf]
      %v5116 = vld [vmem:[%s5105 + $0x28] sm:$0xf]
      %v5117 = vld [vmem:[%s5105 + $0x2c] sm:$0xf]
      %v5118 = vld [vmem:[%s5105 + $0x30] sm:$0xf]
      %v5119 = vld [vmem:[%s5105 + $0x34] sm:$0xf]
      %v5120 = vld [vmem:[%s5105 + $0x38] sm:$0xf]
      %v5121 = vld [vmem:[%s5105 + $0x3c] sm:$0xf]
      %s5122 = scalar_lea.vmem %s22, 1
      %v5123 = vld [vmem:[%s5122] sm:$0x1]
      %v5125 = vperm.slane %v5123, 0
      %v5143 = vunpack.c.l.b16 %v5106
      %v5144 = vunpack.c.l.b16 %v5107
      %v5145 = vunpack.c.l.b16 %v5108
      %v5146 = vunpack.c.l.b16 %v5109
      %v5147 = vunpack.c.l.b16 %v5110
      %v5148 = vunpack.c.l.b16 %v5111
      %v5149 = vunpack.c.l.b16 %v5112
      %v5150 = vunpack.c.l.b16 %v5113
      %v5151 = vunpack.c.l.b16 %v5114
      %v5152 = vunpack.c.l.b16 %v5115
      %v5153 = vunpack.c.l.b16 %v5116
      %v5154 = vunpack.c.l.b16 %v5117
      %v5155 = vunpack.c.l.b16 %v5118
      %v5156 = vunpack.c.l.b16 %v5119
      %v5157 = vunpack.c.l.b16 %v5120
      %v5158 = vunpack.c.l.b16 %v5121
      %v5159 = vpack.c.b16 %v5144, %v5143
      %v5160 = vpack.c.b16 %v5146, %v5145
      %v5161 = vpack.c.b16 %v5148, %v5147
      %v5162 = vpack.c.b16 %v5150, %v5149
      %v5163 = vpack.c.b16 %v5152, %v5151
      %v5164 = vpack.c.b16 %v5154, %v5153
      %v5165 = vpack.c.b16 %v5156, %v5155
      %v5166 = vpack.c.b16 %v5158, %v5157
      %5175 = vmatpush.bf16.msra.mxu0 %v5166
      %5176 = vmatpush.bf16.msra.mxu0 %v5165
      %5177 = vmatpush.bf16.msra.mxu0 %v5164
      %5178 = vmatpush.bf16.msra.mxu0 %v5163
      %5179 = vmatpush.bf16.msra.mxu0 %v5162
      %5180 = vmatpush.bf16.msra.mxu0 %v5161
      %5181 = vmatpush.bf16.msra.mxu0 %v5160
      %5182 = vmatpush.bf16.msra.mxu0 %v5159
      %5183 = vmatmul.bf16.gmra.mxu0 %v5103
      %v5184 = vpop.f32.mrf.mxu0
      %v5185 = vadd.f32 %v5125, %v5184
      %v5186 = vpop.f32.mrf.mxu0
      %v5187 = vadd.f32 %v5125, %v5186
      %5188 = vmatmul.bf16.gmra.mxu0 %v5104
      %v5189 = vpop.f32.mrf.mxu0
      %v5190 = vadd.f32 %v5125, %v5189
      %v5191 = vpop.f32.mrf.mxu0
      %5192 = vdwg.mxu0
      %v5193 = vadd.f32 %v5009, %v5185
      %v5194 = vadd.f32 %v5010, %v5187
      %v5195 = vadd.f32 %v5011, %v5190
      %s5196 = scalar_lea.vmem %s23, 2
      %v5197 = vld [vmem:[%s5196] sm:$0x1]
      %s5198 = scalar_lea.vmem %s23, 3
      %v5199 = vld [vmem:[%s5198] sm:$0x1]
      %v5200 = vsel %vm1675, %v5193, 0.0
      %5201 = vadd.xlane.f32.xlu0 %v5200
      %v5202 = vpop.xlane.xlu0 %5201
      %v5203 = vsel %vm1675, %v5194, 0.0
      %5204 = vadd.xlane.f32.xlu0 %v5203
      %v5205 = vpop.xlane.xlu0 %5204
      %v5206 = vsel %vm1682, %v5195, 0.0
      %5207 = vadd.xlane.f32.xlu0 %v5206
      %v5208 = vpop.xlane.xlu0 %5207
      %v5209 = vmul.f32 %v5202, %v2057
      %v5210 = vmul.f32 %v5205, %v2057
      %v5211 = vmul.f32 %v5208, %v2057
      %v5212 = vsub.f32 %v5193, %v5209
      %v5213 = vsub.f32 %v5194, %v5210
      %v5214 = vsub.f32 %v5195, %v5211
      %v5215 = vmul.f32 %v5212, %v5212
      %v5216 = vmul.f32 %v5213, %v5213
      %v5217 = vmul.f32 %v5214, %v5214
      %v5218 = vsel %vm1675, %v5215, 0.0
      %5219 = vadd.xlane.f32.xlu0 %v5218
      %v5220 = vpop.xlane.xlu0 %5219
      %v5221 = vsel %vm1675, %v5216, 0.0
      %5222 = vadd.xlane.f32.xlu0 %v5221
      %v5223 = vpop.xlane.xlu0 %5222
      %v5224 = vsel %vm1682, %v5217, 0.0
      %5225 = vadd.xlane.f32.xlu0 %v5224
      %v5226 = vpop.xlane.xlu0 %5225
      %v5227 = vmul.f32 %v5220, %v2057
      %v5228 = vmul.f32 %v5223, %v2057
      %v5229 = vmul.f32 %v5226, %v2057
      %v5230 = vadd.f32 %v5227, 1e-05
      %v5231 = vadd.f32 %v5228, 1e-05
      %v5232 = vadd.f32 %v5229, 1e-05
      %v5233 = vrsqrt.pop %v5230
      %v5234 = vmul.f32 %v5233, %v5230
      %v5235 = vmul.f32 %v5234, %v5233
      %v5236 = vmul.f32 0.5, %v5235
      %v5237 = vsub.f32 1.5, %v5236
      %v5238 = vmul.f32 %v5233, %v5237
      %vm5239 = vweird.f32 %v5230
      %vm5240 = vweird.f32 %v5233
      %vm5241 = vmor %vm5239, %vm5240
      %v5242 = vsel %vm5241, %v5233, %v5238
      %v5243 = vrsqrt.pop %v5231
      %v5244 = vmul.f32 %v5243, %v5231
      %v5245 = vmul.f32 %v5244, %v5243
      %v5246 = vmul.f32 0.5, %v5245
      %v5247 = vsub.f32 1.5, %v5246
      %v5248 = vmul.f32 %v5243, %v5247
      %vm5249 = vweird.f32 %v5231
      %vm5250 = vweird.f32 %v5243
      %vm5251 = vmor %vm5249, %vm5250
      %v5252 = vsel %vm5251, %v5243, %v5248
      %v5253 = vrsqrt.pop %v5232
      %v5254 = vmul.f32 %v5253, %v5232
      %v5255 = vmul.f32 %v5254, %v5253
      %v5256 = vmul.f32 0.5, %v5255
      %v5257 = vsub.f32 1.5, %v5256
      %v5258 = vmul.f32 %v5253, %v5257
      %vm5259 = vweird.f32 %v5232
      %vm5260 = vweird.f32 %v5253
      %vm5261 = vmor %vm5259, %vm5260
      %v5262 = vsel %vm5261, %v5253, %v5258
      %v5263 = vmul.f32 %v5212, %v5242
      %v5264 = vmul.f32 %v5213, %v5252
      %v5265 = vmul.f32 %v5214, %v5262
      %v5267 = vperm.slane %v5197, 0
      %v5269 = vmul.f32 %v5263, %v5267
      %v5270 = vmul.f32 %v5264, %v5267
      %v5271 = vmul.f32 %v5265, %v5267
      %v5273 = vperm.slane %v5199, 0
      %v5275 = vadd.f32 %v5269, %v5273
      %v5276 = vadd.f32 %v5270, %v5273
      %v5277 = vadd.f32 %v5271, %v5273
      %5278 = vst.msk [vmem:[%s737] sm:$0xff] %vm1675, %v5275
      %5279 = vst.msk [vmem:[%s737 + $0x8] sm:$0xff] %vm1675, %v5276
      %5280 = vst.msk [vmem:[%s737 + $0x10] sm:$0x7] %vm1682, %v5277
      %p5281 = scmp.lt.s32.totalorder %s35, 1
      %s5282 = scalar_select %p5281, %s35, 1
      %s5283 = smul.addr %s5282, 3
      %s5284 = smul.addr %s5283, 8
      %s5285 = scalar_lea.vmem %s24, %s5284
      // Predicated region
      $region117: #{custom_hubert_forward.1} parent=115 // pred_check
        %p5286 = pneg %p562
      $region118: #{custom_hubert_forward.1} parent=115 // pred_check_branch
        %5288 = sbr.rel (%p5286) target = $region120
      $region119: #{custom_hubert_forward.1} parent=115 // pred_region
        _
      $region120: #{custom_hubert_forward.1} parent=115 // pred_fallthru
        _
    $region116: #{custom_hubert_forward.1} parent=5 // pred_fallthru
      _
    %p5289 = scmp.le.s32.totalorder 2, %s30
    // Predicated region
    $region121: #{custom_hubert_forward.1} parent=5 // pred_check
      %p5290 = pneg %p5289
    $region122: #{custom_hubert_forward.1} parent=5 // pred_check_branch
      %5292 = sbr.rel (%p5290) target = $region124
    $region123: #{custom_hubert_forward.1} parent=5 // pred_region
      %s5293 = ssub.s32 %s30, 2
      // Predicated region
      $region125: #{custom_hubert_forward.1} parent=123 // pred_check
        %p5294 = pneg %p568
      $region126: #{custom_hubert_forward.1} parent=123 // pred_check_branch
        %5296 = sbr.rel (%p5294) target = $region128
      $region127: #{custom_hubert_forward.1} parent=123 // pred_region
        %p5297 = scmp.lt.s32.totalorder %s36, 1
        %s5298 = scalar_select %p5297, %s36, 1
        %s5299 = smul.addr %s5298, 3
        %s5300 = smul.addr %s5299, 8
        %s5301 = scalar_lea.vmem %s24, %s5300
      $region128: #{custom_hubert_forward.1} parent=123 // pred_fallthru
        _
    $region124: #{custom_hubert_forward.1} parent=5 // pred_fallthru
      _
  $region6: #{custom_hubert_forward.1} parent=0 // loop_footer
    %s34 = sadd.s32 1, %s30
  $region7: #{custom_hubert_forward.1} parent=0 // loop_footer_branch
    %29 = sbr.rel target = $region3
  $region8: #{custom_hubert_forward.1} parent=0 // loop_exit
    _

</llo_original>
